<compile_context>
chip_gen: v7x
topology: tpu7x:2x2x1
jax: 0.10.0
libtpu: 0.0.40
codegen_flags: <defaults>
</compile_context>

<pallas_src>
import functools
import math

import jax
import jax.numpy as jnp
import numpy as np
from jax.experimental import pallas as pl
from jax.experimental.pallas import tpu as pltpu


# ----------------------------------------------------------------------------
# Kernel: one (batch-chunk, L-chunk) tile per grid step.
# ----------------------------------------------------------------------------
def _decoder_layer_kernel(
    tgt_ref,    # (Lt, Nb, E)  seq-first block
    mem_ref,    # (S,  Nb, E)
    wq_ref,     # (E, E)    bf16
    wkv_ref,    # (E, 2E)   bf16 fused [K | V] projection
    wo_ref,     # (E, E)    bf16
    w1_ref,     # (E, FF)   bf16
    w2_ref,     # (FF, E)   bf16
    vecs_ref,   # (7, E) f32 packed rows: bq, bo, b2, g2, be2, g3, be3
    bkv_ref,    # (1, 2E) f32 fused K|V bias
    b1_ref,     # (1, FF) f32
    *out_refs,  # out_ref (Lt, Nb, E)  [+ attn_ref (Nb, Lt, S) if need_weights]
    nhead, head_dim, need_weights, eps=1e-5,
):
    out_ref = out_refs[0]
    attn_ref = out_refs[1] if need_weights else None

    Lt, Nb, E = tgt_ref.shape
    S = mem_ref.shape[0]
    H, D = nhead, head_dim
    cdt = wq_ref.dtype                 # MXU compute dtype (bf16)

    vecs = vecs_ref[...]
    bq, bo, b2 = vecs[0:1], vecs[1:2], vecs[2:3]
    g2, be2 = vecs[3:4], vecs[4:5]
    g3, be3 = vecs[5:6], vecs[6:7]

    # Row-wise ops run on all Lt*Nb / S*Nb rows at once -> big MXU matmuls.
    x2 = tgt_ref[...].reshape(Lt * Nb, E).astype(jnp.float32)   # rows (l, b)
    m2 = mem_ref[...].reshape(S * Nb, E)                        # rows (s, b)

    scale = 1.0 / math.sqrt(D)
    q2 = (jnp.dot(x2.astype(cdt), wq_ref[...],
                  preferred_element_type=jnp.float32) + bq) * scale
    kv = jnp.dot(m2.astype(cdt), wkv_ref[...],
                 preferred_element_type=jnp.float32) + bkv_ref[...]
    k2, v2 = kv[:, :E], kv[:, E:]

    # (rows, E) -> (Nb*H, seq, D): single relayout instead of a per-batch unroll.
    def to_heads(t2, seq):
        t4 = t2.reshape(seq, Nb, H, D)
        return jnp.transpose(t4, (1, 2, 0, 3)).reshape(Nb * H, seq, D)

    qh = to_heads(q2, Lt).astype(cdt)
    kh = to_heads(k2, S).astype(cdt)
    vh = to_heads(v2, S).astype(cdt)

    # --- attention: one batched 3-D contraction over all Nb*H instances ---
    logits = jnp.einsum("gld,gsd->gls", qh, kh,
                        preferred_element_type=jnp.float32)     # (G, Lt, S)
    logits = logits - jnp.max(logits, axis=-1, keepdims=True)
    p = jnp.exp(logits)
    p = p * pl.reciprocal(jnp.sum(p, axis=-1, keepdims=True), approx=True)

    if need_weights:
        # head-averaged attention weights (PyTorch average_attn_weights=True)
        attn_ref[...] = (jnp.sum(p.reshape(Nb, H, Lt, S), axis=1)
                         * (1.0 / H)).astype(attn_ref.dtype)

    ctx = jnp.einsum("gls,gsd->gld", p.astype(cdt), vh,
                     preferred_element_type=jnp.float32)        # (G, Lt, D)
    ctx = jnp.transpose(ctx.reshape(Nb, H, Lt, D), (2, 0, 1, 3)).reshape(Lt * Nb, E)

    # --- out-proj + residual + LayerNorm (norm2) ---
    a_out = jnp.dot(ctx.astype(cdt), wo_ref[...],
                    preferred_element_type=jnp.float32) + bo
    y = x2 + a_out
    mu = jnp.mean(y, axis=-1, keepdims=True)
    var = jnp.mean((y - mu) * (y - mu), axis=-1, keepdims=True)
    yn = (y - mu) * jax.lax.rsqrt(var + eps) * g2 + be2

    # --- FFN (linear1 -> relu -> linear2) + residual + LayerNorm (norm3) ---
    h1 = jnp.dot(yn.astype(cdt), w1_ref[...],
                 preferred_element_type=jnp.float32) + b1_ref[...]
    h1 = jnp.maximum(h1, 0.0)
    f = jnp.dot(h1.astype(cdt), w2_ref[...],
                preferred_element_type=jnp.float32) + b2
    z = yn + f
    mu2 = jnp.mean(z, axis=-1, keepdims=True)
    var2 = jnp.mean((z - mu2) * (z - mu2), axis=-1, keepdims=True)
    zn = (z - mu2) * jax.lax.rsqrt(var2 + eps) * g3 + be3

    out_ref[...] = zn.reshape(Lt, Nb, E).astype(out_ref.dtype)


# ----------------------------------------------------------------------------
# One-time parameter prep: PyTorch (out,in) weights -> (in,out) in bf16,
# K/V fused, small vectors packed into one (7, E) f32 array.
# ----------------------------------------------------------------------------
def prepare_params(params, matmul_dtype=jnp.bfloat16):
    E = params["out_proj_weight"].shape[0]
    FF = params["w1"].shape[0]
    in_w = jnp.asarray(params["in_proj_weight"], jnp.float32)   # (3E, E)
    in_b = jnp.asarray(params["in_proj_bias"], jnp.float32)     # (3E,)
    f32 = lambda k: jnp.asarray(params[k], jnp.float32)
    return {
        "wq": in_w[:E].T.astype(matmul_dtype),                  # (E, E)
        "wkv": in_w[E:].T.astype(matmul_dtype),                 # (E, 2E) = [K | V]
        "wo": f32("out_proj_weight").T.astype(matmul_dtype),    # (E, E)
        "w1": f32("w1").T.astype(matmul_dtype),                 # (E, FF)
        "w2": f32("w2").T.astype(matmul_dtype),                 # (FF, E)
        "vecs": jnp.stack(
            [in_b[:E], f32("out_proj_bias"), f32("b2"),
             f32("norm2_gamma"), f32("norm2_beta"),
             f32("norm3_gamma"), f32("norm3_beta")], axis=0),   # (7, E) f32
        "bkv": in_b[E:].reshape(1, 2 * E),                      # (1, 2E) f32
        "b1": f32("b1").reshape(1, FF),                         # (1, FF) f32
    }


# ----------------------------------------------------------------------------
# Tile pickers.
# ----------------------------------------------------------------------------
def _pick_batch_block(N, L, target_rows=256):
    """Divisor of N (full batch or multiple of 8 -- sublane blocking rule for the
    (., Nb, E) blocks) giving ~target_rows rows/step; prefers leaving >= 2 grid
    steps so v7x's two TensorCores both get work."""
    cands = [d for d in range(1, N + 1) if N % d == 0 and (d == N or d % 8 == 0)]

    def score(d):
        rows = d * L
        return (rows >= target_rows, (N // d) >= 2, rows >= 128,
                -abs(rows - target_rows))

    return max(cands, key=score)


def _pick_l_block(L, Nb, E, FF, S, nhead, max_act_bytes=24 << 20):
    """Largest L-tile (full L or multiple of 8 -- attn-block sublane rule) whose
    f32 intermediates fit an activation budget (bounds VMEM for long sequences,
    esp. on v7x's 64 MiB).  K/V projections are recomputed per L-tile."""
    cands = [d for d in range(1, L + 1) if L % d == 0 and (d == L or d % 8 == 0)]

    def act_bytes(lt):
        rows = lt * Nb
        return 4 * (rows * 4 * E + S * Nb * 3 * E
                    + Nb * (nhead + 1) * lt * S + rows * FF)

    good = [d for d in cands if act_bytes(d) <= max_act_bytes]
    return max(good) if good else min(cands)


# ----------------------------------------------------------------------------
# Wrapper.  tgt (L, N, E), memory (S, N, E), seq-first (PyTorch layout).
# ----------------------------------------------------------------------------
def transformer_decoder_layer(tgt, memory, prepared, *, nhead, need_weights=True,
                              batch_block=None, l_block=None,
                              attn_dtype=jnp.float32):
    L, N, E = tgt.shape
    S = memory.shape[0]
    FF = prepared["w1"].shape[1]
    assert E % nhead == 0
    head_dim = E // nhead

    Nb = batch_block if batch_block is not None else _pick_batch_block(N, L)
    assert N % Nb == 0 and (Nb == N or Nb % 8 == 0)
    Lt = l_block if l_block is not None else _pick_l_block(L, Nb, E, FF, S, nhead)
    assert L % Lt == 0 and (Lt == L or Lt % 8 == 0)

    kernel = functools.partial(_decoder_layer_kernel, nhead=nhead,
                               head_dim=head_dim, need_weights=need_weights)

    def _const_spec(shape):
        idx = lambda b, l, _n=len(shape): (0,) * _n
        try:   # never-changing blocks: single pipeline buffer (halves weight VMEM)
            return pl.BlockSpec(shape, idx, pipeline_mode=pl.Buffered(1))
        except TypeError:
            return pl.BlockSpec(shape, idx)

    in_specs = [
        pl.BlockSpec((Lt, Nb, E), lambda b, l: (l, b, 0)),   # tgt (seq-first)
        pl.BlockSpec((S, Nb, E), lambda b, l: (0, b, 0)),    # memory (resident over l)
        _const_spec((E, E)),        # wq
        _const_spec((E, 2 * E)),    # wkv (fused K|V)
        _const_spec((E, E)),        # wo
        _const_spec((E, FF)),       # w1
        _const_spec((FF, E)),       # w2
        _const_spec((7, E)),        # packed bias / LayerNorm vectors
        _const_spec((1, 2 * E)),    # fused K|V bias
        _const_spec((1, FF)),       # b1
    ]
    out_spec_y = pl.BlockSpec((Lt, Nb, E), lambda b, l: (l, b, 0))
    out_shape_y = jax.ShapeDtypeStruct((L, N, E), tgt.dtype)
    if need_weights:
        # TODO(synk): pad S to a multiple of 128 for production shapes so the
        # attn stores are unmasked (lane-dense out_spec).
        out_specs = [out_spec_y, pl.BlockSpec((Nb, Lt, S), lambda b, l: (b, l, 0))]
        out_shape = (out_shape_y, jax.ShapeDtypeStruct((N, L, S), attn_dtype))
    else:
        out_specs = [out_spec_y]
        out_shape = (out_shape_y,)

    grid_spec = pltpu.PrefetchScalarGridSpec(
        num_scalar_prefetch=0,
        grid=(N // Nb, L // Lt),          # L innermost -> memory block stays put
        in_specs=in_specs,
        out_specs=out_specs,
    )

    # Generation-aware VMEM budget: raise the scoped limit only when needed and
    # never above physical VMEM (v7x = 64 MiB, v5e/v6e = 128 MiB).
    wbytes = sum(int(math.prod(prepared[k].shape)) * prepared[k].dtype.itemsize
                 for k in ("wq", "wkv", "wo", "w1", "w2", "vecs", "bkv", "b1"))
    rows_t, rows_m = Lt * Nb, S * Nb
    abytes = 4 * (rows_t * 4 * E + rows_m * 3 * E
                  + Nb * (nhead + 1) * Lt * S + rows_t * FF)
    iobytes = 2 * (tgt.dtype.itemsize * rows_t * E * 2
                   + memory.dtype.itemsize * rows_m * E
                   + (np.dtype(attn_dtype).itemsize * Nb * Lt * S if need_weights else 0))
    est = wbytes + abytes + iobytes
    cp_kwargs = dict(dimension_semantics=("parallel", "parallel"))
    if est > (28 << 20):
        try:
            phys = pltpu.get_tpu_info().vmem_capacity_bytes
        except Exception:
            phys = 64 << 20            # conservative fallback (v7x)
        cp_kwargs["vmem_limit_bytes"] = int(min(est + (4 << 20), (phys * 9) // 10))

    outs = pl.pallas_call(
        kernel,
        out_shape=out_shape,
        grid_spec=grid_spec,
        compiler_params=pltpu.CompilerParams(**cp_kwargs),
    )(tgt, memory,
      prepared["wq"], prepared["wkv"], prepared["wo"],
      prepared["w1"], prepared["w2"], prepared["vecs"],
      prepared["bkv"], prepared["b1"])
    if need_weights:
        return outs[0], outs[1]
    return outs[0], None


# ----------------------------------------------------------------------------
# Pure-JAX reference (PyTorch forward in eval mode) for validation.
# ----------------------------------------------------------------------------
def _reference(tgt_LNE, mem_SNE, params, *, nhead, eps=1e-5):
    L, N, E = tgt_LNE.shape
    S = mem_SNE.shape[0]
    D = E // nhead
    x = jnp.transpose(tgt_LNE, (1, 0, 2))   # (N, L, E)
    m = jnp.transpose(mem_SNE, (1, 0, 2))   # (N, S, E)

    in_w, in_b = params["in_proj_weight"], params["in_proj_bias"]
    q = x @ in_w[:E].T + in_b[:E]
    k = m @ in_w[E:2 * E].T + in_b[E:2 * E]
    v = m @ in_w[2 * E:].T + in_b[2 * E:]
    q = q.reshape(N, L, nhead, D).transpose(0, 2, 1, 3) / math.sqrt(D)
    k = k.reshape(N, S, nhead, D).transpose(0, 2, 1, 3)
    v = v.reshape(N, S, nhead, D).transpose(0, 2, 1, 3)
    s = jnp.einsum("nhld,nhsd->nhls", q, k)
    p = jax.nn.softmax(s, axis=-1)
    ctx = jnp.einsum("nhls,nhsd->nhld", p, v).transpose(0, 2, 1, 3).reshape(N, L, E)
    attn_w = p.mean(axis=1)   # (N, L, S)
    a_out = ctx @ params["out_proj_weight"].T + params["out_proj_bias"]

    def ln(z, g, b):
        mu = z.mean(-1, keepdims=True)
        var = ((z - mu) ** 2).mean(-1, keepdims=True)
        return (z - mu) * jax.lax.rsqrt(var + eps) * g + b

    y = ln(x + a_out, params["norm2_gamma"], params["norm2_beta"])
    f = jnp.maximum(y @ params["w1"].T + params["b1"], 0.0) @ params["w2"].T + params["b2"]
    out = ln(y + f, params["norm3_gamma"], params["norm3_beta"])
    return jnp.transpose(out, (1, 0, 2)), attn_w


# ----------------------------------------------------------------------------
# Deterministic parameter init + run
# ----------------------------------------------------------------------------
def make_params(key, d_model, nhead, dim_feedforward):
    ks = jax.random.split(key, 8)
    s = 1.0 / math.sqrt(d_model)
    return {
        "in_proj_weight": jax.random.normal(ks[0], (3 * d_model, d_model), jnp.float32) * s,
        "in_proj_bias": jax.random.normal(ks[1], (3 * d_model,), jnp.float32) * 0.02,
        "out_proj_weight": jax.random.normal(ks[2], (d_model, d_model), jnp.float32) * s,
        "out_proj_bias": jax.random.normal(ks[3], (d_model,), jnp.float32) * 0.02,
        "w1": jax.random.normal(ks[4], (dim_feedforward, d_model), jnp.float32) * s,
        "b1": jax.random.normal(ks[5], (dim_feedforward,), jnp.float32) * 0.02,
        "w2": jax.random.normal(ks[6], (d_model, dim_feedforward), jnp.float32)
        * (1.0 / math.sqrt(dim_feedforward)),
        "b2": jax.random.normal(ks[7], (d_model,), jnp.float32) * 0.02,
        "norm2_gamma": jnp.ones((d_model,), jnp.float32),
        "norm2_beta": jnp.zeros((d_model,), jnp.float32),
        "norm3_gamma": jnp.ones((d_model,), jnp.float32),
        "norm3_beta": jnp.zeros((d_model,), jnp.float32),
    }


if __name__ == "__main__":
    d_model, nhead, dim_feedforward = 32, 4, 64
    L, S, N = 8, 8, 16   # tgt seq, memory seq, batch (-> 2 batch-chunk grid steps)

    key = jax.random.PRNGKey(0)
    k_tgt, k_mem, k_par = jax.random.split(key, 3)
    tgt = jax.random.normal(k_tgt, (L, N, d_model), jnp.float32)
    memory = jax.random.normal(k_mem, (S, N, d_model), jnp.float32)
    params = make_params(k_par, d_model, nhead, dim_feedforward)
    prepared = prepare_params(params)   # one-time weight relayout + bf16 cast

    out, attn = transformer_decoder_layer(tgt, memory, prepared, nhead=nhead)
    out = jax.block_until_ready(out)
    attn = jax.block_until_ready(attn)

    ref_out, ref_attn = _reference(tgt, memory, params, nhead=nhead)
    # bf16 MXU operands + approx-reciprocal softmax -> relaxed tolerances.
    np.testing.assert_allclose(np.asarray(out), np.asarray(ref_out), atol=3e-2, rtol=3e-2)
    np.testing.assert_allclose(np.asarray(attn), np.asarray(ref_attn), atol=2e-2, rtol=2e-2)

    print("KERNEL_OK")
</pallas_src>

<mosaic_0001>
module attributes {stable_mosaic.version = 11 : i64} {
  func.func @_decoder_layer_kernel(%arg0: i32, %arg1: i32, %arg2: memref<8x8x32xf32, #tpu.memory_space<vmem>>, %arg3: memref<8x8x32xf32, #tpu.memory_space<vmem>>, %arg4: memref<32x32xbf16, #tpu.memory_space<vmem>>, %arg5: memref<32x64xbf16, #tpu.memory_space<vmem>>, %arg6: memref<32x32xbf16, #tpu.memory_space<vmem>>, %arg7: memref<32x64xbf16, #tpu.memory_space<vmem>>, %arg8: memref<64x32xbf16, #tpu.memory_space<vmem>>, %arg9: memref<7x32xf32, #tpu.memory_space<vmem>>, %arg10: memref<1x64xf32, #tpu.memory_space<vmem>>, %arg11: memref<1x64xf32, #tpu.memory_space<vmem>>, %arg12: memref<8x8x32xf32, #tpu.memory_space<vmem>>, %arg13: memref<8x8x8xf32, #tpu.memory_space<vmem>>) attributes {dimension_semantics = [#tpu.dimension_semantics<parallel>, #tpu.dimension_semantics<parallel>], iteration_bounds = array<i64: 2, 1>, scalar_prefetch = 0 : i64, scratch_operands = 0 : i64, tpu.core_type = #tpu.core_type<tc>, window_params = [{transform_indices = @transform_0, window_bounds = array<i64: 8, 8, 32>}, {transform_indices = @transform_1, window_bounds = array<i64: 8, 8, 32>}, {pipeline_mode = #tpu.pipeline_mode<synchronous>, transform_indices = @transform_2, window_bounds = array<i64: 32, 32>}, {pipeline_mode = #tpu.pipeline_mode<synchronous>, transform_indices = @transform_3, window_bounds = array<i64: 32, 64>}, {pipeline_mode = #tpu.pipeline_mode<synchronous>, transform_indices = @transform_4, window_bounds = array<i64: 32, 32>}, {pipeline_mode = #tpu.pipeline_mode<synchronous>, transform_indices = @transform_5, window_bounds = array<i64: 32, 64>}, {pipeline_mode = #tpu.pipeline_mode<synchronous>, transform_indices = @transform_6, window_bounds = array<i64: 64, 32>}, {pipeline_mode = #tpu.pipeline_mode<synchronous>, transform_indices = @transform_7, window_bounds = array<i64: 7, 32>}, {pipeline_mode = #tpu.pipeline_mode<synchronous>, transform_indices = @transform_8, window_bounds = array<i64: 1, 64>}, {pipeline_mode = #tpu.pipeline_mode<synchronous>, transform_indices = @transform_9, window_bounds = array<i64: 1, 64>}, {transform_indices = @transform_10, window_bounds = array<i64: 8, 8, 32>}, {transform_indices = @transform_11, window_bounds = array<i64: 8, 8, 8>}]} {
    %c0 = arith.constant 0 : index
    %c0_0 = arith.constant 0 : index
    %0 = vector.load %arg9[%c0, %c0_0] : memref<7x32xf32, #tpu.memory_space<vmem>>, vector<7x32xf32>
    %1 = vector.extract_strided_slice %0 {offsets = [0, 0], sizes = [1, 32], strides = [1, 1]} : vector<7x32xf32> to vector<1x32xf32>
    %2 = vector.extract_strided_slice %0 {offsets = [1, 0], sizes = [1, 32], strides = [1, 1]} : vector<7x32xf32> to vector<1x32xf32>
    %3 = vector.extract_strided_slice %0 {offsets = [2, 0], sizes = [1, 32], strides = [1, 1]} : vector<7x32xf32> to vector<1x32xf32>
    %4 = vector.extract_strided_slice %0 {offsets = [3, 0], sizes = [1, 32], strides = [1, 1]} : vector<7x32xf32> to vector<1x32xf32>
    %5 = vector.extract_strided_slice %0 {offsets = [4, 0], sizes = [1, 32], strides = [1, 1]} : vector<7x32xf32> to vector<1x32xf32>
    %6 = vector.extract_strided_slice %0 {offsets = [5, 0], sizes = [1, 32], strides = [1, 1]} : vector<7x32xf32> to vector<1x32xf32>
    %7 = vector.extract_strided_slice %0 {offsets = [6, 0], sizes = [1, 32], strides = [1, 1]} : vector<7x32xf32> to vector<1x32xf32>
    %c0_1 = arith.constant 0 : index
    %c0_2 = arith.constant 0 : index
    %c0_3 = arith.constant 0 : index
    %8 = vector.load %arg2[%c0_1, %c0_2, %c0_3] : memref<8x8x32xf32, #tpu.memory_space<vmem>>, vector<8x8x32xf32>
    %9 = vector.shape_cast %8 : vector<8x8x32xf32> to vector<64x32xf32>
    %c0_4 = arith.constant 0 : index
    %c0_5 = arith.constant 0 : index
    %c0_6 = arith.constant 0 : index
    %10 = vector.load %arg3[%c0_4, %c0_5, %c0_6] : memref<8x8x32xf32, #tpu.memory_space<vmem>>, vector<8x8x32xf32>
    %11 = vector.shape_cast %10 : vector<8x8x32xf32> to vector<64x32xf32>
    %12 = arith.truncf %9 : vector<64x32xf32> to vector<64x32xbf16>
    %c0_7 = arith.constant 0 : index
    %c0_8 = arith.constant 0 : index
    %13 = vector.load %arg4[%c0_7, %c0_8] : memref<32x32xbf16, #tpu.memory_space<vmem>>, vector<32x32xbf16>
    %cst = arith.constant dense<0.000000e+00> : vector<64x32xf32>
    %14 = tpu.matmul %12, %13, %cst {dimension_numbers = #tpu.dot_dimension_numbers<[1], [0], [0], [1], [0, 0, 1, 1], [], []>} : vector<64x32xbf16>, vector<32x32xbf16>, vector<64x32xf32> -> vector<64x32xf32>
    %15 = vector.broadcast %1 : vector<1x32xf32> to vector<64x32xf32>
    %16 = arith.addf %14, %15 : vector<64x32xf32>
    %cst_9 = arith.constant 0.353553385 : f32
    %17 = vector.broadcast %cst_9 : f32 to vector<64x32xf32>
    %18 = arith.mulf %16, %17 : vector<64x32xf32>
    %19 = arith.truncf %11 : vector<64x32xf32> to vector<64x32xbf16>
    %c0_10 = arith.constant 0 : index
    %c0_11 = arith.constant 0 : index
    %20 = vector.load %arg5[%c0_10, %c0_11] : memref<32x64xbf16, #tpu.memory_space<vmem>>, vector<32x64xbf16>
    %cst_12 = arith.constant dense<0.000000e+00> : vector<64x64xf32>
    %21 = tpu.matmul %19, %20, %cst_12 {dimension_numbers = #tpu.dot_dimension_numbers<[1], [0], [0], [1], [0, 0, 1, 1], [], []>} : vector<64x32xbf16>, vector<32x64xbf16>, vector<64x64xf32> -> vector<64x64xf32>
    %c0_13 = arith.constant 0 : index
    %c0_14 = arith.constant 0 : index
    %22 = vector.load %arg10[%c0_13, %c0_14] : memref<1x64xf32, #tpu.memory_space<vmem>>, vector<1x64xf32>
    %23 = vector.broadcast %22 : vector<1x64xf32> to vector<64x64xf32>
    %24 = arith.addf %21, %23 : vector<64x64xf32>
    %25 = vector.extract_strided_slice %24 {offsets = [0, 0], sizes = [64, 32], strides = [1, 1]} : vector<64x64xf32> to vector<64x32xf32>
    %26 = vector.extract_strided_slice %24 {offsets = [0, 32], sizes = [64, 32], strides = [1, 1]} : vector<64x64xf32> to vector<64x32xf32>
    %27 = vector.shape_cast %18 : vector<64x32xf32> to vector<8x8x4x8xf32>
    %28 = tpu.transpose %27, [1, 2, 0, 3] : vector<8x8x4x8xf32> -> vector<8x4x8x8xf32>
    %29 = vector.shape_cast %28 : vector<8x4x8x8xf32> to vector<32x8x8xf32>
    %30 = arith.truncf %29 : vector<32x8x8xf32> to vector<32x8x8xbf16>
    %31 = vector.shape_cast %25 : vector<64x32xf32> to vector<8x8x4x8xf32>
    %32 = tpu.transpose %31, [1, 2, 0, 3] : vector<8x8x4x8xf32> -> vector<8x4x8x8xf32>
    %33 = vector.shape_cast %32 : vector<8x4x8x8xf32> to vector<32x8x8xf32>
    %34 = arith.truncf %33 : vector<32x8x8xf32> to vector<32x8x8xbf16>
    %35 = vector.shape_cast %26 : vector<64x32xf32> to vector<8x8x4x8xf32>
    %36 = tpu.transpose %35, [1, 2, 0, 3] : vector<8x8x4x8xf32> -> vector<8x4x8x8xf32>
    %37 = vector.shape_cast %36 : vector<8x4x8x8xf32> to vector<32x8x8xf32>
    %38 = arith.truncf %37 : vector<32x8x8xf32> to vector<32x8x8xbf16>
    "tpu.trace_start"() <{level = 10 : i32, message = "gld,gsd->gls"}> : () -> ()
    %cst_15 = arith.constant dense<0.000000e+00> : vector<32x8x8xf32>
    %39 = tpu.matmul %30, %34, %cst_15 {dimension_numbers = #tpu.dot_dimension_numbers<[2], [2], [1], [1], [0, 0, 0, 1, 1, 1], [0], [0]>} : vector<32x8x8xbf16>, vector<32x8x8xbf16>, vector<32x8x8xf32> -> vector<32x8x8xf32>
    "tpu.trace_stop"() : () -> ()
    %cst_16 = arith.constant dense<0xFF800000> : vector<32x8xf32>
    %40 = vector.multi_reduction <maximumf>, %39, %cst_16 [2] : vector<32x8x8xf32> to vector<32x8xf32>
    %41 = vector.shape_cast %40 : vector<32x8xf32> to vector<32x8x1xf32>
    %42 = vector.broadcast %41 : vector<32x8x1xf32> to vector<32x8x8xf32>
    %43 = arith.subf %39, %42 : vector<32x8x8xf32>
    %44 = math.exp %43 : vector<32x8x8xf32>
    %cst_17 = arith.constant dense<0.000000e+00> : vector<32x8xf32>
    %45 = vector.multi_reduction <add>, %44, %cst_17 [2] : vector<32x8x8xf32> to vector<32x8xf32>
    %46 = vector.shape_cast %45 : vector<32x8xf32> to vector<32x8x1xf32>
    %47 = tpu.reciprocal %46 {approx = true} : vector<32x8x1xf32> -> vector<32x8x1xf32>
    %48 = vector.broadcast %47 : vector<32x8x1xf32> to vector<32x8x8xf32>
    %49 = arith.mulf %44, %48 : vector<32x8x8xf32>
    %50 = vector.shape_cast %49 : vector<32x8x8xf32> to vector<8x4x8x8xf32>
    %cst_18 = arith.constant dense<0.000000e+00> : vector<8x8x8xf32>
    %51 = vector.multi_reduction <add>, %50, %cst_18 [1] : vector<8x4x8x8xf32> to vector<8x8x8xf32>
    %cst_19 = arith.constant 2.500000e-01 : f32
    %52 = vector.broadcast %cst_19 : f32 to vector<8x8x8xf32>
    %53 = arith.mulf %51, %52 : vector<8x8x8xf32>
    %c0_20 = arith.constant 0 : index
    %c0_21 = arith.constant 0 : index
    %c0_22 = arith.constant 0 : index
    %54 = vector.load %arg13[%c0_20, %c0_21, %c0_22] : memref<8x8x8xf32, #tpu.memory_space<vmem>>, vector<8x8x8xf32>
    tpu.vector_store %arg13[%c0_20, %c0_21, %c0_22], %53 {strides = array<i32>} : memref<8x8x8xf32, #tpu.memory_space<vmem>>, vector<8x8x8xf32>,
    %55 = arith.truncf %49 : vector<32x8x8xf32> to vector<32x8x8xbf16>
    "tpu.trace_start"() <{level = 10 : i32, message = "gls,gsd->gld"}> : () -> ()
    %cst_23 = arith.constant dense<0.000000e+00> : vector<32x8x8xf32>
    %56 = tpu.matmul %55, %38, %cst_23 {dimension_numbers = #tpu.dot_dimension_numbers<[2], [1], [1], [2], [0, 0, 0, 1, 1, 2], [0], [0]>} : vector<32x8x8xbf16>, vector<32x8x8xbf16>, vector<32x8x8xf32> -> vector<32x8x8xf32>
    "tpu.trace_stop"() : () -> ()
    %57 = vector.shape_cast %56 : vector<32x8x8xf32> to vector<8x4x8x8xf32>
    %58 = tpu.transpose %57, [2, 0, 1, 3] : vector<8x4x8x8xf32> -> vector<8x8x4x8xf32>
    %59 = vector.shape_cast %58 : vector<8x8x4x8xf32> to vector<64x32xf32>
    %60 = arith.truncf %59 : vector<64x32xf32> to vector<64x32xbf16>
    %c0_24 = arith.constant 0 : index
    %c0_25 = arith.constant 0 : index
    %61 = vector.load %arg6[%c0_24, %c0_25] : memref<32x32xbf16, #tpu.memory_space<vmem>>, vector<32x32xbf16>
    %cst_26 = arith.constant dense<0.000000e+00> : vector<64x32xf32>
    %62 = tpu.matmul %60, %61, %cst_26 {dimension_numbers = #tpu.dot_dimension_numbers<[1], [0], [0], [1], [0, 0, 1, 1], [], []>} : vector<64x32xbf16>, vector<32x32xbf16>, vector<64x32xf32> -> vector<64x32xf32>
    %63 = vector.broadcast %2 : vector<1x32xf32> to vector<64x32xf32>
    %64 = arith.addf %62, %63 : vector<64x32xf32>
    %65 = arith.addf %9, %64 : vector<64x32xf32>
    %cst_27 = arith.constant dense<0.000000e+00> : vector<64xf32>
    %66 = vector.multi_reduction <add>, %65, %cst_27 [1] : vector<64x32xf32> to vector<64xf32>
    %67 = vector.shape_cast %66 : vector<64xf32> to vector<64x1xf32>
    %cst_28 = arith.constant 3.200000e+01 : f32
    %68 = vector.broadcast %cst_28 : f32 to vector<64x1xf32>
    %69 = arith.divf %67, %68 : vector<64x1xf32>
    %70 = vector.broadcast %69 : vector<64x1xf32> to vector<64x32xf32>
    %71 = arith.subf %65, %70 : vector<64x32xf32>
    %72 = vector.broadcast %69 : vector<64x1xf32> to vector<64x32xf32>
    %73 = arith.subf %65, %72 : vector<64x32xf32>
    %74 = arith.mulf %71, %73 : vector<64x32xf32>
    %cst_29 = arith.constant dense<0.000000e+00> : vector<64xf32>
    %75 = vector.multi_reduction <add>, %74, %cst_29 [1] : vector<64x32xf32> to vector<64xf32>
    %76 = vector.shape_cast %75 : vector<64xf32> to vector<64x1xf32>
    %cst_30 = arith.constant 3.200000e+01 : f32
    %77 = vector.broadcast %cst_30 : f32 to vector<64x1xf32>
    %78 = arith.divf %76, %77 : vector<64x1xf32>
    %79 = vector.broadcast %69 : vector<64x1xf32> to vector<64x32xf32>
    %80 = arith.subf %65, %79 : vector<64x32xf32>
    %cst_31 = arith.constant 9.99999974E-6 : f32
    %81 = vector.broadcast %cst_31 : f32 to vector<64x1xf32>
    %82 = arith.addf %78, %81 : vector<64x1xf32>
    %83 = math.rsqrt %82 : vector<64x1xf32>
    %84 = vector.broadcast %83 : vector<64x1xf32> to vector<64x32xf32>
    %85 = arith.mulf %80, %84 : vector<64x32xf32>
    %86 = vector.broadcast %4 : vector<1x32xf32> to vector<64x32xf32>
    %87 = arith.mulf %85, %86 : vector<64x32xf32>
    %88 = vector.broadcast %5 : vector<1x32xf32> to vector<64x32xf32>
    %89 = arith.addf %87, %88 : vector<64x32xf32>
    %90 = arith.truncf %89 : vector<64x32xf32> to vector<64x32xbf16>
    %c0_32 = arith.constant 0 : index
    %c0_33 = arith.constant 0 : index
    %91 = vector.load %arg7[%c0_32, %c0_33] : memref<32x64xbf16, #tpu.memory_space<vmem>>, vector<32x64xbf16>
    %cst_34 = arith.constant dense<0.000000e+00> : vector<64x64xf32>
    %92 = tpu.matmul %90, %91, %cst_34 {dimension_numbers = #tpu.dot_dimension_numbers<[1], [0], [0], [1], [0, 0, 1, 1], [], []>} : vector<64x32xbf16>, vector<32x64xbf16>, vector<64x64xf32> -> vector<64x64xf32>
    %c0_35 = arith.constant 0 : index
    %c0_36 = arith.constant 0 : index
    %93 = vector.load %arg11[%c0_35, %c0_36] : memref<1x64xf32, #tpu.memory_space<vmem>>, vector<1x64xf32>
    %94 = vector.broadcast %93 : vector<1x64xf32> to vector<64x64xf32>
    %95 = arith.addf %92, %94 : vector<64x64xf32>
    %cst_37 = arith.constant 0.000000e+00 : f32
    %96 = vector.broadcast %cst_37 : f32 to vector<64x64xf32>
    %97 = arith.maximumf %95, %96 : vector<64x64xf32>
    %98 = arith.truncf %97 : vector<64x64xf32> to vector<64x64xbf16>
    %c0_38 = arith.constant 0 : index
    %c0_39 = arith.constant 0 : index
    %99 = vector.load %arg8[%c0_38, %c0_39] : memref<64x32xbf16, #tpu.memory_space<vmem>>, vector<64x32xbf16>
    %cst_40 = arith.constant dense<0.000000e+00> : vector<64x32xf32>
    %100 = tpu.matmul %98, %99, %cst_40 {dimension_numbers = #tpu.dot_dimension_numbers<[1], [0], [0], [1], [0, 0, 1, 1], [], []>} : vector<64x64xbf16>, vector<64x32xbf16>, vector<64x32xf32> -> vector<64x32xf32>
    %101 = vector.broadcast %3 : vector<1x32xf32> to vector<64x32xf32>
    %102 = arith.addf %100, %101 : vector<64x32xf32>
    %103 = arith.addf %89, %102 : vector<64x32xf32>
    %cst_41 = arith.constant dense<0.000000e+00> : vector<64xf32>
    %104 = vector.multi_reduction <add>, %103, %cst_41 [1] : vector<64x32xf32> to vector<64xf32>
    %105 = vector.shape_cast %104 : vector<64xf32> to vector<64x1xf32>
    %cst_42 = arith.constant 3.200000e+01 : f32
    %106 = vector.broadcast %cst_42 : f32 to vector<64x1xf32>
    %107 = arith.divf %105, %106 : vector<64x1xf32>
    %108 = vector.broadcast %107 : vector<64x1xf32> to vector<64x32xf32>
    %109 = arith.subf %103, %108 : vector<64x32xf32>
    %110 = vector.broadcast %107 : vector<64x1xf32> to vector<64x32xf32>
    %111 = arith.subf %103, %110 : vector<64x32xf32>
    %112 = arith.mulf %109, %111 : vector<64x32xf32>
    %cst_43 = arith.constant dense<0.000000e+00> : vector<64xf32>
    %113 = vector.multi_reduction <add>, %112, %cst_43 [1] : vector<64x32xf32> to vector<64xf32>
    %114 = vector.shape_cast %113 : vector<64xf32> to vector<64x1xf32>
    %cst_44 = arith.constant 3.200000e+01 : f32
    %115 = vector.broadcast %cst_44 : f32 to vector<64x1xf32>
    %116 = arith.divf %114, %115 : vector<64x1xf32>
    %117 = vector.broadcast %107 : vector<64x1xf32> to vector<64x32xf32>
    %118 = arith.subf %103, %117 : vector<64x32xf32>
    %cst_45 = arith.constant 9.99999974E-6 : f32
    %119 = vector.broadcast %cst_45 : f32 to vector<64x1xf32>
    %120 = arith.addf %116, %119 : vector<64x1xf32>
    %121 = math.rsqrt %120 : vector<64x1xf32>
    %122 = vector.broadcast %121 : vector<64x1xf32> to vector<64x32xf32>
    %123 = arith.mulf %118, %122 : vector<64x32xf32>
    %124 = vector.broadcast %6 : vector<1x32xf32> to vector<64x32xf32>
    %125 = arith.mulf %123, %124 : vector<64x32xf32>
    %126 = vector.broadcast %7 : vector<1x32xf32> to vector<64x32xf32>
    %127 = arith.addf %125, %126 : vector<64x32xf32>
    %128 = vector.shape_cast %127 : vector<64x32xf32> to vector<8x8x32xf32>
    %c0_46 = arith.constant 0 : index
    %c0_47 = arith.constant 0 : index
    %c0_48 = arith.constant 0 : index
    %129 = vector.load %arg12[%c0_46, %c0_47, %c0_48] : memref<8x8x32xf32, #tpu.memory_space<vmem>>, vector<8x8x32xf32>
    tpu.vector_store %arg12[%c0_46, %c0_47, %c0_48], %128 {strides = array<i32>} : memref<8x8x32xf32, #tpu.memory_space<vmem>>, vector<8x8x32xf32>,
    return
  }
  func.func @transform_0(%arg0: i32, %arg1: i32) -> (i32, i32, i32) {
    %c0_i32 = arith.constant 0 : i32
    %c0_i32_0 = arith.constant 0 : i32
    return %arg1, %arg0, %c0_i32 : i32, i32, i32
  }
  func.func @transform_1(%arg0: i32, %arg1: i32) -> (i32, i32, i32) {
    %c0_i32 = arith.constant 0 : i32
    %c0_i32_0 = arith.constant 0 : i32
    %c0_i32_1 = arith.constant 0 : i32
    return %c0_i32, %arg0, %c0_i32_0 : i32, i32, i32
  }
  func.func @transform_2(%arg0: i32, %arg1: i32) -> (i32, i32) {
    %c0_i32 = arith.constant 0 : i32
    %c0_i32_0 = arith.constant 0 : i32
    %c0_i32_1 = arith.constant 0 : i32
    return %c0_i32, %c0_i32_0 : i32, i32
  }
  func.func @transform_3(%arg0: i32, %arg1: i32) -> (i32, i32) {
    %c0_i32 = arith.constant 0 : i32
    %c0_i32_0 = arith.constant 0 : i32
    %c0_i32_1 = arith.constant 0 : i32
    return %c0_i32, %c0_i32_0 : i32, i32
  }
  func.func @transform_4(%arg0: i32, %arg1: i32) -> (i32, i32) {
    %c0_i32 = arith.constant 0 : i32
    %c0_i32_0 = arith.constant 0 : i32
    %c0_i32_1 = arith.constant 0 : i32
    return %c0_i32, %c0_i32_0 : i32, i32
  }
  func.func @transform_5(%arg0: i32, %arg1: i32) -> (i32, i32) {
    %c0_i32 = arith.constant 0 : i32
    %c0_i32_0 = arith.constant 0 : i32
    %c0_i32_1 = arith.constant 0 : i32
    return %c0_i32, %c0_i32_0 : i32, i32
  }
  func.func @transform_6(%arg0: i32, %arg1: i32) -> (i32, i32) {
    %c0_i32 = arith.constant 0 : i32
    %c0_i32_0 = arith.constant 0 : i32
    %c0_i32_1 = arith.constant 0 : i32
    return %c0_i32, %c0_i32_0 : i32, i32
  }
  func.func @transform_7(%arg0: i32, %arg1: i32) -> (i32, i32) {
    %c0_i32 = arith.constant 0 : i32
    %c0_i32_0 = arith.constant 0 : i32
    %c0_i32_1 = arith.constant 0 : i32
    return %c0_i32, %c0_i32_0 : i32, i32
  }
  func.func @transform_8(%arg0: i32, %arg1: i32) -> (i32, i32) {
    %c0_i32 = arith.constant 0 : i32
    %c0_i32_0 = arith.constant 0 : i32
    %c0_i32_1 = arith.constant 0 : i32
    return %c0_i32, %c0_i32_0 : i32, i32
  }
  func.func @transform_9(%arg0: i32, %arg1: i32) -> (i32, i32) {
    %c0_i32 = arith.constant 0 : i32
    %c0_i32_0 = arith.constant 0 : i32
    %c0_i32_1 = arith.constant 0 : i32
    return %c0_i32, %c0_i32_0 : i32, i32
  }
  func.func @transform_10(%arg0: i32, %arg1: i32) -> (i32, i32, i32) {
    %c0_i32 = arith.constant 0 : i32
    %c0_i32_0 = arith.constant 0 : i32
    return %arg1, %arg0, %c0_i32 : i32, i32, i32
  }
  func.func @transform_11(%arg0: i32, %arg1: i32) -> (i32, i32, i32) {
    %c0_i32 = arith.constant 0 : i32
    %c0_i32_0 = arith.constant 0 : i32
    return %arg0, %arg1, %c0_i32 : i32, i32, i32
  }
}

</mosaic_0001>

<llo_original>
// kernel: tpu_custom_call.1
$region0: #{tpu_custom_call.1}
  #allocation0 [shape = 'u32[]', space=smem, size = 0x4, offset = 0x4, fixed_abs, tag = 'smem constant byte address 0x4 - core index']
  #allocation1 [shape = 'u32[144,128]{1,0:T(1,128)}', space=vmem, size = 0x12000, scoped, tag = 'internal scratch']
  %s0 = inlined_call_operand.hbm [shape: f32[8,16,32], index: 0, kind: input, shape index: {}]
  %s1 = inlined_call_operand.hbm [shape: f32[8,16,32], index: 1, kind: input, shape index: {}]
  %s2 = inlined_call_operand.vmem [shape: bf16[32,32], index: 2, kind: input, shape index: {}]
  %s3 = inlined_call_operand.vmem [shape: bf16[32,64], index: 3, kind: input, shape index: {}]
  %s4 = inlined_call_operand.vmem [shape: bf16[32,32], index: 4, kind: input, shape index: {}]
  %s5 = inlined_call_operand.hbm [shape: bf16[32,64], index: 5, kind: input, shape index: {}]
  %s6 = inlined_call_operand.vmem [shape: bf16[64,32], index: 6, kind: input, shape index: {}]
  %s7 = inlined_call_operand.vmem [shape: f32[7,32], index: 7, kind: input, shape index: {}]
  %s8 = inlined_call_operand.vmem [shape: f32[1,64], index: 8, kind: input, shape index: {}]
  %s9 = inlined_call_operand.vmem [shape: f32[1,64], index: 9, kind: input, shape index: {}]
  %s10 = inlined_call_operand.hbm [shape: f32[8,16,32], index: 10, kind: output, shape index: {0}]
  %s11 = inlined_call_operand.vmem [shape: f32[16,8,8], index: 11, kind: output, shape index: {1}]
  %12 = xla_tuple %s10, %s11
  %s13 = sld [smem:[#allocation0]]
  $region93: #{tpu_custom_call.1} parent=0
    _
  %s15 = ssub.s32 1, %s13
  %s16 = scalar_select 0, %s15, %s13
  $region1: #{tpu_custom_call.1} parent=0
    #allocation2 [shape = 'u8[65536]{0}', space=vmem, size = 0x10000, scoped, tag = 'input window, operand 0']
    #allocation3 [shape = 's32[2]{0}', space=sflag, size = 0x8, scoped, tag = 'scoped memory for tpu_custom_call.1']
    #allocation4 [shape = 's32[2]{0}', space=sflag, size = 0x8, scoped, tag = 'scoped memory for tpu_custom_call.1']
    #allocation5 [shape = 'u8[65536]{0}', space=vmem, size = 0x10000, scoped, tag = 'input window, operand 1']
    #allocation6 [shape = 's32[2]{0}', space=sflag, size = 0x8, scoped, tag = 'scoped memory for tpu_custom_call.1']
    #allocation7 [shape = 'u8[8192]{0}', space=vmem, size = 0x2000, scoped, tag = 'input window, operand 5, single buffered']
    #allocation8 [shape = 'u8[65536]{0}', space=vmem, size = 0x10000, scoped, tag = 'output window, operand 0']
    %17 = vsyncpa [#allocation3], 0
    %s18 = scalar_lea.sflag [#allocation3], 1
    %19 = vsyncpa %s18, 0
    %20 = vsyncpa [#allocation6], 0
    %s21 = scalar_lea.sflag [#allocation6], 1
    %22 = vsyncpa %s21, 0
    %23 = vsyncpa [#allocation4], 0
    %s24 = scalar_lea.sflag [#allocation4], 1
    %25 = vsyncpa %s24, 0
    loop: start=0, step=1, limit=4
    $region2: #{tpu_custom_call.1} parent=1 // loop_pre_header
      _
    $region3: #{tpu_custom_call.1} parent=1 // loop_header
      %s27 = sphi 0, %s31
      %p28 = scmp.ge.s32.totalorder %s27, 4
      %s34 = sphi 0, %s46
      %s35 = sphi 0, %s42
      %s36 = sphi 0, %s34
      %s37 = sphi 0, %s35
      %s38 = sphi 0, %s36
      %s39 = sphi 0, %s37
      %s51 = sphi 0, %s53
      %s54 = sphi 0, %s51
      %s55 = sphi 0, %s54
      %s71 = sphi 0, %s55
      %s77 = sphi 0, %s79
      %s80 = sphi 0, %s77
      %s81 = sphi 0, %s80
      %s97 = sphi 0, %s81
      %s101 = sphi 0, %s101
      %s103 = sphi 0, %s101
      %s104 = sphi 0, %s103
      %s118 = sphi 0, %s104
      %s122 = sphi 0, %s122
      %s124 = sphi 0, %s122
      %s125 = sphi 0, %s124
      %s139 = sphi 0, %s125
      %s143 = sphi 0, %s143
      %s145 = sphi 0, %s143
      %s146 = sphi 0, %s145
      %s160 = sphi 0, %s146
      %s164 = sphi 0, %s164
      %s166 = sphi 0, %s164
      %s167 = sphi 0, %s166
      %s181 = sphi 0, %s167
      %s185 = sphi 0, %s185
      %s187 = sphi 0, %s185
      %s188 = sphi 0, %s187
      %s202 = sphi 0, %s188
      %s206 = sphi 0, %s206
      %s208 = sphi 0, %s206
      %s209 = sphi 0, %s208
      %s223 = sphi 0, %s209
      %s227 = sphi 0, %s227
      %s229 = sphi 0, %s227
      %s230 = sphi 0, %s229
      %s244 = sphi 0, %s230
      %s248 = sphi 0, %s248
      %s250 = sphi 0, %s248
      %s251 = sphi 0, %s250
      %s265 = sphi 0, %s251
      %s273 = sphi 0, %s275
      %s276 = sphi 0, %s273
      %s277 = sphi 0, %s276
      %s293 = sphi 0, %s277
      %s301 = sphi 0, %s303
      %s304 = sphi 0, %s301
      %s305 = sphi 0, %s304
      %s321 = sphi 0, %s305
    $region4: #{tpu_custom_call.1} parent=1 // loop_header_branch
      %30 = sbr.rel (%p28) target = $region8
    $region5: #{tpu_custom_call.1} parent=1 // loop_body
      %s32 = ssub.s32 %s27, 1
      %s33 = ssub.s32 %s27, 2
      %s40 = sadd.s32 1, %s35
      %p41 = scmp.ge.s32.totalorder %s40, 1
      %s42 = scalar_select %p41, 0, %s40
      %s43 = sadd.s32 1, %s34
      %s44 = scalar_select %p41, %s43, %s34
      %p45 = scmp.ge.s32.totalorder %s44, 2
      %s46 = scalar_select %p45, 0, %s44
      %s47 = ssub.s32 %s35, %s42
      %s48 = ssub.s32 %s34, %s46
      %s49 = sor.u32 %s47, %s48
      %p50 = scmp.eq.s32.totalorder %s49, 0
      %s52 = sadd.s32 %s51, 1
      %s53 = scalar_select %p50, %s51, %s52
      %p56 = pneg %p50
      %p57 = scmp.eq.s32.totalorder %s27, 1
      %p58 = por %p56, %p57
      %p59 = scmp.ne.s32.totalorder %s51, %s54
      %p60 = scmp.eq.s32.totalorder %s27, 0
      %p61 = por %p59, %p60
      %p62 = scmp.ne.s32.totalorder %s51, %s54
      %p63 = scmp.eq.s32.totalorder %s32, 1
      %p64 = por %p62, %p63
      %p65 = scmp.ne.s32.totalorder %s54, %s55
      %p66 = scmp.eq.s32.totalorder %s32, 0
      %p67 = por %p65, %p66
      %p68 = scmp.ne.s32.totalorder %s54, %s55
      %p69 = scmp.eq.s32.totalorder %s33, 1
      %p70 = por %p68, %p69
      %p72 = scmp.ne.s32.totalorder %s55, %s71
      %p73 = scmp.eq.s32.totalorder %s33, 0
      %p74 = por %p72, %p73
      %s75 = ssub.s32 %s34, %s46
      %p76 = scmp.eq.s32.totalorder %s75, 0
      %s78 = sadd.s32 %s77, 1
      %s79 = scalar_select %p76, %s77, %s78
      %p82 = pneg %p76
      %p83 = scmp.eq.s32.totalorder %s27, 1
      %p84 = por %p82, %p83
      %p85 = scmp.ne.s32.totalorder %s77, %s80
      %p86 = scmp.eq.s32.totalorder %s27, 0
      %p87 = por %p85, %p86
      %p88 = scmp.ne.s32.totalorder %s77, %s80
      %p89 = scmp.eq.s32.totalorder %s32, 1
      %p90 = por %p88, %p89
      %p91 = scmp.ne.s32.totalorder %s80, %s81
      %p92 = scmp.eq.s32.totalorder %s32, 0
      %p93 = por %p91, %p92
      %p94 = scmp.ne.s32.totalorder %s80, %s81
      %p95 = scmp.eq.s32.totalorder %s33, 1
      %p96 = por %p94, %p95
      %p98 = scmp.ne.s32.totalorder %s81, %s97
      %p99 = scmp.eq.s32.totalorder %s33, 0
      %p100 = por %p98, %p99
      %s102 = sadd.s32 %s101, 1
      %p105 = scmp.eq.s32.totalorder %s27, 1
      %p106 = scmp.ne.s32.totalorder %s101, %s103
      %p107 = scmp.eq.s32.totalorder %s27, 0
      %p108 = por %p106, %p107
      %p109 = scmp.ne.s32.totalorder %s101, %s103
      %p110 = scmp.eq.s32.totalorder %s32, 1
      %p111 = por %p109, %p110
      %p112 = scmp.ne.s32.totalorder %s103, %s104
      %p113 = scmp.eq.s32.totalorder %s32, 0
      %p114 = por %p112, %p113
      %p115 = scmp.ne.s32.totalorder %s103, %s104
      %p116 = scmp.eq.s32.totalorder %s33, 1
      %p117 = por %p115, %p116
      %p119 = scmp.ne.s32.totalorder %s104, %s118
      %p120 = scmp.eq.s32.totalorder %s33, 0
      %p121 = por %p119, %p120
      %s123 = sadd.s32 %s122, 1
      %p126 = scmp.eq.s32.totalorder %s27, 1
      %p127 = scmp.ne.s32.totalorder %s122, %s124
      %p128 = scmp.eq.s32.totalorder %s27, 0
      %p129 = por %p127, %p128
      %p130 = scmp.ne.s32.totalorder %s122, %s124
      %p131 = scmp.eq.s32.totalorder %s32, 1
      %p132 = por %p130, %p131
      %p133 = scmp.ne.s32.totalorder %s124, %s125
      %p134 = scmp.eq.s32.totalorder %s32, 0
      %p135 = por %p133, %p134
      %p136 = scmp.ne.s32.totalorder %s124, %s125
      %p137 = scmp.eq.s32.totalorder %s33, 1
      %p138 = por %p136, %p137
      %p140 = scmp.ne.s32.totalorder %s125, %s139
      %p141 = scmp.eq.s32.totalorder %s33, 0
      %p142 = por %p140, %p141
      %s144 = sadd.s32 %s143, 1
      %p147 = scmp.eq.s32.totalorder %s27, 1
      %p148 = scmp.ne.s32.totalorder %s143, %s145
      %p149 = scmp.eq.s32.totalorder %s27, 0
      %p150 = por %p148, %p149
      %p151 = scmp.ne.s32.totalorder %s143, %s145
      %p152 = scmp.eq.s32.totalorder %s32, 1
      %p153 = por %p151, %p152
      %p154 = scmp.ne.s32.totalorder %s145, %s146
      %p155 = scmp.eq.s32.totalorder %s32, 0
      %p156 = por %p154, %p155
      %p157 = scmp.ne.s32.totalorder %s145, %s146
      %p158 = scmp.eq.s32.totalorder %s33, 1
      %p159 = por %p157, %p158
      %p161 = scmp.ne.s32.totalorder %s146, %s160
      %p162 = scmp.eq.s32.totalorder %s33, 0
      %p163 = por %p161, %p162
      %s165 = sadd.s32 %s164, 1
      %p168 = scmp.eq.s32.totalorder %s27, 1
      %p169 = scmp.ne.s32.totalorder %s164, %s166
      %p170 = scmp.eq.s32.totalorder %s27, 0
      %p171 = por %p169, %p170
      %p172 = scmp.ne.s32.totalorder %s164, %s166
      %p173 = scmp.eq.s32.totalorder %s32, 1
      %p174 = por %p172, %p173
      %p175 = scmp.ne.s32.totalorder %s166, %s167
      %p176 = scmp.eq.s32.totalorder %s32, 0
      %p177 = por %p175, %p176
      %p178 = scmp.ne.s32.totalorder %s166, %s167
      %p179 = scmp.eq.s32.totalorder %s33, 1
      %p180 = por %p178, %p179
      %p182 = scmp.ne.s32.totalorder %s167, %s181
      %p183 = scmp.eq.s32.totalorder %s33, 0
      %p184 = por %p182, %p183
      %s186 = sadd.s32 %s185, 1
      %p189 = scmp.eq.s32.totalorder %s27, 1
      %p190 = scmp.ne.s32.totalorder %s185, %s187
      %p191 = scmp.eq.s32.totalorder %s27, 0
      %p192 = por %p190, %p191
      %p193 = scmp.ne.s32.totalorder %s185, %s187
      %p194 = scmp.eq.s32.totalorder %s32, 1
      %p195 = por %p193, %p194
      %p196 = scmp.ne.s32.totalorder %s187, %s188
      %p197 = scmp.eq.s32.totalorder %s32, 0
      %p198 = por %p196, %p197
      %p199 = scmp.ne.s32.totalorder %s187, %s188
      %p200 = scmp.eq.s32.totalorder %s33, 1
      %p201 = por %p199, %p200
      %p203 = scmp.ne.s32.totalorder %s188, %s202
      %p204 = scmp.eq.s32.totalorder %s33, 0
      %p205 = por %p203, %p204
      %s207 = sadd.s32 %s206, 1
      %p210 = scmp.eq.s32.totalorder %s27, 1
      %p211 = scmp.ne.s32.totalorder %s206, %s208
      %p212 = scmp.eq.s32.totalorder %s27, 0
      %p213 = por %p211, %p212
      %p214 = scmp.ne.s32.totalorder %s206, %s208
      %p215 = scmp.eq.s32.totalorder %s32, 1
      %p216 = por %p214, %p215
      %p217 = scmp.ne.s32.totalorder %s208, %s209
      %p218 = scmp.eq.s32.totalorder %s32, 0
      %p219 = por %p217, %p218
      %p220 = scmp.ne.s32.totalorder %s208, %s209
      %p221 = scmp.eq.s32.totalorder %s33, 1
      %p222 = por %p220, %p221
      %p224 = scmp.ne.s32.totalorder %s209, %s223
      %p225 = scmp.eq.s32.totalorder %s33, 0
      %p226 = por %p224, %p225
      %s228 = sadd.s32 %s227, 1
      %p231 = scmp.eq.s32.totalorder %s27, 1
      %p232 = scmp.ne.s32.totalorder %s227, %s229
      %p233 = scmp.eq.s32.totalorder %s27, 0
      %p234 = por %p232, %p233
      %p235 = scmp.ne.s32.totalorder %s227, %s229
      %p236 = scmp.eq.s32.totalorder %s32, 1
      %p237 = por %p235, %p236
      %p238 = scmp.ne.s32.totalorder %s229, %s230
      %p239 = scmp.eq.s32.totalorder %s32, 0
      %p240 = por %p238, %p239
      %p241 = scmp.ne.s32.totalorder %s229, %s230
      %p242 = scmp.eq.s32.totalorder %s33, 1
      %p243 = por %p241, %p242
      %p245 = scmp.ne.s32.totalorder %s230, %s244
      %p246 = scmp.eq.s32.totalorder %s33, 0
      %p247 = por %p245, %p246
      %s249 = sadd.s32 %s248, 1
      %p252 = scmp.eq.s32.totalorder %s27, 1
      %p253 = scmp.ne.s32.totalorder %s248, %s250
      %p254 = scmp.eq.s32.totalorder %s27, 0
      %p255 = por %p253, %p254
      %p256 = scmp.ne.s32.totalorder %s248, %s250
      %p257 = scmp.eq.s32.totalorder %s32, 1
      %p258 = por %p256, %p257
      %p259 = scmp.ne.s32.totalorder %s250, %s251
      %p260 = scmp.eq.s32.totalorder %s32, 0
      %p261 = por %p259, %p260
      %p262 = scmp.ne.s32.totalorder %s250, %s251
      %p263 = scmp.eq.s32.totalorder %s33, 1
      %p264 = por %p262, %p263
      %p266 = scmp.ne.s32.totalorder %s251, %s265
      %p267 = scmp.eq.s32.totalorder %s33, 0
      %p268 = por %p266, %p267
      %s269 = ssub.s32 %s35, %s42
      %s270 = ssub.s32 %s34, %s46
      %s271 = sor.u32 %s269, %s270
      %p272 = scmp.eq.s32.totalorder %s271, 0
      %s274 = sadd.s32 %s273, 1
      %s275 = scalar_select %p272, %s273, %s274
      %p278 = pneg %p272
      %p279 = scmp.eq.s32.totalorder %s27, 1
      %p280 = por %p278, %p279
      %p281 = scmp.ne.s32.totalorder %s273, %s276
      %p282 = scmp.eq.s32.totalorder %s27, 0
      %p283 = por %p281, %p282
      %p284 = scmp.ne.s32.totalorder %s273, %s276
      %p285 = scmp.eq.s32.totalorder %s32, 1
      %p286 = por %p284, %p285
      %p287 = scmp.ne.s32.totalorder %s276, %s277
      %p288 = scmp.eq.s32.totalorder %s32, 0
      %p289 = por %p287, %p288
      %p290 = scmp.ne.s32.totalorder %s276, %s277
      %p291 = scmp.eq.s32.totalorder %s33, 1
      %p292 = por %p290, %p291
      %p294 = scmp.ne.s32.totalorder %s277, %s293
      %p295 = scmp.eq.s32.totalorder %s33, 0
      %p296 = por %p294, %p295
      %s297 = ssub.s32 %s34, %s46
      %s298 = ssub.s32 %s35, %s42
      %s299 = sor.u32 %s297, %s298
      %p300 = scmp.eq.s32.totalorder %s299, 0
      %s302 = sadd.s32 %s301, 1
      %s303 = scalar_select %p300, %s301, %s302
      %p306 = pneg %p300
      %p307 = scmp.eq.s32.totalorder %s27, 1
      %p308 = por %p306, %p307
      %p309 = scmp.ne.s32.totalorder %s301, %s304
      %p310 = scmp.eq.s32.totalorder %s27, 0
      %p311 = por %p309, %p310
      %p312 = scmp.ne.s32.totalorder %s301, %s304
      %p313 = scmp.eq.s32.totalorder %s32, 1
      %p314 = por %p312, %p313
      %p315 = scmp.ne.s32.totalorder %s304, %s305
      %p316 = scmp.eq.s32.totalorder %s32, 0
      %p317 = por %p315, %p316
      %p318 = scmp.ne.s32.totalorder %s304, %s305
      %p319 = scmp.eq.s32.totalorder %s33, 1
      %p320 = por %p318, %p319
      %p322 = scmp.ne.s32.totalorder %s305, %s321
      %p323 = scmp.eq.s32.totalorder %s33, 0
      %p324 = por %p322, %p323
      %p325 = scmp.le.s32.totalorder 1, %s27
      %p326 = scmp.lt.s32.totalorder %s27, 3
      %p327 = pnand %p325, %p326
      %p328 = pneg %p327
      // Predicated region
      $region9: #{tpu_custom_call.1} parent=5 // pred_check
        _
      $region10: #{tpu_custom_call.1} parent=5 // pred_check_branch
        %330 = sbr.rel (%p327) target = $region12
      $region11: #{tpu_custom_call.1} parent=5 // pred_region
        %s331 = ssub.s32 %s27, 1
        // Predicated region
        $region13: #{tpu_custom_call.1} parent=11 // pred_check
          %p332 = pneg %p114
        $region14: #{tpu_custom_call.1} parent=11 // pred_check_branch
          %334 = sbr.rel (%p332) target = $region16
        $region15: #{tpu_custom_call.1} parent=11 // pred_region
          _
        $region16: #{tpu_custom_call.1} parent=11 // pred_fallthru
          _
        // Predicated region
        $region17: #{tpu_custom_call.1} parent=11 // pred_check
          %p335 = pneg %p135
        $region18: #{tpu_custom_call.1} parent=11 // pred_check_branch
          %337 = sbr.rel (%p335) target = $region20
        $region19: #{tpu_custom_call.1} parent=11 // pred_region
          _
        $region20: #{tpu_custom_call.1} parent=11 // pred_fallthru
          _
        // Predicated region
        $region21: #{tpu_custom_call.1} parent=11 // pred_check
          %p338 = pneg %p156
        $region22: #{tpu_custom_call.1} parent=11 // pred_check_branch
          %340 = sbr.rel (%p338) target = $region24
        $region23: #{tpu_custom_call.1} parent=11 // pred_region
          _
        $region24: #{tpu_custom_call.1} parent=11 // pred_fallthru
          _
        // Predicated region
        $region25: #{tpu_custom_call.1} parent=11 // pred_check
          %p341 = pneg %p177
        $region26: #{tpu_custom_call.1} parent=11 // pred_check_branch
          %343 = sbr.rel (%p341) target = $region28
        $region27: #{tpu_custom_call.1} parent=11 // pred_region
          %s345 = ssub.s32 256, 256
          %346 = vsyncadd [#allocation6], %s345
          %s347 = sshll.u32 [#allocation7], 4
          %s348 = int_to_ptr.vmem [resolvable:$true] %s347
          %353 = dma.hbm_to_vmem [thread:$0]  %s5, 256, %s348, [#allocation6], 64, 64, 4
        $region28: #{tpu_custom_call.1} parent=11 // pred_fallthru
          _
        // Predicated region
        $region29: #{tpu_custom_call.1} parent=11 // pred_check
          %p354 = pneg %p198
        $region30: #{tpu_custom_call.1} parent=11 // pred_check_branch
          %356 = sbr.rel (%p354) target = $region32
        $region31: #{tpu_custom_call.1} parent=11 // pred_region
          _
        $region32: #{tpu_custom_call.1} parent=11 // pred_fallthru
          _
        // Predicated region
        $region33: #{tpu_custom_call.1} parent=11 // pred_check
          %p357 = pneg %p219
        $region34: #{tpu_custom_call.1} parent=11 // pred_check_branch
          %359 = sbr.rel (%p357) target = $region36
        $region35: #{tpu_custom_call.1} parent=11 // pred_region
          _
        $region36: #{tpu_custom_call.1} parent=11 // pred_fallthru
          _
        // Predicated region
        $region37: #{tpu_custom_call.1} parent=11 // pred_check
          %p360 = pneg %p240
        $region38: #{tpu_custom_call.1} parent=11 // pred_check_branch
          %362 = sbr.rel (%p360) target = $region40
        $region39: #{tpu_custom_call.1} parent=11 // pred_region
          _
        $region40: #{tpu_custom_call.1} parent=11 // pred_fallthru
          _
        // Predicated region
        $region41: #{tpu_custom_call.1} parent=11 // pred_check
          %p363 = pneg %p261
        $region42: #{tpu_custom_call.1} parent=11 // pred_check_branch
          %365 = sbr.rel (%p363) target = $region44
        $region43: #{tpu_custom_call.1} parent=11 // pred_region
          _
        $region44: #{tpu_custom_call.1} parent=11 // pred_fallthru
          _
      $region12: #{tpu_custom_call.1} parent=5 // pred_fallthru
        _
      %p366 = scmp.lt.s32.totalorder %s27, 2
      // Predicated region
      $region45: #{tpu_custom_call.1} parent=5 // pred_check
        %p367 = pneg %p366
      $region46: #{tpu_custom_call.1} parent=5 // pred_check_branch
        %369 = sbr.rel (%p367) target = $region48
      $region47: #{tpu_custom_call.1} parent=5 // pred_region
        // Predicated region
        $region49: #{tpu_custom_call.1} parent=47 // pred_check
          %p370 = pneg %p61
        $region50: #{tpu_custom_call.1} parent=47 // pred_check_branch
          %372 = sbr.rel (%p370) target = $region52
        $region51: #{tpu_custom_call.1} parent=47 // pred_region
          %s373 = sand.u32 %s51, 1
          %s374 = scalar_lea.sflag [#allocation3], %s373
          %s375 = sand.u32 %s51, 1
          %s376 = smul.addr %s375, 64
          %s377 = scalar_lea.vmem [#allocation2], %s376
          %s378 = smul.u32 8, %s35
          %s380 = ssub.s32 1024, 1024
          %381 = vsyncadd %s374, %s380
          %s382 = smul.addr %s378, 2
          %s383 = sadd.s32 %s34, %s382
          %s384 = smul.addr %s383, 128
          %s385 = scalar_lea.hbm %s0, %s384
          %s386 = sshll.u32 %s377, 4
          %s387 = int_to_ptr.vmem [resolvable:$true] %s386
          %392 = dma.hbm_to_vmem [thread:$0]  %s385, 1024, %s387, %s374, 256, 128, 8
        $region52: #{tpu_custom_call.1} parent=47 // pred_fallthru
          _
        // Predicated region
        $region53: #{tpu_custom_call.1} parent=47 // pred_check
          %p393 = pneg %p87
        $region54: #{tpu_custom_call.1} parent=47 // pred_check_branch
          %395 = sbr.rel (%p393) target = $region56
        $region55: #{tpu_custom_call.1} parent=47 // pred_region
          %s396 = sand.u32 %s27, 1
          %s397 = scalar_lea.sflag [#allocation6], %s396
          %s398 = sand.u32 %s77, 1
          %s399 = smul.addr %s398, 64
          %s400 = scalar_lea.vmem [#allocation5], %s399
          %s402 = ssub.s32 1024, 1024
          %403 = vsyncadd %s397, %s402
          %s404 = smul.addr %s34, 128
          %s405 = scalar_lea.hbm %s1, %s404
          %s406 = sshll.u32 %s400, 4
          %s407 = int_to_ptr.vmem [resolvable:$true] %s406
          %412 = dma.hbm_to_vmem [thread:$0]  %s405, 1024, %s407, %s397, 256, 128, 8
        $region56: #{tpu_custom_call.1} parent=47 // pred_fallthru
          _
      $region48: #{tpu_custom_call.1} parent=5 // pred_fallthru
        _
      %p413 = scmp.le.s32.totalorder 1, %s27
      %p414 = scmp.lt.s32.totalorder %s27, 3
      %p415 = pnand %p413, %p414
      %p416 = pneg %p415
      // Predicated region
      $region57: #{tpu_custom_call.1} parent=5 // pred_check
        _
      $region58: #{tpu_custom_call.1} parent=5 // pred_check_branch
        %418 = sbr.rel (%p415) target = $region60
      $region59: #{tpu_custom_call.1} parent=5 // pred_region
        %s419 = ssub.s32 %s27, 1
        %s420 = sand.u32 %s54, 1
        %s421 = scalar_lea.sflag [#allocation3], %s420
        %s422 = sand.u32 %s54, 1
        %s423 = smul.addr %s422, 64
        %s424 = scalar_lea.vmem [#allocation2], %s423
        // Predicated region
        $region61: #{tpu_custom_call.1} parent=59 // pred_check
          %p425 = pneg %p67
        $region62: #{tpu_custom_call.1} parent=59 // pred_check_branch
          %427 = sbr.rel (%p425) target = $region64
        $region63: #{tpu_custom_call.1} parent=59 // pred_region
          %428 = dma.done %s421, 1024
        $region64: #{tpu_custom_call.1} parent=59 // pred_fallthru
          _
        %s429 = sand.u32 %s32, 1
        %s430 = scalar_lea.sflag [#allocation6], %s429
        %s431 = sand.u32 %s80, 1
        %s432 = smul.addr %s431, 64
        %s433 = scalar_lea.vmem [#allocation5], %s432
        // Predicated region
        $region65: #{tpu_custom_call.1} parent=59 // pred_check
          %p434 = pneg %p93
        $region66: #{tpu_custom_call.1} parent=59 // pred_check_branch
          %436 = sbr.rel (%p434) target = $region68
        $region67: #{tpu_custom_call.1} parent=59 // pred_region
          %437 = dma.done %s430, 1024
        $region68: #{tpu_custom_call.1} parent=59 // pred_fallthru
          _
        // Predicated region
        $region69: #{tpu_custom_call.1} parent=59 // pred_check
          %p438 = pneg %p177
        $region70: #{tpu_custom_call.1} parent=59 // pred_check_branch
          %440 = sbr.rel (%p438) target = $region72
        $region71: #{tpu_custom_call.1} parent=59 // pred_region
          %441 = dma.done [#allocation6], 256
        $region72: #{tpu_custom_call.1} parent=59 // pred_fallthru
          _
        %s442 = sand.u32 %s54, 1
        %s443 = scalar_lea.sflag [#allocation3], %s442
        %s444 = sand.u32 %s54, 1
        %s445 = smul.addr %s444, 64
        %s446 = scalar_lea.vmem [#allocation2], %s445
        %p447 = pneg %p67
        %p448 = pneg %p64
        %s449 = sand.u32 %s32, 1
        %s450 = scalar_lea.sflag [#allocation6], %s449
        %s451 = sand.u32 %s80, 1
        %s452 = smul.addr %s451, 64
        %s453 = scalar_lea.vmem [#allocation5], %s452
        %p454 = pneg %p93
        %p455 = pneg %p90
        %p456 = pneg %p114
        %p457 = pneg %p111
        %p458 = pneg %p135
        %p459 = pneg %p132
        %p460 = pneg %p156
        %p461 = pneg %p153
        %p462 = pneg %p177
        %p463 = pneg %p174
        %p464 = pneg %p198
        %p465 = pneg %p195
        %p466 = pneg %p219
        %p467 = pneg %p216
        %p468 = pneg %p240
        %p469 = pneg %p237
        %p470 = pneg %p261
        %p471 = pneg %p258
        %p472 = pneg %p289
        %p473 = pneg %p286
        %s474 = sand.u32 %s276, 1
        %s475 = scalar_lea.sflag [#allocation4], %s474
        %s476 = sand.u32 %s276, 1
        %s477 = smul.addr %s476, 64
        %s478 = scalar_lea.vmem [#allocation8], %s477
        %p479 = pneg %p317
        %p480 = pneg %p314
        %s481 = smul.u32 8, %s36
        %p482 = scmp.lt.s32.totalorder %s481, 15
        %s483 = scalar_select %p482, %s481, 15
        %p484 = scmp.lt.s32.totalorder %s37, 0
        %s485 = scalar_select %p484, %s37, 0
        %s486 = sadd.s32 %s485, %s483
        %s487 = smul.addr %s486, 8
        %s488 = scalar_lea.vmem %s11, %s487
        %s489 = smul.u32 8, %s37
        %s490 = smul.u32 8, %s37
        %s491 = smul.u32 8, %s36
        %p492 = scmp.lt.s32.totalorder %s491, 15
        %s493 = scalar_select %p492, %s491, 15
        %p494 = scmp.lt.s32.totalorder %s37, 0
        %s495 = scalar_select %p494, %s37, 0
        %s496 = sadd.s32 %s495, %s493
        %s497 = smul.addr %s496, 8
        %s498 = scalar_lea.vmem %s11, %s497
        %s499 = smul.u32 8, %s36
        %v501 = vld [vmem:[%s7] sm:$0x7f]
        %v502 = vld [vmem:[%s424] sm:$0xff]
        %v503 = vld [vmem:[%s424 + $0x8] sm:$0xff]
        %v504 = vld [vmem:[%s424 + $0x10] sm:$0xff]
        %v505 = vld [vmem:[%s424 + $0x18] sm:$0xff]
        %v506 = vld [vmem:[%s424 + $0x20] sm:$0xff]
        %v507 = vld [vmem:[%s424 + $0x28] sm:$0xff]
        %v508 = vld [vmem:[%s424 + $0x30] sm:$0xff]
        %v509 = vld [vmem:[%s424 + $0x38] sm:$0xff]
        %v510 = vld [vmem:[%s433] sm:$0xff]
        %v511 = vld [vmem:[%s433 + $0x8] sm:$0xff]
        %v512 = vld [vmem:[%s433 + $0x10] sm:$0xff]
        %v513 = vld [vmem:[%s433 + $0x18] sm:$0xff]
        %v514 = vld [vmem:[%s433 + $0x20] sm:$0xff]
        %v515 = vld [vmem:[%s433 + $0x28] sm:$0xff]
        %v516 = vld [vmem:[%s433 + $0x30] sm:$0xff]
        %v517 = vld [vmem:[%s433 + $0x38] sm:$0xff]
        %v518 = vpack.c.bf16 %v503, %v502
        %v519 = vpack.c.bf16 %v505, %v504
        %v520 = vpack.c.bf16 %v507, %v506
        %v521 = vpack.c.bf16 %v509, %v508
        %v522 = vld [vmem:[%s2] sm:$0xf]
        %v523 = vld [vmem:[%s2 + $0x4] sm:$0xf]
        %v524 = vld [vmem:[%s2 + $0x8] sm:$0xf]
        %v525 = vld [vmem:[%s2 + $0xc] sm:$0xf]
        %v526 = vlaneseq
        %v527 = vshrl.u32 %v526, 7
        %v528 = vsub.s32 0, %v527
        %v529 = vrot.slane %v501, %v528
        %v534 = vunpack.c.l.b16 %v522
        %v535 = vunpack.c.l.b16 %v523
        %v536 = vunpack.c.l.b16 %v524
        %v537 = vunpack.c.l.b16 %v525
        %v538 = vpack.c.b16 %v535, %v534
        %v539 = vpack.c.b16 %v537, %v536
        %vm542 = vcmask 261120
        %v544 = vsel %vm542, %v518, 0
        %v547 = vsel %vm542, %v519, 0
        %v550 = vsel %vm542, %v520, 0
        %v553 = vsel %vm542, %v521, 0
        %555 = vmatprep.subr.bf16.mxu0 0
        %556 = vmatpush1.bf16.msra.mxu0 %v538
        %557 = vmatprep.subr.bf16.mxu0 0
        %558 = vmatpush1.bf16.msra.mxu0 %v539
        %559 = vmatprep.subr.bf16.mxu0 0
        %560 = vmatpush1.bf16.msra.mxu0 0
        %561 = vmatprep.subr.bf16.mxu0 0
        %562 = vmatpush1.bf16.msra.mxu0 0
        %563 = vmatprep.subr.bf16.mxu0 0
        %564 = vmatpush1.bf16.msra.mxu0 0
        %565 = vmatprep.subr.bf16.mxu0 0
        %566 = vmatpush1.bf16.msra.mxu0 0
        %567 = vmatprep.subr.bf16.mxu0 0
        %568 = vmatpush1.bf16.msra.mxu0 0
        %569 = vmatprep.subr.bf16.mxu0 0
        %570 = vmatpush1.bf16.msra.mxu0 0
        %571 = vmatprep.subr.bf16.mxu0 0
        %572 = vmatpush1.bf16.msra.mxu0 0
        %573 = vmatprep.subr.bf16.mxu0 0
        %574 = vmatpush1.bf16.msra.mxu0 0
        %575 = vmatprep.subr.bf16.mxu0 0
        %576 = vmatpush1.bf16.msra.mxu0 0
        %577 = vmatprep.subr.bf16.mxu0 0
        %578 = vmatpush1.bf16.msra.mxu0 0
        %579 = vmatprep.subr.bf16.mxu0 0
        %580 = vmatpush1.bf16.msra.mxu0 0
        %581 = vmatprep.subr.bf16.mxu0 0
        %582 = vmatpush1.bf16.msra.mxu0 0
        %583 = vmatprep.subr.bf16.mxu0 0
        %584 = vmatpush1.bf16.msra.mxu0 0
        %585 = vmatprep.subr.bf16.mxu0 0
        %586 = vmatpush1.bf16.msra.mxu0 0
        %587 = vmatprep.mubr.bf16.mxu0 0
        %588 = vmatmul.mubr.bf16.gmra.mrb[0].mxu0 %v544
        %v589 = vpop.f32.mrb[0].mxu0
        %v590 = vadd.f32 %v529, %v589
        %v591 = vpop.f32.mrb[0].mxu0
        %v592 = vpop.f32.mrb[0].mxu0
        %v593 = vadd.f32 %v529, %v592
        %v594 = vpop.f32.mrb[0].mxu0
        %595 = vmatprep.mubr.bf16.mxu0 0
        %596 = vmatmul.mubr.bf16.gmra.mrb[0].mxu0 %v547
        %v597 = vpop.f32.mrb[0].mxu0
        %v598 = vadd.f32 %v529, %v597
        %v599 = vpop.f32.mrb[0].mxu0
        %v600 = vpop.f32.mrb[0].mxu0
        %v601 = vadd.f32 %v529, %v600
        %v602 = vpop.f32.mrb[0].mxu0
        %603 = vmatprep.mubr.bf16.mxu0 0
        %604 = vmatmul.mubr.bf16.gmra.mrb[0].mxu0 %v550
        %v605 = vpop.f32.mrb[0].mxu0
        %v606 = vadd.f32 %v529, %v605
        %v607 = vpop.f32.mrb[0].mxu0
        %v608 = vpop.f32.mrb[0].mxu0
        %v609 = vadd.f32 %v529, %v608
        %v610 = vpop.f32.mrb[0].mxu0
        %611 = vmatprep.mubr.bf16.mxu0 0
        %612 = vmatmul.mubr.bf16.gmra.mrb[0].mxu0 %v553
        %v613 = vpop.f32.mrb[0].mxu0
        %v614 = vadd.f32 %v529, %v613
        %v615 = vpop.f32.mrb[0].mxu0
        %v616 = vpop.f32.mrb[0].mxu0
        %v617 = vadd.f32 %v529, %v616
        %v618 = vpop.f32.mrb[0].mxu0
        %619 = vdwg.mxu0
        %v620 = vmul.f32 %v590, 0.35355338
        %v621 = vmul.f32 %v593, 0.35355338
        %v622 = vmul.f32 %v598, 0.35355338
        %v623 = vmul.f32 %v601, 0.35355338
        %v624 = vmul.f32 %v606, 0.35355338
        %v625 = vmul.f32 %v609, 0.35355338
        %v626 = vmul.f32 %v614, 0.35355338
        %v627 = vmul.f32 %v617, 0.35355338
        %v628 = vpack.c.bf16 %v511, %v510
        %v629 = vpack.c.bf16 %v513, %v512
        %v630 = vpack.c.bf16 %v515, %v514
        %v631 = vpack.c.bf16 %v517, %v516
        %v632 = vld [vmem:[%s3] sm:$0xf]
        %v633 = vld [vmem:[%s3 + $0x4] sm:$0xf]
        %v634 = vld [vmem:[%s3 + $0x8] sm:$0xf]
        %v635 = vld [vmem:[%s3 + $0xc] sm:$0xf]
        %v636 = vld [vmem:[%s8] sm:$0x1]
        %v638 = vlaneseq
        %v639 = vshrl.u32 %v638, 7
        %v640 = vsub.s32 0, %v639
        %v641 = vrot.slane %v636, %v640
        %v647 = vunpack.c.l.b16 %v632
        %v648 = vunpack.c.l.b16 %v633
        %v649 = vunpack.c.l.b16 %v634
        %v650 = vunpack.c.l.b16 %v635
        %v651 = vpack.c.b16 %v648, %v647
        %v652 = vpack.c.b16 %v650, %v649
        %v656 = vsel %vm542, %v628, 0
        %v659 = vsel %vm542, %v629, 0
        %v662 = vsel %vm542, %v630, 0
        %v665 = vsel %vm542, %v631, 0
        %667 = vmatprep.subr.bf16.mxu0 0
        %668 = vmatpush1.bf16.msra.mxu0 %v651
        %669 = vmatprep.subr.bf16.mxu0 0
        %670 = vmatpush1.bf16.msra.mxu0 %v652
        %671 = vmatprep.subr.bf16.mxu0 0
        %672 = vmatpush1.bf16.msra.mxu0 0
        %673 = vmatprep.subr.bf16.mxu0 0
        %674 = vmatpush1.bf16.msra.mxu0 0
        %675 = vmatprep.subr.bf16.mxu0 0
        %676 = vmatpush1.bf16.msra.mxu0 0
        %677 = vmatprep.subr.bf16.mxu0 0
        %678 = vmatpush1.bf16.msra.mxu0 0
        %679 = vmatprep.subr.bf16.mxu0 0
        %680 = vmatpush1.bf16.msra.mxu0 0
        %681 = vmatprep.subr.bf16.mxu0 0
        %682 = vmatpush1.bf16.msra.mxu0 0
        %683 = vmatprep.subr.bf16.mxu0 0
        %684 = vmatpush1.bf16.msra.mxu0 0
        %685 = vmatprep.subr.bf16.mxu0 0
        %686 = vmatpush1.bf16.msra.mxu0 0
        %687 = vmatprep.subr.bf16.mxu0 0
        %688 = vmatpush1.bf16.msra.mxu0 0
        %689 = vmatprep.subr.bf16.mxu0 0
        %690 = vmatpush1.bf16.msra.mxu0 0
        %691 = vmatprep.subr.bf16.mxu0 0
        %692 = vmatpush1.bf16.msra.mxu0 0
        %693 = vmatprep.subr.bf16.mxu0 0
        %694 = vmatpush1.bf16.msra.mxu0 0
        %695 = vmatprep.subr.bf16.mxu0 0
        %696 = vmatpush1.bf16.msra.mxu0 0
        %697 = vmatprep.subr.bf16.mxu0 0
        %698 = vmatpush1.bf16.msra.mxu0 0
        %699 = vmatprep.mubr.bf16.mxu0 0
        %700 = vmatmul.mubr.bf16.gmra.mrb[0].mxu0 %v656
        %v701 = vpop.f32.mrb[0].mxu0
        %v702 = vadd.f32 %v641, %v701
        %v703 = vpop.f32.mrb[0].mxu0
        %v704 = vpop.f32.mrb[0].mxu0
        %v705 = vadd.f32 %v641, %v704
        %v706 = vpop.f32.mrb[0].mxu0
        %707 = vmatprep.mubr.bf16.mxu0 0
        %708 = vmatmul.mubr.bf16.gmra.mrb[0].mxu0 %v659
        %v709 = vpop.f32.mrb[0].mxu0
        %v710 = vadd.f32 %v641, %v709
        %v711 = vpop.f32.mrb[0].mxu0
        %v712 = vpop.f32.mrb[0].mxu0
        %v713 = vadd.f32 %v641, %v712
        %v714 = vpop.f32.mrb[0].mxu0
        %715 = vmatprep.mubr.bf16.mxu0 0
        %716 = vmatmul.mubr.bf16.gmra.mrb[0].mxu0 %v662
        %v717 = vpop.f32.mrb[0].mxu0
        %v718 = vadd.f32 %v641, %v717
        %v719 = vpop.f32.mrb[0].mxu0
        %v720 = vpop.f32.mrb[0].mxu0
        %v721 = vadd.f32 %v641, %v720
        %v722 = vpop.f32.mrb[0].mxu0
        %723 = vmatprep.mubr.bf16.mxu0 0
        %724 = vmatmul.mubr.bf16.gmra.mrb[0].mxu0 %v665
        %v725 = vpop.f32.mrb[0].mxu0
        %v726 = vadd.f32 %v641, %v725
        %v727 = vpop.f32.mrb[0].mxu0
        %v728 = vpop.f32.mrb[0].mxu0
        %v729 = vadd.f32 %v641, %v728
        %v730 = vpop.f32.mrb[0].mxu0
        %731 = vdwg.mxu0
        %740 = vrot.lane.b32.xlu0 %v620, 120
        %v741 = vpop.permute.xlu0 %740
        %742 = vrot.lane.b32.xlu0 %v621, 120
        %v743 = vpop.permute.xlu0 %742
        %744 = vrot.lane.b32.xlu0 %v622, 120
        %v745 = vpop.permute.xlu0 %744
        %746 = vrot.lane.b32.xlu0 %v623, 120
        %v747 = vpop.permute.xlu0 %746
        %748 = vrot.lane.b32.xlu0 %v624, 120
        %v749 = vpop.permute.xlu0 %748
        %750 = vrot.lane.b32.xlu0 %v625, 120
        %v751 = vpop.permute.xlu0 %750
        %752 = vrot.lane.b32.xlu0 %v626, 120
        %v753 = vpop.permute.xlu0 %752
        %754 = vrot.lane.b32.xlu0 %v627, 120
        %v755 = vpop.permute.xlu0 %754
        %764 = vrot.lane.b32.xlu0 %v620, 112
        %v765 = vpop.permute.xlu0 %764
        %766 = vrot.lane.b32.xlu0 %v621, 112
        %v767 = vpop.permute.xlu0 %766
        %768 = vrot.lane.b32.xlu0 %v622, 112
        %v769 = vpop.permute.xlu0 %768
        %770 = vrot.lane.b32.xlu0 %v623, 112
        %v771 = vpop.permute.xlu0 %770
        %772 = vrot.lane.b32.xlu0 %v624, 112
        %v773 = vpop.permute.xlu0 %772
        %774 = vrot.lane.b32.xlu0 %v625, 112
        %v775 = vpop.permute.xlu0 %774
        %776 = vrot.lane.b32.xlu0 %v626, 112
        %v777 = vpop.permute.xlu0 %776
        %778 = vrot.lane.b32.xlu0 %v627, 112
        %v779 = vpop.permute.xlu0 %778
        %788 = vrot.lane.b32.xlu0 %v620, 104
        %v789 = vpop.permute.xlu0 %788
        %790 = vrot.lane.b32.xlu0 %v621, 104
        %v791 = vpop.permute.xlu0 %790
        %792 = vrot.lane.b32.xlu0 %v622, 104
        %v793 = vpop.permute.xlu0 %792
        %794 = vrot.lane.b32.xlu0 %v623, 104
        %v795 = vpop.permute.xlu0 %794
        %796 = vrot.lane.b32.xlu0 %v624, 104
        %v797 = vpop.permute.xlu0 %796
        %798 = vrot.lane.b32.xlu0 %v625, 104
        %v799 = vpop.permute.xlu0 %798
        %800 = vrot.lane.b32.xlu0 %v626, 104
        %v801 = vpop.permute.xlu0 %800
        %802 = vrot.lane.b32.xlu0 %v627, 104
        %v803 = vpop.permute.xlu0 %802
        %v812 = vcombine.low %v620, %v765
        %v813 = vcombine.high %v620, %v765
        %v815 = vunpack.c.l.s4 1983009808
        %v816 = vunpack.c.0.s8 %v815
        %v817 = vlaneseq
        %v818 = vshrl.u32 %v817, 7
        %v819 = vsub.s32 %v816, %v818
        %v820 = vrot.slane %v812, %v819
        %v822 = vunpack.c.l.s4 1983009808
        %v823 = vunpack.c.0.s8 %v822
        %v824 = vlaneseq
        %v825 = vshrl.u32 %v824, 7
        %v826 = vsub.s32 %v823, %v825
        %v827 = vrot.slane %v813, %v826
        %v828 = vcombine.low %v741, %v789
        %v829 = vcombine.high %v741, %v789
        %v831 = vunpack.c.l.s4 1983009808
        %v832 = vunpack.c.0.s8 %v831
        %v833 = vlaneseq
        %v834 = vshrl.u32 %v833, 7
        %v835 = vsub.s32 %v832, %v834
        %v836 = vrot.slane %v828, %v835
        %v838 = vunpack.c.l.s4 1983009808
        %v839 = vunpack.c.0.s8 %v838
        %v840 = vlaneseq
        %v841 = vshrl.u32 %v840, 7
        %v842 = vsub.s32 %v839, %v841
        %v843 = vrot.slane %v829, %v842
        %v844 = vcombine.low %v820, %v836
        %v845 = vcombine.high %v820, %v836
        %v847 = vunpack.c.l.s4 1934713408
        %v848 = vunpack.c.0.s8 %v847
        %v849 = vlaneseq
        %v850 = vshrl.u32 %v849, 7
        %v851 = vsub.s32 %v848, %v850
        %v852 = vrot.slane %v844, %v851
        %v854 = vunpack.c.l.s4 1934713408
        %v855 = vunpack.c.0.s8 %v854
        %v856 = vlaneseq
        %v857 = vshrl.u32 %v856, 7
        %v858 = vsub.s32 %v855, %v857
        %v859 = vrot.slane %v845, %v858
        %v860 = vcombine.low %v827, %v843
        %v861 = vcombine.high %v827, %v843
        %v863 = vunpack.c.l.s4 1934713408
        %v864 = vunpack.c.0.s8 %v863
        %v865 = vlaneseq
        %v866 = vshrl.u32 %v865, 7
        %v867 = vsub.s32 %v864, %v866
        %v868 = vrot.slane %v860, %v867
        %v870 = vunpack.c.l.s4 1934713408
        %v871 = vunpack.c.0.s8 %v870
        %v872 = vlaneseq
        %v873 = vshrl.u32 %v872, 7
        %v874 = vsub.s32 %v871, %v873
        %v875 = vrot.slane %v861, %v874
        %v876 = vcombine.high %v852, 0.0
        %v877 = vcombine.high %v859, 0.0
        %v878 = vcombine.high %v868, 0.0
        %v879 = vcombine.high %v875, 0.0
        %v880 = vcombine.low %v621, %v767
        %v881 = vcombine.high %v621, %v767
        %v883 = vunpack.c.l.s4 1983009808
        %v884 = vunpack.c.0.s8 %v883
        %v885 = vlaneseq
        %v886 = vshrl.u32 %v885, 7
        %v887 = vsub.s32 %v884, %v886
        %v888 = vrot.slane %v880, %v887
        %v890 = vunpack.c.l.s4 1983009808
        %v891 = vunpack.c.0.s8 %v890
        %v892 = vlaneseq
        %v893 = vshrl.u32 %v892, 7
        %v894 = vsub.s32 %v891, %v893
        %v895 = vrot.slane %v881, %v894
        %v896 = vcombine.low %v743, %v791
        %v897 = vcombine.high %v743, %v791
        %v899 = vunpack.c.l.s4 1983009808
        %v900 = vunpack.c.0.s8 %v899
        %v901 = vlaneseq
        %v902 = vshrl.u32 %v901, 7
        %v903 = vsub.s32 %v900, %v902
        %v904 = vrot.slane %v896, %v903
        %v906 = vunpack.c.l.s4 1983009808
        %v907 = vunpack.c.0.s8 %v906
        %v908 = vlaneseq
        %v909 = vshrl.u32 %v908, 7
        %v910 = vsub.s32 %v907, %v909
        %v911 = vrot.slane %v897, %v910
        %v912 = vcombine.low %v888, %v904
        %v913 = vcombine.high %v888, %v904
        %v915 = vunpack.c.l.s4 1934713408
        %v916 = vunpack.c.0.s8 %v915
        %v917 = vlaneseq
        %v918 = vshrl.u32 %v917, 7
        %v919 = vsub.s32 %v916, %v918
        %v920 = vrot.slane %v912, %v919
        %v922 = vunpack.c.l.s4 1934713408
        %v923 = vunpack.c.0.s8 %v922
        %v924 = vlaneseq
        %v925 = vshrl.u32 %v924, 7
        %v926 = vsub.s32 %v923, %v925
        %v927 = vrot.slane %v913, %v926
        %v928 = vcombine.low %v895, %v911
        %v929 = vcombine.high %v895, %v911
        %v931 = vunpack.c.l.s4 1934713408
        %v932 = vunpack.c.0.s8 %v931
        %v933 = vlaneseq
        %v934 = vshrl.u32 %v933, 7
        %v935 = vsub.s32 %v932, %v934
        %v936 = vrot.slane %v928, %v935
        %v938 = vunpack.c.l.s4 1934713408
        %v939 = vunpack.c.0.s8 %v938
        %v940 = vlaneseq
        %v941 = vshrl.u32 %v940, 7
        %v942 = vsub.s32 %v939, %v941
        %v943 = vrot.slane %v929, %v942
        %v944 = vcombine.high %v920, 0.0
        %v945 = vcombine.high %v927, 0.0
        %v946 = vcombine.high %v936, 0.0
        %v947 = vcombine.high %v943, 0.0
        %v948 = vcombine.low %v622, %v769
        %v949 = vcombine.high %v622, %v769
        %v951 = vunpack.c.l.s4 1983009808
        %v952 = vunpack.c.0.s8 %v951
        %v953 = vlaneseq
        %v954 = vshrl.u32 %v953, 7
        %v955 = vsub.s32 %v952, %v954
        %v956 = vrot.slane %v948, %v955
        %v958 = vunpack.c.l.s4 1983009808
        %v959 = vunpack.c.0.s8 %v958
        %v960 = vlaneseq
        %v961 = vshrl.u32 %v960, 7
        %v962 = vsub.s32 %v959, %v961
        %v963 = vrot.slane %v949, %v962
        %v964 = vcombine.low %v745, %v793
        %v965 = vcombine.high %v745, %v793
        %v967 = vunpack.c.l.s4 1983009808
        %v968 = vunpack.c.0.s8 %v967
        %v969 = vlaneseq
        %v970 = vshrl.u32 %v969, 7
        %v971 = vsub.s32 %v968, %v970
        %v972 = vrot.slane %v964, %v971
        %v974 = vunpack.c.l.s4 1983009808
        %v975 = vunpack.c.0.s8 %v974
        %v976 = vlaneseq
        %v977 = vshrl.u32 %v976, 7
        %v978 = vsub.s32 %v975, %v977
        %v979 = vrot.slane %v965, %v978
        %v980 = vcombine.low %v956, %v972
        %v981 = vcombine.high %v956, %v972
        %v983 = vunpack.c.l.s4 1934713408
        %v984 = vunpack.c.0.s8 %v983
        %v985 = vlaneseq
        %v986 = vshrl.u32 %v985, 7
        %v987 = vsub.s32 %v984, %v986
        %v988 = vrot.slane %v980, %v987
        %v990 = vunpack.c.l.s4 1934713408
        %v991 = vunpack.c.0.s8 %v990
        %v992 = vlaneseq
        %v993 = vshrl.u32 %v992, 7
        %v994 = vsub.s32 %v991, %v993
        %v995 = vrot.slane %v981, %v994
        %v996 = vcombine.low %v963, %v979
        %v997 = vcombine.high %v963, %v979
        %v999 = vunpack.c.l.s4 1934713408
        %v1000 = vunpack.c.0.s8 %v999
        %v1001 = vlaneseq
        %v1002 = vshrl.u32 %v1001, 7
        %v1003 = vsub.s32 %v1000, %v1002
        %v1004 = vrot.slane %v996, %v1003
        %v1006 = vunpack.c.l.s4 1934713408
        %v1007 = vunpack.c.0.s8 %v1006
        %v1008 = vlaneseq
        %v1009 = vshrl.u32 %v1008, 7
        %v1010 = vsub.s32 %v1007, %v1009
        %v1011 = vrot.slane %v997, %v1010
        %v1012 = vcombine.high %v988, 0.0
        %v1013 = vcombine.high %v995, 0.0
        %v1014 = vcombine.high %v1004, 0.0
        %v1015 = vcombine.high %v1011, 0.0
        %v1016 = vcombine.low %v623, %v771
        %v1017 = vcombine.high %v623, %v771
        %v1019 = vunpack.c.l.s4 1983009808
        %v1020 = vunpack.c.0.s8 %v1019
        %v1021 = vlaneseq
        %v1022 = vshrl.u32 %v1021, 7
        %v1023 = vsub.s32 %v1020, %v1022
        %v1024 = vrot.slane %v1016, %v1023
        %v1026 = vunpack.c.l.s4 1983009808
        %v1027 = vunpack.c.0.s8 %v1026
        %v1028 = vlaneseq
        %v1029 = vshrl.u32 %v1028, 7
        %v1030 = vsub.s32 %v1027, %v1029
        %v1031 = vrot.slane %v1017, %v1030
        %v1032 = vcombine.low %v747, %v795
        %v1033 = vcombine.high %v747, %v795
        %v1035 = vunpack.c.l.s4 1983009808
        %v1036 = vunpack.c.0.s8 %v1035
        %v1037 = vlaneseq
        %v1038 = vshrl.u32 %v1037, 7
        %v1039 = vsub.s32 %v1036, %v1038
        %v1040 = vrot.slane %v1032, %v1039
        %v1042 = vunpack.c.l.s4 1983009808
        %v1043 = vunpack.c.0.s8 %v1042
        %v1044 = vlaneseq
        %v1045 = vshrl.u32 %v1044, 7
        %v1046 = vsub.s32 %v1043, %v1045
        %v1047 = vrot.slane %v1033, %v1046
        %v1048 = vcombine.low %v1024, %v1040
        %v1049 = vcombine.high %v1024, %v1040
        %v1051 = vunpack.c.l.s4 1934713408
        %v1052 = vunpack.c.0.s8 %v1051
        %v1053 = vlaneseq
        %v1054 = vshrl.u32 %v1053, 7
        %v1055 = vsub.s32 %v1052, %v1054
        %v1056 = vrot.slane %v1048, %v1055
        %v1058 = vunpack.c.l.s4 1934713408
        %v1059 = vunpack.c.0.s8 %v1058
        %v1060 = vlaneseq
        %v1061 = vshrl.u32 %v1060, 7
        %v1062 = vsub.s32 %v1059, %v1061
        %v1063 = vrot.slane %v1049, %v1062
        %v1064 = vcombine.low %v1031, %v1047
        %v1065 = vcombine.high %v1031, %v1047
        %v1067 = vunpack.c.l.s4 1934713408
        %v1068 = vunpack.c.0.s8 %v1067
        %v1069 = vlaneseq
        %v1070 = vshrl.u32 %v1069, 7
        %v1071 = vsub.s32 %v1068, %v1070
        %v1072 = vrot.slane %v1064, %v1071
        %v1074 = vunpack.c.l.s4 1934713408
        %v1075 = vunpack.c.0.s8 %v1074
        %v1076 = vlaneseq
        %v1077 = vshrl.u32 %v1076, 7
        %v1078 = vsub.s32 %v1075, %v1077
        %v1079 = vrot.slane %v1065, %v1078
        %v1080 = vcombine.high %v1056, 0.0
        %v1081 = vcombine.high %v1063, 0.0
        %v1082 = vcombine.high %v1072, 0.0
        %v1083 = vcombine.high %v1079, 0.0
        %v1084 = vcombine.low %v624, %v773
        %v1085 = vcombine.high %v624, %v773
        %v1087 = vunpack.c.l.s4 1983009808
        %v1088 = vunpack.c.0.s8 %v1087
        %v1089 = vlaneseq
        %v1090 = vshrl.u32 %v1089, 7
        %v1091 = vsub.s32 %v1088, %v1090
        %v1092 = vrot.slane %v1084, %v1091
        %v1094 = vunpack.c.l.s4 1983009808
        %v1095 = vunpack.c.0.s8 %v1094
        %v1096 = vlaneseq
        %v1097 = vshrl.u32 %v1096, 7
        %v1098 = vsub.s32 %v1095, %v1097
        %v1099 = vrot.slane %v1085, %v1098
        %v1100 = vcombine.low %v749, %v797
        %v1101 = vcombine.high %v749, %v797
        %v1103 = vunpack.c.l.s4 1983009808
        %v1104 = vunpack.c.0.s8 %v1103
        %v1105 = vlaneseq
        %v1106 = vshrl.u32 %v1105, 7
        %v1107 = vsub.s32 %v1104, %v1106
        %v1108 = vrot.slane %v1100, %v1107
        %v1110 = vunpack.c.l.s4 1983009808
        %v1111 = vunpack.c.0.s8 %v1110
        %v1112 = vlaneseq
        %v1113 = vshrl.u32 %v1112, 7
        %v1114 = vsub.s32 %v1111, %v1113
        %v1115 = vrot.slane %v1101, %v1114
        %v1116 = vcombine.low %v1092, %v1108
        %v1117 = vcombine.high %v1092, %v1108
        %v1119 = vunpack.c.l.s4 1934713408
        %v1120 = vunpack.c.0.s8 %v1119
        %v1121 = vlaneseq
        %v1122 = vshrl.u32 %v1121, 7
        %v1123 = vsub.s32 %v1120, %v1122
        %v1124 = vrot.slane %v1116, %v1123
        %v1126 = vunpack.c.l.s4 1934713408
        %v1127 = vunpack.c.0.s8 %v1126
        %v1128 = vlaneseq
        %v1129 = vshrl.u32 %v1128, 7
        %v1130 = vsub.s32 %v1127, %v1129
        %v1131 = vrot.slane %v1117, %v1130
        %v1132 = vcombine.low %v1099, %v1115
        %v1133 = vcombine.high %v1099, %v1115
        %v1135 = vunpack.c.l.s4 1934713408
        %v1136 = vunpack.c.0.s8 %v1135
        %v1137 = vlaneseq
        %v1138 = vshrl.u32 %v1137, 7
        %v1139 = vsub.s32 %v1136, %v1138
        %v1140 = vrot.slane %v1132, %v1139
        %v1142 = vunpack.c.l.s4 1934713408
        %v1143 = vunpack.c.0.s8 %v1142
        %v1144 = vlaneseq
        %v1145 = vshrl.u32 %v1144, 7
        %v1146 = vsub.s32 %v1143, %v1145
        %v1147 = vrot.slane %v1133, %v1146
        %v1148 = vcombine.high %v1124, 0.0
        %v1149 = vcombine.high %v1131, 0.0
        %v1150 = vcombine.high %v1140, 0.0
        %v1151 = vcombine.high %v1147, 0.0
        %v1152 = vcombine.low %v625, %v775
        %v1153 = vcombine.high %v625, %v775
        %v1155 = vunpack.c.l.s4 1983009808
        %v1156 = vunpack.c.0.s8 %v1155
        %v1157 = vlaneseq
        %v1158 = vshrl.u32 %v1157, 7
        %v1159 = vsub.s32 %v1156, %v1158
        %v1160 = vrot.slane %v1152, %v1159
        %v1162 = vunpack.c.l.s4 1983009808
        %v1163 = vunpack.c.0.s8 %v1162
        %v1164 = vlaneseq
        %v1165 = vshrl.u32 %v1164, 7
        %v1166 = vsub.s32 %v1163, %v1165
        %v1167 = vrot.slane %v1153, %v1166
        %v1168 = vcombine.low %v751, %v799
        %v1169 = vcombine.high %v751, %v799
        %v1171 = vunpack.c.l.s4 1983009808
        %v1172 = vunpack.c.0.s8 %v1171
        %v1173 = vlaneseq
        %v1174 = vshrl.u32 %v1173, 7
        %v1175 = vsub.s32 %v1172, %v1174
        %v1176 = vrot.slane %v1168, %v1175
        %v1178 = vunpack.c.l.s4 1983009808
        %v1179 = vunpack.c.0.s8 %v1178
        %v1180 = vlaneseq
        %v1181 = vshrl.u32 %v1180, 7
        %v1182 = vsub.s32 %v1179, %v1181
        %v1183 = vrot.slane %v1169, %v1182
        %v1184 = vcombine.low %v1160, %v1176
        %v1185 = vcombine.high %v1160, %v1176
        %v1187 = vunpack.c.l.s4 1934713408
        %v1188 = vunpack.c.0.s8 %v1187
        %v1189 = vlaneseq
        %v1190 = vshrl.u32 %v1189, 7
        %v1191 = vsub.s32 %v1188, %v1190
        %v1192 = vrot.slane %v1184, %v1191
        %v1194 = vunpack.c.l.s4 1934713408
        %v1195 = vunpack.c.0.s8 %v1194
        %v1196 = vlaneseq
        %v1197 = vshrl.u32 %v1196, 7
        %v1198 = vsub.s32 %v1195, %v1197
        %v1199 = vrot.slane %v1185, %v1198
        %v1200 = vcombine.low %v1167, %v1183
        %v1201 = vcombine.high %v1167, %v1183
        %v1203 = vunpack.c.l.s4 1934713408
        %v1204 = vunpack.c.0.s8 %v1203
        %v1205 = vlaneseq
        %v1206 = vshrl.u32 %v1205, 7
        %v1207 = vsub.s32 %v1204, %v1206
        %v1208 = vrot.slane %v1200, %v1207
        %v1210 = vunpack.c.l.s4 1934713408
        %v1211 = vunpack.c.0.s8 %v1210
        %v1212 = vlaneseq
        %v1213 = vshrl.u32 %v1212, 7
        %v1214 = vsub.s32 %v1211, %v1213
        %v1215 = vrot.slane %v1201, %v1214
        %v1216 = vcombine.high %v1192, 0.0
        %v1217 = vcombine.high %v1199, 0.0
        %v1218 = vcombine.high %v1208, 0.0
        %v1219 = vcombine.high %v1215, 0.0
        %v1220 = vcombine.low %v626, %v777
        %v1221 = vcombine.high %v626, %v777
        %v1223 = vunpack.c.l.s4 1983009808
        %v1224 = vunpack.c.0.s8 %v1223
        %v1225 = vlaneseq
        %v1226 = vshrl.u32 %v1225, 7
        %v1227 = vsub.s32 %v1224, %v1226
        %v1228 = vrot.slane %v1220, %v1227
        %v1230 = vunpack.c.l.s4 1983009808
        %v1231 = vunpack.c.0.s8 %v1230
        %v1232 = vlaneseq
        %v1233 = vshrl.u32 %v1232, 7
        %v1234 = vsub.s32 %v1231, %v1233
        %v1235 = vrot.slane %v1221, %v1234
        %v1236 = vcombine.low %v753, %v801
        %v1237 = vcombine.high %v753, %v801
        %v1239 = vunpack.c.l.s4 1983009808
        %v1240 = vunpack.c.0.s8 %v1239
        %v1241 = vlaneseq
        %v1242 = vshrl.u32 %v1241, 7
        %v1243 = vsub.s32 %v1240, %v1242
        %v1244 = vrot.slane %v1236, %v1243
        %v1246 = vunpack.c.l.s4 1983009808
        %v1247 = vunpack.c.0.s8 %v1246
        %v1248 = vlaneseq
        %v1249 = vshrl.u32 %v1248, 7
        %v1250 = vsub.s32 %v1247, %v1249
        %v1251 = vrot.slane %v1237, %v1250
        %v1252 = vcombine.low %v1228, %v1244
        %v1253 = vcombine.high %v1228, %v1244
        %v1255 = vunpack.c.l.s4 1934713408
        %v1256 = vunpack.c.0.s8 %v1255
        %v1257 = vlaneseq
        %v1258 = vshrl.u32 %v1257, 7
        %v1259 = vsub.s32 %v1256, %v1258
        %v1260 = vrot.slane %v1252, %v1259
        %v1262 = vunpack.c.l.s4 1934713408
        %v1263 = vunpack.c.0.s8 %v1262
        %v1264 = vlaneseq
        %v1265 = vshrl.u32 %v1264, 7
        %v1266 = vsub.s32 %v1263, %v1265
        %v1267 = vrot.slane %v1253, %v1266
        %v1268 = vcombine.low %v1235, %v1251
        %v1269 = vcombine.high %v1235, %v1251
        %v1271 = vunpack.c.l.s4 1934713408
        %v1272 = vunpack.c.0.s8 %v1271
        %v1273 = vlaneseq
        %v1274 = vshrl.u32 %v1273, 7
        %v1275 = vsub.s32 %v1272, %v1274
        %v1276 = vrot.slane %v1268, %v1275
        %v1278 = vunpack.c.l.s4 1934713408
        %v1279 = vunpack.c.0.s8 %v1278
        %v1280 = vlaneseq
        %v1281 = vshrl.u32 %v1280, 7
        %v1282 = vsub.s32 %v1279, %v1281
        %v1283 = vrot.slane %v1269, %v1282
        %v1284 = vcombine.high %v1260, 0.0
        %v1285 = vcombine.high %v1267, 0.0
        %v1286 = vcombine.high %v1276, 0.0
        %v1287 = vcombine.high %v1283, 0.0
        %v1288 = vcombine.low %v627, %v779
        %v1289 = vcombine.high %v627, %v779
        %v1291 = vunpack.c.l.s4 1983009808
        %v1292 = vunpack.c.0.s8 %v1291
        %v1293 = vlaneseq
        %v1294 = vshrl.u32 %v1293, 7
        %v1295 = vsub.s32 %v1292, %v1294
        %v1296 = vrot.slane %v1288, %v1295
        %v1298 = vunpack.c.l.s4 1983009808
        %v1299 = vunpack.c.0.s8 %v1298
        %v1300 = vlaneseq
        %v1301 = vshrl.u32 %v1300, 7
        %v1302 = vsub.s32 %v1299, %v1301
        %v1303 = vrot.slane %v1289, %v1302
        %v1304 = vcombine.low %v755, %v803
        %v1305 = vcombine.high %v755, %v803
        %v1307 = vunpack.c.l.s4 1983009808
        %v1308 = vunpack.c.0.s8 %v1307
        %v1309 = vlaneseq
        %v1310 = vshrl.u32 %v1309, 7
        %v1311 = vsub.s32 %v1308, %v1310
        %v1312 = vrot.slane %v1304, %v1311
        %v1314 = vunpack.c.l.s4 1983009808
        %v1315 = vunpack.c.0.s8 %v1314
        %v1316 = vlaneseq
        %v1317 = vshrl.u32 %v1316, 7
        %v1318 = vsub.s32 %v1315, %v1317
        %v1319 = vrot.slane %v1305, %v1318
        %v1320 = vcombine.low %v1296, %v1312
        %v1321 = vcombine.high %v1296, %v1312
        %v1323 = vunpack.c.l.s4 1934713408
        %v1324 = vunpack.c.0.s8 %v1323
        %v1325 = vlaneseq
        %v1326 = vshrl.u32 %v1325, 7
        %v1327 = vsub.s32 %v1324, %v1326
        %v1328 = vrot.slane %v1320, %v1327
        %v1330 = vunpack.c.l.s4 1934713408
        %v1331 = vunpack.c.0.s8 %v1330
        %v1332 = vlaneseq
        %v1333 = vshrl.u32 %v1332, 7
        %v1334 = vsub.s32 %v1331, %v1333
        %v1335 = vrot.slane %v1321, %v1334
        %v1336 = vcombine.low %v1303, %v1319
        %v1337 = vcombine.high %v1303, %v1319
        %v1339 = vunpack.c.l.s4 1934713408
        %v1340 = vunpack.c.0.s8 %v1339
        %v1341 = vlaneseq
        %v1342 = vshrl.u32 %v1341, 7
        %v1343 = vsub.s32 %v1340, %v1342
        %v1344 = vrot.slane %v1336, %v1343
        %v1346 = vunpack.c.l.s4 1934713408
        %v1347 = vunpack.c.0.s8 %v1346
        %v1348 = vlaneseq
        %v1349 = vshrl.u32 %v1348, 7
        %v1350 = vsub.s32 %v1347, %v1349
        %v1351 = vrot.slane %v1337, %v1350
        %v1352 = vcombine.high %v1328, 0.0
        %v1353 = vcombine.high %v1335, 0.0
        %v1354 = vcombine.high %v1344, 0.0
        %v1355 = vcombine.high %v1351, 0.0
        %v1356 = vcombine.low %v852, %v988
        %v1358 = vunpack.c.l.s4 1983009808
        %v1359 = vunpack.c.0.s8 %v1358
        %v1360 = vlaneseq
        %v1361 = vshrl.u32 %v1360, 7
        %v1362 = vsub.s32 %v1359, %v1361
        %v1363 = vrot.slane %v1356, %v1362
        %v1364 = vcombine.low %v920, %v1056
        %v1366 = vunpack.c.l.s4 1983009808
        %v1367 = vunpack.c.0.s8 %v1366
        %v1368 = vlaneseq
        %v1369 = vshrl.u32 %v1368, 7
        %v1370 = vsub.s32 %v1367, %v1369
        %v1371 = vrot.slane %v1364, %v1370
        %v1372 = vcombine.low %v1124, %v1260
        %v1374 = vunpack.c.l.s4 1983009808
        %v1375 = vunpack.c.0.s8 %v1374
        %v1376 = vlaneseq
        %v1377 = vshrl.u32 %v1376, 7
        %v1378 = vsub.s32 %v1375, %v1377
        %v1379 = vrot.slane %v1372, %v1378
        %v1380 = vcombine.low %v1192, %v1328
        %v1382 = vunpack.c.l.s4 1983009808
        %v1383 = vunpack.c.0.s8 %v1382
        %v1384 = vlaneseq
        %v1385 = vshrl.u32 %v1384, 7
        %v1386 = vsub.s32 %v1383, %v1385
        %v1387 = vrot.slane %v1380, %v1386
        %v1388 = vcombine.low %v1363, %v1371
        %v1389 = vcombine.high %v1363, %v1371
        %v1391 = vunpack.c.l.s4 1934713408
        %v1392 = vunpack.c.0.s8 %v1391
        %v1393 = vlaneseq
        %v1394 = vshrl.u32 %v1393, 7
        %v1395 = vsub.s32 %v1392, %v1394
        %v1396 = vrot.slane %v1388, %v1395
        %v1398 = vunpack.c.l.s4 1934713408
        %v1399 = vunpack.c.0.s8 %v1398
        %v1400 = vlaneseq
        %v1401 = vshrl.u32 %v1400, 7
        %v1402 = vsub.s32 %v1399, %v1401
        %v1403 = vrot.slane %v1389, %v1402
        %v1404 = vcombine.low %v1379, %v1387
        %v1405 = vcombine.high %v1379, %v1387
        %v1407 = vunpack.c.l.s4 1934713408
        %v1408 = vunpack.c.0.s8 %v1407
        %v1409 = vlaneseq
        %v1410 = vshrl.u32 %v1409, 7
        %v1411 = vsub.s32 %v1408, %v1410
        %v1412 = vrot.slane %v1404, %v1411
        %v1414 = vunpack.c.l.s4 1934713408
        %v1415 = vunpack.c.0.s8 %v1414
        %v1416 = vlaneseq
        %v1417 = vshrl.u32 %v1416, 7
        %v1418 = vsub.s32 %v1415, %v1417
        %v1419 = vrot.slane %v1405, %v1418
        %v1420 = vcombine.low %v1396, %v1412
        %v1421 = vcombine.high %v1396, %v1412
        %v1422 = vcombine.low %v1403, %v1419
        %v1423 = vcombine.high %v1403, %v1419
        %v1424 = vcombine.low %v876, %v1012
        %v1426 = vunpack.c.l.s4 1983009808
        %v1427 = vunpack.c.0.s8 %v1426
        %v1428 = vlaneseq
        %v1429 = vshrl.u32 %v1428, 7
        %v1430 = vsub.s32 %v1427, %v1429
        %v1431 = vrot.slane %v1424, %v1430
        %v1432 = vcombine.low %v944, %v1080
        %v1434 = vunpack.c.l.s4 1983009808
        %v1435 = vunpack.c.0.s8 %v1434
        %v1436 = vlaneseq
        %v1437 = vshrl.u32 %v1436, 7
        %v1438 = vsub.s32 %v1435, %v1437
        %v1439 = vrot.slane %v1432, %v1438
        %v1440 = vcombine.low %v1148, %v1284
        %v1442 = vunpack.c.l.s4 1983009808
        %v1443 = vunpack.c.0.s8 %v1442
        %v1444 = vlaneseq
        %v1445 = vshrl.u32 %v1444, 7
        %v1446 = vsub.s32 %v1443, %v1445
        %v1447 = vrot.slane %v1440, %v1446
        %v1448 = vcombine.low %v1216, %v1352
        %v1450 = vunpack.c.l.s4 1983009808
        %v1451 = vunpack.c.0.s8 %v1450
        %v1452 = vlaneseq
        %v1453 = vshrl.u32 %v1452, 7
        %v1454 = vsub.s32 %v1451, %v1453
        %v1455 = vrot.slane %v1448, %v1454
        %v1456 = vcombine.low %v1431, %v1439
        %v1457 = vcombine.high %v1431, %v1439
        %v1459 = vunpack.c.l.s4 1934713408
        %v1460 = vunpack.c.0.s8 %v1459
        %v1461 = vlaneseq
        %v1462 = vshrl.u32 %v1461, 7
        %v1463 = vsub.s32 %v1460, %v1462
        %v1464 = vrot.slane %v1456, %v1463
        %v1466 = vunpack.c.l.s4 1934713408
        %v1467 = vunpack.c.0.s8 %v1466
        %v1468 = vlaneseq
        %v1469 = vshrl.u32 %v1468, 7
        %v1470 = vsub.s32 %v1467, %v1469
        %v1471 = vrot.slane %v1457, %v1470
        %v1472 = vcombine.low %v1447, %v1455
        %v1473 = vcombine.high %v1447, %v1455
        %v1475 = vunpack.c.l.s4 1934713408
        %v1476 = vunpack.c.0.s8 %v1475
        %v1477 = vlaneseq
        %v1478 = vshrl.u32 %v1477, 7
        %v1479 = vsub.s32 %v1476, %v1478
        %v1480 = vrot.slane %v1472, %v1479
        %v1482 = vunpack.c.l.s4 1934713408
        %v1483 = vunpack.c.0.s8 %v1482
        %v1484 = vlaneseq
        %v1485 = vshrl.u32 %v1484, 7
        %v1486 = vsub.s32 %v1483, %v1485
        %v1487 = vrot.slane %v1473, %v1486
        %v1488 = vcombine.low %v1464, %v1480
        %v1489 = vcombine.high %v1464, %v1480
        %v1490 = vcombine.low %v1471, %v1487
        %v1491 = vcombine.high %v1471, %v1487
        %v1492 = vcombine.low %v859, %v995
        %v1494 = vunpack.c.l.s4 1983009808
        %v1495 = vunpack.c.0.s8 %v1494
        %v1496 = vlaneseq
        %v1497 = vshrl.u32 %v1496, 7
        %v1498 = vsub.s32 %v1495, %v1497
        %v1499 = vrot.slane %v1492, %v1498
        %v1500 = vcombine.low %v927, %v1063
        %v1502 = vunpack.c.l.s4 1983009808
        %v1503 = vunpack.c.0.s8 %v1502
        %v1504 = vlaneseq
        %v1505 = vshrl.u32 %v1504, 7
        %v1506 = vsub.s32 %v1503, %v1505
        %v1507 = vrot.slane %v1500, %v1506
        %v1508 = vcombine.low %v1131, %v1267
        %v1510 = vunpack.c.l.s4 1983009808
        %v1511 = vunpack.c.0.s8 %v1510
        %v1512 = vlaneseq
        %v1513 = vshrl.u32 %v1512, 7
        %v1514 = vsub.s32 %v1511, %v1513
        %v1515 = vrot.slane %v1508, %v1514
        %v1516 = vcombine.low %v1199, %v1335
        %v1518 = vunpack.c.l.s4 1983009808
        %v1519 = vunpack.c.0.s8 %v1518
        %v1520 = vlaneseq
        %v1521 = vshrl.u32 %v1520, 7
        %v1522 = vsub.s32 %v1519, %v1521
        %v1523 = vrot.slane %v1516, %v1522
        %v1524 = vcombine.low %v1499, %v1507
        %v1525 = vcombine.high %v1499, %v1507
        %v1527 = vunpack.c.l.s4 1934713408
        %v1528 = vunpack.c.0.s8 %v1527
        %v1529 = vlaneseq
        %v1530 = vshrl.u32 %v1529, 7
        %v1531 = vsub.s32 %v1528, %v1530
        %v1532 = vrot.slane %v1524, %v1531
        %v1534 = vunpack.c.l.s4 1934713408
        %v1535 = vunpack.c.0.s8 %v1534
        %v1536 = vlaneseq
        %v1537 = vshrl.u32 %v1536, 7
        %v1538 = vsub.s32 %v1535, %v1537
        %v1539 = vrot.slane %v1525, %v1538
        %v1540 = vcombine.low %v1515, %v1523
        %v1541 = vcombine.high %v1515, %v1523
        %v1543 = vunpack.c.l.s4 1934713408
        %v1544 = vunpack.c.0.s8 %v1543
        %v1545 = vlaneseq
        %v1546 = vshrl.u32 %v1545, 7
        %v1547 = vsub.s32 %v1544, %v1546
        %v1548 = vrot.slane %v1540, %v1547
        %v1550 = vunpack.c.l.s4 1934713408
        %v1551 = vunpack.c.0.s8 %v1550
        %v1552 = vlaneseq
        %v1553 = vshrl.u32 %v1552, 7
        %v1554 = vsub.s32 %v1551, %v1553
        %v1555 = vrot.slane %v1541, %v1554
        %v1556 = vcombine.low %v1532, %v1548
        %v1557 = vcombine.high %v1532, %v1548
        %v1558 = vcombine.low %v1539, %v1555
        %v1559 = vcombine.high %v1539, %v1555
        %v1560 = vcombine.low %v877, %v1013
        %v1562 = vunpack.c.l.s4 1983009808
        %v1563 = vunpack.c.0.s8 %v1562
        %v1564 = vlaneseq
        %v1565 = vshrl.u32 %v1564, 7
        %v1566 = vsub.s32 %v1563, %v1565
        %v1567 = vrot.slane %v1560, %v1566
        %v1568 = vcombine.low %v945, %v1081
        %v1570 = vunpack.c.l.s4 1983009808
        %v1571 = vunpack.c.0.s8 %v1570
        %v1572 = vlaneseq
        %v1573 = vshrl.u32 %v1572, 7
        %v1574 = vsub.s32 %v1571, %v1573
        %v1575 = vrot.slane %v1568, %v1574
        %v1576 = vcombine.low %v1149, %v1285
        %v1578 = vunpack.c.l.s4 1983009808
        %v1579 = vunpack.c.0.s8 %v1578
        %v1580 = vlaneseq
        %v1581 = vshrl.u32 %v1580, 7
        %v1582 = vsub.s32 %v1579, %v1581
        %v1583 = vrot.slane %v1576, %v1582
        %v1584 = vcombine.low %v1217, %v1353
        %v1586 = vunpack.c.l.s4 1983009808
        %v1587 = vunpack.c.0.s8 %v1586
        %v1588 = vlaneseq
        %v1589 = vshrl.u32 %v1588, 7
        %v1590 = vsub.s32 %v1587, %v1589
        %v1591 = vrot.slane %v1584, %v1590
        %v1592 = vcombine.low %v1567, %v1575
        %v1593 = vcombine.high %v1567, %v1575
        %v1595 = vunpack.c.l.s4 1934713408
        %v1596 = vunpack.c.0.s8 %v1595
        %v1597 = vlaneseq
        %v1598 = vshrl.u32 %v1597, 7
        %v1599 = vsub.s32 %v1596, %v1598
        %v1600 = vrot.slane %v1592, %v1599
        %v1602 = vunpack.c.l.s4 1934713408
        %v1603 = vunpack.c.0.s8 %v1602
        %v1604 = vlaneseq
        %v1605 = vshrl.u32 %v1604, 7
        %v1606 = vsub.s32 %v1603, %v1605
        %v1607 = vrot.slane %v1593, %v1606
        %v1608 = vcombine.low %v1583, %v1591
        %v1609 = vcombine.high %v1583, %v1591
        %v1611 = vunpack.c.l.s4 1934713408
        %v1612 = vunpack.c.0.s8 %v1611
        %v1613 = vlaneseq
        %v1614 = vshrl.u32 %v1613, 7
        %v1615 = vsub.s32 %v1612, %v1614
        %v1616 = vrot.slane %v1608, %v1615
        %v1618 = vunpack.c.l.s4 1934713408
        %v1619 = vunpack.c.0.s8 %v1618
        %v1620 = vlaneseq
        %v1621 = vshrl.u32 %v1620, 7
        %v1622 = vsub.s32 %v1619, %v1621
        %v1623 = vrot.slane %v1609, %v1622
        %v1624 = vcombine.low %v1600, %v1616
        %v1625 = vcombine.high %v1600, %v1616
        %v1626 = vcombine.low %v1607, %v1623
        %v1627 = vcombine.high %v1607, %v1623
        %v1628 = vcombine.low %v868, %v1004
        %v1630 = vunpack.c.l.s4 1983009808
        %v1631 = vunpack.c.0.s8 %v1630
        %v1632 = vlaneseq
        %v1633 = vshrl.u32 %v1632, 7
        %v1634 = vsub.s32 %v1631, %v1633
        %v1635 = vrot.slane %v1628, %v1634
        %v1636 = vcombine.low %v936, %v1072
        %v1638 = vunpack.c.l.s4 1983009808
        %v1639 = vunpack.c.0.s8 %v1638
        %v1640 = vlaneseq
        %v1641 = vshrl.u32 %v1640, 7
        %v1642 = vsub.s32 %v1639, %v1641
        %v1643 = vrot.slane %v1636, %v1642
        %v1644 = vcombine.low %v1140, %v1276
        %v1646 = vunpack.c.l.s4 1983009808
        %v1647 = vunpack.c.0.s8 %v1646
        %v1648 = vlaneseq
        %v1649 = vshrl.u32 %v1648, 7
        %v1650 = vsub.s32 %v1647, %v1649
        %v1651 = vrot.slane %v1644, %v1650
        %v1652 = vcombine.low %v1208, %v1344
        %v1654 = vunpack.c.l.s4 1983009808
        %v1655 = vunpack.c.0.s8 %v1654
        %v1656 = vlaneseq
        %v1657 = vshrl.u32 %v1656, 7
        %v1658 = vsub.s32 %v1655, %v1657
        %v1659 = vrot.slane %v1652, %v1658
        %v1660 = vcombine.low %v1635, %v1643
        %v1661 = vcombine.high %v1635, %v1643
        %v1663 = vunpack.c.l.s4 1934713408
        %v1664 = vunpack.c.0.s8 %v1663
        %v1665 = vlaneseq
        %v1666 = vshrl.u32 %v1665, 7
        %v1667 = vsub.s32 %v1664, %v1666
        %v1668 = vrot.slane %v1660, %v1667
        %v1670 = vunpack.c.l.s4 1934713408
        %v1671 = vunpack.c.0.s8 %v1670
        %v1672 = vlaneseq
        %v1673 = vshrl.u32 %v1672, 7
        %v1674 = vsub.s32 %v1671, %v1673
        %v1675 = vrot.slane %v1661, %v1674
        %v1676 = vcombine.low %v1651, %v1659
        %v1677 = vcombine.high %v1651, %v1659
        %v1679 = vunpack.c.l.s4 1934713408
        %v1680 = vunpack.c.0.s8 %v1679
        %v1681 = vlaneseq
        %v1682 = vshrl.u32 %v1681, 7
        %v1683 = vsub.s32 %v1680, %v1682
        %v1684 = vrot.slane %v1676, %v1683
        %v1686 = vunpack.c.l.s4 1934713408
        %v1687 = vunpack.c.0.s8 %v1686
        %v1688 = vlaneseq
        %v1689 = vshrl.u32 %v1688, 7
        %v1690 = vsub.s32 %v1687, %v1689
        %v1691 = vrot.slane %v1677, %v1690
        %v1692 = vcombine.low %v1668, %v1684
        %v1693 = vcombine.high %v1668, %v1684
        %v1694 = vcombine.low %v1675, %v1691
        %v1695 = vcombine.high %v1675, %v1691
        %v1696 = vcombine.low %v878, %v1014
        %v1698 = vunpack.c.l.s4 1983009808
        %v1699 = vunpack.c.0.s8 %v1698
        %v1700 = vlaneseq
        %v1701 = vshrl.u32 %v1700, 7
        %v1702 = vsub.s32 %v1699, %v1701
        %v1703 = vrot.slane %v1696, %v1702
        %v1704 = vcombine.low %v946, %v1082
        %v1706 = vunpack.c.l.s4 1983009808
        %v1707 = vunpack.c.0.s8 %v1706
        %v1708 = vlaneseq
        %v1709 = vshrl.u32 %v1708, 7
        %v1710 = vsub.s32 %v1707, %v1709
        %v1711 = vrot.slane %v1704, %v1710
        %v1712 = vcombine.low %v1150, %v1286
        %v1714 = vunpack.c.l.s4 1983009808
        %v1715 = vunpack.c.0.s8 %v1714
        %v1716 = vlaneseq
        %v1717 = vshrl.u32 %v1716, 7
        %v1718 = vsub.s32 %v1715, %v1717
        %v1719 = vrot.slane %v1712, %v1718
        %v1720 = vcombine.low %v1218, %v1354
        %v1722 = vunpack.c.l.s4 1983009808
        %v1723 = vunpack.c.0.s8 %v1722
        %v1724 = vlaneseq
        %v1725 = vshrl.u32 %v1724, 7
        %v1726 = vsub.s32 %v1723, %v1725
        %v1727 = vrot.slane %v1720, %v1726
        %v1728 = vcombine.low %v1703, %v1711
        %v1729 = vcombine.high %v1703, %v1711
        %v1731 = vunpack.c.l.s4 1934713408
        %v1732 = vunpack.c.0.s8 %v1731
        %v1733 = vlaneseq
        %v1734 = vshrl.u32 %v1733, 7
        %v1735 = vsub.s32 %v1732, %v1734
        %v1736 = vrot.slane %v1728, %v1735
        %v1738 = vunpack.c.l.s4 1934713408
        %v1739 = vunpack.c.0.s8 %v1738
        %v1740 = vlaneseq
        %v1741 = vshrl.u32 %v1740, 7
        %v1742 = vsub.s32 %v1739, %v1741
        %v1743 = vrot.slane %v1729, %v1742
        %v1744 = vcombine.low %v1719, %v1727
        %v1745 = vcombine.high %v1719, %v1727
        %v1747 = vunpack.c.l.s4 1934713408
        %v1748 = vunpack.c.0.s8 %v1747
        %v1749 = vlaneseq
        %v1750 = vshrl.u32 %v1749, 7
        %v1751 = vsub.s32 %v1748, %v1750
        %v1752 = vrot.slane %v1744, %v1751
        %v1754 = vunpack.c.l.s4 1934713408
        %v1755 = vunpack.c.0.s8 %v1754
        %v1756 = vlaneseq
        %v1757 = vshrl.u32 %v1756, 7
        %v1758 = vsub.s32 %v1755, %v1757
        %v1759 = vrot.slane %v1745, %v1758
        %v1760 = vcombine.low %v1736, %v1752
        %v1761 = vcombine.high %v1736, %v1752
        %v1762 = vcombine.low %v1743, %v1759
        %v1763 = vcombine.high %v1743, %v1759
        %v1764 = vcombine.low %v875, %v1011
        %v1766 = vunpack.c.l.s4 1983009808
        %v1767 = vunpack.c.0.s8 %v1766
        %v1768 = vlaneseq
        %v1769 = vshrl.u32 %v1768, 7
        %v1770 = vsub.s32 %v1767, %v1769
        %v1771 = vrot.slane %v1764, %v1770
        %v1772 = vcombine.low %v943, %v1079
        %v1774 = vunpack.c.l.s4 1983009808
        %v1775 = vunpack.c.0.s8 %v1774
        %v1776 = vlaneseq
        %v1777 = vshrl.u32 %v1776, 7
        %v1778 = vsub.s32 %v1775, %v1777
        %v1779 = vrot.slane %v1772, %v1778
        %v1780 = vcombine.low %v1147, %v1283
        %v1782 = vunpack.c.l.s4 1983009808
        %v1783 = vunpack.c.0.s8 %v1782
        %v1784 = vlaneseq
        %v1785 = vshrl.u32 %v1784, 7
        %v1786 = vsub.s32 %v1783, %v1785
        %v1787 = vrot.slane %v1780, %v1786
        %v1788 = vcombine.low %v1215, %v1351
        %v1790 = vunpack.c.l.s4 1983009808
        %v1791 = vunpack.c.0.s8 %v1790
        %v1792 = vlaneseq
        %v1793 = vshrl.u32 %v1792, 7
        %v1794 = vsub.s32 %v1791, %v1793
        %v1795 = vrot.slane %v1788, %v1794
        %v1796 = vcombine.low %v1771, %v1779
        %v1797 = vcombine.high %v1771, %v1779
        %v1799 = vunpack.c.l.s4 1934713408
        %v1800 = vunpack.c.0.s8 %v1799
        %v1801 = vlaneseq
        %v1802 = vshrl.u32 %v1801, 7
        %v1803 = vsub.s32 %v1800, %v1802
        %v1804 = vrot.slane %v1796, %v1803
        %v1806 = vunpack.c.l.s4 1934713408
        %v1807 = vunpack.c.0.s8 %v1806
        %v1808 = vlaneseq
        %v1809 = vshrl.u32 %v1808, 7
        %v1810 = vsub.s32 %v1807, %v1809
        %v1811 = vrot.slane %v1797, %v1810
        %v1812 = vcombine.low %v1787, %v1795
        %v1813 = vcombine.high %v1787, %v1795
        %v1815 = vunpack.c.l.s4 1934713408
        %v1816 = vunpack.c.0.s8 %v1815
        %v1817 = vlaneseq
        %v1818 = vshrl.u32 %v1817, 7
        %v1819 = vsub.s32 %v1816, %v1818
        %v1820 = vrot.slane %v1812, %v1819
        %v1822 = vunpack.c.l.s4 1934713408
        %v1823 = vunpack.c.0.s8 %v1822
        %v1824 = vlaneseq
        %v1825 = vshrl.u32 %v1824, 7
        %v1826 = vsub.s32 %v1823, %v1825
        %v1827 = vrot.slane %v1813, %v1826
        %v1828 = vcombine.low %v1804, %v1820
        %v1829 = vcombine.high %v1804, %v1820
        %v1830 = vcombine.low %v1811, %v1827
        %v1831 = vcombine.high %v1811, %v1827
        %v1832 = vcombine.low %v879, %v1015
        %v1834 = vunpack.c.l.s4 1983009808
        %v1835 = vunpack.c.0.s8 %v1834
        %v1836 = vlaneseq
        %v1837 = vshrl.u32 %v1836, 7
        %v1838 = vsub.s32 %v1835, %v1837
        %v1839 = vrot.slane %v1832, %v1838
        %v1840 = vcombine.low %v947, %v1083
        %v1842 = vunpack.c.l.s4 1983009808
        %v1843 = vunpack.c.0.s8 %v1842
        %v1844 = vlaneseq
        %v1845 = vshrl.u32 %v1844, 7
        %v1846 = vsub.s32 %v1843, %v1845
        %v1847 = vrot.slane %v1840, %v1846
        %v1848 = vcombine.low %v1151, %v1287
        %v1850 = vunpack.c.l.s4 1983009808
        %v1851 = vunpack.c.0.s8 %v1850
        %v1852 = vlaneseq
        %v1853 = vshrl.u32 %v1852, 7
        %v1854 = vsub.s32 %v1851, %v1853
        %v1855 = vrot.slane %v1848, %v1854
        %v1856 = vcombine.low %v1219, %v1355
        %v1858 = vunpack.c.l.s4 1983009808
        %v1859 = vunpack.c.0.s8 %v1858
        %v1860 = vlaneseq
        %v1861 = vshrl.u32 %v1860, 7
        %v1862 = vsub.s32 %v1859, %v1861
        %v1863 = vrot.slane %v1856, %v1862
        %v1864 = vcombine.low %v1839, %v1847
        %v1865 = vcombine.high %v1839, %v1847
        %v1867 = vunpack.c.l.s4 1934713408
        %v1868 = vunpack.c.0.s8 %v1867
        %v1869 = vlaneseq
        %v1870 = vshrl.u32 %v1869, 7
        %v1871 = vsub.s32 %v1868, %v1870
        %v1872 = vrot.slane %v1864, %v1871
        %v1874 = vunpack.c.l.s4 1934713408
        %v1875 = vunpack.c.0.s8 %v1874
        %v1876 = vlaneseq
        %v1877 = vshrl.u32 %v1876, 7
        %v1878 = vsub.s32 %v1875, %v1877
        %v1879 = vrot.slane %v1865, %v1878
        %v1880 = vcombine.low %v1855, %v1863
        %v1881 = vcombine.high %v1855, %v1863
        %v1883 = vunpack.c.l.s4 1934713408
        %v1884 = vunpack.c.0.s8 %v1883
        %v1885 = vlaneseq
        %v1886 = vshrl.u32 %v1885, 7
        %v1887 = vsub.s32 %v1884, %v1886
        %v1888 = vrot.slane %v1880, %v1887
        %v1890 = vunpack.c.l.s4 1934713408
        %v1891 = vunpack.c.0.s8 %v1890
        %v1892 = vlaneseq
        %v1893 = vshrl.u32 %v1892, 7
        %v1894 = vsub.s32 %v1891, %v1893
        %v1895 = vrot.slane %v1881, %v1894
        %v1896 = vcombine.low %v1872, %v1888
        %v1897 = vcombine.high %v1872, %v1888
        %v1898 = vcombine.low %v1879, %v1895
        %v1899 = vcombine.high %v1879, %v1895
        %v1900 = vpack.c.bf16 %v1420, %v1420
        %v1901 = vpack.c.bf16 %v1421, %v1421
        %v1902 = vpack.c.bf16 %v1422, %v1422
        %v1903 = vpack.c.bf16 %v1423, %v1423
        %v1904 = vpack.c.bf16 %v1488, %v1488
        %v1905 = vpack.c.bf16 %v1489, %v1489
        %v1906 = vpack.c.bf16 %v1490, %v1490
        %v1907 = vpack.c.bf16 %v1491, %v1491
        %v1908 = vpack.c.bf16 %v1556, %v1556
        %v1909 = vpack.c.bf16 %v1557, %v1557
        %v1910 = vpack.c.bf16 %v1558, %v1558
        %v1911 = vpack.c.bf16 %v1559, %v1559
        %v1912 = vpack.c.bf16 %v1624, %v1624
        %v1913 = vpack.c.bf16 %v1625, %v1625
        %v1914 = vpack.c.bf16 %v1626, %v1626
        %v1915 = vpack.c.bf16 %v1627, %v1627
        %v1916 = vpack.c.bf16 %v1692, %v1692
        %v1917 = vpack.c.bf16 %v1693, %v1693
        %v1918 = vpack.c.bf16 %v1694, %v1694
        %v1919 = vpack.c.bf16 %v1695, %v1695
        %v1920 = vpack.c.bf16 %v1760, %v1760
        %v1921 = vpack.c.bf16 %v1761, %v1761
        %v1922 = vpack.c.bf16 %v1762, %v1762
        %v1923 = vpack.c.bf16 %v1763, %v1763
        %v1924 = vpack.c.bf16 %v1828, %v1828
        %v1925 = vpack.c.bf16 %v1829, %v1829
        %v1926 = vpack.c.bf16 %v1830, %v1830
        %v1927 = vpack.c.bf16 %v1831, %v1831
        %v1928 = vpack.c.bf16 %v1896, %v1896
        %v1929 = vpack.c.bf16 %v1897, %v1897
        %v1930 = vpack.c.bf16 %v1898, %v1898
        %v1931 = vpack.c.bf16 %v1899, %v1899
        %1940 = vrot.lane.b32.xlu0 %v702, 120
        %v1941 = vpop.permute.xlu0 %1940
        %1942 = vrot.lane.b32.xlu0 %v705, 120
        %v1943 = vpop.permute.xlu0 %1942
        %1944 = vrot.lane.b32.xlu0 %v710, 120
        %v1945 = vpop.permute.xlu0 %1944
        %1946 = vrot.lane.b32.xlu0 %v713, 120
        %v1947 = vpop.permute.xlu0 %1946
        %1948 = vrot.lane.b32.xlu0 %v718, 120
        %v1949 = vpop.permute.xlu0 %1948
        %1950 = vrot.lane.b32.xlu0 %v721, 120
        %v1951 = vpop.permute.xlu0 %1950
        %1952 = vrot.lane.b32.xlu0 %v726, 120
        %v1953 = vpop.permute.xlu0 %1952
        %1954 = vrot.lane.b32.xlu0 %v729, 120
        %v1955 = vpop.permute.xlu0 %1954
        %1964 = vrot.lane.b32.xlu0 %v702, 112
        %v1965 = vpop.permute.xlu0 %1964
        %1966 = vrot.lane.b32.xlu0 %v705, 112
        %v1967 = vpop.permute.xlu0 %1966
        %1968 = vrot.lane.b32.xlu0 %v710, 112
        %v1969 = vpop.permute.xlu0 %1968
        %1970 = vrot.lane.b32.xlu0 %v713, 112
        %v1971 = vpop.permute.xlu0 %1970
        %1972 = vrot.lane.b32.xlu0 %v718, 112
        %v1973 = vpop.permute.xlu0 %1972
        %1974 = vrot.lane.b32.xlu0 %v721, 112
        %v1975 = vpop.permute.xlu0 %1974
        %1976 = vrot.lane.b32.xlu0 %v726, 112
        %v1977 = vpop.permute.xlu0 %1976
        %1978 = vrot.lane.b32.xlu0 %v729, 112
        %v1979 = vpop.permute.xlu0 %1978
        %1988 = vrot.lane.b32.xlu0 %v702, 104
        %v1989 = vpop.permute.xlu0 %1988
        %1990 = vrot.lane.b32.xlu0 %v705, 104
        %v1991 = vpop.permute.xlu0 %1990
        %1992 = vrot.lane.b32.xlu0 %v710, 104
        %v1993 = vpop.permute.xlu0 %1992
        %1994 = vrot.lane.b32.xlu0 %v713, 104
        %v1995 = vpop.permute.xlu0 %1994
        %1996 = vrot.lane.b32.xlu0 %v718, 104
        %v1997 = vpop.permute.xlu0 %1996
        %1998 = vrot.lane.b32.xlu0 %v721, 104
        %v1999 = vpop.permute.xlu0 %1998
        %2000 = vrot.lane.b32.xlu0 %v726, 104
        %v2001 = vpop.permute.xlu0 %2000
        %2002 = vrot.lane.b32.xlu0 %v729, 104
        %v2003 = vpop.permute.xlu0 %2002
        %v2012 = vcombine.low %v702, %v1965
        %v2013 = vcombine.high %v702, %v1965
        %v2015 = vunpack.c.l.s4 1983009808
        %v2016 = vunpack.c.0.s8 %v2015
        %v2017 = vlaneseq
        %v2018 = vshrl.u32 %v2017, 7
        %v2019 = vsub.s32 %v2016, %v2018
        %v2020 = vrot.slane %v2012, %v2019
        %v2022 = vunpack.c.l.s4 1983009808
        %v2023 = vunpack.c.0.s8 %v2022
        %v2024 = vlaneseq
        %v2025 = vshrl.u32 %v2024, 7
        %v2026 = vsub.s32 %v2023, %v2025
        %v2027 = vrot.slane %v2013, %v2026
        %v2028 = vcombine.low %v1941, %v1989
        %v2029 = vcombine.high %v1941, %v1989
        %v2031 = vunpack.c.l.s4 1983009808
        %v2032 = vunpack.c.0.s8 %v2031
        %v2033 = vlaneseq
        %v2034 = vshrl.u32 %v2033, 7
        %v2035 = vsub.s32 %v2032, %v2034
        %v2036 = vrot.slane %v2028, %v2035
        %v2038 = vunpack.c.l.s4 1983009808
        %v2039 = vunpack.c.0.s8 %v2038
        %v2040 = vlaneseq
        %v2041 = vshrl.u32 %v2040, 7
        %v2042 = vsub.s32 %v2039, %v2041
        %v2043 = vrot.slane %v2029, %v2042
        %v2044 = vcombine.low %v2020, %v2036
        %v2045 = vcombine.high %v2020, %v2036
        %v2047 = vunpack.c.l.s4 1934713408
        %v2048 = vunpack.c.0.s8 %v2047
        %v2049 = vlaneseq
        %v2050 = vshrl.u32 %v2049, 7
        %v2051 = vsub.s32 %v2048, %v2050
        %v2052 = vrot.slane %v2044, %v2051
        %v2054 = vunpack.c.l.s4 1934713408
        %v2055 = vunpack.c.0.s8 %v2054
        %v2056 = vlaneseq
        %v2057 = vshrl.u32 %v2056, 7
        %v2058 = vsub.s32 %v2055, %v2057
        %v2059 = vrot.slane %v2045, %v2058
        %v2060 = vcombine.low %v2027, %v2043
        %v2061 = vcombine.high %v2027, %v2043
        %v2063 = vunpack.c.l.s4 1934713408
        %v2064 = vunpack.c.0.s8 %v2063
        %v2065 = vlaneseq
        %v2066 = vshrl.u32 %v2065, 7
        %v2067 = vsub.s32 %v2064, %v2066
        %v2068 = vrot.slane %v2060, %v2067
        %v2070 = vunpack.c.l.s4 1934713408
        %v2071 = vunpack.c.0.s8 %v2070
        %v2072 = vlaneseq
        %v2073 = vshrl.u32 %v2072, 7
        %v2074 = vsub.s32 %v2071, %v2073
        %v2075 = vrot.slane %v2061, %v2074
        %v2076 = vcombine.high %v2052, 0.0
        %v2077 = vcombine.high %v2059, 0.0
        %v2078 = vcombine.high %v2068, 0.0
        %v2079 = vcombine.high %v2075, 0.0
        %v2080 = vcombine.low %v705, %v1967
        %v2081 = vcombine.high %v705, %v1967
        %v2083 = vunpack.c.l.s4 1983009808
        %v2084 = vunpack.c.0.s8 %v2083
        %v2085 = vlaneseq
        %v2086 = vshrl.u32 %v2085, 7
        %v2087 = vsub.s32 %v2084, %v2086
        %v2088 = vrot.slane %v2080, %v2087
        %v2090 = vunpack.c.l.s4 1983009808
        %v2091 = vunpack.c.0.s8 %v2090
        %v2092 = vlaneseq
        %v2093 = vshrl.u32 %v2092, 7
        %v2094 = vsub.s32 %v2091, %v2093
        %v2095 = vrot.slane %v2081, %v2094
        %v2096 = vcombine.low %v1943, %v1991
        %v2097 = vcombine.high %v1943, %v1991
        %v2099 = vunpack.c.l.s4 1983009808
        %v2100 = vunpack.c.0.s8 %v2099
        %v2101 = vlaneseq
        %v2102 = vshrl.u32 %v2101, 7
        %v2103 = vsub.s32 %v2100, %v2102
        %v2104 = vrot.slane %v2096, %v2103
        %v2106 = vunpack.c.l.s4 1983009808
        %v2107 = vunpack.c.0.s8 %v2106
        %v2108 = vlaneseq
        %v2109 = vshrl.u32 %v2108, 7
        %v2110 = vsub.s32 %v2107, %v2109
        %v2111 = vrot.slane %v2097, %v2110
        %v2112 = vcombine.low %v2088, %v2104
        %v2113 = vcombine.high %v2088, %v2104
        %v2115 = vunpack.c.l.s4 1934713408
        %v2116 = vunpack.c.0.s8 %v2115
        %v2117 = vlaneseq
        %v2118 = vshrl.u32 %v2117, 7
        %v2119 = vsub.s32 %v2116, %v2118
        %v2120 = vrot.slane %v2112, %v2119
        %v2122 = vunpack.c.l.s4 1934713408
        %v2123 = vunpack.c.0.s8 %v2122
        %v2124 = vlaneseq
        %v2125 = vshrl.u32 %v2124, 7
        %v2126 = vsub.s32 %v2123, %v2125
        %v2127 = vrot.slane %v2113, %v2126
        %v2128 = vcombine.low %v2095, %v2111
        %v2129 = vcombine.high %v2095, %v2111
        %v2131 = vunpack.c.l.s4 1934713408
        %v2132 = vunpack.c.0.s8 %v2131
        %v2133 = vlaneseq
        %v2134 = vshrl.u32 %v2133, 7
        %v2135 = vsub.s32 %v2132, %v2134
        %v2136 = vrot.slane %v2128, %v2135
        %v2138 = vunpack.c.l.s4 1934713408
        %v2139 = vunpack.c.0.s8 %v2138
        %v2140 = vlaneseq
        %v2141 = vshrl.u32 %v2140, 7
        %v2142 = vsub.s32 %v2139, %v2141
        %v2143 = vrot.slane %v2129, %v2142
        %v2144 = vcombine.high %v2120, 0.0
        %v2145 = vcombine.high %v2127, 0.0
        %v2146 = vcombine.high %v2136, 0.0
        %v2147 = vcombine.high %v2143, 0.0
        %v2148 = vcombine.low %v710, %v1969
        %v2149 = vcombine.high %v710, %v1969
        %v2151 = vunpack.c.l.s4 1983009808
        %v2152 = vunpack.c.0.s8 %v2151
        %v2153 = vlaneseq
        %v2154 = vshrl.u32 %v2153, 7
        %v2155 = vsub.s32 %v2152, %v2154
        %v2156 = vrot.slane %v2148, %v2155
        %v2158 = vunpack.c.l.s4 1983009808
        %v2159 = vunpack.c.0.s8 %v2158
        %v2160 = vlaneseq
        %v2161 = vshrl.u32 %v2160, 7
        %v2162 = vsub.s32 %v2159, %v2161
        %v2163 = vrot.slane %v2149, %v2162
        %v2164 = vcombine.low %v1945, %v1993
        %v2165 = vcombine.high %v1945, %v1993
        %v2167 = vunpack.c.l.s4 1983009808
        %v2168 = vunpack.c.0.s8 %v2167
        %v2169 = vlaneseq
        %v2170 = vshrl.u32 %v2169, 7
        %v2171 = vsub.s32 %v2168, %v2170
        %v2172 = vrot.slane %v2164, %v2171
        %v2174 = vunpack.c.l.s4 1983009808
        %v2175 = vunpack.c.0.s8 %v2174
        %v2176 = vlaneseq
        %v2177 = vshrl.u32 %v2176, 7
        %v2178 = vsub.s32 %v2175, %v2177
        %v2179 = vrot.slane %v2165, %v2178
        %v2180 = vcombine.low %v2156, %v2172
        %v2181 = vcombine.high %v2156, %v2172
        %v2183 = vunpack.c.l.s4 1934713408
        %v2184 = vunpack.c.0.s8 %v2183
        %v2185 = vlaneseq
        %v2186 = vshrl.u32 %v2185, 7
        %v2187 = vsub.s32 %v2184, %v2186
        %v2188 = vrot.slane %v2180, %v2187
        %v2190 = vunpack.c.l.s4 1934713408
        %v2191 = vunpack.c.0.s8 %v2190
        %v2192 = vlaneseq
        %v2193 = vshrl.u32 %v2192, 7
        %v2194 = vsub.s32 %v2191, %v2193
        %v2195 = vrot.slane %v2181, %v2194
        %v2196 = vcombine.low %v2163, %v2179
        %v2197 = vcombine.high %v2163, %v2179
        %v2199 = vunpack.c.l.s4 1934713408
        %v2200 = vunpack.c.0.s8 %v2199
        %v2201 = vlaneseq
        %v2202 = vshrl.u32 %v2201, 7
        %v2203 = vsub.s32 %v2200, %v2202
        %v2204 = vrot.slane %v2196, %v2203
        %v2206 = vunpack.c.l.s4 1934713408
        %v2207 = vunpack.c.0.s8 %v2206
        %v2208 = vlaneseq
        %v2209 = vshrl.u32 %v2208, 7
        %v2210 = vsub.s32 %v2207, %v2209
        %v2211 = vrot.slane %v2197, %v2210
        %v2212 = vcombine.high %v2188, 0.0
        %v2213 = vcombine.high %v2195, 0.0
        %v2214 = vcombine.high %v2204, 0.0
        %v2215 = vcombine.high %v2211, 0.0
        %v2216 = vcombine.low %v713, %v1971
        %v2217 = vcombine.high %v713, %v1971
        %v2219 = vunpack.c.l.s4 1983009808
        %v2220 = vunpack.c.0.s8 %v2219
        %v2221 = vlaneseq
        %v2222 = vshrl.u32 %v2221, 7
        %v2223 = vsub.s32 %v2220, %v2222
        %v2224 = vrot.slane %v2216, %v2223
        %v2226 = vunpack.c.l.s4 1983009808
        %v2227 = vunpack.c.0.s8 %v2226
        %v2228 = vlaneseq
        %v2229 = vshrl.u32 %v2228, 7
        %v2230 = vsub.s32 %v2227, %v2229
        %v2231 = vrot.slane %v2217, %v2230
        %v2232 = vcombine.low %v1947, %v1995
        %v2233 = vcombine.high %v1947, %v1995
        %v2235 = vunpack.c.l.s4 1983009808
        %v2236 = vunpack.c.0.s8 %v2235
        %v2237 = vlaneseq
        %v2238 = vshrl.u32 %v2237, 7
        %v2239 = vsub.s32 %v2236, %v2238
        %v2240 = vrot.slane %v2232, %v2239
        %v2242 = vunpack.c.l.s4 1983009808
        %v2243 = vunpack.c.0.s8 %v2242
        %v2244 = vlaneseq
        %v2245 = vshrl.u32 %v2244, 7
        %v2246 = vsub.s32 %v2243, %v2245
        %v2247 = vrot.slane %v2233, %v2246
        %v2248 = vcombine.low %v2224, %v2240
        %v2249 = vcombine.high %v2224, %v2240
        %v2251 = vunpack.c.l.s4 1934713408
        %v2252 = vunpack.c.0.s8 %v2251
        %v2253 = vlaneseq
        %v2254 = vshrl.u32 %v2253, 7
        %v2255 = vsub.s32 %v2252, %v2254
        %v2256 = vrot.slane %v2248, %v2255
        %v2258 = vunpack.c.l.s4 1934713408
        %v2259 = vunpack.c.0.s8 %v2258
        %v2260 = vlaneseq
        %v2261 = vshrl.u32 %v2260, 7
        %v2262 = vsub.s32 %v2259, %v2261
        %v2263 = vrot.slane %v2249, %v2262
        %v2264 = vcombine.low %v2231, %v2247
        %v2265 = vcombine.high %v2231, %v2247
        %v2267 = vunpack.c.l.s4 1934713408
        %v2268 = vunpack.c.0.s8 %v2267
        %v2269 = vlaneseq
        %v2270 = vshrl.u32 %v2269, 7
        %v2271 = vsub.s32 %v2268, %v2270
        %v2272 = vrot.slane %v2264, %v2271
        %v2274 = vunpack.c.l.s4 1934713408
        %v2275 = vunpack.c.0.s8 %v2274
        %v2276 = vlaneseq
        %v2277 = vshrl.u32 %v2276, 7
        %v2278 = vsub.s32 %v2275, %v2277
        %v2279 = vrot.slane %v2265, %v2278
        %v2280 = vcombine.high %v2256, 0.0
        %v2281 = vcombine.high %v2263, 0.0
        %v2282 = vcombine.high %v2272, 0.0
        %v2283 = vcombine.high %v2279, 0.0
        %v2284 = vcombine.low %v718, %v1973
        %v2285 = vcombine.high %v718, %v1973
        %v2287 = vunpack.c.l.s4 1983009808
        %v2288 = vunpack.c.0.s8 %v2287
        %v2289 = vlaneseq
        %v2290 = vshrl.u32 %v2289, 7
        %v2291 = vsub.s32 %v2288, %v2290
        %v2292 = vrot.slane %v2284, %v2291
        %v2294 = vunpack.c.l.s4 1983009808
        %v2295 = vunpack.c.0.s8 %v2294
        %v2296 = vlaneseq
        %v2297 = vshrl.u32 %v2296, 7
        %v2298 = vsub.s32 %v2295, %v2297
        %v2299 = vrot.slane %v2285, %v2298
        %v2300 = vcombine.low %v1949, %v1997
        %v2301 = vcombine.high %v1949, %v1997
        %v2303 = vunpack.c.l.s4 1983009808
        %v2304 = vunpack.c.0.s8 %v2303
        %v2305 = vlaneseq
        %v2306 = vshrl.u32 %v2305, 7
        %v2307 = vsub.s32 %v2304, %v2306
        %v2308 = vrot.slane %v2300, %v2307
        %v2310 = vunpack.c.l.s4 1983009808
        %v2311 = vunpack.c.0.s8 %v2310
        %v2312 = vlaneseq
        %v2313 = vshrl.u32 %v2312, 7
        %v2314 = vsub.s32 %v2311, %v2313
        %v2315 = vrot.slane %v2301, %v2314
        %v2316 = vcombine.low %v2292, %v2308
        %v2317 = vcombine.high %v2292, %v2308
        %v2319 = vunpack.c.l.s4 1934713408
        %v2320 = vunpack.c.0.s8 %v2319
        %v2321 = vlaneseq
        %v2322 = vshrl.u32 %v2321, 7
        %v2323 = vsub.s32 %v2320, %v2322
        %v2324 = vrot.slane %v2316, %v2323
        %v2326 = vunpack.c.l.s4 1934713408
        %v2327 = vunpack.c.0.s8 %v2326
        %v2328 = vlaneseq
        %v2329 = vshrl.u32 %v2328, 7
        %v2330 = vsub.s32 %v2327, %v2329
        %v2331 = vrot.slane %v2317, %v2330
        %v2332 = vcombine.low %v2299, %v2315
        %v2333 = vcombine.high %v2299, %v2315
        %v2335 = vunpack.c.l.s4 1934713408
        %v2336 = vunpack.c.0.s8 %v2335
        %v2337 = vlaneseq
        %v2338 = vshrl.u32 %v2337, 7
        %v2339 = vsub.s32 %v2336, %v2338
        %v2340 = vrot.slane %v2332, %v2339
        %v2342 = vunpack.c.l.s4 1934713408
        %v2343 = vunpack.c.0.s8 %v2342
        %v2344 = vlaneseq
        %v2345 = vshrl.u32 %v2344, 7
        %v2346 = vsub.s32 %v2343, %v2345
        %v2347 = vrot.slane %v2333, %v2346
        %v2348 = vcombine.high %v2324, 0.0
        %v2349 = vcombine.high %v2331, 0.0
        %v2350 = vcombine.high %v2340, 0.0
        %v2351 = vcombine.high %v2347, 0.0
        %v2352 = vcombine.low %v721, %v1975
        %v2353 = vcombine.high %v721, %v1975
        %v2355 = vunpack.c.l.s4 1983009808
        %v2356 = vunpack.c.0.s8 %v2355
        %v2357 = vlaneseq
        %v2358 = vshrl.u32 %v2357, 7
        %v2359 = vsub.s32 %v2356, %v2358
        %v2360 = vrot.slane %v2352, %v2359
        %v2362 = vunpack.c.l.s4 1983009808
        %v2363 = vunpack.c.0.s8 %v2362
        %v2364 = vlaneseq
        %v2365 = vshrl.u32 %v2364, 7
        %v2366 = vsub.s32 %v2363, %v2365
        %v2367 = vrot.slane %v2353, %v2366
        %v2368 = vcombine.low %v1951, %v1999
        %v2369 = vcombine.high %v1951, %v1999
        %v2371 = vunpack.c.l.s4 1983009808
        %v2372 = vunpack.c.0.s8 %v2371
        %v2373 = vlaneseq
        %v2374 = vshrl.u32 %v2373, 7
        %v2375 = vsub.s32 %v2372, %v2374
        %v2376 = vrot.slane %v2368, %v2375
        %v2378 = vunpack.c.l.s4 1983009808
        %v2379 = vunpack.c.0.s8 %v2378
        %v2380 = vlaneseq
        %v2381 = vshrl.u32 %v2380, 7
        %v2382 = vsub.s32 %v2379, %v2381
        %v2383 = vrot.slane %v2369, %v2382
        %v2384 = vcombine.low %v2360, %v2376
        %v2385 = vcombine.high %v2360, %v2376
        %v2387 = vunpack.c.l.s4 1934713408
        %v2388 = vunpack.c.0.s8 %v2387
        %v2389 = vlaneseq
        %v2390 = vshrl.u32 %v2389, 7
        %v2391 = vsub.s32 %v2388, %v2390
        %v2392 = vrot.slane %v2384, %v2391
        %v2394 = vunpack.c.l.s4 1934713408
        %v2395 = vunpack.c.0.s8 %v2394
        %v2396 = vlaneseq
        %v2397 = vshrl.u32 %v2396, 7
        %v2398 = vsub.s32 %v2395, %v2397
        %v2399 = vrot.slane %v2385, %v2398
        %v2400 = vcombine.low %v2367, %v2383
        %v2401 = vcombine.high %v2367, %v2383
        %v2403 = vunpack.c.l.s4 1934713408
        %v2404 = vunpack.c.0.s8 %v2403
        %v2405 = vlaneseq
        %v2406 = vshrl.u32 %v2405, 7
        %v2407 = vsub.s32 %v2404, %v2406
        %v2408 = vrot.slane %v2400, %v2407
        %v2410 = vunpack.c.l.s4 1934713408
        %v2411 = vunpack.c.0.s8 %v2410
        %v2412 = vlaneseq
        %v2413 = vshrl.u32 %v2412, 7
        %v2414 = vsub.s32 %v2411, %v2413
        %v2415 = vrot.slane %v2401, %v2414
        %v2416 = vcombine.high %v2392, 0.0
        %v2417 = vcombine.high %v2399, 0.0
        %v2418 = vcombine.high %v2408, 0.0
        %v2419 = vcombine.high %v2415, 0.0
        %v2420 = vcombine.low %v726, %v1977
        %v2421 = vcombine.high %v726, %v1977
        %v2423 = vunpack.c.l.s4 1983009808
        %v2424 = vunpack.c.0.s8 %v2423
        %v2425 = vlaneseq
        %v2426 = vshrl.u32 %v2425, 7
        %v2427 = vsub.s32 %v2424, %v2426
        %v2428 = vrot.slane %v2420, %v2427
        %v2430 = vunpack.c.l.s4 1983009808
        %v2431 = vunpack.c.0.s8 %v2430
        %v2432 = vlaneseq
        %v2433 = vshrl.u32 %v2432, 7
        %v2434 = vsub.s32 %v2431, %v2433
        %v2435 = vrot.slane %v2421, %v2434
        %v2436 = vcombine.low %v1953, %v2001
        %v2437 = vcombine.high %v1953, %v2001
        %v2439 = vunpack.c.l.s4 1983009808
        %v2440 = vunpack.c.0.s8 %v2439
        %v2441 = vlaneseq
        %v2442 = vshrl.u32 %v2441, 7
        %v2443 = vsub.s32 %v2440, %v2442
        %v2444 = vrot.slane %v2436, %v2443
        %v2446 = vunpack.c.l.s4 1983009808
        %v2447 = vunpack.c.0.s8 %v2446
        %v2448 = vlaneseq
        %v2449 = vshrl.u32 %v2448, 7
        %v2450 = vsub.s32 %v2447, %v2449
        %v2451 = vrot.slane %v2437, %v2450
        %v2452 = vcombine.low %v2428, %v2444
        %v2453 = vcombine.high %v2428, %v2444
        %v2455 = vunpack.c.l.s4 1934713408
        %v2456 = vunpack.c.0.s8 %v2455
        %v2457 = vlaneseq
        %v2458 = vshrl.u32 %v2457, 7
        %v2459 = vsub.s32 %v2456, %v2458
        %v2460 = vrot.slane %v2452, %v2459
        %v2462 = vunpack.c.l.s4 1934713408
        %v2463 = vunpack.c.0.s8 %v2462
        %v2464 = vlaneseq
        %v2465 = vshrl.u32 %v2464, 7
        %v2466 = vsub.s32 %v2463, %v2465
        %v2467 = vrot.slane %v2453, %v2466
        %v2468 = vcombine.low %v2435, %v2451
        %v2469 = vcombine.high %v2435, %v2451
        %v2471 = vunpack.c.l.s4 1934713408
        %v2472 = vunpack.c.0.s8 %v2471
        %v2473 = vlaneseq
        %v2474 = vshrl.u32 %v2473, 7
        %v2475 = vsub.s32 %v2472, %v2474
        %v2476 = vrot.slane %v2468, %v2475
        %v2478 = vunpack.c.l.s4 1934713408
        %v2479 = vunpack.c.0.s8 %v2478
        %v2480 = vlaneseq
        %v2481 = vshrl.u32 %v2480, 7
        %v2482 = vsub.s32 %v2479, %v2481
        %v2483 = vrot.slane %v2469, %v2482
        %v2484 = vcombine.high %v2460, 0.0
        %v2485 = vcombine.high %v2467, 0.0
        %v2486 = vcombine.high %v2476, 0.0
        %v2487 = vcombine.high %v2483, 0.0
        %v2488 = vcombine.low %v729, %v1979
        %v2489 = vcombine.high %v729, %v1979
        %v2491 = vunpack.c.l.s4 1983009808
        %v2492 = vunpack.c.0.s8 %v2491
        %v2493 = vlaneseq
        %v2494 = vshrl.u32 %v2493, 7
        %v2495 = vsub.s32 %v2492, %v2494
        %v2496 = vrot.slane %v2488, %v2495
        %v2498 = vunpack.c.l.s4 1983009808
        %v2499 = vunpack.c.0.s8 %v2498
        %v2500 = vlaneseq
        %v2501 = vshrl.u32 %v2500, 7
        %v2502 = vsub.s32 %v2499, %v2501
        %v2503 = vrot.slane %v2489, %v2502
        %v2504 = vcombine.low %v1955, %v2003
        %v2505 = vcombine.high %v1955, %v2003
        %v2507 = vunpack.c.l.s4 1983009808
        %v2508 = vunpack.c.0.s8 %v2507
        %v2509 = vlaneseq
        %v2510 = vshrl.u32 %v2509, 7
        %v2511 = vsub.s32 %v2508, %v2510
        %v2512 = vrot.slane %v2504, %v2511
        %v2514 = vunpack.c.l.s4 1983009808
        %v2515 = vunpack.c.0.s8 %v2514
        %v2516 = vlaneseq
        %v2517 = vshrl.u32 %v2516, 7
        %v2518 = vsub.s32 %v2515, %v2517
        %v2519 = vrot.slane %v2505, %v2518
        %v2520 = vcombine.low %v2496, %v2512
        %v2521 = vcombine.high %v2496, %v2512
        %v2523 = vunpack.c.l.s4 1934713408
        %v2524 = vunpack.c.0.s8 %v2523
        %v2525 = vlaneseq
        %v2526 = vshrl.u32 %v2525, 7
        %v2527 = vsub.s32 %v2524, %v2526
        %v2528 = vrot.slane %v2520, %v2527
        %v2530 = vunpack.c.l.s4 1934713408
        %v2531 = vunpack.c.0.s8 %v2530
        %v2532 = vlaneseq
        %v2533 = vshrl.u32 %v2532, 7
        %v2534 = vsub.s32 %v2531, %v2533
        %v2535 = vrot.slane %v2521, %v2534
        %v2536 = vcombine.low %v2503, %v2519
        %v2537 = vcombine.high %v2503, %v2519
        %v2539 = vunpack.c.l.s4 1934713408
        %v2540 = vunpack.c.0.s8 %v2539
        %v2541 = vlaneseq
        %v2542 = vshrl.u32 %v2541, 7
        %v2543 = vsub.s32 %v2540, %v2542
        %v2544 = vrot.slane %v2536, %v2543
        %v2546 = vunpack.c.l.s4 1934713408
        %v2547 = vunpack.c.0.s8 %v2546
        %v2548 = vlaneseq
        %v2549 = vshrl.u32 %v2548, 7
        %v2550 = vsub.s32 %v2547, %v2549
        %v2551 = vrot.slane %v2537, %v2550
        %v2552 = vcombine.high %v2528, 0.0
        %v2553 = vcombine.high %v2535, 0.0
        %v2554 = vcombine.high %v2544, 0.0
        %v2555 = vcombine.high %v2551, 0.0
        %v2556 = vcombine.low %v2052, %v2188
        %v2558 = vunpack.c.l.s4 1983009808
        %v2559 = vunpack.c.0.s8 %v2558
        %v2560 = vlaneseq
        %v2561 = vshrl.u32 %v2560, 7
        %v2562 = vsub.s32 %v2559, %v2561
        %v2563 = vrot.slane %v2556, %v2562
        %v2564 = vcombine.low %v2120, %v2256
        %v2566 = vunpack.c.l.s4 1983009808
        %v2567 = vunpack.c.0.s8 %v2566
        %v2568 = vlaneseq
        %v2569 = vshrl.u32 %v2568, 7
        %v2570 = vsub.s32 %v2567, %v2569
        %v2571 = vrot.slane %v2564, %v2570
        %v2572 = vcombine.low %v2324, %v2460
        %v2574 = vunpack.c.l.s4 1983009808
        %v2575 = vunpack.c.0.s8 %v2574
        %v2576 = vlaneseq
        %v2577 = vshrl.u32 %v2576, 7
        %v2578 = vsub.s32 %v2575, %v2577
        %v2579 = vrot.slane %v2572, %v2578
        %v2580 = vcombine.low %v2392, %v2528
        %v2582 = vunpack.c.l.s4 1983009808
        %v2583 = vunpack.c.0.s8 %v2582
        %v2584 = vlaneseq
        %v2585 = vshrl.u32 %v2584, 7
        %v2586 = vsub.s32 %v2583, %v2585
        %v2587 = vrot.slane %v2580, %v2586
        %v2588 = vcombine.low %v2563, %v2571
        %v2589 = vcombine.high %v2563, %v2571
        %v2591 = vunpack.c.l.s4 1934713408
        %v2592 = vunpack.c.0.s8 %v2591
        %v2593 = vlaneseq
        %v2594 = vshrl.u32 %v2593, 7
        %v2595 = vsub.s32 %v2592, %v2594
        %v2596 = vrot.slane %v2588, %v2595
        %v2598 = vunpack.c.l.s4 1934713408
        %v2599 = vunpack.c.0.s8 %v2598
        %v2600 = vlaneseq
        %v2601 = vshrl.u32 %v2600, 7
        %v2602 = vsub.s32 %v2599, %v2601
        %v2603 = vrot.slane %v2589, %v2602
        %v2604 = vcombine.low %v2579, %v2587
        %v2605 = vcombine.high %v2579, %v2587
        %v2607 = vunpack.c.l.s4 1934713408
        %v2608 = vunpack.c.0.s8 %v2607
        %v2609 = vlaneseq
        %v2610 = vshrl.u32 %v2609, 7
        %v2611 = vsub.s32 %v2608, %v2610
        %v2612 = vrot.slane %v2604, %v2611
        %v2614 = vunpack.c.l.s4 1934713408
        %v2615 = vunpack.c.0.s8 %v2614
        %v2616 = vlaneseq
        %v2617 = vshrl.u32 %v2616, 7
        %v2618 = vsub.s32 %v2615, %v2617
        %v2619 = vrot.slane %v2605, %v2618
        %v2620 = vcombine.low %v2596, %v2612
        %v2621 = vcombine.high %v2596, %v2612
        %v2622 = vcombine.low %v2603, %v2619
        %v2623 = vcombine.high %v2603, %v2619
        %v2624 = vcombine.low %v2076, %v2212
        %v2626 = vunpack.c.l.s4 1983009808
        %v2627 = vunpack.c.0.s8 %v2626
        %v2628 = vlaneseq
        %v2629 = vshrl.u32 %v2628, 7
        %v2630 = vsub.s32 %v2627, %v2629
        %v2631 = vrot.slane %v2624, %v2630
        %v2632 = vcombine.low %v2144, %v2280
        %v2634 = vunpack.c.l.s4 1983009808
        %v2635 = vunpack.c.0.s8 %v2634
        %v2636 = vlaneseq
        %v2637 = vshrl.u32 %v2636, 7
        %v2638 = vsub.s32 %v2635, %v2637
        %v2639 = vrot.slane %v2632, %v2638
        %v2640 = vcombine.low %v2348, %v2484
        %v2642 = vunpack.c.l.s4 1983009808
        %v2643 = vunpack.c.0.s8 %v2642
        %v2644 = vlaneseq
        %v2645 = vshrl.u32 %v2644, 7
        %v2646 = vsub.s32 %v2643, %v2645
        %v2647 = vrot.slane %v2640, %v2646
        %v2648 = vcombine.low %v2416, %v2552
        %v2650 = vunpack.c.l.s4 1983009808
        %v2651 = vunpack.c.0.s8 %v2650
        %v2652 = vlaneseq
        %v2653 = vshrl.u32 %v2652, 7
        %v2654 = vsub.s32 %v2651, %v2653
        %v2655 = vrot.slane %v2648, %v2654
        %v2656 = vcombine.low %v2631, %v2639
        %v2657 = vcombine.high %v2631, %v2639
        %v2659 = vunpack.c.l.s4 1934713408
        %v2660 = vunpack.c.0.s8 %v2659
        %v2661 = vlaneseq
        %v2662 = vshrl.u32 %v2661, 7
        %v2663 = vsub.s32 %v2660, %v2662
        %v2664 = vrot.slane %v2656, %v2663
        %v2666 = vunpack.c.l.s4 1934713408
        %v2667 = vunpack.c.0.s8 %v2666
        %v2668 = vlaneseq
        %v2669 = vshrl.u32 %v2668, 7
        %v2670 = vsub.s32 %v2667, %v2669
        %v2671 = vrot.slane %v2657, %v2670
        %v2672 = vcombine.low %v2647, %v2655
        %v2673 = vcombine.high %v2647, %v2655
        %v2675 = vunpack.c.l.s4 1934713408
        %v2676 = vunpack.c.0.s8 %v2675
        %v2677 = vlaneseq
        %v2678 = vshrl.u32 %v2677, 7
        %v2679 = vsub.s32 %v2676, %v2678
        %v2680 = vrot.slane %v2672, %v2679
        %v2682 = vunpack.c.l.s4 1934713408
        %v2683 = vunpack.c.0.s8 %v2682
        %v2684 = vlaneseq
        %v2685 = vshrl.u32 %v2684, 7
        %v2686 = vsub.s32 %v2683, %v2685
        %v2687 = vrot.slane %v2673, %v2686
        %v2688 = vcombine.low %v2664, %v2680
        %v2689 = vcombine.high %v2664, %v2680
        %v2690 = vcombine.low %v2671, %v2687
        %v2691 = vcombine.high %v2671, %v2687
        %v2692 = vcombine.low %v2059, %v2195
        %v2694 = vunpack.c.l.s4 1983009808
        %v2695 = vunpack.c.0.s8 %v2694
        %v2696 = vlaneseq
        %v2697 = vshrl.u32 %v2696, 7
        %v2698 = vsub.s32 %v2695, %v2697
        %v2699 = vrot.slane %v2692, %v2698
        %v2700 = vcombine.low %v2127, %v2263
        %v2702 = vunpack.c.l.s4 1983009808
        %v2703 = vunpack.c.0.s8 %v2702
        %v2704 = vlaneseq
        %v2705 = vshrl.u32 %v2704, 7
        %v2706 = vsub.s32 %v2703, %v2705
        %v2707 = vrot.slane %v2700, %v2706
        %v2708 = vcombine.low %v2331, %v2467
        %v2710 = vunpack.c.l.s4 1983009808
        %v2711 = vunpack.c.0.s8 %v2710
        %v2712 = vlaneseq
        %v2713 = vshrl.u32 %v2712, 7
        %v2714 = vsub.s32 %v2711, %v2713
        %v2715 = vrot.slane %v2708, %v2714
        %v2716 = vcombine.low %v2399, %v2535
        %v2718 = vunpack.c.l.s4 1983009808
        %v2719 = vunpack.c.0.s8 %v2718
        %v2720 = vlaneseq
        %v2721 = vshrl.u32 %v2720, 7
        %v2722 = vsub.s32 %v2719, %v2721
        %v2723 = vrot.slane %v2716, %v2722
        %v2724 = vcombine.low %v2699, %v2707
        %v2725 = vcombine.high %v2699, %v2707
        %v2727 = vunpack.c.l.s4 1934713408
        %v2728 = vunpack.c.0.s8 %v2727
        %v2729 = vlaneseq
        %v2730 = vshrl.u32 %v2729, 7
        %v2731 = vsub.s32 %v2728, %v2730
        %v2732 = vrot.slane %v2724, %v2731
        %v2734 = vunpack.c.l.s4 1934713408
        %v2735 = vunpack.c.0.s8 %v2734
        %v2736 = vlaneseq
        %v2737 = vshrl.u32 %v2736, 7
        %v2738 = vsub.s32 %v2735, %v2737
        %v2739 = vrot.slane %v2725, %v2738
        %v2740 = vcombine.low %v2715, %v2723
        %v2741 = vcombine.high %v2715, %v2723
        %v2743 = vunpack.c.l.s4 1934713408
        %v2744 = vunpack.c.0.s8 %v2743
        %v2745 = vlaneseq
        %v2746 = vshrl.u32 %v2745, 7
        %v2747 = vsub.s32 %v2744, %v2746
        %v2748 = vrot.slane %v2740, %v2747
        %v2750 = vunpack.c.l.s4 1934713408
        %v2751 = vunpack.c.0.s8 %v2750
        %v2752 = vlaneseq
        %v2753 = vshrl.u32 %v2752, 7
        %v2754 = vsub.s32 %v2751, %v2753
        %v2755 = vrot.slane %v2741, %v2754
        %v2756 = vcombine.low %v2732, %v2748
        %v2757 = vcombine.high %v2732, %v2748
        %v2758 = vcombine.low %v2739, %v2755
        %v2759 = vcombine.high %v2739, %v2755
        %v2760 = vcombine.low %v2077, %v2213
        %v2762 = vunpack.c.l.s4 1983009808
        %v2763 = vunpack.c.0.s8 %v2762
        %v2764 = vlaneseq
        %v2765 = vshrl.u32 %v2764, 7
        %v2766 = vsub.s32 %v2763, %v2765
        %v2767 = vrot.slane %v2760, %v2766
        %v2768 = vcombine.low %v2145, %v2281
        %v2770 = vunpack.c.l.s4 1983009808
        %v2771 = vunpack.c.0.s8 %v2770
        %v2772 = vlaneseq
        %v2773 = vshrl.u32 %v2772, 7
        %v2774 = vsub.s32 %v2771, %v2773
        %v2775 = vrot.slane %v2768, %v2774
        %v2776 = vcombine.low %v2349, %v2485
        %v2778 = vunpack.c.l.s4 1983009808
        %v2779 = vunpack.c.0.s8 %v2778
        %v2780 = vlaneseq
        %v2781 = vshrl.u32 %v2780, 7
        %v2782 = vsub.s32 %v2779, %v2781
        %v2783 = vrot.slane %v2776, %v2782
        %v2784 = vcombine.low %v2417, %v2553
        %v2786 = vunpack.c.l.s4 1983009808
        %v2787 = vunpack.c.0.s8 %v2786
        %v2788 = vlaneseq
        %v2789 = vshrl.u32 %v2788, 7
        %v2790 = vsub.s32 %v2787, %v2789
        %v2791 = vrot.slane %v2784, %v2790
        %v2792 = vcombine.low %v2767, %v2775
        %v2793 = vcombine.high %v2767, %v2775
        %v2795 = vunpack.c.l.s4 1934713408
        %v2796 = vunpack.c.0.s8 %v2795
        %v2797 = vlaneseq
        %v2798 = vshrl.u32 %v2797, 7
        %v2799 = vsub.s32 %v2796, %v2798
        %v2800 = vrot.slane %v2792, %v2799
        %v2802 = vunpack.c.l.s4 1934713408
        %v2803 = vunpack.c.0.s8 %v2802
        %v2804 = vlaneseq
        %v2805 = vshrl.u32 %v2804, 7
        %v2806 = vsub.s32 %v2803, %v2805
        %v2807 = vrot.slane %v2793, %v2806
        %v2808 = vcombine.low %v2783, %v2791
        %v2809 = vcombine.high %v2783, %v2791
        %v2811 = vunpack.c.l.s4 1934713408
        %v2812 = vunpack.c.0.s8 %v2811
        %v2813 = vlaneseq
        %v2814 = vshrl.u32 %v2813, 7
        %v2815 = vsub.s32 %v2812, %v2814
        %v2816 = vrot.slane %v2808, %v2815
        %v2818 = vunpack.c.l.s4 1934713408
        %v2819 = vunpack.c.0.s8 %v2818
        %v2820 = vlaneseq
        %v2821 = vshrl.u32 %v2820, 7
        %v2822 = vsub.s32 %v2819, %v2821
        %v2823 = vrot.slane %v2809, %v2822
        %v2824 = vcombine.low %v2800, %v2816
        %v2825 = vcombine.high %v2800, %v2816
        %v2826 = vcombine.low %v2807, %v2823
        %v2827 = vcombine.high %v2807, %v2823
        %v2828 = vcombine.low %v2068, %v2204
        %v2830 = vunpack.c.l.s4 1983009808
        %v2831 = vunpack.c.0.s8 %v2830
        %v2832 = vlaneseq
        %v2833 = vshrl.u32 %v2832, 7
        %v2834 = vsub.s32 %v2831, %v2833
        %v2835 = vrot.slane %v2828, %v2834
        %v2836 = vcombine.low %v2136, %v2272
        %v2838 = vunpack.c.l.s4 1983009808
        %v2839 = vunpack.c.0.s8 %v2838
        %v2840 = vlaneseq
        %v2841 = vshrl.u32 %v2840, 7
        %v2842 = vsub.s32 %v2839, %v2841
        %v2843 = vrot.slane %v2836, %v2842
        %v2844 = vcombine.low %v2340, %v2476
        %v2846 = vunpack.c.l.s4 1983009808
        %v2847 = vunpack.c.0.s8 %v2846
        %v2848 = vlaneseq
        %v2849 = vshrl.u32 %v2848, 7
        %v2850 = vsub.s32 %v2847, %v2849
        %v2851 = vrot.slane %v2844, %v2850
        %v2852 = vcombine.low %v2408, %v2544
        %v2854 = vunpack.c.l.s4 1983009808
        %v2855 = vunpack.c.0.s8 %v2854
        %v2856 = vlaneseq
        %v2857 = vshrl.u32 %v2856, 7
        %v2858 = vsub.s32 %v2855, %v2857
        %v2859 = vrot.slane %v2852, %v2858
        %v2860 = vcombine.low %v2835, %v2843
        %v2861 = vcombine.high %v2835, %v2843
        %v2863 = vunpack.c.l.s4 1934713408
        %v2864 = vunpack.c.0.s8 %v2863
        %v2865 = vlaneseq
        %v2866 = vshrl.u32 %v2865, 7
        %v2867 = vsub.s32 %v2864, %v2866
        %v2868 = vrot.slane %v2860, %v2867
        %v2870 = vunpack.c.l.s4 1934713408
        %v2871 = vunpack.c.0.s8 %v2870
        %v2872 = vlaneseq
        %v2873 = vshrl.u32 %v2872, 7
        %v2874 = vsub.s32 %v2871, %v2873
        %v2875 = vrot.slane %v2861, %v2874
        %v2876 = vcombine.low %v2851, %v2859
        %v2877 = vcombine.high %v2851, %v2859
        %v2879 = vunpack.c.l.s4 1934713408
        %v2880 = vunpack.c.0.s8 %v2879
        %v2881 = vlaneseq
        %v2882 = vshrl.u32 %v2881, 7
        %v2883 = vsub.s32 %v2880, %v2882
        %v2884 = vrot.slane %v2876, %v2883
        %v2886 = vunpack.c.l.s4 1934713408
        %v2887 = vunpack.c.0.s8 %v2886
        %v2888 = vlaneseq
        %v2889 = vshrl.u32 %v2888, 7
        %v2890 = vsub.s32 %v2887, %v2889
        %v2891 = vrot.slane %v2877, %v2890
        %v2892 = vcombine.low %v2868, %v2884
        %v2893 = vcombine.high %v2868, %v2884
        %v2894 = vcombine.low %v2875, %v2891
        %v2895 = vcombine.high %v2875, %v2891
        %v2896 = vcombine.low %v2078, %v2214
        %v2898 = vunpack.c.l.s4 1983009808
        %v2899 = vunpack.c.0.s8 %v2898
        %v2900 = vlaneseq
        %v2901 = vshrl.u32 %v2900, 7
        %v2902 = vsub.s32 %v2899, %v2901
        %v2903 = vrot.slane %v2896, %v2902
        %v2904 = vcombine.low %v2146, %v2282
        %v2906 = vunpack.c.l.s4 1983009808
        %v2907 = vunpack.c.0.s8 %v2906
        %v2908 = vlaneseq
        %v2909 = vshrl.u32 %v2908, 7
        %v2910 = vsub.s32 %v2907, %v2909
        %v2911 = vrot.slane %v2904, %v2910
        %v2912 = vcombine.low %v2350, %v2486
        %v2914 = vunpack.c.l.s4 1983009808
        %v2915 = vunpack.c.0.s8 %v2914
        %v2916 = vlaneseq
        %v2917 = vshrl.u32 %v2916, 7
        %v2918 = vsub.s32 %v2915, %v2917
        %v2919 = vrot.slane %v2912, %v2918
        %v2920 = vcombine.low %v2418, %v2554
        %v2922 = vunpack.c.l.s4 1983009808
        %v2923 = vunpack.c.0.s8 %v2922
        %v2924 = vlaneseq
        %v2925 = vshrl.u32 %v2924, 7
        %v2926 = vsub.s32 %v2923, %v2925
        %v2927 = vrot.slane %v2920, %v2926
        %v2928 = vcombine.low %v2903, %v2911
        %v2929 = vcombine.high %v2903, %v2911
        %v2931 = vunpack.c.l.s4 1934713408
        %v2932 = vunpack.c.0.s8 %v2931
        %v2933 = vlaneseq
        %v2934 = vshrl.u32 %v2933, 7
        %v2935 = vsub.s32 %v2932, %v2934
        %v2936 = vrot.slane %v2928, %v2935
        %v2938 = vunpack.c.l.s4 1934713408
        %v2939 = vunpack.c.0.s8 %v2938
        %v2940 = vlaneseq
        %v2941 = vshrl.u32 %v2940, 7
        %v2942 = vsub.s32 %v2939, %v2941
        %v2943 = vrot.slane %v2929, %v2942
        %v2944 = vcombine.low %v2919, %v2927
        %v2945 = vcombine.high %v2919, %v2927
        %v2947 = vunpack.c.l.s4 1934713408
        %v2948 = vunpack.c.0.s8 %v2947
        %v2949 = vlaneseq
        %v2950 = vshrl.u32 %v2949, 7
        %v2951 = vsub.s32 %v2948, %v2950
        %v2952 = vrot.slane %v2944, %v2951
        %v2954 = vunpack.c.l.s4 1934713408
        %v2955 = vunpack.c.0.s8 %v2954
        %v2956 = vlaneseq
        %v2957 = vshrl.u32 %v2956, 7
        %v2958 = vsub.s32 %v2955, %v2957
        %v2959 = vrot.slane %v2945, %v2958
        %v2960 = vcombine.low %v2936, %v2952
        %v2961 = vcombine.high %v2936, %v2952
        %v2962 = vcombine.low %v2943, %v2959
        %v2963 = vcombine.high %v2943, %v2959
        %v2964 = vcombine.low %v2075, %v2211
        %v2966 = vunpack.c.l.s4 1983009808
        %v2967 = vunpack.c.0.s8 %v2966
        %v2968 = vlaneseq
        %v2969 = vshrl.u32 %v2968, 7
        %v2970 = vsub.s32 %v2967, %v2969
        %v2971 = vrot.slane %v2964, %v2970
        %v2972 = vcombine.low %v2143, %v2279
        %v2974 = vunpack.c.l.s4 1983009808
        %v2975 = vunpack.c.0.s8 %v2974
        %v2976 = vlaneseq
        %v2977 = vshrl.u32 %v2976, 7
        %v2978 = vsub.s32 %v2975, %v2977
        %v2979 = vrot.slane %v2972, %v2978
        %v2980 = vcombine.low %v2347, %v2483
        %v2982 = vunpack.c.l.s4 1983009808
        %v2983 = vunpack.c.0.s8 %v2982
        %v2984 = vlaneseq
        %v2985 = vshrl.u32 %v2984, 7
        %v2986 = vsub.s32 %v2983, %v2985
        %v2987 = vrot.slane %v2980, %v2986
        %v2988 = vcombine.low %v2415, %v2551
        %v2990 = vunpack.c.l.s4 1983009808
        %v2991 = vunpack.c.0.s8 %v2990
        %v2992 = vlaneseq
        %v2993 = vshrl.u32 %v2992, 7
        %v2994 = vsub.s32 %v2991, %v2993
        %v2995 = vrot.slane %v2988, %v2994
        %v2996 = vcombine.low %v2971, %v2979
        %v2997 = vcombine.high %v2971, %v2979
        %v2999 = vunpack.c.l.s4 1934713408
        %v3000 = vunpack.c.0.s8 %v2999
        %v3001 = vlaneseq
        %v3002 = vshrl.u32 %v3001, 7
        %v3003 = vsub.s32 %v3000, %v3002
        %v3004 = vrot.slane %v2996, %v3003
        %v3006 = vunpack.c.l.s4 1934713408
        %v3007 = vunpack.c.0.s8 %v3006
        %v3008 = vlaneseq
        %v3009 = vshrl.u32 %v3008, 7
        %v3010 = vsub.s32 %v3007, %v3009
        %v3011 = vrot.slane %v2997, %v3010
        %v3012 = vcombine.low %v2987, %v2995
        %v3013 = vcombine.high %v2987, %v2995
        %v3015 = vunpack.c.l.s4 1934713408
        %v3016 = vunpack.c.0.s8 %v3015
        %v3017 = vlaneseq
        %v3018 = vshrl.u32 %v3017, 7
        %v3019 = vsub.s32 %v3016, %v3018
        %v3020 = vrot.slane %v3012, %v3019
        %v3022 = vunpack.c.l.s4 1934713408
        %v3023 = vunpack.c.0.s8 %v3022
        %v3024 = vlaneseq
        %v3025 = vshrl.u32 %v3024, 7
        %v3026 = vsub.s32 %v3023, %v3025
        %v3027 = vrot.slane %v3013, %v3026
        %v3028 = vcombine.low %v3004, %v3020
        %v3029 = vcombine.high %v3004, %v3020
        %v3030 = vcombine.low %v3011, %v3027
        %v3031 = vcombine.high %v3011, %v3027
        %v3032 = vcombine.low %v2079, %v2215
        %v3034 = vunpack.c.l.s4 1983009808
        %v3035 = vunpack.c.0.s8 %v3034
        %v3036 = vlaneseq
        %v3037 = vshrl.u32 %v3036, 7
        %v3038 = vsub.s32 %v3035, %v3037
        %v3039 = vrot.slane %v3032, %v3038
        %v3040 = vcombine.low %v2147, %v2283
        %v3042 = vunpack.c.l.s4 1983009808
        %v3043 = vunpack.c.0.s8 %v3042
        %v3044 = vlaneseq
        %v3045 = vshrl.u32 %v3044, 7
        %v3046 = vsub.s32 %v3043, %v3045
        %v3047 = vrot.slane %v3040, %v3046
        %v3048 = vcombine.low %v2351, %v2487
        %v3050 = vunpack.c.l.s4 1983009808
        %v3051 = vunpack.c.0.s8 %v3050
        %v3052 = vlaneseq
        %v3053 = vshrl.u32 %v3052, 7
        %v3054 = vsub.s32 %v3051, %v3053
        %v3055 = vrot.slane %v3048, %v3054
        %v3056 = vcombine.low %v2419, %v2555
        %v3058 = vunpack.c.l.s4 1983009808
        %v3059 = vunpack.c.0.s8 %v3058
        %v3060 = vlaneseq
        %v3061 = vshrl.u32 %v3060, 7
        %v3062 = vsub.s32 %v3059, %v3061
        %v3063 = vrot.slane %v3056, %v3062
        %v3064 = vcombine.low %v3039, %v3047
        %v3065 = vcombine.high %v3039, %v3047
        %v3067 = vunpack.c.l.s4 1934713408
        %v3068 = vunpack.c.0.s8 %v3067
        %v3069 = vlaneseq
        %v3070 = vshrl.u32 %v3069, 7
        %v3071 = vsub.s32 %v3068, %v3070
        %v3072 = vrot.slane %v3064, %v3071
        %v3074 = vunpack.c.l.s4 1934713408
        %v3075 = vunpack.c.0.s8 %v3074
        %v3076 = vlaneseq
        %v3077 = vshrl.u32 %v3076, 7
        %v3078 = vsub.s32 %v3075, %v3077
        %v3079 = vrot.slane %v3065, %v3078
        %v3080 = vcombine.low %v3055, %v3063
        %v3081 = vcombine.high %v3055, %v3063
        %v3083 = vunpack.c.l.s4 1934713408
        %v3084 = vunpack.c.0.s8 %v3083
        %v3085 = vlaneseq
        %v3086 = vshrl.u32 %v3085, 7
        %v3087 = vsub.s32 %v3084, %v3086
        %v3088 = vrot.slane %v3080, %v3087
        %v3090 = vunpack.c.l.s4 1934713408
        %v3091 = vunpack.c.0.s8 %v3090
        %v3092 = vlaneseq
        %v3093 = vshrl.u32 %v3092, 7
        %v3094 = vsub.s32 %v3091, %v3093
        %v3095 = vrot.slane %v3081, %v3094
        %v3096 = vcombine.low %v3072, %v3088
        %v3097 = vcombine.high %v3072, %v3088
        %v3098 = vcombine.low %v3079, %v3095
        %v3099 = vcombine.high %v3079, %v3095
        %v3100 = vpack.c.bf16 %v2620, %v2620
        %v3101 = vpack.c.bf16 %v2621, %v2621
        %v3102 = vpack.c.bf16 %v2622, %v2622
        %v3103 = vpack.c.bf16 %v2623, %v2623
        %v3104 = vpack.c.bf16 %v2688, %v2688
        %v3105 = vpack.c.bf16 %v2689, %v2689
        %v3106 = vpack.c.bf16 %v2690, %v2690
        %v3107 = vpack.c.bf16 %v2691, %v2691
        %v3108 = vpack.c.bf16 %v2756, %v2756
        %v3109 = vpack.c.bf16 %v2757, %v2757
        %v3110 = vpack.c.bf16 %v2758, %v2758
        %v3111 = vpack.c.bf16 %v2759, %v2759
        %v3112 = vpack.c.bf16 %v2824, %v2824
        %v3113 = vpack.c.bf16 %v2825, %v2825
        %v3114 = vpack.c.bf16 %v2826, %v2826
        %v3115 = vpack.c.bf16 %v2827, %v2827
        %v3116 = vpack.c.bf16 %v2892, %v2892
        %v3117 = vpack.c.bf16 %v2893, %v2893
        %v3118 = vpack.c.bf16 %v2894, %v2894
        %v3119 = vpack.c.bf16 %v2895, %v2895
        %v3120 = vpack.c.bf16 %v2960, %v2960
        %v3121 = vpack.c.bf16 %v2961, %v2961
        %v3122 = vpack.c.bf16 %v2962, %v2962
        %v3123 = vpack.c.bf16 %v2963, %v2963
        %v3124 = vpack.c.bf16 %v3028, %v3028
        %v3125 = vpack.c.bf16 %v3029, %v3029
        %v3126 = vpack.c.bf16 %v3030, %v3030
        %v3127 = vpack.c.bf16 %v3031, %v3031
        %v3128 = vpack.c.bf16 %v3096, %v3096
        %v3129 = vpack.c.bf16 %v3097, %v3097
        %v3130 = vpack.c.bf16 %v3098, %v3098
        %v3131 = vpack.c.bf16 %v3099, %v3099
        %3132 = vrot.lane.b32.xlu0 %v702, 96
        %v3133 = vpop.permute.xlu0 %3132
        %3134 = vrot.lane.b32.xlu0 %v705, 96
        %v3135 = vpop.permute.xlu0 %3134
        %3136 = vrot.lane.b32.xlu0 %v710, 96
        %v3137 = vpop.permute.xlu0 %3136
        %3138 = vrot.lane.b32.xlu0 %v713, 96
        %v3139 = vpop.permute.xlu0 %3138
        %3140 = vrot.lane.b32.xlu0 %v718, 96
        %v3141 = vpop.permute.xlu0 %3140
        %3142 = vrot.lane.b32.xlu0 %v721, 96
        %v3143 = vpop.permute.xlu0 %3142
        %3144 = vrot.lane.b32.xlu0 %v726, 96
        %v3145 = vpop.permute.xlu0 %3144
        %3146 = vrot.lane.b32.xlu0 %v729, 96
        %v3147 = vpop.permute.xlu0 %3146
        %3148 = vrot.lane.b32.xlu0 %v1941, 96
        %v3149 = vpop.permute.xlu0 %3148
        %3150 = vrot.lane.b32.xlu0 %v1943, 96
        %v3151 = vpop.permute.xlu0 %3150
        %3152 = vrot.lane.b32.xlu0 %v1945, 96
        %v3153 = vpop.permute.xlu0 %3152
        %3154 = vrot.lane.b32.xlu0 %v1947, 96
        %v3155 = vpop.permute.xlu0 %3154
        %3156 = vrot.lane.b32.xlu0 %v1949, 96
        %v3157 = vpop.permute.xlu0 %3156
        %3158 = vrot.lane.b32.xlu0 %v1951, 96
        %v3159 = vpop.permute.xlu0 %3158
        %3160 = vrot.lane.b32.xlu0 %v1953, 96
        %v3161 = vpop.permute.xlu0 %3160
        %3162 = vrot.lane.b32.xlu0 %v1955, 96
        %v3163 = vpop.permute.xlu0 %3162
        %3164 = vrot.lane.b32.xlu0 %v1965, 96
        %v3165 = vpop.permute.xlu0 %3164
        %3166 = vrot.lane.b32.xlu0 %v1967, 96
        %v3167 = vpop.permute.xlu0 %3166
        %3168 = vrot.lane.b32.xlu0 %v1969, 96
        %v3169 = vpop.permute.xlu0 %3168
        %3170 = vrot.lane.b32.xlu0 %v1971, 96
        %v3171 = vpop.permute.xlu0 %3170
        %3172 = vrot.lane.b32.xlu0 %v1973, 96
        %v3173 = vpop.permute.xlu0 %3172
        %3174 = vrot.lane.b32.xlu0 %v1975, 96
        %v3175 = vpop.permute.xlu0 %3174
        %3176 = vrot.lane.b32.xlu0 %v1977, 96
        %v3177 = vpop.permute.xlu0 %3176
        %3178 = vrot.lane.b32.xlu0 %v1979, 96
        %v3179 = vpop.permute.xlu0 %3178
        %3180 = vrot.lane.b32.xlu0 %v1989, 96
        %v3181 = vpop.permute.xlu0 %3180
        %3182 = vrot.lane.b32.xlu0 %v1991, 96
        %v3183 = vpop.permute.xlu0 %3182
        %3184 = vrot.lane.b32.xlu0 %v1993, 96
        %v3185 = vpop.permute.xlu0 %3184
        %3186 = vrot.lane.b32.xlu0 %v1995, 96
        %v3187 = vpop.permute.xlu0 %3186
        %3188 = vrot.lane.b32.xlu0 %v1997, 96
        %v3189 = vpop.permute.xlu0 %3188
        %3190 = vrot.lane.b32.xlu0 %v1999, 96
        %v3191 = vpop.permute.xlu0 %3190
        %3192 = vrot.lane.b32.xlu0 %v2001, 96
        %v3193 = vpop.permute.xlu0 %3192
        %3194 = vrot.lane.b32.xlu0 %v2003, 96
        %v3195 = vpop.permute.xlu0 %3194
        %v3228 = vcombine.low %v3133, %v3165
        %v3229 = vcombine.high %v3133, %v3165
        %v3231 = vunpack.c.l.s4 1983009808
        %v3232 = vunpack.c.0.s8 %v3231
        %v3233 = vlaneseq
        %v3234 = vshrl.u32 %v3233, 7
        %v3235 = vsub.s32 %v3232, %v3234
        %v3236 = vrot.slane %v3228, %v3235
        %v3238 = vunpack.c.l.s4 1983009808
        %v3239 = vunpack.c.0.s8 %v3238
        %v3240 = vlaneseq
        %v3241 = vshrl.u32 %v3240, 7
        %v3242 = vsub.s32 %v3239, %v3241
        %v3243 = vrot.slane %v3229, %v3242
        %v3244 = vcombine.low %v3149, %v3181
        %v3245 = vcombine.high %v3149, %v3181
        %v3247 = vunpack.c.l.s4 1983009808
        %v3248 = vunpack.c.0.s8 %v3247
        %v3249 = vlaneseq
        %v3250 = vshrl.u32 %v3249, 7
        %v3251 = vsub.s32 %v3248, %v3250
        %v3252 = vrot.slane %v3244, %v3251
        %v3254 = vunpack.c.l.s4 1983009808
        %v3255 = vunpack.c.0.s8 %v3254
        %v3256 = vlaneseq
        %v3257 = vshrl.u32 %v3256, 7
        %v3258 = vsub.s32 %v3255, %v3257
        %v3259 = vrot.slane %v3245, %v3258
        %v3260 = vcombine.low %v3236, %v3252
        %v3261 = vcombine.high %v3236, %v3252
        %v3263 = vunpack.c.l.s4 1934713408
        %v3264 = vunpack.c.0.s8 %v3263
        %v3265 = vlaneseq
        %v3266 = vshrl.u32 %v3265, 7
        %v3267 = vsub.s32 %v3264, %v3266
        %v3268 = vrot.slane %v3260, %v3267
        %v3270 = vunpack.c.l.s4 1934713408
        %v3271 = vunpack.c.0.s8 %v3270
        %v3272 = vlaneseq
        %v3273 = vshrl.u32 %v3272, 7
        %v3274 = vsub.s32 %v3271, %v3273
        %v3275 = vrot.slane %v3261, %v3274
        %v3276 = vcombine.low %v3243, %v3259
        %v3277 = vcombine.high %v3243, %v3259
        %v3279 = vunpack.c.l.s4 1934713408
        %v3280 = vunpack.c.0.s8 %v3279
        %v3281 = vlaneseq
        %v3282 = vshrl.u32 %v3281, 7
        %v3283 = vsub.s32 %v3280, %v3282
        %v3284 = vrot.slane %v3276, %v3283
        %v3286 = vunpack.c.l.s4 1934713408
        %v3287 = vunpack.c.0.s8 %v3286
        %v3288 = vlaneseq
        %v3289 = vshrl.u32 %v3288, 7
        %v3290 = vsub.s32 %v3287, %v3289
        %v3291 = vrot.slane %v3277, %v3290
        %v3292 = vcombine.high %v3268, 0.0
        %v3293 = vcombine.high %v3275, 0.0
        %v3294 = vcombine.high %v3284, 0.0
        %v3295 = vcombine.high %v3291, 0.0
        %v3296 = vcombine.low %v3135, %v3167
        %v3297 = vcombine.high %v3135, %v3167
        %v3299 = vunpack.c.l.s4 1983009808
        %v3300 = vunpack.c.0.s8 %v3299
        %v3301 = vlaneseq
        %v3302 = vshrl.u32 %v3301, 7
        %v3303 = vsub.s32 %v3300, %v3302
        %v3304 = vrot.slane %v3296, %v3303
        %v3306 = vunpack.c.l.s4 1983009808
        %v3307 = vunpack.c.0.s8 %v3306
        %v3308 = vlaneseq
        %v3309 = vshrl.u32 %v3308, 7
        %v3310 = vsub.s32 %v3307, %v3309
        %v3311 = vrot.slane %v3297, %v3310
        %v3312 = vcombine.low %v3151, %v3183
        %v3313 = vcombine.high %v3151, %v3183
        %v3315 = vunpack.c.l.s4 1983009808
        %v3316 = vunpack.c.0.s8 %v3315
        %v3317 = vlaneseq
        %v3318 = vshrl.u32 %v3317, 7
        %v3319 = vsub.s32 %v3316, %v3318
        %v3320 = vrot.slane %v3312, %v3319
        %v3322 = vunpack.c.l.s4 1983009808
        %v3323 = vunpack.c.0.s8 %v3322
        %v3324 = vlaneseq
        %v3325 = vshrl.u32 %v3324, 7
        %v3326 = vsub.s32 %v3323, %v3325
        %v3327 = vrot.slane %v3313, %v3326
        %v3328 = vcombine.low %v3304, %v3320
        %v3329 = vcombine.high %v3304, %v3320
        %v3331 = vunpack.c.l.s4 1934713408
        %v3332 = vunpack.c.0.s8 %v3331
        %v3333 = vlaneseq
        %v3334 = vshrl.u32 %v3333, 7
        %v3335 = vsub.s32 %v3332, %v3334
        %v3336 = vrot.slane %v3328, %v3335
        %v3338 = vunpack.c.l.s4 1934713408
        %v3339 = vunpack.c.0.s8 %v3338
        %v3340 = vlaneseq
        %v3341 = vshrl.u32 %v3340, 7
        %v3342 = vsub.s32 %v3339, %v3341
        %v3343 = vrot.slane %v3329, %v3342
        %v3344 = vcombine.low %v3311, %v3327
        %v3345 = vcombine.high %v3311, %v3327
        %v3347 = vunpack.c.l.s4 1934713408
        %v3348 = vunpack.c.0.s8 %v3347
        %v3349 = vlaneseq
        %v3350 = vshrl.u32 %v3349, 7
        %v3351 = vsub.s32 %v3348, %v3350
        %v3352 = vrot.slane %v3344, %v3351
        %v3354 = vunpack.c.l.s4 1934713408
        %v3355 = vunpack.c.0.s8 %v3354
        %v3356 = vlaneseq
        %v3357 = vshrl.u32 %v3356, 7
        %v3358 = vsub.s32 %v3355, %v3357
        %v3359 = vrot.slane %v3345, %v3358
        %v3360 = vcombine.high %v3336, 0.0
        %v3361 = vcombine.high %v3343, 0.0
        %v3362 = vcombine.high %v3352, 0.0
        %v3363 = vcombine.high %v3359, 0.0
        %v3364 = vcombine.low %v3137, %v3169
        %v3365 = vcombine.high %v3137, %v3169
        %v3367 = vunpack.c.l.s4 1983009808
        %v3368 = vunpack.c.0.s8 %v3367
        %v3369 = vlaneseq
        %v3370 = vshrl.u32 %v3369, 7
        %v3371 = vsub.s32 %v3368, %v3370
        %v3372 = vrot.slane %v3364, %v3371
        %v3374 = vunpack.c.l.s4 1983009808
        %v3375 = vunpack.c.0.s8 %v3374
        %v3376 = vlaneseq
        %v3377 = vshrl.u32 %v3376, 7
        %v3378 = vsub.s32 %v3375, %v3377
        %v3379 = vrot.slane %v3365, %v3378
        %v3380 = vcombine.low %v3153, %v3185
        %v3381 = vcombine.high %v3153, %v3185
        %v3383 = vunpack.c.l.s4 1983009808
        %v3384 = vunpack.c.0.s8 %v3383
        %v3385 = vlaneseq
        %v3386 = vshrl.u32 %v3385, 7
        %v3387 = vsub.s32 %v3384, %v3386
        %v3388 = vrot.slane %v3380, %v3387
        %v3390 = vunpack.c.l.s4 1983009808
        %v3391 = vunpack.c.0.s8 %v3390
        %v3392 = vlaneseq
        %v3393 = vshrl.u32 %v3392, 7
        %v3394 = vsub.s32 %v3391, %v3393
        %v3395 = vrot.slane %v3381, %v3394
        %v3396 = vcombine.low %v3372, %v3388
        %v3397 = vcombine.high %v3372, %v3388
        %v3399 = vunpack.c.l.s4 1934713408
        %v3400 = vunpack.c.0.s8 %v3399
        %v3401 = vlaneseq
        %v3402 = vshrl.u32 %v3401, 7
        %v3403 = vsub.s32 %v3400, %v3402
        %v3404 = vrot.slane %v3396, %v3403
        %v3406 = vunpack.c.l.s4 1934713408
        %v3407 = vunpack.c.0.s8 %v3406
        %v3408 = vlaneseq
        %v3409 = vshrl.u32 %v3408, 7
        %v3410 = vsub.s32 %v3407, %v3409
        %v3411 = vrot.slane %v3397, %v3410
        %v3412 = vcombine.low %v3379, %v3395
        %v3413 = vcombine.high %v3379, %v3395
        %v3415 = vunpack.c.l.s4 1934713408
        %v3416 = vunpack.c.0.s8 %v3415
        %v3417 = vlaneseq
        %v3418 = vshrl.u32 %v3417, 7
        %v3419 = vsub.s32 %v3416, %v3418
        %v3420 = vrot.slane %v3412, %v3419
        %v3422 = vunpack.c.l.s4 1934713408
        %v3423 = vunpack.c.0.s8 %v3422
        %v3424 = vlaneseq
        %v3425 = vshrl.u32 %v3424, 7
        %v3426 = vsub.s32 %v3423, %v3425
        %v3427 = vrot.slane %v3413, %v3426
        %v3428 = vcombine.high %v3404, 0.0
        %v3429 = vcombine.high %v3411, 0.0
        %v3430 = vcombine.high %v3420, 0.0
        %v3431 = vcombine.high %v3427, 0.0
        %v3432 = vcombine.low %v3139, %v3171
        %v3433 = vcombine.high %v3139, %v3171
        %v3435 = vunpack.c.l.s4 1983009808
        %v3436 = vunpack.c.0.s8 %v3435
        %v3437 = vlaneseq
        %v3438 = vshrl.u32 %v3437, 7
        %v3439 = vsub.s32 %v3436, %v3438
        %v3440 = vrot.slane %v3432, %v3439
        %v3442 = vunpack.c.l.s4 1983009808
        %v3443 = vunpack.c.0.s8 %v3442
        %v3444 = vlaneseq
        %v3445 = vshrl.u32 %v3444, 7
        %v3446 = vsub.s32 %v3443, %v3445
        %v3447 = vrot.slane %v3433, %v3446
        %v3448 = vcombine.low %v3155, %v3187
        %v3449 = vcombine.high %v3155, %v3187
        %v3451 = vunpack.c.l.s4 1983009808
        %v3452 = vunpack.c.0.s8 %v3451
        %v3453 = vlaneseq
        %v3454 = vshrl.u32 %v3453, 7
        %v3455 = vsub.s32 %v3452, %v3454
        %v3456 = vrot.slane %v3448, %v3455
        %v3458 = vunpack.c.l.s4 1983009808
        %v3459 = vunpack.c.0.s8 %v3458
        %v3460 = vlaneseq
        %v3461 = vshrl.u32 %v3460, 7
        %v3462 = vsub.s32 %v3459, %v3461
        %v3463 = vrot.slane %v3449, %v3462
        %v3464 = vcombine.low %v3440, %v3456
        %v3465 = vcombine.high %v3440, %v3456
        %v3467 = vunpack.c.l.s4 1934713408
        %v3468 = vunpack.c.0.s8 %v3467
        %v3469 = vlaneseq
        %v3470 = vshrl.u32 %v3469, 7
        %v3471 = vsub.s32 %v3468, %v3470
        %v3472 = vrot.slane %v3464, %v3471
        %v3474 = vunpack.c.l.s4 1934713408
        %v3475 = vunpack.c.0.s8 %v3474
        %v3476 = vlaneseq
        %v3477 = vshrl.u32 %v3476, 7
        %v3478 = vsub.s32 %v3475, %v3477
        %v3479 = vrot.slane %v3465, %v3478
        %v3480 = vcombine.low %v3447, %v3463
        %v3481 = vcombine.high %v3447, %v3463
        %v3483 = vunpack.c.l.s4 1934713408
        %v3484 = vunpack.c.0.s8 %v3483
        %v3485 = vlaneseq
        %v3486 = vshrl.u32 %v3485, 7
        %v3487 = vsub.s32 %v3484, %v3486
        %v3488 = vrot.slane %v3480, %v3487
        %v3490 = vunpack.c.l.s4 1934713408
        %v3491 = vunpack.c.0.s8 %v3490
        %v3492 = vlaneseq
        %v3493 = vshrl.u32 %v3492, 7
        %v3494 = vsub.s32 %v3491, %v3493
        %v3495 = vrot.slane %v3481, %v3494
        %v3496 = vcombine.high %v3472, 0.0
        %v3497 = vcombine.high %v3479, 0.0
        %v3498 = vcombine.high %v3488, 0.0
        %v3499 = vcombine.high %v3495, 0.0
        %v3500 = vcombine.low %v3141, %v3173
        %v3501 = vcombine.high %v3141, %v3173
        %v3503 = vunpack.c.l.s4 1983009808
        %v3504 = vunpack.c.0.s8 %v3503
        %v3505 = vlaneseq
        %v3506 = vshrl.u32 %v3505, 7
        %v3507 = vsub.s32 %v3504, %v3506
        %v3508 = vrot.slane %v3500, %v3507
        %v3510 = vunpack.c.l.s4 1983009808
        %v3511 = vunpack.c.0.s8 %v3510
        %v3512 = vlaneseq
        %v3513 = vshrl.u32 %v3512, 7
        %v3514 = vsub.s32 %v3511, %v3513
        %v3515 = vrot.slane %v3501, %v3514
        %v3516 = vcombine.low %v3157, %v3189
        %v3517 = vcombine.high %v3157, %v3189
        %v3519 = vunpack.c.l.s4 1983009808
        %v3520 = vunpack.c.0.s8 %v3519
        %v3521 = vlaneseq
        %v3522 = vshrl.u32 %v3521, 7
        %v3523 = vsub.s32 %v3520, %v3522
        %v3524 = vrot.slane %v3516, %v3523
        %v3526 = vunpack.c.l.s4 1983009808
        %v3527 = vunpack.c.0.s8 %v3526
        %v3528 = vlaneseq
        %v3529 = vshrl.u32 %v3528, 7
        %v3530 = vsub.s32 %v3527, %v3529
        %v3531 = vrot.slane %v3517, %v3530
        %v3532 = vcombine.low %v3508, %v3524
        %v3533 = vcombine.high %v3508, %v3524
        %v3535 = vunpack.c.l.s4 1934713408
        %v3536 = vunpack.c.0.s8 %v3535
        %v3537 = vlaneseq
        %v3538 = vshrl.u32 %v3537, 7
        %v3539 = vsub.s32 %v3536, %v3538
        %v3540 = vrot.slane %v3532, %v3539
        %v3542 = vunpack.c.l.s4 1934713408
        %v3543 = vunpack.c.0.s8 %v3542
        %v3544 = vlaneseq
        %v3545 = vshrl.u32 %v3544, 7
        %v3546 = vsub.s32 %v3543, %v3545
        %v3547 = vrot.slane %v3533, %v3546
        %v3548 = vcombine.low %v3515, %v3531
        %v3549 = vcombine.high %v3515, %v3531
        %v3551 = vunpack.c.l.s4 1934713408
        %v3552 = vunpack.c.0.s8 %v3551
        %v3553 = vlaneseq
        %v3554 = vshrl.u32 %v3553, 7
        %v3555 = vsub.s32 %v3552, %v3554
        %v3556 = vrot.slane %v3548, %v3555
        %v3558 = vunpack.c.l.s4 1934713408
        %v3559 = vunpack.c.0.s8 %v3558
        %v3560 = vlaneseq
        %v3561 = vshrl.u32 %v3560, 7
        %v3562 = vsub.s32 %v3559, %v3561
        %v3563 = vrot.slane %v3549, %v3562
        %v3564 = vcombine.high %v3540, 0.0
        %v3565 = vcombine.high %v3547, 0.0
        %v3566 = vcombine.high %v3556, 0.0
        %v3567 = vcombine.high %v3563, 0.0
        %v3568 = vcombine.low %v3143, %v3175
        %v3569 = vcombine.high %v3143, %v3175
        %v3571 = vunpack.c.l.s4 1983009808
        %v3572 = vunpack.c.0.s8 %v3571
        %v3573 = vlaneseq
        %v3574 = vshrl.u32 %v3573, 7
        %v3575 = vsub.s32 %v3572, %v3574
        %v3576 = vrot.slane %v3568, %v3575
        %v3578 = vunpack.c.l.s4 1983009808
        %v3579 = vunpack.c.0.s8 %v3578
        %v3580 = vlaneseq
        %v3581 = vshrl.u32 %v3580, 7
        %v3582 = vsub.s32 %v3579, %v3581
        %v3583 = vrot.slane %v3569, %v3582
        %v3584 = vcombine.low %v3159, %v3191
        %v3585 = vcombine.high %v3159, %v3191
        %v3587 = vunpack.c.l.s4 1983009808
        %v3588 = vunpack.c.0.s8 %v3587
        %v3589 = vlaneseq
        %v3590 = vshrl.u32 %v3589, 7
        %v3591 = vsub.s32 %v3588, %v3590
        %v3592 = vrot.slane %v3584, %v3591
        %v3594 = vunpack.c.l.s4 1983009808
        %v3595 = vunpack.c.0.s8 %v3594
        %v3596 = vlaneseq
        %v3597 = vshrl.u32 %v3596, 7
        %v3598 = vsub.s32 %v3595, %v3597
        %v3599 = vrot.slane %v3585, %v3598
        %v3600 = vcombine.low %v3576, %v3592
        %v3601 = vcombine.high %v3576, %v3592
        %v3603 = vunpack.c.l.s4 1934713408
        %v3604 = vunpack.c.0.s8 %v3603
        %v3605 = vlaneseq
        %v3606 = vshrl.u32 %v3605, 7
        %v3607 = vsub.s32 %v3604, %v3606
        %v3608 = vrot.slane %v3600, %v3607
        %v3610 = vunpack.c.l.s4 1934713408
        %v3611 = vunpack.c.0.s8 %v3610
        %v3612 = vlaneseq
        %v3613 = vshrl.u32 %v3612, 7
        %v3614 = vsub.s32 %v3611, %v3613
        %v3615 = vrot.slane %v3601, %v3614
        %v3616 = vcombine.low %v3583, %v3599
        %v3617 = vcombine.high %v3583, %v3599
        %v3619 = vunpack.c.l.s4 1934713408
        %v3620 = vunpack.c.0.s8 %v3619
        %v3621 = vlaneseq
        %v3622 = vshrl.u32 %v3621, 7
        %v3623 = vsub.s32 %v3620, %v3622
        %v3624 = vrot.slane %v3616, %v3623
        %v3626 = vunpack.c.l.s4 1934713408
        %v3627 = vunpack.c.0.s8 %v3626
        %v3628 = vlaneseq
        %v3629 = vshrl.u32 %v3628, 7
        %v3630 = vsub.s32 %v3627, %v3629
        %v3631 = vrot.slane %v3617, %v3630
        %v3632 = vcombine.high %v3608, 0.0
        %v3633 = vcombine.high %v3615, 0.0
        %v3634 = vcombine.high %v3624, 0.0
        %v3635 = vcombine.high %v3631, 0.0
        %v3636 = vcombine.low %v3145, %v3177
        %v3637 = vcombine.high %v3145, %v3177
        %v3639 = vunpack.c.l.s4 1983009808
        %v3640 = vunpack.c.0.s8 %v3639
        %v3641 = vlaneseq
        %v3642 = vshrl.u32 %v3641, 7
        %v3643 = vsub.s32 %v3640, %v3642
        %v3644 = vrot.slane %v3636, %v3643
        %v3646 = vunpack.c.l.s4 1983009808
        %v3647 = vunpack.c.0.s8 %v3646
        %v3648 = vlaneseq
        %v3649 = vshrl.u32 %v3648, 7
        %v3650 = vsub.s32 %v3647, %v3649
        %v3651 = vrot.slane %v3637, %v3650
        %v3652 = vcombine.low %v3161, %v3193
        %v3653 = vcombine.high %v3161, %v3193
        %v3655 = vunpack.c.l.s4 1983009808
        %v3656 = vunpack.c.0.s8 %v3655
        %v3657 = vlaneseq
        %v3658 = vshrl.u32 %v3657, 7
        %v3659 = vsub.s32 %v3656, %v3658
        %v3660 = vrot.slane %v3652, %v3659
        %v3662 = vunpack.c.l.s4 1983009808
        %v3663 = vunpack.c.0.s8 %v3662
        %v3664 = vlaneseq
        %v3665 = vshrl.u32 %v3664, 7
        %v3666 = vsub.s32 %v3663, %v3665
        %v3667 = vrot.slane %v3653, %v3666
        %v3668 = vcombine.low %v3644, %v3660
        %v3669 = vcombine.high %v3644, %v3660
        %v3671 = vunpack.c.l.s4 1934713408
        %v3672 = vunpack.c.0.s8 %v3671
        %v3673 = vlaneseq
        %v3674 = vshrl.u32 %v3673, 7
        %v3675 = vsub.s32 %v3672, %v3674
        %v3676 = vrot.slane %v3668, %v3675
        %v3678 = vunpack.c.l.s4 1934713408
        %v3679 = vunpack.c.0.s8 %v3678
        %v3680 = vlaneseq
        %v3681 = vshrl.u32 %v3680, 7
        %v3682 = vsub.s32 %v3679, %v3681
        %v3683 = vrot.slane %v3669, %v3682
        %v3684 = vcombine.low %v3651, %v3667
        %v3685 = vcombine.high %v3651, %v3667
        %v3687 = vunpack.c.l.s4 1934713408
        %v3688 = vunpack.c.0.s8 %v3687
        %v3689 = vlaneseq
        %v3690 = vshrl.u32 %v3689, 7
        %v3691 = vsub.s32 %v3688, %v3690
        %v3692 = vrot.slane %v3684, %v3691
        %v3694 = vunpack.c.l.s4 1934713408
        %v3695 = vunpack.c.0.s8 %v3694
        %v3696 = vlaneseq
        %v3697 = vshrl.u32 %v3696, 7
        %v3698 = vsub.s32 %v3695, %v3697
        %v3699 = vrot.slane %v3685, %v3698
        %v3700 = vcombine.high %v3676, 0.0
        %v3701 = vcombine.high %v3683, 0.0
        %v3702 = vcombine.high %v3692, 0.0
        %v3703 = vcombine.high %v3699, 0.0
        %v3704 = vcombine.low %v3147, %v3179
        %v3705 = vcombine.high %v3147, %v3179
        %v3707 = vunpack.c.l.s4 1983009808
        %v3708 = vunpack.c.0.s8 %v3707
        %v3709 = vlaneseq
        %v3710 = vshrl.u32 %v3709, 7
        %v3711 = vsub.s32 %v3708, %v3710
        %v3712 = vrot.slane %v3704, %v3711
        %v3714 = vunpack.c.l.s4 1983009808
        %v3715 = vunpack.c.0.s8 %v3714
        %v3716 = vlaneseq
        %v3717 = vshrl.u32 %v3716, 7
        %v3718 = vsub.s32 %v3715, %v3717
        %v3719 = vrot.slane %v3705, %v3718
        %v3720 = vcombine.low %v3163, %v3195
        %v3721 = vcombine.high %v3163, %v3195
        %v3723 = vunpack.c.l.s4 1983009808
        %v3724 = vunpack.c.0.s8 %v3723
        %v3725 = vlaneseq
        %v3726 = vshrl.u32 %v3725, 7
        %v3727 = vsub.s32 %v3724, %v3726
        %v3728 = vrot.slane %v3720, %v3727
        %v3730 = vunpack.c.l.s4 1983009808
        %v3731 = vunpack.c.0.s8 %v3730
        %v3732 = vlaneseq
        %v3733 = vshrl.u32 %v3732, 7
        %v3734 = vsub.s32 %v3731, %v3733
        %v3735 = vrot.slane %v3721, %v3734
        %v3736 = vcombine.low %v3712, %v3728
        %v3737 = vcombine.high %v3712, %v3728
        %v3739 = vunpack.c.l.s4 1934713408
        %v3740 = vunpack.c.0.s8 %v3739
        %v3741 = vlaneseq
        %v3742 = vshrl.u32 %v3741, 7
        %v3743 = vsub.s32 %v3740, %v3742
        %v3744 = vrot.slane %v3736, %v3743
        %v3746 = vunpack.c.l.s4 1934713408
        %v3747 = vunpack.c.0.s8 %v3746
        %v3748 = vlaneseq
        %v3749 = vshrl.u32 %v3748, 7
        %v3750 = vsub.s32 %v3747, %v3749
        %v3751 = vrot.slane %v3737, %v3750
        %v3752 = vcombine.low %v3719, %v3735
        %v3753 = vcombine.high %v3719, %v3735
        %v3755 = vunpack.c.l.s4 1934713408
        %v3756 = vunpack.c.0.s8 %v3755
        %v3757 = vlaneseq
        %v3758 = vshrl.u32 %v3757, 7
        %v3759 = vsub.s32 %v3756, %v3758
        %v3760 = vrot.slane %v3752, %v3759
        %v3762 = vunpack.c.l.s4 1934713408
        %v3763 = vunpack.c.0.s8 %v3762
        %v3764 = vlaneseq
        %v3765 = vshrl.u32 %v3764, 7
        %v3766 = vsub.s32 %v3763, %v3765
        %v3767 = vrot.slane %v3753, %v3766
        %v3768 = vcombine.high %v3744, 0.0
        %v3769 = vcombine.high %v3751, 0.0
        %v3770 = vcombine.high %v3760, 0.0
        %v3771 = vcombine.high %v3767, 0.0
        %v3772 = vcombine.low %v3268, %v3404
        %v3774 = vunpack.c.l.s4 1983009808
        %v3775 = vunpack.c.0.s8 %v3774
        %v3776 = vlaneseq
        %v3777 = vshrl.u32 %v3776, 7
        %v3778 = vsub.s32 %v3775, %v3777
        %v3779 = vrot.slane %v3772, %v3778
        %v3780 = vcombine.low %v3336, %v3472
        %v3782 = vunpack.c.l.s4 1983009808
        %v3783 = vunpack.c.0.s8 %v3782
        %v3784 = vlaneseq
        %v3785 = vshrl.u32 %v3784, 7
        %v3786 = vsub.s32 %v3783, %v3785
        %v3787 = vrot.slane %v3780, %v3786
        %v3788 = vcombine.low %v3540, %v3676
        %v3790 = vunpack.c.l.s4 1983009808
        %v3791 = vunpack.c.0.s8 %v3790
        %v3792 = vlaneseq
        %v3793 = vshrl.u32 %v3792, 7
        %v3794 = vsub.s32 %v3791, %v3793
        %v3795 = vrot.slane %v3788, %v3794
        %v3796 = vcombine.low %v3608, %v3744
        %v3798 = vunpack.c.l.s4 1983009808
        %v3799 = vunpack.c.0.s8 %v3798
        %v3800 = vlaneseq
        %v3801 = vshrl.u32 %v3800, 7
        %v3802 = vsub.s32 %v3799, %v3801
        %v3803 = vrot.slane %v3796, %v3802
        %v3804 = vcombine.low %v3779, %v3787
        %v3805 = vcombine.high %v3779, %v3787
        %v3807 = vunpack.c.l.s4 1934713408
        %v3808 = vunpack.c.0.s8 %v3807
        %v3809 = vlaneseq
        %v3810 = vshrl.u32 %v3809, 7
        %v3811 = vsub.s32 %v3808, %v3810
        %v3812 = vrot.slane %v3804, %v3811
        %v3814 = vunpack.c.l.s4 1934713408
        %v3815 = vunpack.c.0.s8 %v3814
        %v3816 = vlaneseq
        %v3817 = vshrl.u32 %v3816, 7
        %v3818 = vsub.s32 %v3815, %v3817
        %v3819 = vrot.slane %v3805, %v3818
        %v3820 = vcombine.low %v3795, %v3803
        %v3821 = vcombine.high %v3795, %v3803
        %v3823 = vunpack.c.l.s4 1934713408
        %v3824 = vunpack.c.0.s8 %v3823
        %v3825 = vlaneseq
        %v3826 = vshrl.u32 %v3825, 7
        %v3827 = vsub.s32 %v3824, %v3826
        %v3828 = vrot.slane %v3820, %v3827
        %v3830 = vunpack.c.l.s4 1934713408
        %v3831 = vunpack.c.0.s8 %v3830
        %v3832 = vlaneseq
        %v3833 = vshrl.u32 %v3832, 7
        %v3834 = vsub.s32 %v3831, %v3833
        %v3835 = vrot.slane %v3821, %v3834
        %v3836 = vcombine.low %v3812, %v3828
        %v3837 = vcombine.high %v3812, %v3828
        %v3838 = vcombine.low %v3819, %v3835
        %v3839 = vcombine.high %v3819, %v3835
        %v3840 = vcombine.low %v3292, %v3428
        %v3842 = vunpack.c.l.s4 1983009808
        %v3843 = vunpack.c.0.s8 %v3842
        %v3844 = vlaneseq
        %v3845 = vshrl.u32 %v3844, 7
        %v3846 = vsub.s32 %v3843, %v3845
        %v3847 = vrot.slane %v3840, %v3846
        %v3848 = vcombine.low %v3360, %v3496
        %v3850 = vunpack.c.l.s4 1983009808
        %v3851 = vunpack.c.0.s8 %v3850
        %v3852 = vlaneseq
        %v3853 = vshrl.u32 %v3852, 7
        %v3854 = vsub.s32 %v3851, %v3853
        %v3855 = vrot.slane %v3848, %v3854
        %v3856 = vcombine.low %v3564, %v3700
        %v3858 = vunpack.c.l.s4 1983009808
        %v3859 = vunpack.c.0.s8 %v3858
        %v3860 = vlaneseq
        %v3861 = vshrl.u32 %v3860, 7
        %v3862 = vsub.s32 %v3859, %v3861
        %v3863 = vrot.slane %v3856, %v3862
        %v3864 = vcombine.low %v3632, %v3768
        %v3866 = vunpack.c.l.s4 1983009808
        %v3867 = vunpack.c.0.s8 %v3866
        %v3868 = vlaneseq
        %v3869 = vshrl.u32 %v3868, 7
        %v3870 = vsub.s32 %v3867, %v3869
        %v3871 = vrot.slane %v3864, %v3870
        %v3872 = vcombine.low %v3847, %v3855
        %v3873 = vcombine.high %v3847, %v3855
        %v3875 = vunpack.c.l.s4 1934713408
        %v3876 = vunpack.c.0.s8 %v3875
        %v3877 = vlaneseq
        %v3878 = vshrl.u32 %v3877, 7
        %v3879 = vsub.s32 %v3876, %v3878
        %v3880 = vrot.slane %v3872, %v3879
        %v3882 = vunpack.c.l.s4 1934713408
        %v3883 = vunpack.c.0.s8 %v3882
        %v3884 = vlaneseq
        %v3885 = vshrl.u32 %v3884, 7
        %v3886 = vsub.s32 %v3883, %v3885
        %v3887 = vrot.slane %v3873, %v3886
        %v3888 = vcombine.low %v3863, %v3871
        %v3889 = vcombine.high %v3863, %v3871
        %v3891 = vunpack.c.l.s4 1934713408
        %v3892 = vunpack.c.0.s8 %v3891
        %v3893 = vlaneseq
        %v3894 = vshrl.u32 %v3893, 7
        %v3895 = vsub.s32 %v3892, %v3894
        %v3896 = vrot.slane %v3888, %v3895
        %v3898 = vunpack.c.l.s4 1934713408
        %v3899 = vunpack.c.0.s8 %v3898
        %v3900 = vlaneseq
        %v3901 = vshrl.u32 %v3900, 7
        %v3902 = vsub.s32 %v3899, %v3901
        %v3903 = vrot.slane %v3889, %v3902
        %v3904 = vcombine.low %v3880, %v3896
        %v3905 = vcombine.high %v3880, %v3896
        %v3906 = vcombine.low %v3887, %v3903
        %v3907 = vcombine.high %v3887, %v3903
        %v3908 = vcombine.low %v3275, %v3411
        %v3910 = vunpack.c.l.s4 1983009808
        %v3911 = vunpack.c.0.s8 %v3910
        %v3912 = vlaneseq
        %v3913 = vshrl.u32 %v3912, 7
        %v3914 = vsub.s32 %v3911, %v3913
        %v3915 = vrot.slane %v3908, %v3914
        %v3916 = vcombine.low %v3343, %v3479
        %v3918 = vunpack.c.l.s4 1983009808
        %v3919 = vunpack.c.0.s8 %v3918
        %v3920 = vlaneseq
        %v3921 = vshrl.u32 %v3920, 7
        %v3922 = vsub.s32 %v3919, %v3921
        %v3923 = vrot.slane %v3916, %v3922
        %v3924 = vcombine.low %v3547, %v3683
        %v3926 = vunpack.c.l.s4 1983009808
        %v3927 = vunpack.c.0.s8 %v3926
        %v3928 = vlaneseq
        %v3929 = vshrl.u32 %v3928, 7
        %v3930 = vsub.s32 %v3927, %v3929
        %v3931 = vrot.slane %v3924, %v3930
        %v3932 = vcombine.low %v3615, %v3751
        %v3934 = vunpack.c.l.s4 1983009808
        %v3935 = vunpack.c.0.s8 %v3934
        %v3936 = vlaneseq
        %v3937 = vshrl.u32 %v3936, 7
        %v3938 = vsub.s32 %v3935, %v3937
        %v3939 = vrot.slane %v3932, %v3938
        %v3940 = vcombine.low %v3915, %v3923
        %v3941 = vcombine.high %v3915, %v3923
        %v3943 = vunpack.c.l.s4 1934713408
        %v3944 = vunpack.c.0.s8 %v3943
        %v3945 = vlaneseq
        %v3946 = vshrl.u32 %v3945, 7
        %v3947 = vsub.s32 %v3944, %v3946
        %v3948 = vrot.slane %v3940, %v3947
        %v3950 = vunpack.c.l.s4 1934713408
        %v3951 = vunpack.c.0.s8 %v3950
        %v3952 = vlaneseq
        %v3953 = vshrl.u32 %v3952, 7
        %v3954 = vsub.s32 %v3951, %v3953
        %v3955 = vrot.slane %v3941, %v3954
        %v3956 = vcombine.low %v3931, %v3939
        %v3957 = vcombine.high %v3931, %v3939
        %v3959 = vunpack.c.l.s4 1934713408
        %v3960 = vunpack.c.0.s8 %v3959
        %v3961 = vlaneseq
        %v3962 = vshrl.u32 %v3961, 7
        %v3963 = vsub.s32 %v3960, %v3962
        %v3964 = vrot.slane %v3956, %v3963
        %v3966 = vunpack.c.l.s4 1934713408
        %v3967 = vunpack.c.0.s8 %v3966
        %v3968 = vlaneseq
        %v3969 = vshrl.u32 %v3968, 7
        %v3970 = vsub.s32 %v3967, %v3969
        %v3971 = vrot.slane %v3957, %v3970
        %v3972 = vcombine.low %v3948, %v3964
        %v3973 = vcombine.high %v3948, %v3964
        %v3974 = vcombine.low %v3955, %v3971
        %v3975 = vcombine.high %v3955, %v3971
        %v3976 = vcombine.low %v3293, %v3429
        %v3978 = vunpack.c.l.s4 1983009808
        %v3979 = vunpack.c.0.s8 %v3978
        %v3980 = vlaneseq
        %v3981 = vshrl.u32 %v3980, 7
        %v3982 = vsub.s32 %v3979, %v3981
        %v3983 = vrot.slane %v3976, %v3982
        %v3984 = vcombine.low %v3361, %v3497
        %v3986 = vunpack.c.l.s4 1983009808
        %v3987 = vunpack.c.0.s8 %v3986
        %v3988 = vlaneseq
        %v3989 = vshrl.u32 %v3988, 7
        %v3990 = vsub.s32 %v3987, %v3989
        %v3991 = vrot.slane %v3984, %v3990
        %v3992 = vcombine.low %v3565, %v3701
        %v3994 = vunpack.c.l.s4 1983009808
        %v3995 = vunpack.c.0.s8 %v3994
        %v3996 = vlaneseq
        %v3997 = vshrl.u32 %v3996, 7
        %v3998 = vsub.s32 %v3995, %v3997
        %v3999 = vrot.slane %v3992, %v3998
        %v4000 = vcombine.low %v3633, %v3769
        %v4002 = vunpack.c.l.s4 1983009808
        %v4003 = vunpack.c.0.s8 %v4002
        %v4004 = vlaneseq
        %v4005 = vshrl.u32 %v4004, 7
        %v4006 = vsub.s32 %v4003, %v4005
        %v4007 = vrot.slane %v4000, %v4006
        %v4008 = vcombine.low %v3983, %v3991
        %v4009 = vcombine.high %v3983, %v3991
        %v4011 = vunpack.c.l.s4 1934713408
        %v4012 = vunpack.c.0.s8 %v4011
        %v4013 = vlaneseq
        %v4014 = vshrl.u32 %v4013, 7
        %v4015 = vsub.s32 %v4012, %v4014
        %v4016 = vrot.slane %v4008, %v4015
        %v4018 = vunpack.c.l.s4 1934713408
        %v4019 = vunpack.c.0.s8 %v4018
        %v4020 = vlaneseq
        %v4021 = vshrl.u32 %v4020, 7
        %v4022 = vsub.s32 %v4019, %v4021
        %v4023 = vrot.slane %v4009, %v4022
        %v4024 = vcombine.low %v3999, %v4007
        %v4025 = vcombine.high %v3999, %v4007
        %v4027 = vunpack.c.l.s4 1934713408
        %v4028 = vunpack.c.0.s8 %v4027
        %v4029 = vlaneseq
        %v4030 = vshrl.u32 %v4029, 7
        %v4031 = vsub.s32 %v4028, %v4030
        %v4032 = vrot.slane %v4024, %v4031
        %v4034 = vunpack.c.l.s4 1934713408
        %v4035 = vunpack.c.0.s8 %v4034
        %v4036 = vlaneseq
        %v4037 = vshrl.u32 %v4036, 7
        %v4038 = vsub.s32 %v4035, %v4037
        %v4039 = vrot.slane %v4025, %v4038
        %v4040 = vcombine.low %v4016, %v4032
        %v4041 = vcombine.high %v4016, %v4032
        %v4042 = vcombine.low %v4023, %v4039
        %v4043 = vcombine.high %v4023, %v4039
        %v4044 = vcombine.low %v3284, %v3420
        %v4046 = vunpack.c.l.s4 1983009808
        %v4047 = vunpack.c.0.s8 %v4046
        %v4048 = vlaneseq
        %v4049 = vshrl.u32 %v4048, 7
        %v4050 = vsub.s32 %v4047, %v4049
        %v4051 = vrot.slane %v4044, %v4050
        %v4052 = vcombine.low %v3352, %v3488
        %v4054 = vunpack.c.l.s4 1983009808
        %v4055 = vunpack.c.0.s8 %v4054
        %v4056 = vlaneseq
        %v4057 = vshrl.u32 %v4056, 7
        %v4058 = vsub.s32 %v4055, %v4057
        %v4059 = vrot.slane %v4052, %v4058
        %v4060 = vcombine.low %v3556, %v3692
        %v4062 = vunpack.c.l.s4 1983009808
        %v4063 = vunpack.c.0.s8 %v4062
        %v4064 = vlaneseq
        %v4065 = vshrl.u32 %v4064, 7
        %v4066 = vsub.s32 %v4063, %v4065
        %v4067 = vrot.slane %v4060, %v4066
        %v4068 = vcombine.low %v3624, %v3760
        %v4070 = vunpack.c.l.s4 1983009808
        %v4071 = vunpack.c.0.s8 %v4070
        %v4072 = vlaneseq
        %v4073 = vshrl.u32 %v4072, 7
        %v4074 = vsub.s32 %v4071, %v4073
        %v4075 = vrot.slane %v4068, %v4074
        %v4076 = vcombine.low %v4051, %v4059
        %v4077 = vcombine.high %v4051, %v4059
        %v4079 = vunpack.c.l.s4 1934713408
        %v4080 = vunpack.c.0.s8 %v4079
        %v4081 = vlaneseq
        %v4082 = vshrl.u32 %v4081, 7
        %v4083 = vsub.s32 %v4080, %v4082
        %v4084 = vrot.slane %v4076, %v4083
        %v4086 = vunpack.c.l.s4 1934713408
        %v4087 = vunpack.c.0.s8 %v4086
        %v4088 = vlaneseq
        %v4089 = vshrl.u32 %v4088, 7
        %v4090 = vsub.s32 %v4087, %v4089
        %v4091 = vrot.slane %v4077, %v4090
        %v4092 = vcombine.low %v4067, %v4075
        %v4093 = vcombine.high %v4067, %v4075
        %v4095 = vunpack.c.l.s4 1934713408
        %v4096 = vunpack.c.0.s8 %v4095
        %v4097 = vlaneseq
        %v4098 = vshrl.u32 %v4097, 7
        %v4099 = vsub.s32 %v4096, %v4098
        %v4100 = vrot.slane %v4092, %v4099
        %v4102 = vunpack.c.l.s4 1934713408
        %v4103 = vunpack.c.0.s8 %v4102
        %v4104 = vlaneseq
        %v4105 = vshrl.u32 %v4104, 7
        %v4106 = vsub.s32 %v4103, %v4105
        %v4107 = vrot.slane %v4093, %v4106
        %v4108 = vcombine.low %v4084, %v4100
        %v4109 = vcombine.high %v4084, %v4100
        %v4110 = vcombine.low %v4091, %v4107
        %v4111 = vcombine.high %v4091, %v4107
        %v4112 = vcombine.low %v3294, %v3430
        %v4114 = vunpack.c.l.s4 1983009808
        %v4115 = vunpack.c.0.s8 %v4114
        %v4116 = vlaneseq
        %v4117 = vshrl.u32 %v4116, 7
        %v4118 = vsub.s32 %v4115, %v4117
        %v4119 = vrot.slane %v4112, %v4118
        %v4120 = vcombine.low %v3362, %v3498
        %v4122 = vunpack.c.l.s4 1983009808
        %v4123 = vunpack.c.0.s8 %v4122
        %v4124 = vlaneseq
        %v4125 = vshrl.u32 %v4124, 7
        %v4126 = vsub.s32 %v4123, %v4125
        %v4127 = vrot.slane %v4120, %v4126
        %v4128 = vcombine.low %v3566, %v3702
        %v4130 = vunpack.c.l.s4 1983009808
        %v4131 = vunpack.c.0.s8 %v4130
        %v4132 = vlaneseq
        %v4133 = vshrl.u32 %v4132, 7
        %v4134 = vsub.s32 %v4131, %v4133
        %v4135 = vrot.slane %v4128, %v4134
        %v4136 = vcombine.low %v3634, %v3770
        %v4138 = vunpack.c.l.s4 1983009808
        %v4139 = vunpack.c.0.s8 %v4138
        %v4140 = vlaneseq
        %v4141 = vshrl.u32 %v4140, 7
        %v4142 = vsub.s32 %v4139, %v4141
        %v4143 = vrot.slane %v4136, %v4142
        %v4144 = vcombine.low %v4119, %v4127
        %v4145 = vcombine.high %v4119, %v4127
        %v4147 = vunpack.c.l.s4 1934713408
        %v4148 = vunpack.c.0.s8 %v4147
        %v4149 = vlaneseq
        %v4150 = vshrl.u32 %v4149, 7
        %v4151 = vsub.s32 %v4148, %v4150
        %v4152 = vrot.slane %v4144, %v4151
        %v4154 = vunpack.c.l.s4 1934713408
        %v4155 = vunpack.c.0.s8 %v4154
        %v4156 = vlaneseq
        %v4157 = vshrl.u32 %v4156, 7
        %v4158 = vsub.s32 %v4155, %v4157
        %v4159 = vrot.slane %v4145, %v4158
        %v4160 = vcombine.low %v4135, %v4143
        %v4161 = vcombine.high %v4135, %v4143
        %v4163 = vunpack.c.l.s4 1934713408
        %v4164 = vunpack.c.0.s8 %v4163
        %v4165 = vlaneseq
        %v4166 = vshrl.u32 %v4165, 7
        %v4167 = vsub.s32 %v4164, %v4166
        %v4168 = vrot.slane %v4160, %v4167
        %v4170 = vunpack.c.l.s4 1934713408
        %v4171 = vunpack.c.0.s8 %v4170
        %v4172 = vlaneseq
        %v4173 = vshrl.u32 %v4172, 7
        %v4174 = vsub.s32 %v4171, %v4173
        %v4175 = vrot.slane %v4161, %v4174
        %v4176 = vcombine.low %v4152, %v4168
        %v4177 = vcombine.high %v4152, %v4168
        %v4178 = vcombine.low %v4159, %v4175
        %v4179 = vcombine.high %v4159, %v4175
        %v4180 = vcombine.low %v3291, %v3427
        %v4182 = vunpack.c.l.s4 1983009808
        %v4183 = vunpack.c.0.s8 %v4182
        %v4184 = vlaneseq
        %v4185 = vshrl.u32 %v4184, 7
        %v4186 = vsub.s32 %v4183, %v4185
        %v4187 = vrot.slane %v4180, %v4186
        %v4188 = vcombine.low %v3359, %v3495
        %v4190 = vunpack.c.l.s4 1983009808
        %v4191 = vunpack.c.0.s8 %v4190
        %v4192 = vlaneseq
        %v4193 = vshrl.u32 %v4192, 7
        %v4194 = vsub.s32 %v4191, %v4193
        %v4195 = vrot.slane %v4188, %v4194
        %v4196 = vcombine.low %v3563, %v3699
        %v4198 = vunpack.c.l.s4 1983009808
        %v4199 = vunpack.c.0.s8 %v4198
        %v4200 = vlaneseq
        %v4201 = vshrl.u32 %v4200, 7
        %v4202 = vsub.s32 %v4199, %v4201
        %v4203 = vrot.slane %v4196, %v4202
        %v4204 = vcombine.low %v3631, %v3767
        %v4206 = vunpack.c.l.s4 1983009808
        %v4207 = vunpack.c.0.s8 %v4206
        %v4208 = vlaneseq
        %v4209 = vshrl.u32 %v4208, 7
        %v4210 = vsub.s32 %v4207, %v4209
        %v4211 = vrot.slane %v4204, %v4210
        %v4212 = vcombine.low %v4187, %v4195
        %v4213 = vcombine.high %v4187, %v4195
        %v4215 = vunpack.c.l.s4 1934713408
        %v4216 = vunpack.c.0.s8 %v4215
        %v4217 = vlaneseq
        %v4218 = vshrl.u32 %v4217, 7
        %v4219 = vsub.s32 %v4216, %v4218
        %v4220 = vrot.slane %v4212, %v4219
        %v4222 = vunpack.c.l.s4 1934713408
        %v4223 = vunpack.c.0.s8 %v4222
        %v4224 = vlaneseq
        %v4225 = vshrl.u32 %v4224, 7
        %v4226 = vsub.s32 %v4223, %v4225
        %v4227 = vrot.slane %v4213, %v4226
        %v4228 = vcombine.low %v4203, %v4211
        %v4229 = vcombine.high %v4203, %v4211
        %v4231 = vunpack.c.l.s4 1934713408
        %v4232 = vunpack.c.0.s8 %v4231
        %v4233 = vlaneseq
        %v4234 = vshrl.u32 %v4233, 7
        %v4235 = vsub.s32 %v4232, %v4234
        %v4236 = vrot.slane %v4228, %v4235
        %v4238 = vunpack.c.l.s4 1934713408
        %v4239 = vunpack.c.0.s8 %v4238
        %v4240 = vlaneseq
        %v4241 = vshrl.u32 %v4240, 7
        %v4242 = vsub.s32 %v4239, %v4241
        %v4243 = vrot.slane %v4229, %v4242
        %v4244 = vcombine.low %v4220, %v4236
        %v4245 = vcombine.high %v4220, %v4236
        %v4246 = vcombine.low %v4227, %v4243
        %v4247 = vcombine.high %v4227, %v4243
        %v4248 = vcombine.low %v3295, %v3431
        %v4250 = vunpack.c.l.s4 1983009808
        %v4251 = vunpack.c.0.s8 %v4250
        %v4252 = vlaneseq
        %v4253 = vshrl.u32 %v4252, 7
        %v4254 = vsub.s32 %v4251, %v4253
        %v4255 = vrot.slane %v4248, %v4254
        %v4256 = vcombine.low %v3363, %v3499
        %v4258 = vunpack.c.l.s4 1983009808
        %v4259 = vunpack.c.0.s8 %v4258
        %v4260 = vlaneseq
        %v4261 = vshrl.u32 %v4260, 7
        %v4262 = vsub.s32 %v4259, %v4261
        %v4263 = vrot.slane %v4256, %v4262
        %v4264 = vcombine.low %v3567, %v3703
        %v4266 = vunpack.c.l.s4 1983009808
        %v4267 = vunpack.c.0.s8 %v4266
        %v4268 = vlaneseq
        %v4269 = vshrl.u32 %v4268, 7
        %v4270 = vsub.s32 %v4267, %v4269
        %v4271 = vrot.slane %v4264, %v4270
        %v4272 = vcombine.low %v3635, %v3771
        %v4274 = vunpack.c.l.s4 1983009808
        %v4275 = vunpack.c.0.s8 %v4274
        %v4276 = vlaneseq
        %v4277 = vshrl.u32 %v4276, 7
        %v4278 = vsub.s32 %v4275, %v4277
        %v4279 = vrot.slane %v4272, %v4278
        %v4280 = vcombine.low %v4255, %v4263
        %v4281 = vcombine.high %v4255, %v4263
        %v4283 = vunpack.c.l.s4 1934713408
        %v4284 = vunpack.c.0.s8 %v4283
        %v4285 = vlaneseq
        %v4286 = vshrl.u32 %v4285, 7
        %v4287 = vsub.s32 %v4284, %v4286
        %v4288 = vrot.slane %v4280, %v4287
        %v4290 = vunpack.c.l.s4 1934713408
        %v4291 = vunpack.c.0.s8 %v4290
        %v4292 = vlaneseq
        %v4293 = vshrl.u32 %v4292, 7
        %v4294 = vsub.s32 %v4291, %v4293
        %v4295 = vrot.slane %v4281, %v4294
        %v4296 = vcombine.low %v4271, %v4279
        %v4297 = vcombine.high %v4271, %v4279
        %v4299 = vunpack.c.l.s4 1934713408
        %v4300 = vunpack.c.0.s8 %v4299
        %v4301 = vlaneseq
        %v4302 = vshrl.u32 %v4301, 7
        %v4303 = vsub.s32 %v4300, %v4302
        %v4304 = vrot.slane %v4296, %v4303
        %v4306 = vunpack.c.l.s4 1934713408
        %v4307 = vunpack.c.0.s8 %v4306
        %v4308 = vlaneseq
        %v4309 = vshrl.u32 %v4308, 7
        %v4310 = vsub.s32 %v4307, %v4309
        %v4311 = vrot.slane %v4297, %v4310
        %v4312 = vcombine.low %v4288, %v4304
        %v4313 = vcombine.high %v4288, %v4304
        %v4314 = vcombine.low %v4295, %v4311
        %v4315 = vcombine.high %v4295, %v4311
        %v4316 = vpack.c.bf16 %v3836, %v3836
        %v4317 = vpack.c.bf16 %v3837, %v3837
        %v4318 = vpack.c.bf16 %v3838, %v3838
        %v4319 = vpack.c.bf16 %v3839, %v3839
        %v4320 = vpack.c.bf16 %v3904, %v3904
        %v4321 = vpack.c.bf16 %v3905, %v3905
        %v4322 = vpack.c.bf16 %v3906, %v3906
        %v4323 = vpack.c.bf16 %v3907, %v3907
        %v4324 = vpack.c.bf16 %v3972, %v3972
        %v4325 = vpack.c.bf16 %v3973, %v3973
        %v4326 = vpack.c.bf16 %v3974, %v3974
        %v4327 = vpack.c.bf16 %v3975, %v3975
        %v4328 = vpack.c.bf16 %v4040, %v4040
        %v4329 = vpack.c.bf16 %v4041, %v4041
        %v4330 = vpack.c.bf16 %v4042, %v4042
        %v4331 = vpack.c.bf16 %v4043, %v4043
        %v4332 = vpack.c.bf16 %v4108, %v4108
        %v4333 = vpack.c.bf16 %v4109, %v4109
        %v4334 = vpack.c.bf16 %v4110, %v4110
        %v4335 = vpack.c.bf16 %v4111, %v4111
        %v4336 = vpack.c.bf16 %v4176, %v4176
        %v4337 = vpack.c.bf16 %v4177, %v4177
        %v4338 = vpack.c.bf16 %v4178, %v4178
        %v4339 = vpack.c.bf16 %v4179, %v4179
        %v4340 = vpack.c.bf16 %v4244, %v4244
        %v4341 = vpack.c.bf16 %v4245, %v4245
        %v4342 = vpack.c.bf16 %v4246, %v4246
        %v4343 = vpack.c.bf16 %v4247, %v4247
        %v4344 = vpack.c.bf16 %v4312, %v4312
        %v4345 = vpack.c.bf16 %v4313, %v4313
        %v4346 = vpack.c.bf16 %v4314, %v4314
        %v4347 = vpack.c.bf16 %v4315, %v4315
        %vm4348 = vcmask 64512
        %v4350 = vsel %vm4348, %v1900, 0
        %v4353 = vsel %vm4348, %v3100, 0
        %4355 = vmatprep.subr.bf16.mxu0 0
        %4356 = vmatpush1.bf16.xpose.msra.mxu0 %v4353
        %4357 = vmatprep.subr.bf16.mxu0 0
        %4358 = vmatpush1.bf16.xpose.msra.mxu0 0
        %4359 = vmatprep.subr.bf16.mxu0 0
        %4360 = vmatpush1.bf16.xpose.msra.mxu0 0
        %4361 = vmatprep.subr.bf16.mxu0 0
        %4362 = vmatpush1.bf16.xpose.msra.mxu0 0
        %4363 = vmatprep.subr.bf16.mxu0 0
        %4364 = vmatpush1.bf16.xpose.msra.mxu0 0
        %4365 = vmatprep.subr.bf16.mxu0 0
        %4366 = vmatpush1.bf16.xpose.msra.mxu0 0
        %4367 = vmatprep.subr.bf16.mxu0 0
        %4368 = vmatpush1.bf16.xpose.msra.mxu0 0
        %4369 = vmatprep.subr.bf16.mxu0 0
        %4370 = vmatpush1.bf16.xpose.msra.mxu0 0
        %4371 = vmatprep.subr.bf16.mxu0 0
        %4372 = vmatpush1.bf16.xpose.msra.mxu0 0
        %4373 = vmatprep.subr.bf16.mxu0 0
        %4374 = vmatpush1.bf16.xpose.msra.mxu0 0
        %4375 = vmatprep.subr.bf16.mxu0 0
        %4376 = vmatpush1.bf16.xpose.msra.mxu0 0
        %4377 = vmatprep.subr.bf16.mxu0 0
        %4378 = vmatpush1.bf16.xpose.msra.mxu0 0
        %4379 = vmatprep.subr.bf16.mxu0 0
        %4380 = vmatpush1.bf16.xpose.msra.mxu0 0
        %4381 = vmatprep.subr.bf16.mxu0 0
        %4382 = vmatpush1.bf16.xpose.msra.mxu0 0
        %4383 = vmatprep.subr.bf16.mxu0 0
        %4384 = vmatpush1.bf16.xpose.msra.mxu0 0
        %4385 = vmatprep.subr.bf16.mxu0 0
        %4386 = vmatpush1.bf16.xpose.msra.mxu0 0
        %4387 = vmatprep.mubr.bf16.mxu0 0
        %4388 = vmatmul.mubr.bf16.gmra.mrb[0].mxu0 %v4350
        %v4389 = vpop.f32.mrb[0].mxu0
        %v4390 = vadd.f32 0.0, %v4389
        %v4391 = vpop.f32.mrb[0].mxu0
        %v4392 = vpop.f32.mrb[0].mxu0
        %v4393 = vpop.f32.mrb[0].mxu0
        %4394 = vdwg.mxu0
        %v4396 = vsel %vm4348, %v1901, 0
        %v4399 = vsel %vm4348, %v3101, 0
        %4401 = vmatprep.subr.bf16.mxu0 0
        %4402 = vmatpush1.bf16.xpose.msra.mxu0 %v4399
        %4403 = vmatprep.subr.bf16.mxu0 0
        %4404 = vmatpush1.bf16.xpose.msra.mxu0 0
        %4405 = vmatprep.subr.bf16.mxu0 0
        %4406 = vmatpush1.bf16.xpose.msra.mxu0 0
        %4407 = vmatprep.subr.bf16.mxu0 0
        %4408 = vmatpush1.bf16.xpose.msra.mxu0 0
        %4409 = vmatprep.subr.bf16.mxu0 0
        %4410 = vmatpush1.bf16.xpose.msra.mxu0 0
        %4411 = vmatprep.subr.bf16.mxu0 0
        %4412 = vmatpush1.bf16.xpose.msra.mxu0 0
        %4413 = vmatprep.subr.bf16.mxu0 0
        %4414 = vmatpush1.bf16.xpose.msra.mxu0 0
        %4415 = vmatprep.subr.bf16.mxu0 0
        %4416 = vmatpush1.bf16.xpose.msra.mxu0 0
        %4417 = vmatprep.subr.bf16.mxu0 0
        %4418 = vmatpush1.bf16.xpose.msra.mxu0 0
        %4419 = vmatprep.subr.bf16.mxu0 0
        %4420 = vmatpush1.bf16.xpose.msra.mxu0 0
        %4421 = vmatprep.subr.bf16.mxu0 0
        %4422 = vmatpush1.bf16.xpose.msra.mxu0 0
        %4423 = vmatprep.subr.bf16.mxu0 0
        %4424 = vmatpush1.bf16.xpose.msra.mxu0 0
        %4425 = vmatprep.subr.bf16.mxu0 0
        %4426 = vmatpush1.bf16.xpose.msra.mxu0 0
        %4427 = vmatprep.subr.bf16.mxu0 0
        %4428 = vmatpush1.bf16.xpose.msra.mxu0 0
        %4429 = vmatprep.subr.bf16.mxu0 0
        %4430 = vmatpush1.bf16.xpose.msra.mxu0 0
        %4431 = vmatprep.subr.bf16.mxu0 0
        %4432 = vmatpush1.bf16.xpose.msra.mxu0 0
        %4433 = vmatprep.mubr.bf16.mxu0 0
        %4434 = vmatmul.mubr.bf16.gmra.mrb[0].mxu0 %v4396
        %v4435 = vpop.f32.mrb[0].mxu0
        %v4436 = vadd.f32 0.0, %v4435
        %v4437 = vpop.f32.mrb[0].mxu0
        %v4438 = vpop.f32.mrb[0].mxu0
        %v4439 = vpop.f32.mrb[0].mxu0
        %4440 = vdwg.mxu0
        %v4442 = vsel %vm4348, %v1902, 0
        %v4445 = vsel %vm4348, %v3102, 0
        %4447 = vmatprep.subr.bf16.mxu0 0
        %4448 = vmatpush1.bf16.xpose.msra.mxu0 %v4445
        %4449 = vmatprep.subr.bf16.mxu0 0
        %4450 = vmatpush1.bf16.xpose.msra.mxu0 0
        %4451 = vmatprep.subr.bf16.mxu0 0
        %4452 = vmatpush1.bf16.xpose.msra.mxu0 0
        %4453 = vmatprep.subr.bf16.mxu0 0
        %4454 = vmatpush1.bf16.xpose.msra.mxu0 0
        %4455 = vmatprep.subr.bf16.mxu0 0
        %4456 = vmatpush1.bf16.xpose.msra.mxu0 0
        %4457 = vmatprep.subr.bf16.mxu0 0
        %4458 = vmatpush1.bf16.xpose.msra.mxu0 0
        %4459 = vmatprep.subr.bf16.mxu0 0
        %4460 = vmatpush1.bf16.xpose.msra.mxu0 0
        %4461 = vmatprep.subr.bf16.mxu0 0
        %4462 = vmatpush1.bf16.xpose.msra.mxu0 0
        %4463 = vmatprep.subr.bf16.mxu0 0
        %4464 = vmatpush1.bf16.xpose.msra.mxu0 0
        %4465 = vmatprep.subr.bf16.mxu0 0
        %4466 = vmatpush1.bf16.xpose.msra.mxu0 0
        %4467 = vmatprep.subr.bf16.mxu0 0
        %4468 = vmatpush1.bf16.xpose.msra.mxu0 0
        %4469 = vmatprep.subr.bf16.mxu0 0
        %4470 = vmatpush1.bf16.xpose.msra.mxu0 0
        %4471 = vmatprep.subr.bf16.mxu0 0
        %4472 = vmatpush1.bf16.xpose.msra.mxu0 0
        %4473 = vmatprep.subr.bf16.mxu0 0
        %4474 = vmatpush1.bf16.xpose.msra.mxu0 0
        %4475 = vmatprep.subr.bf16.mxu0 0
        %4476 = vmatpush1.bf16.xpose.msra.mxu0 0
        %4477 = vmatprep.subr.bf16.mxu0 0
        %4478 = vmatpush1.bf16.xpose.msra.mxu0 0
        %4479 = vmatprep.mubr.bf16.mxu0 0
        %4480 = vmatmul.mubr.bf16.gmra.mrb[0].mxu0 %v4442
        %v4481 = vpop.f32.mrb[0].mxu0
        %v4482 = vadd.f32 0.0, %v4481
        %v4483 = vpop.f32.mrb[0].mxu0
        %v4484 = vpop.f32.mrb[0].mxu0
        %v4485 = vpop.f32.mrb[0].mxu0
        %4486 = vdwg.mxu0
        %v4488 = vsel %vm4348, %v1903, 0
        %v4491 = vsel %vm4348, %v3103, 0
        %4493 = vmatprep.subr.bf16.mxu0 0
        %4494 = vmatpush1.bf16.xpose.msra.mxu0 %v4491
        %4495 = vmatprep.subr.bf16.mxu0 0
        %4496 = vmatpush1.bf16.xpose.msra.mxu0 0
        %4497 = vmatprep.subr.bf16.mxu0 0
        %4498 = vmatpush1.bf16.xpose.msra.mxu0 0
        %4499 = vmatprep.subr.bf16.mxu0 0
        %4500 = vmatpush1.bf16.xpose.msra.mxu0 0
        %4501 = vmatprep.subr.bf16.mxu0 0
        %4502 = vmatpush1.bf16.xpose.msra.mxu0 0
        %4503 = vmatprep.subr.bf16.mxu0 0
        %4504 = vmatpush1.bf16.xpose.msra.mxu0 0
        %4505 = vmatprep.subr.bf16.mxu0 0
        %4506 = vmatpush1.bf16.xpose.msra.mxu0 0
        %4507 = vmatprep.subr.bf16.mxu0 0
        %4508 = vmatpush1.bf16.xpose.msra.mxu0 0
        %4509 = vmatprep.subr.bf16.mxu0 0
        %4510 = vmatpush1.bf16.xpose.msra.mxu0 0
        %4511 = vmatprep.subr.bf16.mxu0 0
        %4512 = vmatpush1.bf16.xpose.msra.mxu0 0
        %4513 = vmatprep.subr.bf16.mxu0 0
        %4514 = vmatpush1.bf16.xpose.msra.mxu0 0
        %4515 = vmatprep.subr.bf16.mxu0 0
        %4516 = vmatpush1.bf16.xpose.msra.mxu0 0
        %4517 = vmatprep.subr.bf16.mxu0 0
        %4518 = vmatpush1.bf16.xpose.msra.mxu0 0
        %4519 = vmatprep.subr.bf16.mxu0 0
        %4520 = vmatpush1.bf16.xpose.msra.mxu0 0
        %4521 = vmatprep.subr.bf16.mxu0 0
        %4522 = vmatpush1.bf16.xpose.msra.mxu0 0
        %4523 = vmatprep.subr.bf16.mxu0 0
        %4524 = vmatpush1.bf16.xpose.msra.mxu0 0
        %4525 = vmatprep.mubr.bf16.mxu0 0
        %4526 = vmatmul.mubr.bf16.gmra.mrb[0].mxu0 %v4488
        %v4527 = vpop.f32.mrb[0].mxu0
        %v4528 = vadd.f32 0.0, %v4527
        %v4529 = vpop.f32.mrb[0].mxu0
        %v4530 = vpop.f32.mrb[0].mxu0
        %v4531 = vpop.f32.mrb[0].mxu0
        %4532 = vdwg.mxu0
        %v4534 = vsel %vm4348, %v1904, 0
        %v4537 = vsel %vm4348, %v3104, 0
        %4539 = vmatprep.subr.bf16.mxu0 0
        %4540 = vmatpush1.bf16.xpose.msra.mxu0 %v4537
        %4541 = vmatprep.subr.bf16.mxu0 0
        %4542 = vmatpush1.bf16.xpose.msra.mxu0 0
        %4543 = vmatprep.subr.bf16.mxu0 0
        %4544 = vmatpush1.bf16.xpose.msra.mxu0 0
        %4545 = vmatprep.subr.bf16.mxu0 0
        %4546 = vmatpush1.bf16.xpose.msra.mxu0 0
        %4547 = vmatprep.subr.bf16.mxu0 0
        %4548 = vmatpush1.bf16.xpose.msra.mxu0 0
        %4549 = vmatprep.subr.bf16.mxu0 0
        %4550 = vmatpush1.bf16.xpose.msra.mxu0 0
        %4551 = vmatprep.subr.bf16.mxu0 0
        %4552 = vmatpush1.bf16.xpose.msra.mxu0 0
        %4553 = vmatprep.subr.bf16.mxu0 0
        %4554 = vmatpush1.bf16.xpose.msra.mxu0 0
        %4555 = vmatprep.subr.bf16.mxu0 0
        %4556 = vmatpush1.bf16.xpose.msra.mxu0 0
        %4557 = vmatprep.subr.bf16.mxu0 0
        %4558 = vmatpush1.bf16.xpose.msra.mxu0 0
        %4559 = vmatprep.subr.bf16.mxu0 0
        %4560 = vmatpush1.bf16.xpose.msra.mxu0 0
        %4561 = vmatprep.subr.bf16.mxu0 0
        %4562 = vmatpush1.bf16.xpose.msra.mxu0 0
        %4563 = vmatprep.subr.bf16.mxu0 0
        %4564 = vmatpush1.bf16.xpose.msra.mxu0 0
        %4565 = vmatprep.subr.bf16.mxu0 0
        %4566 = vmatpush1.bf16.xpose.msra.mxu0 0
        %4567 = vmatprep.subr.bf16.mxu0 0
        %4568 = vmatpush1.bf16.xpose.msra.mxu0 0
        %4569 = vmatprep.subr.bf16.mxu0 0
        %4570 = vmatpush1.bf16.xpose.msra.mxu0 0
        %4571 = vmatprep.mubr.bf16.mxu0 0
        %4572 = vmatmul.mubr.bf16.gmra.mrb[0].mxu0 %v4534
        %v4573 = vpop.f32.mrb[0].mxu0
        %v4574 = vadd.f32 0.0, %v4573
        %v4575 = vpop.f32.mrb[0].mxu0
        %v4576 = vpop.f32.mrb[0].mxu0
        %v4577 = vpop.f32.mrb[0].mxu0
        %4578 = vdwg.mxu0
        %v4580 = vsel %vm4348, %v1905, 0
        %v4583 = vsel %vm4348, %v3105, 0
        %4585 = vmatprep.subr.bf16.mxu0 0
        %4586 = vmatpush1.bf16.xpose.msra.mxu0 %v4583
        %4587 = vmatprep.subr.bf16.mxu0 0
        %4588 = vmatpush1.bf16.xpose.msra.mxu0 0
        %4589 = vmatprep.subr.bf16.mxu0 0
        %4590 = vmatpush1.bf16.xpose.msra.mxu0 0
        %4591 = vmatprep.subr.bf16.mxu0 0
        %4592 = vmatpush1.bf16.xpose.msra.mxu0 0
        %4593 = vmatprep.subr.bf16.mxu0 0
        %4594 = vmatpush1.bf16.xpose.msra.mxu0 0
        %4595 = vmatprep.subr.bf16.mxu0 0
        %4596 = vmatpush1.bf16.xpose.msra.mxu0 0
        %4597 = vmatprep.subr.bf16.mxu0 0
        %4598 = vmatpush1.bf16.xpose.msra.mxu0 0
        %4599 = vmatprep.subr.bf16.mxu0 0
        %4600 = vmatpush1.bf16.xpose.msra.mxu0 0
        %4601 = vmatprep.subr.bf16.mxu0 0
        %4602 = vmatpush1.bf16.xpose.msra.mxu0 0
        %4603 = vmatprep.subr.bf16.mxu0 0
        %4604 = vmatpush1.bf16.xpose.msra.mxu0 0
        %4605 = vmatprep.subr.bf16.mxu0 0
        %4606 = vmatpush1.bf16.xpose.msra.mxu0 0
        %4607 = vmatprep.subr.bf16.mxu0 0
        %4608 = vmatpush1.bf16.xpose.msra.mxu0 0
        %4609 = vmatprep.subr.bf16.mxu0 0
        %4610 = vmatpush1.bf16.xpose.msra.mxu0 0
        %4611 = vmatprep.subr.bf16.mxu0 0
        %4612 = vmatpush1.bf16.xpose.msra.mxu0 0
        %4613 = vmatprep.subr.bf16.mxu0 0
        %4614 = vmatpush1.bf16.xpose.msra.mxu0 0
        %4615 = vmatprep.subr.bf16.mxu0 0
        %4616 = vmatpush1.bf16.xpose.msra.mxu0 0
        %4617 = vmatprep.mubr.bf16.mxu0 0
        %4618 = vmatmul.mubr.bf16.gmra.mrb[0].mxu0 %v4580
        %v4619 = vpop.f32.mrb[0].mxu0
        %v4620 = vadd.f32 0.0, %v4619
        %v4621 = vpop.f32.mrb[0].mxu0
        %v4622 = vpop.f32.mrb[0].mxu0
        %v4623 = vpop.f32.mrb[0].mxu0
        %4624 = vdwg.mxu0
        %v4626 = vsel %vm4348, %v1906, 0
        %v4629 = vsel %vm4348, %v3106, 0
        %4631 = vmatprep.subr.bf16.mxu0 0
        %4632 = vmatpush1.bf16.xpose.msra.mxu0 %v4629
        %4633 = vmatprep.subr.bf16.mxu0 0
        %4634 = vmatpush1.bf16.xpose.msra.mxu0 0
        %4635 = vmatprep.subr.bf16.mxu0 0
        %4636 = vmatpush1.bf16.xpose.msra.mxu0 0
        %4637 = vmatprep.subr.bf16.mxu0 0
        %4638 = vmatpush1.bf16.xpose.msra.mxu0 0
        %4639 = vmatprep.subr.bf16.mxu0 0
        %4640 = vmatpush1.bf16.xpose.msra.mxu0 0
        %4641 = vmatprep.subr.bf16.mxu0 0
        %4642 = vmatpush1.bf16.xpose.msra.mxu0 0
        %4643 = vmatprep.subr.bf16.mxu0 0
        %4644 = vmatpush1.bf16.xpose.msra.mxu0 0
        %4645 = vmatprep.subr.bf16.mxu0 0
        %4646 = vmatpush1.bf16.xpose.msra.mxu0 0
        %4647 = vmatprep.subr.bf16.mxu0 0
        %4648 = vmatpush1.bf16.xpose.msra.mxu0 0
        %4649 = vmatprep.subr.bf16.mxu0 0
        %4650 = vmatpush1.bf16.xpose.msra.mxu0 0
        %4651 = vmatprep.subr.bf16.mxu0 0
        %4652 = vmatpush1.bf16.xpose.msra.mxu0 0
        %4653 = vmatprep.subr.bf16.mxu0 0
        %4654 = vmatpush1.bf16.xpose.msra.mxu0 0
        %4655 = vmatprep.subr.bf16.mxu0 0
        %4656 = vmatpush1.bf16.xpose.msra.mxu0 0
        %4657 = vmatprep.subr.bf16.mxu0 0
        %4658 = vmatpush1.bf16.xpose.msra.mxu0 0
        %4659 = vmatprep.subr.bf16.mxu0 0
        %4660 = vmatpush1.bf16.xpose.msra.mxu0 0
        %4661 = vmatprep.subr.bf16.mxu0 0
        %4662 = vmatpush1.bf16.xpose.msra.mxu0 0
        %4663 = vmatprep.mubr.bf16.mxu0 0
        %4664 = vmatmul.mubr.bf16.gmra.mrb[0].mxu0 %v4626
        %v4665 = vpop.f32.mrb[0].mxu0
        %v4666 = vadd.f32 0.0, %v4665
        %v4667 = vpop.f32.mrb[0].mxu0
        %v4668 = vpop.f32.mrb[0].mxu0
        %v4669 = vpop.f32.mrb[0].mxu0
        %4670 = vdwg.mxu0
        %v4672 = vsel %vm4348, %v1907, 0
        %v4675 = vsel %vm4348, %v3107, 0
        %4677 = vmatprep.subr.bf16.mxu0 0
        %4678 = vmatpush1.bf16.xpose.msra.mxu0 %v4675
        %4679 = vmatprep.subr.bf16.mxu0 0
        %4680 = vmatpush1.bf16.xpose.msra.mxu0 0
        %4681 = vmatprep.subr.bf16.mxu0 0
        %4682 = vmatpush1.bf16.xpose.msra.mxu0 0
        %4683 = vmatprep.subr.bf16.mxu0 0
        %4684 = vmatpush1.bf16.xpose.msra.mxu0 0
        %4685 = vmatprep.subr.bf16.mxu0 0
        %4686 = vmatpush1.bf16.xpose.msra.mxu0 0
        %4687 = vmatprep.subr.bf16.mxu0 0
        %4688 = vmatpush1.bf16.xpose.msra.mxu0 0
        %4689 = vmatprep.subr.bf16.mxu0 0
        %4690 = vmatpush1.bf16.xpose.msra.mxu0 0
        %4691 = vmatprep.subr.bf16.mxu0 0
        %4692 = vmatpush1.bf16.xpose.msra.mxu0 0
        %4693 = vmatprep.subr.bf16.mxu0 0
        %4694 = vmatpush1.bf16.xpose.msra.mxu0 0
        %4695 = vmatprep.subr.bf16.mxu0 0
        %4696 = vmatpush1.bf16.xpose.msra.mxu0 0
        %4697 = vmatprep.subr.bf16.mxu0 0
        %4698 = vmatpush1.bf16.xpose.msra.mxu0 0
        %4699 = vmatprep.subr.bf16.mxu0 0
        %4700 = vmatpush1.bf16.xpose.msra.mxu0 0
        %4701 = vmatprep.subr.bf16.mxu0 0
        %4702 = vmatpush1.bf16.xpose.msra.mxu0 0
        %4703 = vmatprep.subr.bf16.mxu0 0
        %4704 = vmatpush1.bf16.xpose.msra.mxu0 0
        %4705 = vmatprep.subr.bf16.mxu0 0
        %4706 = vmatpush1.bf16.xpose.msra.mxu0 0
        %4707 = vmatprep.subr.bf16.mxu0 0
        %4708 = vmatpush1.bf16.xpose.msra.mxu0 0
        %4709 = vmatprep.mubr.bf16.mxu0 0
        %4710 = vmatmul.mubr.bf16.gmra.mrb[0].mxu0 %v4672
        %v4711 = vpop.f32.mrb[0].mxu0
        %v4712 = vadd.f32 0.0, %v4711
        %v4713 = vpop.f32.mrb[0].mxu0
        %v4714 = vpop.f32.mrb[0].mxu0
        %v4715 = vpop.f32.mrb[0].mxu0
        %4716 = vdwg.mxu0
        %v4718 = vsel %vm4348, %v1908, 0
        %v4721 = vsel %vm4348, %v3108, 0
        %4723 = vmatprep.subr.bf16.mxu0 0
        %4724 = vmatpush1.bf16.xpose.msra.mxu0 %v4721
        %4725 = vmatprep.subr.bf16.mxu0 0
        %4726 = vmatpush1.bf16.xpose.msra.mxu0 0
        %4727 = vmatprep.subr.bf16.mxu0 0
        %4728 = vmatpush1.bf16.xpose.msra.mxu0 0
        %4729 = vmatprep.subr.bf16.mxu0 0
        %4730 = vmatpush1.bf16.xpose.msra.mxu0 0
        %4731 = vmatprep.subr.bf16.mxu0 0
        %4732 = vmatpush1.bf16.xpose.msra.mxu0 0
        %4733 = vmatprep.subr.bf16.mxu0 0
        %4734 = vmatpush1.bf16.xpose.msra.mxu0 0
        %4735 = vmatprep.subr.bf16.mxu0 0
        %4736 = vmatpush1.bf16.xpose.msra.mxu0 0
        %4737 = vmatprep.subr.bf16.mxu0 0
        %4738 = vmatpush1.bf16.xpose.msra.mxu0 0
        %4739 = vmatprep.subr.bf16.mxu0 0
        %4740 = vmatpush1.bf16.xpose.msra.mxu0 0
        %4741 = vmatprep.subr.bf16.mxu0 0
        %4742 = vmatpush1.bf16.xpose.msra.mxu0 0
        %4743 = vmatprep.subr.bf16.mxu0 0
        %4744 = vmatpush1.bf16.xpose.msra.mxu0 0
        %4745 = vmatprep.subr.bf16.mxu0 0
        %4746 = vmatpush1.bf16.xpose.msra.mxu0 0
        %4747 = vmatprep.subr.bf16.mxu0 0
        %4748 = vmatpush1.bf16.xpose.msra.mxu0 0
        %4749 = vmatprep.subr.bf16.mxu0 0
        %4750 = vmatpush1.bf16.xpose.msra.mxu0 0
        %4751 = vmatprep.subr.bf16.mxu0 0
        %4752 = vmatpush1.bf16.xpose.msra.mxu0 0
        %4753 = vmatprep.subr.bf16.mxu0 0
        %4754 = vmatpush1.bf16.xpose.msra.mxu0 0
        %4755 = vmatprep.mubr.bf16.mxu0 0
        %4756 = vmatmul.mubr.bf16.gmra.mrb[0].mxu0 %v4718
        %v4757 = vpop.f32.mrb[0].mxu0
        %v4758 = vadd.f32 0.0, %v4757
        %v4759 = vpop.f32.mrb[0].mxu0
        %v4760 = vpop.f32.mrb[0].mxu0
        %v4761 = vpop.f32.mrb[0].mxu0
        %4762 = vdwg.mxu0
        %v4764 = vsel %vm4348, %v1909, 0
        %v4767 = vsel %vm4348, %v3109, 0
        %4769 = vmatprep.subr.bf16.mxu0 0
        %4770 = vmatpush1.bf16.xpose.msra.mxu0 %v4767
        %4771 = vmatprep.subr.bf16.mxu0 0
        %4772 = vmatpush1.bf16.xpose.msra.mxu0 0
        %4773 = vmatprep.subr.bf16.mxu0 0
        %4774 = vmatpush1.bf16.xpose.msra.mxu0 0
        %4775 = vmatprep.subr.bf16.mxu0 0
        %4776 = vmatpush1.bf16.xpose.msra.mxu0 0
        %4777 = vmatprep.subr.bf16.mxu0 0
        %4778 = vmatpush1.bf16.xpose.msra.mxu0 0
        %4779 = vmatprep.subr.bf16.mxu0 0
        %4780 = vmatpush1.bf16.xpose.msra.mxu0 0
        %4781 = vmatprep.subr.bf16.mxu0 0
        %4782 = vmatpush1.bf16.xpose.msra.mxu0 0
        %4783 = vmatprep.subr.bf16.mxu0 0
        %4784 = vmatpush1.bf16.xpose.msra.mxu0 0
        %4785 = vmatprep.subr.bf16.mxu0 0
        %4786 = vmatpush1.bf16.xpose.msra.mxu0 0
        %4787 = vmatprep.subr.bf16.mxu0 0
        %4788 = vmatpush1.bf16.xpose.msra.mxu0 0
        %4789 = vmatprep.subr.bf16.mxu0 0
        %4790 = vmatpush1.bf16.xpose.msra.mxu0 0
        %4791 = vmatprep.subr.bf16.mxu0 0
        %4792 = vmatpush1.bf16.xpose.msra.mxu0 0
        %4793 = vmatprep.subr.bf16.mxu0 0
        %4794 = vmatpush1.bf16.xpose.msra.mxu0 0
        %4795 = vmatprep.subr.bf16.mxu0 0
        %4796 = vmatpush1.bf16.xpose.msra.mxu0 0
        %4797 = vmatprep.subr.bf16.mxu0 0
        %4798 = vmatpush1.bf16.xpose.msra.mxu0 0
        %4799 = vmatprep.subr.bf16.mxu0 0
        %4800 = vmatpush1.bf16.xpose.msra.mxu0 0
        %4801 = vmatprep.mubr.bf16.mxu0 0
        %4802 = vmatmul.mubr.bf16.gmra.mrb[0].mxu0 %v4764
        %v4803 = vpop.f32.mrb[0].mxu0
        %v4804 = vadd.f32 0.0, %v4803
        %v4805 = vpop.f32.mrb[0].mxu0
        %v4806 = vpop.f32.mrb[0].mxu0
        %v4807 = vpop.f32.mrb[0].mxu0
        %4808 = vdwg.mxu0
        %v4810 = vsel %vm4348, %v1910, 0
        %v4813 = vsel %vm4348, %v3110, 0
        %4815 = vmatprep.subr.bf16.mxu0 0
        %4816 = vmatpush1.bf16.xpose.msra.mxu0 %v4813
        %4817 = vmatprep.subr.bf16.mxu0 0
        %4818 = vmatpush1.bf16.xpose.msra.mxu0 0
        %4819 = vmatprep.subr.bf16.mxu0 0
        %4820 = vmatpush1.bf16.xpose.msra.mxu0 0
        %4821 = vmatprep.subr.bf16.mxu0 0
        %4822 = vmatpush1.bf16.xpose.msra.mxu0 0
        %4823 = vmatprep.subr.bf16.mxu0 0
        %4824 = vmatpush1.bf16.xpose.msra.mxu0 0
        %4825 = vmatprep.subr.bf16.mxu0 0
        %4826 = vmatpush1.bf16.xpose.msra.mxu0 0
        %4827 = vmatprep.subr.bf16.mxu0 0
        %4828 = vmatpush1.bf16.xpose.msra.mxu0 0
        %4829 = vmatprep.subr.bf16.mxu0 0
        %4830 = vmatpush1.bf16.xpose.msra.mxu0 0
        %4831 = vmatprep.subr.bf16.mxu0 0
        %4832 = vmatpush1.bf16.xpose.msra.mxu0 0
        %4833 = vmatprep.subr.bf16.mxu0 0
        %4834 = vmatpush1.bf16.xpose.msra.mxu0 0
        %4835 = vmatprep.subr.bf16.mxu0 0
        %4836 = vmatpush1.bf16.xpose.msra.mxu0 0
        %4837 = vmatprep.subr.bf16.mxu0 0
        %4838 = vmatpush1.bf16.xpose.msra.mxu0 0
        %4839 = vmatprep.subr.bf16.mxu0 0
        %4840 = vmatpush1.bf16.xpose.msra.mxu0 0
        %4841 = vmatprep.subr.bf16.mxu0 0
        %4842 = vmatpush1.bf16.xpose.msra.mxu0 0
        %4843 = vmatprep.subr.bf16.mxu0 0
        %4844 = vmatpush1.bf16.xpose.msra.mxu0 0
        %4845 = vmatprep.subr.bf16.mxu0 0
        %4846 = vmatpush1.bf16.xpose.msra.mxu0 0
        %4847 = vmatprep.mubr.bf16.mxu0 0
        %4848 = vmatmul.mubr.bf16.gmra.mrb[0].mxu0 %v4810
        %v4849 = vpop.f32.mrb[0].mxu0
        %v4850 = vadd.f32 0.0, %v4849
        %v4851 = vpop.f32.mrb[0].mxu0
        %v4852 = vpop.f32.mrb[0].mxu0
        %v4853 = vpop.f32.mrb[0].mxu0
        %4854 = vdwg.mxu0
        %v4856 = vsel %vm4348, %v1911, 0
        %v4859 = vsel %vm4348, %v3111, 0
        %4861 = vmatprep.subr.bf16.mxu0 0
        %4862 = vmatpush1.bf16.xpose.msra.mxu0 %v4859
        %4863 = vmatprep.subr.bf16.mxu0 0
        %4864 = vmatpush1.bf16.xpose.msra.mxu0 0
        %4865 = vmatprep.subr.bf16.mxu0 0
        %4866 = vmatpush1.bf16.xpose.msra.mxu0 0
        %4867 = vmatprep.subr.bf16.mxu0 0
        %4868 = vmatpush1.bf16.xpose.msra.mxu0 0
        %4869 = vmatprep.subr.bf16.mxu0 0
        %4870 = vmatpush1.bf16.xpose.msra.mxu0 0
        %4871 = vmatprep.subr.bf16.mxu0 0
        %4872 = vmatpush1.bf16.xpose.msra.mxu0 0
        %4873 = vmatprep.subr.bf16.mxu0 0
        %4874 = vmatpush1.bf16.xpose.msra.mxu0 0
        %4875 = vmatprep.subr.bf16.mxu0 0
        %4876 = vmatpush1.bf16.xpose.msra.mxu0 0
        %4877 = vmatprep.subr.bf16.mxu0 0
        %4878 = vmatpush1.bf16.xpose.msra.mxu0 0
        %4879 = vmatprep.subr.bf16.mxu0 0
        %4880 = vmatpush1.bf16.xpose.msra.mxu0 0
        %4881 = vmatprep.subr.bf16.mxu0 0
        %4882 = vmatpush1.bf16.xpose.msra.mxu0 0
        %4883 = vmatprep.subr.bf16.mxu0 0
        %4884 = vmatpush1.bf16.xpose.msra.mxu0 0
        %4885 = vmatprep.subr.bf16.mxu0 0
        %4886 = vmatpush1.bf16.xpose.msra.mxu0 0
        %4887 = vmatprep.subr.bf16.mxu0 0
        %4888 = vmatpush1.bf16.xpose.msra.mxu0 0
        %4889 = vmatprep.subr.bf16.mxu0 0
        %4890 = vmatpush1.bf16.xpose.msra.mxu0 0
        %4891 = vmatprep.subr.bf16.mxu0 0
        %4892 = vmatpush1.bf16.xpose.msra.mxu0 0
        %4893 = vmatprep.mubr.bf16.mxu0 0
        %4894 = vmatmul.mubr.bf16.gmra.mrb[0].mxu0 %v4856
        %v4895 = vpop.f32.mrb[0].mxu0
        %v4896 = vadd.f32 0.0, %v4895
        %v4897 = vpop.f32.mrb[0].mxu0
        %v4898 = vpop.f32.mrb[0].mxu0
        %v4899 = vpop.f32.mrb[0].mxu0
        %4900 = vdwg.mxu0
        %v4902 = vsel %vm4348, %v1912, 0
        %v4905 = vsel %vm4348, %v3112, 0
        %4907 = vmatprep.subr.bf16.mxu0 0
        %4908 = vmatpush1.bf16.xpose.msra.mxu0 %v4905
        %4909 = vmatprep.subr.bf16.mxu0 0
        %4910 = vmatpush1.bf16.xpose.msra.mxu0 0
        %4911 = vmatprep.subr.bf16.mxu0 0
        %4912 = vmatpush1.bf16.xpose.msra.mxu0 0
        %4913 = vmatprep.subr.bf16.mxu0 0
        %4914 = vmatpush1.bf16.xpose.msra.mxu0 0
        %4915 = vmatprep.subr.bf16.mxu0 0
        %4916 = vmatpush1.bf16.xpose.msra.mxu0 0
        %4917 = vmatprep.subr.bf16.mxu0 0
        %4918 = vmatpush1.bf16.xpose.msra.mxu0 0
        %4919 = vmatprep.subr.bf16.mxu0 0
        %4920 = vmatpush1.bf16.xpose.msra.mxu0 0
        %4921 = vmatprep.subr.bf16.mxu0 0
        %4922 = vmatpush1.bf16.xpose.msra.mxu0 0
        %4923 = vmatprep.subr.bf16.mxu0 0
        %4924 = vmatpush1.bf16.xpose.msra.mxu0 0
        %4925 = vmatprep.subr.bf16.mxu0 0
        %4926 = vmatpush1.bf16.xpose.msra.mxu0 0
        %4927 = vmatprep.subr.bf16.mxu0 0
        %4928 = vmatpush1.bf16.xpose.msra.mxu0 0
        %4929 = vmatprep.subr.bf16.mxu0 0
        %4930 = vmatpush1.bf16.xpose.msra.mxu0 0
        %4931 = vmatprep.subr.bf16.mxu0 0
        %4932 = vmatpush1.bf16.xpose.msra.mxu0 0
        %4933 = vmatprep.subr.bf16.mxu0 0
        %4934 = vmatpush1.bf16.xpose.msra.mxu0 0
        %4935 = vmatprep.subr.bf16.mxu0 0
        %4936 = vmatpush1.bf16.xpose.msra.mxu0 0
        %4937 = vmatprep.subr.bf16.mxu0 0
        %4938 = vmatpush1.bf16.xpose.msra.mxu0 0
        %4939 = vmatprep.mubr.bf16.mxu0 0
        %4940 = vmatmul.mubr.bf16.gmra.mrb[0].mxu0 %v4902
        %v4941 = vpop.f32.mrb[0].mxu0
        %v4942 = vadd.f32 0.0, %v4941
        %v4943 = vpop.f32.mrb[0].mxu0
        %v4944 = vpop.f32.mrb[0].mxu0
        %v4945 = vpop.f32.mrb[0].mxu0
        %4946 = vdwg.mxu0
        %v4948 = vsel %vm4348, %v1913, 0
        %v4951 = vsel %vm4348, %v3113, 0
        %4953 = vmatprep.subr.bf16.mxu0 0
        %4954 = vmatpush1.bf16.xpose.msra.mxu0 %v4951
        %4955 = vmatprep.subr.bf16.mxu0 0
        %4956 = vmatpush1.bf16.xpose.msra.mxu0 0
        %4957 = vmatprep.subr.bf16.mxu0 0
        %4958 = vmatpush1.bf16.xpose.msra.mxu0 0
        %4959 = vmatprep.subr.bf16.mxu0 0
        %4960 = vmatpush1.bf16.xpose.msra.mxu0 0
        %4961 = vmatprep.subr.bf16.mxu0 0
        %4962 = vmatpush1.bf16.xpose.msra.mxu0 0
        %4963 = vmatprep.subr.bf16.mxu0 0
        %4964 = vmatpush1.bf16.xpose.msra.mxu0 0
        %4965 = vmatprep.subr.bf16.mxu0 0
        %4966 = vmatpush1.bf16.xpose.msra.mxu0 0
        %4967 = vmatprep.subr.bf16.mxu0 0
        %4968 = vmatpush1.bf16.xpose.msra.mxu0 0
        %4969 = vmatprep.subr.bf16.mxu0 0
        %4970 = vmatpush1.bf16.xpose.msra.mxu0 0
        %4971 = vmatprep.subr.bf16.mxu0 0
        %4972 = vmatpush1.bf16.xpose.msra.mxu0 0
        %4973 = vmatprep.subr.bf16.mxu0 0
        %4974 = vmatpush1.bf16.xpose.msra.mxu0 0
        %4975 = vmatprep.subr.bf16.mxu0 0
        %4976 = vmatpush1.bf16.xpose.msra.mxu0 0
        %4977 = vmatprep.subr.bf16.mxu0 0
        %4978 = vmatpush1.bf16.xpose.msra.mxu0 0
        %4979 = vmatprep.subr.bf16.mxu0 0
        %4980 = vmatpush1.bf16.xpose.msra.mxu0 0
        %4981 = vmatprep.subr.bf16.mxu0 0
        %4982 = vmatpush1.bf16.xpose.msra.mxu0 0
        %4983 = vmatprep.subr.bf16.mxu0 0
        %4984 = vmatpush1.bf16.xpose.msra.mxu0 0
        %4985 = vmatprep.mubr.bf16.mxu0 0
        %4986 = vmatmul.mubr.bf16.gmra.mrb[0].mxu0 %v4948
        %v4987 = vpop.f32.mrb[0].mxu0
        %v4988 = vadd.f32 0.0, %v4987
        %v4989 = vpop.f32.mrb[0].mxu0
        %v4990 = vpop.f32.mrb[0].mxu0
        %v4991 = vpop.f32.mrb[0].mxu0
        %4992 = vdwg.mxu0
        %v4994 = vsel %vm4348, %v1914, 0
        %v4997 = vsel %vm4348, %v3114, 0
        %4999 = vmatprep.subr.bf16.mxu0 0
        %5000 = vmatpush1.bf16.xpose.msra.mxu0 %v4997
        %5001 = vmatprep.subr.bf16.mxu0 0
        %5002 = vmatpush1.bf16.xpose.msra.mxu0 0
        %5003 = vmatprep.subr.bf16.mxu0 0
        %5004 = vmatpush1.bf16.xpose.msra.mxu0 0
        %5005 = vmatprep.subr.bf16.mxu0 0
        %5006 = vmatpush1.bf16.xpose.msra.mxu0 0
        %5007 = vmatprep.subr.bf16.mxu0 0
        %5008 = vmatpush1.bf16.xpose.msra.mxu0 0
        %5009 = vmatprep.subr.bf16.mxu0 0
        %5010 = vmatpush1.bf16.xpose.msra.mxu0 0
        %5011 = vmatprep.subr.bf16.mxu0 0
        %5012 = vmatpush1.bf16.xpose.msra.mxu0 0
        %5013 = vmatprep.subr.bf16.mxu0 0
        %5014 = vmatpush1.bf16.xpose.msra.mxu0 0
        %5015 = vmatprep.subr.bf16.mxu0 0
        %5016 = vmatpush1.bf16.xpose.msra.mxu0 0
        %5017 = vmatprep.subr.bf16.mxu0 0
        %5018 = vmatpush1.bf16.xpose.msra.mxu0 0
        %5019 = vmatprep.subr.bf16.mxu0 0
        %5020 = vmatpush1.bf16.xpose.msra.mxu0 0
        %5021 = vmatprep.subr.bf16.mxu0 0
        %5022 = vmatpush1.bf16.xpose.msra.mxu0 0
        %5023 = vmatprep.subr.bf16.mxu0 0
        %5024 = vmatpush1.bf16.xpose.msra.mxu0 0
        %5025 = vmatprep.subr.bf16.mxu0 0
        %5026 = vmatpush1.bf16.xpose.msra.mxu0 0
        %5027 = vmatprep.subr.bf16.mxu0 0
        %5028 = vmatpush1.bf16.xpose.msra.mxu0 0
        %5029 = vmatprep.subr.bf16.mxu0 0
        %5030 = vmatpush1.bf16.xpose.msra.mxu0 0
        %5031 = vmatprep.mubr.bf16.mxu0 0
        %5032 = vmatmul.mubr.bf16.gmra.mrb[0].mxu0 %v4994
        %v5033 = vpop.f32.mrb[0].mxu0
        %v5034 = vadd.f32 0.0, %v5033
        %v5035 = vpop.f32.mrb[0].mxu0
        %v5036 = vpop.f32.mrb[0].mxu0
        %v5037 = vpop.f32.mrb[0].mxu0
        %5038 = vdwg.mxu0
        %v5040 = vsel %vm4348, %v1915, 0
        %v5043 = vsel %vm4348, %v3115, 0
        %5045 = vmatprep.subr.bf16.mxu0 0
        %5046 = vmatpush1.bf16.xpose.msra.mxu0 %v5043
        %5047 = vmatprep.subr.bf16.mxu0 0
        %5048 = vmatpush1.bf16.xpose.msra.mxu0 0
        %5049 = vmatprep.subr.bf16.mxu0 0
        %5050 = vmatpush1.bf16.xpose.msra.mxu0 0
        %5051 = vmatprep.subr.bf16.mxu0 0
        %5052 = vmatpush1.bf16.xpose.msra.mxu0 0
        %5053 = vmatprep.subr.bf16.mxu0 0
        %5054 = vmatpush1.bf16.xpose.msra.mxu0 0
        %5055 = vmatprep.subr.bf16.mxu0 0
        %5056 = vmatpush1.bf16.xpose.msra.mxu0 0
        %5057 = vmatprep.subr.bf16.mxu0 0
        %5058 = vmatpush1.bf16.xpose.msra.mxu0 0
        %5059 = vmatprep.subr.bf16.mxu0 0
        %5060 = vmatpush1.bf16.xpose.msra.mxu0 0
        %5061 = vmatprep.subr.bf16.mxu0 0
        %5062 = vmatpush1.bf16.xpose.msra.mxu0 0
        %5063 = vmatprep.subr.bf16.mxu0 0
        %5064 = vmatpush1.bf16.xpose.msra.mxu0 0
        %5065 = vmatprep.subr.bf16.mxu0 0
        %5066 = vmatpush1.bf16.xpose.msra.mxu0 0
        %5067 = vmatprep.subr.bf16.mxu0 0
        %5068 = vmatpush1.bf16.xpose.msra.mxu0 0
        %5069 = vmatprep.subr.bf16.mxu0 0
        %5070 = vmatpush1.bf16.xpose.msra.mxu0 0
        %5071 = vmatprep.subr.bf16.mxu0 0
        %5072 = vmatpush1.bf16.xpose.msra.mxu0 0
        %5073 = vmatprep.subr.bf16.mxu0 0
        %5074 = vmatpush1.bf16.xpose.msra.mxu0 0
        %5075 = vmatprep.subr.bf16.mxu0 0
        %5076 = vmatpush1.bf16.xpose.msra.mxu0 0
        %5077 = vmatprep.mubr.bf16.mxu0 0
        %5078 = vmatmul.mubr.bf16.gmra.mrb[0].mxu0 %v5040
        %v5079 = vpop.f32.mrb[0].mxu0
        %v5080 = vadd.f32 0.0, %v5079
        %v5081 = vpop.f32.mrb[0].mxu0
        %v5082 = vpop.f32.mrb[0].mxu0
        %v5083 = vpop.f32.mrb[0].mxu0
        %5084 = vdwg.mxu0
        %v5086 = vsel %vm4348, %v1916, 0
        %v5089 = vsel %vm4348, %v3116, 0
        %5091 = vmatprep.subr.bf16.mxu0 0
        %5092 = vmatpush1.bf16.xpose.msra.mxu0 %v5089
        %5093 = vmatprep.subr.bf16.mxu0 0
        %5094 = vmatpush1.bf16.xpose.msra.mxu0 0
        %5095 = vmatprep.subr.bf16.mxu0 0
        %5096 = vmatpush1.bf16.xpose.msra.mxu0 0
        %5097 = vmatprep.subr.bf16.mxu0 0
        %5098 = vmatpush1.bf16.xpose.msra.mxu0 0
        %5099 = vmatprep.subr.bf16.mxu0 0
        %5100 = vmatpush1.bf16.xpose.msra.mxu0 0
        %5101 = vmatprep.subr.bf16.mxu0 0
        %5102 = vmatpush1.bf16.xpose.msra.mxu0 0
        %5103 = vmatprep.subr.bf16.mxu0 0
        %5104 = vmatpush1.bf16.xpose.msra.mxu0 0
        %5105 = vmatprep.subr.bf16.mxu0 0
        %5106 = vmatpush1.bf16.xpose.msra.mxu0 0
        %5107 = vmatprep.subr.bf16.mxu0 0
        %5108 = vmatpush1.bf16.xpose.msra.mxu0 0
        %5109 = vmatprep.subr.bf16.mxu0 0
        %5110 = vmatpush1.bf16.xpose.msra.mxu0 0
        %5111 = vmatprep.subr.bf16.mxu0 0
        %5112 = vmatpush1.bf16.xpose.msra.mxu0 0
        %5113 = vmatprep.subr.bf16.mxu0 0
        %5114 = vmatpush1.bf16.xpose.msra.mxu0 0
        %5115 = vmatprep.subr.bf16.mxu0 0
        %5116 = vmatpush1.bf16.xpose.msra.mxu0 0
        %5117 = vmatprep.subr.bf16.mxu0 0
        %5118 = vmatpush1.bf16.xpose.msra.mxu0 0
        %5119 = vmatprep.subr.bf16.mxu0 0
        %5120 = vmatpush1.bf16.xpose.msra.mxu0 0
        %5121 = vmatprep.subr.bf16.mxu0 0
        %5122 = vmatpush1.bf16.xpose.msra.mxu0 0
        %5123 = vmatprep.mubr.bf16.mxu0 0
        %5124 = vmatmul.mubr.bf16.gmra.mrb[0].mxu0 %v5086
        %v5125 = vpop.f32.mrb[0].mxu0
        %v5126 = vadd.f32 0.0, %v5125
        %v5127 = vpop.f32.mrb[0].mxu0
        %v5128 = vpop.f32.mrb[0].mxu0
        %v5129 = vpop.f32.mrb[0].mxu0
        %5130 = vdwg.mxu0
        %v5132 = vsel %vm4348, %v1917, 0
        %v5135 = vsel %vm4348, %v3117, 0
        %5137 = vmatprep.subr.bf16.mxu0 0
        %5138 = vmatpush1.bf16.xpose.msra.mxu0 %v5135
        %5139 = vmatprep.subr.bf16.mxu0 0
        %5140 = vmatpush1.bf16.xpose.msra.mxu0 0
        %5141 = vmatprep.subr.bf16.mxu0 0
        %5142 = vmatpush1.bf16.xpose.msra.mxu0 0
        %5143 = vmatprep.subr.bf16.mxu0 0
        %5144 = vmatpush1.bf16.xpose.msra.mxu0 0
        %5145 = vmatprep.subr.bf16.mxu0 0
        %5146 = vmatpush1.bf16.xpose.msra.mxu0 0
        %5147 = vmatprep.subr.bf16.mxu0 0
        %5148 = vmatpush1.bf16.xpose.msra.mxu0 0
        %5149 = vmatprep.subr.bf16.mxu0 0
        %5150 = vmatpush1.bf16.xpose.msra.mxu0 0
        %5151 = vmatprep.subr.bf16.mxu0 0
        %5152 = vmatpush1.bf16.xpose.msra.mxu0 0
        %5153 = vmatprep.subr.bf16.mxu0 0
        %5154 = vmatpush1.bf16.xpose.msra.mxu0 0
        %5155 = vmatprep.subr.bf16.mxu0 0
        %5156 = vmatpush1.bf16.xpose.msra.mxu0 0
        %5157 = vmatprep.subr.bf16.mxu0 0
        %5158 = vmatpush1.bf16.xpose.msra.mxu0 0
        %5159 = vmatprep.subr.bf16.mxu0 0
        %5160 = vmatpush1.bf16.xpose.msra.mxu0 0
        %5161 = vmatprep.subr.bf16.mxu0 0
        %5162 = vmatpush1.bf16.xpose.msra.mxu0 0
        %5163 = vmatprep.subr.bf16.mxu0 0
        %5164 = vmatpush1.bf16.xpose.msra.mxu0 0
        %5165 = vmatprep.subr.bf16.mxu0 0
        %5166 = vmatpush1.bf16.xpose.msra.mxu0 0
        %5167 = vmatprep.subr.bf16.mxu0 0
        %5168 = vmatpush1.bf16.xpose.msra.mxu0 0
        %5169 = vmatprep.mubr.bf16.mxu0 0
        %5170 = vmatmul.mubr.bf16.gmra.mrb[0].mxu0 %v5132
        %v5171 = vpop.f32.mrb[0].mxu0
        %v5172 = vadd.f32 0.0, %v5171
        %v5173 = vpop.f32.mrb[0].mxu0
        %v5174 = vpop.f32.mrb[0].mxu0
        %v5175 = vpop.f32.mrb[0].mxu0
        %5176 = vdwg.mxu0
        %v5178 = vsel %vm4348, %v1918, 0
        %v5181 = vsel %vm4348, %v3118, 0
        %5183 = vmatprep.subr.bf16.mxu0 0
        %5184 = vmatpush1.bf16.xpose.msra.mxu0 %v5181
        %5185 = vmatprep.subr.bf16.mxu0 0
        %5186 = vmatpush1.bf16.xpose.msra.mxu0 0
        %5187 = vmatprep.subr.bf16.mxu0 0
        %5188 = vmatpush1.bf16.xpose.msra.mxu0 0
        %5189 = vmatprep.subr.bf16.mxu0 0
        %5190 = vmatpush1.bf16.xpose.msra.mxu0 0
        %5191 = vmatprep.subr.bf16.mxu0 0
        %5192 = vmatpush1.bf16.xpose.msra.mxu0 0
        %5193 = vmatprep.subr.bf16.mxu0 0
        %5194 = vmatpush1.bf16.xpose.msra.mxu0 0
        %5195 = vmatprep.subr.bf16.mxu0 0
        %5196 = vmatpush1.bf16.xpose.msra.mxu0 0
        %5197 = vmatprep.subr.bf16.mxu0 0
        %5198 = vmatpush1.bf16.xpose.msra.mxu0 0
        %5199 = vmatprep.subr.bf16.mxu0 0
        %5200 = vmatpush1.bf16.xpose.msra.mxu0 0
        %5201 = vmatprep.subr.bf16.mxu0 0
        %5202 = vmatpush1.bf16.xpose.msra.mxu0 0
        %5203 = vmatprep.subr.bf16.mxu0 0
        %5204 = vmatpush1.bf16.xpose.msra.mxu0 0
        %5205 = vmatprep.subr.bf16.mxu0 0
        %5206 = vmatpush1.bf16.xpose.msra.mxu0 0
        %5207 = vmatprep.subr.bf16.mxu0 0
        %5208 = vmatpush1.bf16.xpose.msra.mxu0 0
        %5209 = vmatprep.subr.bf16.mxu0 0
        %5210 = vmatpush1.bf16.xpose.msra.mxu0 0
        %5211 = vmatprep.subr.bf16.mxu0 0
        %5212 = vmatpush1.bf16.xpose.msra.mxu0 0
        %5213 = vmatprep.subr.bf16.mxu0 0
        %5214 = vmatpush1.bf16.xpose.msra.mxu0 0
        %5215 = vmatprep.mubr.bf16.mxu0 0
        %5216 = vmatmul.mubr.bf16.gmra.mrb[0].mxu0 %v5178
        %v5217 = vpop.f32.mrb[0].mxu0
        %v5218 = vadd.f32 0.0, %v5217
        %v5219 = vpop.f32.mrb[0].mxu0
        %v5220 = vpop.f32.mrb[0].mxu0
        %v5221 = vpop.f32.mrb[0].mxu0
        %5222 = vdwg.mxu0
        %v5224 = vsel %vm4348, %v1919, 0
        %v5227 = vsel %vm4348, %v3119, 0
        %5229 = vmatprep.subr.bf16.mxu0 0
        %5230 = vmatpush1.bf16.xpose.msra.mxu0 %v5227
        %5231 = vmatprep.subr.bf16.mxu0 0
        %5232 = vmatpush1.bf16.xpose.msra.mxu0 0
        %5233 = vmatprep.subr.bf16.mxu0 0
        %5234 = vmatpush1.bf16.xpose.msra.mxu0 0
        %5235 = vmatprep.subr.bf16.mxu0 0
        %5236 = vmatpush1.bf16.xpose.msra.mxu0 0
        %5237 = vmatprep.subr.bf16.mxu0 0
        %5238 = vmatpush1.bf16.xpose.msra.mxu0 0
        %5239 = vmatprep.subr.bf16.mxu0 0
        %5240 = vmatpush1.bf16.xpose.msra.mxu0 0
        %5241 = vmatprep.subr.bf16.mxu0 0
        %5242 = vmatpush1.bf16.xpose.msra.mxu0 0
        %5243 = vmatprep.subr.bf16.mxu0 0
        %5244 = vmatpush1.bf16.xpose.msra.mxu0 0
        %5245 = vmatprep.subr.bf16.mxu0 0
        %5246 = vmatpush1.bf16.xpose.msra.mxu0 0
        %5247 = vmatprep.subr.bf16.mxu0 0
        %5248 = vmatpush1.bf16.xpose.msra.mxu0 0
        %5249 = vmatprep.subr.bf16.mxu0 0
        %5250 = vmatpush1.bf16.xpose.msra.mxu0 0
        %5251 = vmatprep.subr.bf16.mxu0 0
        %5252 = vmatpush1.bf16.xpose.msra.mxu0 0
        %5253 = vmatprep.subr.bf16.mxu0 0
        %5254 = vmatpush1.bf16.xpose.msra.mxu0 0
        %5255 = vmatprep.subr.bf16.mxu0 0
        %5256 = vmatpush1.bf16.xpose.msra.mxu0 0
        %5257 = vmatprep.subr.bf16.mxu0 0
        %5258 = vmatpush1.bf16.xpose.msra.mxu0 0
        %5259 = vmatprep.subr.bf16.mxu0 0
        %5260 = vmatpush1.bf16.xpose.msra.mxu0 0
        %5261 = vmatprep.mubr.bf16.mxu0 0
        %5262 = vmatmul.mubr.bf16.gmra.mrb[0].mxu0 %v5224
        %v5263 = vpop.f32.mrb[0].mxu0
        %v5264 = vadd.f32 0.0, %v5263
        %v5265 = vpop.f32.mrb[0].mxu0
        %v5266 = vpop.f32.mrb[0].mxu0
        %v5267 = vpop.f32.mrb[0].mxu0
        %5268 = vdwg.mxu0
        %v5270 = vsel %vm4348, %v1920, 0
        %v5273 = vsel %vm4348, %v3120, 0
        %5275 = vmatprep.subr.bf16.mxu0 0
        %5276 = vmatpush1.bf16.xpose.msra.mxu0 %v5273
        %5277 = vmatprep.subr.bf16.mxu0 0
        %5278 = vmatpush1.bf16.xpose.msra.mxu0 0
        %5279 = vmatprep.subr.bf16.mxu0 0
        %5280 = vmatpush1.bf16.xpose.msra.mxu0 0
        %5281 = vmatprep.subr.bf16.mxu0 0
        %5282 = vmatpush1.bf16.xpose.msra.mxu0 0
        %5283 = vmatprep.subr.bf16.mxu0 0
        %5284 = vmatpush1.bf16.xpose.msra.mxu0 0
        %5285 = vmatprep.subr.bf16.mxu0 0
        %5286 = vmatpush1.bf16.xpose.msra.mxu0 0
        %5287 = vmatprep.subr.bf16.mxu0 0
        %5288 = vmatpush1.bf16.xpose.msra.mxu0 0
        %5289 = vmatprep.subr.bf16.mxu0 0
        %5290 = vmatpush1.bf16.xpose.msra.mxu0 0
        %5291 = vmatprep.subr.bf16.mxu0 0
        %5292 = vmatpush1.bf16.xpose.msra.mxu0 0
        %5293 = vmatprep.subr.bf16.mxu0 0
        %5294 = vmatpush1.bf16.xpose.msra.mxu0 0
        %5295 = vmatprep.subr.bf16.mxu0 0
        %5296 = vmatpush1.bf16.xpose.msra.mxu0 0
        %5297 = vmatprep.subr.bf16.mxu0 0
        %5298 = vmatpush1.bf16.xpose.msra.mxu0 0
        %5299 = vmatprep.subr.bf16.mxu0 0
        %5300 = vmatpush1.bf16.xpose.msra.mxu0 0
        %5301 = vmatprep.subr.bf16.mxu0 0
        %5302 = vmatpush1.bf16.xpose.msra.mxu0 0
        %5303 = vmatprep.subr.bf16.mxu0 0
        %5304 = vmatpush1.bf16.xpose.msra.mxu0 0
        %5305 = vmatprep.subr.bf16.mxu0 0
        %5306 = vmatpush1.bf16.xpose.msra.mxu0 0
        %5307 = vmatprep.mubr.bf16.mxu0 0
        %5308 = vmatmul.mubr.bf16.gmra.mrb[0].mxu0 %v5270
        %v5309 = vpop.f32.mrb[0].mxu0
        %v5310 = vadd.f32 0.0, %v5309
        %v5311 = vpop.f32.mrb[0].mxu0
        %v5312 = vpop.f32.mrb[0].mxu0
        %v5313 = vpop.f32.mrb[0].mxu0
        %5314 = vdwg.mxu0
        %v5316 = vsel %vm4348, %v1921, 0
        %v5319 = vsel %vm4348, %v3121, 0
        %5321 = vmatprep.subr.bf16.mxu0 0
        %5322 = vmatpush1.bf16.xpose.msra.mxu0 %v5319
        %5323 = vmatprep.subr.bf16.mxu0 0
        %5324 = vmatpush1.bf16.xpose.msra.mxu0 0
        %5325 = vmatprep.subr.bf16.mxu0 0
        %5326 = vmatpush1.bf16.xpose.msra.mxu0 0
        %5327 = vmatprep.subr.bf16.mxu0 0
        %5328 = vmatpush1.bf16.xpose.msra.mxu0 0
        %5329 = vmatprep.subr.bf16.mxu0 0
        %5330 = vmatpush1.bf16.xpose.msra.mxu0 0
        %5331 = vmatprep.subr.bf16.mxu0 0
        %5332 = vmatpush1.bf16.xpose.msra.mxu0 0
        %5333 = vmatprep.subr.bf16.mxu0 0
        %5334 = vmatpush1.bf16.xpose.msra.mxu0 0
        %5335 = vmatprep.subr.bf16.mxu0 0
        %5336 = vmatpush1.bf16.xpose.msra.mxu0 0
        %5337 = vmatprep.subr.bf16.mxu0 0
        %5338 = vmatpush1.bf16.xpose.msra.mxu0 0
        %5339 = vmatprep.subr.bf16.mxu0 0
        %5340 = vmatpush1.bf16.xpose.msra.mxu0 0
        %5341 = vmatprep.subr.bf16.mxu0 0
        %5342 = vmatpush1.bf16.xpose.msra.mxu0 0
        %5343 = vmatprep.subr.bf16.mxu0 0
        %5344 = vmatpush1.bf16.xpose.msra.mxu0 0
        %5345 = vmatprep.subr.bf16.mxu0 0
        %5346 = vmatpush1.bf16.xpose.msra.mxu0 0
        %5347 = vmatprep.subr.bf16.mxu0 0
        %5348 = vmatpush1.bf16.xpose.msra.mxu0 0
        %5349 = vmatprep.subr.bf16.mxu0 0
        %5350 = vmatpush1.bf16.xpose.msra.mxu0 0
        %5351 = vmatprep.subr.bf16.mxu0 0
        %5352 = vmatpush1.bf16.xpose.msra.mxu0 0
        %5353 = vmatprep.mubr.bf16.mxu0 0
        %5354 = vmatmul.mubr.bf16.gmra.mrb[0].mxu0 %v5316
        %v5355 = vpop.f32.mrb[0].mxu0
        %v5356 = vadd.f32 0.0, %v5355
        %v5357 = vpop.f32.mrb[0].mxu0
        %v5358 = vpop.f32.mrb[0].mxu0
        %v5359 = vpop.f32.mrb[0].mxu0
        %5360 = vdwg.mxu0
        %v5362 = vsel %vm4348, %v1922, 0
        %v5365 = vsel %vm4348, %v3122, 0
        %5367 = vmatprep.subr.bf16.mxu0 0
        %5368 = vmatpush1.bf16.xpose.msra.mxu0 %v5365
        %5369 = vmatprep.subr.bf16.mxu0 0
        %5370 = vmatpush1.bf16.xpose.msra.mxu0 0
        %5371 = vmatprep.subr.bf16.mxu0 0
        %5372 = vmatpush1.bf16.xpose.msra.mxu0 0
        %5373 = vmatprep.subr.bf16.mxu0 0
        %5374 = vmatpush1.bf16.xpose.msra.mxu0 0
        %5375 = vmatprep.subr.bf16.mxu0 0
        %5376 = vmatpush1.bf16.xpose.msra.mxu0 0
        %5377 = vmatprep.subr.bf16.mxu0 0
        %5378 = vmatpush1.bf16.xpose.msra.mxu0 0
        %5379 = vmatprep.subr.bf16.mxu0 0
        %5380 = vmatpush1.bf16.xpose.msra.mxu0 0
        %5381 = vmatprep.subr.bf16.mxu0 0
        %5382 = vmatpush1.bf16.xpose.msra.mxu0 0
        %5383 = vmatprep.subr.bf16.mxu0 0
        %5384 = vmatpush1.bf16.xpose.msra.mxu0 0
        %5385 = vmatprep.subr.bf16.mxu0 0
        %5386 = vmatpush1.bf16.xpose.msra.mxu0 0
        %5387 = vmatprep.subr.bf16.mxu0 0
        %5388 = vmatpush1.bf16.xpose.msra.mxu0 0
        %5389 = vmatprep.subr.bf16.mxu0 0
        %5390 = vmatpush1.bf16.xpose.msra.mxu0 0
        %5391 = vmatprep.subr.bf16.mxu0 0
        %5392 = vmatpush1.bf16.xpose.msra.mxu0 0
        %5393 = vmatprep.subr.bf16.mxu0 0
        %5394 = vmatpush1.bf16.xpose.msra.mxu0 0
        %5395 = vmatprep.subr.bf16.mxu0 0
        %5396 = vmatpush1.bf16.xpose.msra.mxu0 0
        %5397 = vmatprep.subr.bf16.mxu0 0
        %5398 = vmatpush1.bf16.xpose.msra.mxu0 0
        %5399 = vmatprep.mubr.bf16.mxu0 0
        %5400 = vmatmul.mubr.bf16.gmra.mrb[0].mxu0 %v5362
        %v5401 = vpop.f32.mrb[0].mxu0
        %v5402 = vadd.f32 0.0, %v5401
        %v5403 = vpop.f32.mrb[0].mxu0
        %v5404 = vpop.f32.mrb[0].mxu0
        %v5405 = vpop.f32.mrb[0].mxu0
        %5406 = vdwg.mxu0
        %v5408 = vsel %vm4348, %v1923, 0
        %v5411 = vsel %vm4348, %v3123, 0
        %5413 = vmatprep.subr.bf16.mxu0 0
        %5414 = vmatpush1.bf16.xpose.msra.mxu0 %v5411
        %5415 = vmatprep.subr.bf16.mxu0 0
        %5416 = vmatpush1.bf16.xpose.msra.mxu0 0
        %5417 = vmatprep.subr.bf16.mxu0 0
        %5418 = vmatpush1.bf16.xpose.msra.mxu0 0
        %5419 = vmatprep.subr.bf16.mxu0 0
        %5420 = vmatpush1.bf16.xpose.msra.mxu0 0
        %5421 = vmatprep.subr.bf16.mxu0 0
        %5422 = vmatpush1.bf16.xpose.msra.mxu0 0
        %5423 = vmatprep.subr.bf16.mxu0 0
        %5424 = vmatpush1.bf16.xpose.msra.mxu0 0
        %5425 = vmatprep.subr.bf16.mxu0 0
        %5426 = vmatpush1.bf16.xpose.msra.mxu0 0
        %5427 = vmatprep.subr.bf16.mxu0 0
        %5428 = vmatpush1.bf16.xpose.msra.mxu0 0
        %5429 = vmatprep.subr.bf16.mxu0 0
        %5430 = vmatpush1.bf16.xpose.msra.mxu0 0
        %5431 = vmatprep.subr.bf16.mxu0 0
        %5432 = vmatpush1.bf16.xpose.msra.mxu0 0
        %5433 = vmatprep.subr.bf16.mxu0 0
        %5434 = vmatpush1.bf16.xpose.msra.mxu0 0
        %5435 = vmatprep.subr.bf16.mxu0 0
        %5436 = vmatpush1.bf16.xpose.msra.mxu0 0
        %5437 = vmatprep.subr.bf16.mxu0 0
        %5438 = vmatpush1.bf16.xpose.msra.mxu0 0
        %5439 = vmatprep.subr.bf16.mxu0 0
        %5440 = vmatpush1.bf16.xpose.msra.mxu0 0
        %5441 = vmatprep.subr.bf16.mxu0 0
        %5442 = vmatpush1.bf16.xpose.msra.mxu0 0
        %5443 = vmatprep.subr.bf16.mxu0 0
        %5444 = vmatpush1.bf16.xpose.msra.mxu0 0
        %5445 = vmatprep.mubr.bf16.mxu0 0
        %5446 = vmatmul.mubr.bf16.gmra.mrb[0].mxu0 %v5408
        %v5447 = vpop.f32.mrb[0].mxu0
        %v5448 = vadd.f32 0.0, %v5447
        %v5449 = vpop.f32.mrb[0].mxu0
        %v5450 = vpop.f32.mrb[0].mxu0
        %v5451 = vpop.f32.mrb[0].mxu0
        %5452 = vdwg.mxu0
        %v5454 = vsel %vm4348, %v1924, 0
        %v5457 = vsel %vm4348, %v3124, 0
        %5459 = vmatprep.subr.bf16.mxu0 0
        %5460 = vmatpush1.bf16.xpose.msra.mxu0 %v5457
        %5461 = vmatprep.subr.bf16.mxu0 0
        %5462 = vmatpush1.bf16.xpose.msra.mxu0 0
        %5463 = vmatprep.subr.bf16.mxu0 0
        %5464 = vmatpush1.bf16.xpose.msra.mxu0 0
        %5465 = vmatprep.subr.bf16.mxu0 0
        %5466 = vmatpush1.bf16.xpose.msra.mxu0 0
        %5467 = vmatprep.subr.bf16.mxu0 0
        %5468 = vmatpush1.bf16.xpose.msra.mxu0 0
        %5469 = vmatprep.subr.bf16.mxu0 0
        %5470 = vmatpush1.bf16.xpose.msra.mxu0 0
        %5471 = vmatprep.subr.bf16.mxu0 0
        %5472 = vmatpush1.bf16.xpose.msra.mxu0 0
        %5473 = vmatprep.subr.bf16.mxu0 0
        %5474 = vmatpush1.bf16.xpose.msra.mxu0 0
        %5475 = vmatprep.subr.bf16.mxu0 0
        %5476 = vmatpush1.bf16.xpose.msra.mxu0 0
        %5477 = vmatprep.subr.bf16.mxu0 0
        %5478 = vmatpush1.bf16.xpose.msra.mxu0 0
        %5479 = vmatprep.subr.bf16.mxu0 0
        %5480 = vmatpush1.bf16.xpose.msra.mxu0 0
        %5481 = vmatprep.subr.bf16.mxu0 0
        %5482 = vmatpush1.bf16.xpose.msra.mxu0 0
        %5483 = vmatprep.subr.bf16.mxu0 0
        %5484 = vmatpush1.bf16.xpose.msra.mxu0 0
        %5485 = vmatprep.subr.bf16.mxu0 0
        %5486 = vmatpush1.bf16.xpose.msra.mxu0 0
        %5487 = vmatprep.subr.bf16.mxu0 0
        %5488 = vmatpush1.bf16.xpose.msra.mxu0 0
        %5489 = vmatprep.subr.bf16.mxu0 0
        %5490 = vmatpush1.bf16.xpose.msra.mxu0 0
        %5491 = vmatprep.mubr.bf16.mxu0 0
        %5492 = vmatmul.mubr.bf16.gmra.mrb[0].mxu0 %v5454
        %v5493 = vpop.f32.mrb[0].mxu0
        %v5494 = vadd.f32 0.0, %v5493
        %v5495 = vpop.f32.mrb[0].mxu0
        %v5496 = vpop.f32.mrb[0].mxu0
        %v5497 = vpop.f32.mrb[0].mxu0
        %5498 = vdwg.mxu0
        %v5500 = vsel %vm4348, %v1925, 0
        %v5503 = vsel %vm4348, %v3125, 0
        %5505 = vmatprep.subr.bf16.mxu0 0
        %5506 = vmatpush1.bf16.xpose.msra.mxu0 %v5503
        %5507 = vmatprep.subr.bf16.mxu0 0
        %5508 = vmatpush1.bf16.xpose.msra.mxu0 0
        %5509 = vmatprep.subr.bf16.mxu0 0
        %5510 = vmatpush1.bf16.xpose.msra.mxu0 0
        %5511 = vmatprep.subr.bf16.mxu0 0
        %5512 = vmatpush1.bf16.xpose.msra.mxu0 0
        %5513 = vmatprep.subr.bf16.mxu0 0
        %5514 = vmatpush1.bf16.xpose.msra.mxu0 0
        %5515 = vmatprep.subr.bf16.mxu0 0
        %5516 = vmatpush1.bf16.xpose.msra.mxu0 0
        %5517 = vmatprep.subr.bf16.mxu0 0
        %5518 = vmatpush1.bf16.xpose.msra.mxu0 0
        %5519 = vmatprep.subr.bf16.mxu0 0
        %5520 = vmatpush1.bf16.xpose.msra.mxu0 0
        %5521 = vmatprep.subr.bf16.mxu0 0
        %5522 = vmatpush1.bf16.xpose.msra.mxu0 0
        %5523 = vmatprep.subr.bf16.mxu0 0
        %5524 = vmatpush1.bf16.xpose.msra.mxu0 0
        %5525 = vmatprep.subr.bf16.mxu0 0
        %5526 = vmatpush1.bf16.xpose.msra.mxu0 0
        %5527 = vmatprep.subr.bf16.mxu0 0
        %5528 = vmatpush1.bf16.xpose.msra.mxu0 0
        %5529 = vmatprep.subr.bf16.mxu0 0
        %5530 = vmatpush1.bf16.xpose.msra.mxu0 0
        %5531 = vmatprep.subr.bf16.mxu0 0
        %5532 = vmatpush1.bf16.xpose.msra.mxu0 0
        %5533 = vmatprep.subr.bf16.mxu0 0
        %5534 = vmatpush1.bf16.xpose.msra.mxu0 0
        %5535 = vmatprep.subr.bf16.mxu0 0
        %5536 = vmatpush1.bf16.xpose.msra.mxu0 0
        %5537 = vmatprep.mubr.bf16.mxu0 0
        %5538 = vmatmul.mubr.bf16.gmra.mrb[0].mxu0 %v5500
        %v5539 = vpop.f32.mrb[0].mxu0
        %v5540 = vadd.f32 0.0, %v5539
        %v5541 = vpop.f32.mrb[0].mxu0
        %v5542 = vpop.f32.mrb[0].mxu0
        %v5543 = vpop.f32.mrb[0].mxu0
        %5544 = vdwg.mxu0
        %v5546 = vsel %vm4348, %v1926, 0
        %v5549 = vsel %vm4348, %v3126, 0
        %5551 = vmatprep.subr.bf16.mxu0 0
        %5552 = vmatpush1.bf16.xpose.msra.mxu0 %v5549
        %5553 = vmatprep.subr.bf16.mxu0 0
        %5554 = vmatpush1.bf16.xpose.msra.mxu0 0
        %5555 = vmatprep.subr.bf16.mxu0 0
        %5556 = vmatpush1.bf16.xpose.msra.mxu0 0
        %5557 = vmatprep.subr.bf16.mxu0 0
        %5558 = vmatpush1.bf16.xpose.msra.mxu0 0
        %5559 = vmatprep.subr.bf16.mxu0 0
        %5560 = vmatpush1.bf16.xpose.msra.mxu0 0
        %5561 = vmatprep.subr.bf16.mxu0 0
        %5562 = vmatpush1.bf16.xpose.msra.mxu0 0
        %5563 = vmatprep.subr.bf16.mxu0 0
        %5564 = vmatpush1.bf16.xpose.msra.mxu0 0
        %5565 = vmatprep.subr.bf16.mxu0 0
        %5566 = vmatpush1.bf16.xpose.msra.mxu0 0
        %5567 = vmatprep.subr.bf16.mxu0 0
        %5568 = vmatpush1.bf16.xpose.msra.mxu0 0
        %5569 = vmatprep.subr.bf16.mxu0 0
        %5570 = vmatpush1.bf16.xpose.msra.mxu0 0
        %5571 = vmatprep.subr.bf16.mxu0 0
        %5572 = vmatpush1.bf16.xpose.msra.mxu0 0
        %5573 = vmatprep.subr.bf16.mxu0 0
        %5574 = vmatpush1.bf16.xpose.msra.mxu0 0
        %5575 = vmatprep.subr.bf16.mxu0 0
        %5576 = vmatpush1.bf16.xpose.msra.mxu0 0
        %5577 = vmatprep.subr.bf16.mxu0 0
        %5578 = vmatpush1.bf16.xpose.msra.mxu0 0
        %5579 = vmatprep.subr.bf16.mxu0 0
        %5580 = vmatpush1.bf16.xpose.msra.mxu0 0
        %5581 = vmatprep.subr.bf16.mxu0 0
        %5582 = vmatpush1.bf16.xpose.msra.mxu0 0
        %5583 = vmatprep.mubr.bf16.mxu0 0
        %5584 = vmatmul.mubr.bf16.gmra.mrb[0].mxu0 %v5546
        %v5585 = vpop.f32.mrb[0].mxu0
        %v5586 = vadd.f32 0.0, %v5585
        %v5587 = vpop.f32.mrb[0].mxu0
        %v5588 = vpop.f32.mrb[0].mxu0
        %v5589 = vpop.f32.mrb[0].mxu0
        %5590 = vdwg.mxu0
        %v5592 = vsel %vm4348, %v1927, 0
        %v5595 = vsel %vm4348, %v3127, 0
        %5597 = vmatprep.subr.bf16.mxu0 0
        %5598 = vmatpush1.bf16.xpose.msra.mxu0 %v5595
        %5599 = vmatprep.subr.bf16.mxu0 0
        %5600 = vmatpush1.bf16.xpose.msra.mxu0 0
        %5601 = vmatprep.subr.bf16.mxu0 0
        %5602 = vmatpush1.bf16.xpose.msra.mxu0 0
        %5603 = vmatprep.subr.bf16.mxu0 0
        %5604 = vmatpush1.bf16.xpose.msra.mxu0 0
        %5605 = vmatprep.subr.bf16.mxu0 0
        %5606 = vmatpush1.bf16.xpose.msra.mxu0 0
        %5607 = vmatprep.subr.bf16.mxu0 0
        %5608 = vmatpush1.bf16.xpose.msra.mxu0 0
        %5609 = vmatprep.subr.bf16.mxu0 0
        %5610 = vmatpush1.bf16.xpose.msra.mxu0 0
        %5611 = vmatprep.subr.bf16.mxu0 0
        %5612 = vmatpush1.bf16.xpose.msra.mxu0 0
        %5613 = vmatprep.subr.bf16.mxu0 0
        %5614 = vmatpush1.bf16.xpose.msra.mxu0 0
        %5615 = vmatprep.subr.bf16.mxu0 0
        %5616 = vmatpush1.bf16.xpose.msra.mxu0 0
        %5617 = vmatprep.subr.bf16.mxu0 0
        %5618 = vmatpush1.bf16.xpose.msra.mxu0 0
        %5619 = vmatprep.subr.bf16.mxu0 0
        %5620 = vmatpush1.bf16.xpose.msra.mxu0 0
        %5621 = vmatprep.subr.bf16.mxu0 0
        %5622 = vmatpush1.bf16.xpose.msra.mxu0 0
        %5623 = vmatprep.subr.bf16.mxu0 0
        %5624 = vmatpush1.bf16.xpose.msra.mxu0 0
        %5625 = vmatprep.subr.bf16.mxu0 0
        %5626 = vmatpush1.bf16.xpose.msra.mxu0 0
        %5627 = vmatprep.subr.bf16.mxu0 0
        %5628 = vmatpush1.bf16.xpose.msra.mxu0 0
        %5629 = vmatprep.mubr.bf16.mxu0 0
        %5630 = vmatmul.mubr.bf16.gmra.mrb[0].mxu0 %v5592
        %v5631 = vpop.f32.mrb[0].mxu0
        %v5632 = vadd.f32 0.0, %v5631
        %v5633 = vpop.f32.mrb[0].mxu0
        %v5634 = vpop.f32.mrb[0].mxu0
        %v5635 = vpop.f32.mrb[0].mxu0
        %5636 = vdwg.mxu0
        %v5638 = vsel %vm4348, %v1928, 0
        %v5641 = vsel %vm4348, %v3128, 0
        %5643 = vmatprep.subr.bf16.mxu0 0
        %5644 = vmatpush1.bf16.xpose.msra.mxu0 %v5641
        %5645 = vmatprep.subr.bf16.mxu0 0
        %5646 = vmatpush1.bf16.xpose.msra.mxu0 0
        %5647 = vmatprep.subr.bf16.mxu0 0
        %5648 = vmatpush1.bf16.xpose.msra.mxu0 0
        %5649 = vmatprep.subr.bf16.mxu0 0
        %5650 = vmatpush1.bf16.xpose.msra.mxu0 0
        %5651 = vmatprep.subr.bf16.mxu0 0
        %5652 = vmatpush1.bf16.xpose.msra.mxu0 0
        %5653 = vmatprep.subr.bf16.mxu0 0
        %5654 = vmatpush1.bf16.xpose.msra.mxu0 0
        %5655 = vmatprep.subr.bf16.mxu0 0
        %5656 = vmatpush1.bf16.xpose.msra.mxu0 0
        %5657 = vmatprep.subr.bf16.mxu0 0
        %5658 = vmatpush1.bf16.xpose.msra.mxu0 0
        %5659 = vmatprep.subr.bf16.mxu0 0
        %5660 = vmatpush1.bf16.xpose.msra.mxu0 0
        %5661 = vmatprep.subr.bf16.mxu0 0
        %5662 = vmatpush1.bf16.xpose.msra.mxu0 0
        %5663 = vmatprep.subr.bf16.mxu0 0
        %5664 = vmatpush1.bf16.xpose.msra.mxu0 0
        %5665 = vmatprep.subr.bf16.mxu0 0
        %5666 = vmatpush1.bf16.xpose.msra.mxu0 0
        %5667 = vmatprep.subr.bf16.mxu0 0
        %5668 = vmatpush1.bf16.xpose.msra.mxu0 0
        %5669 = vmatprep.subr.bf16.mxu0 0
        %5670 = vmatpush1.bf16.xpose.msra.mxu0 0
        %5671 = vmatprep.subr.bf16.mxu0 0
        %5672 = vmatpush1.bf16.xpose.msra.mxu0 0
        %5673 = vmatprep.subr.bf16.mxu0 0
        %5674 = vmatpush1.bf16.xpose.msra.mxu0 0
        %5675 = vmatprep.mubr.bf16.mxu0 0
        %5676 = vmatmul.mubr.bf16.gmra.mrb[0].mxu0 %v5638
        %v5677 = vpop.f32.mrb[0].mxu0
        %v5678 = vadd.f32 0.0, %v5677
        %v5679 = vpop.f32.mrb[0].mxu0
        %v5680 = vpop.f32.mrb[0].mxu0
        %v5681 = vpop.f32.mrb[0].mxu0
        %5682 = vdwg.mxu0
        %v5684 = vsel %vm4348, %v1929, 0
        %v5687 = vsel %vm4348, %v3129, 0
        %5689 = vmatprep.subr.bf16.mxu0 0
        %5690 = vmatpush1.bf16.xpose.msra.mxu0 %v5687
        %5691 = vmatprep.subr.bf16.mxu0 0
        %5692 = vmatpush1.bf16.xpose.msra.mxu0 0
        %5693 = vmatprep.subr.bf16.mxu0 0
        %5694 = vmatpush1.bf16.xpose.msra.mxu0 0
        %5695 = vmatprep.subr.bf16.mxu0 0
        %5696 = vmatpush1.bf16.xpose.msra.mxu0 0
        %5697 = vmatprep.subr.bf16.mxu0 0
        %5698 = vmatpush1.bf16.xpose.msra.mxu0 0
        %5699 = vmatprep.subr.bf16.mxu0 0
        %5700 = vmatpush1.bf16.xpose.msra.mxu0 0
        %5701 = vmatprep.subr.bf16.mxu0 0
        %5702 = vmatpush1.bf16.xpose.msra.mxu0 0
        %5703 = vmatprep.subr.bf16.mxu0 0
        %5704 = vmatpush1.bf16.xpose.msra.mxu0 0
        %5705 = vmatprep.subr.bf16.mxu0 0
        %5706 = vmatpush1.bf16.xpose.msra.mxu0 0
        %5707 = vmatprep.subr.bf16.mxu0 0
        %5708 = vmatpush1.bf16.xpose.msra.mxu0 0
        %5709 = vmatprep.subr.bf16.mxu0 0
        %5710 = vmatpush1.bf16.xpose.msra.mxu0 0
        %5711 = vmatprep.subr.bf16.mxu0 0
        %5712 = vmatpush1.bf16.xpose.msra.mxu0 0
        %5713 = vmatprep.subr.bf16.mxu0 0
        %5714 = vmatpush1.bf16.xpose.msra.mxu0 0
        %5715 = vmatprep.subr.bf16.mxu0 0
        %5716 = vmatpush1.bf16.xpose.msra.mxu0 0
        %5717 = vmatprep.subr.bf16.mxu0 0
        %5718 = vmatpush1.bf16.xpose.msra.mxu0 0
        %5719 = vmatprep.subr.bf16.mxu0 0
        %5720 = vmatpush1.bf16.xpose.msra.mxu0 0
        %5721 = vmatprep.mubr.bf16.mxu0 0
        %5722 = vmatmul.mubr.bf16.gmra.mrb[0].mxu0 %v5684
        %v5723 = vpop.f32.mrb[0].mxu0
        %v5724 = vadd.f32 0.0, %v5723
        %v5725 = vpop.f32.mrb[0].mxu0
        %v5726 = vpop.f32.mrb[0].mxu0
        %v5727 = vpop.f32.mrb[0].mxu0
        %5728 = vdwg.mxu0
        %v5730 = vsel %vm4348, %v1930, 0
        %v5733 = vsel %vm4348, %v3130, 0
        %5735 = vmatprep.subr.bf16.mxu0 0
        %5736 = vmatpush1.bf16.xpose.msra.mxu0 %v5733
        %5737 = vmatprep.subr.bf16.mxu0 0
        %5738 = vmatpush1.bf16.xpose.msra.mxu0 0
        %5739 = vmatprep.subr.bf16.mxu0 0
        %5740 = vmatpush1.bf16.xpose.msra.mxu0 0
        %5741 = vmatprep.subr.bf16.mxu0 0
        %5742 = vmatpush1.bf16.xpose.msra.mxu0 0
        %5743 = vmatprep.subr.bf16.mxu0 0
        %5744 = vmatpush1.bf16.xpose.msra.mxu0 0
        %5745 = vmatprep.subr.bf16.mxu0 0
        %5746 = vmatpush1.bf16.xpose.msra.mxu0 0
        %5747 = vmatprep.subr.bf16.mxu0 0
        %5748 = vmatpush1.bf16.xpose.msra.mxu0 0
        %5749 = vmatprep.subr.bf16.mxu0 0
        %5750 = vmatpush1.bf16.xpose.msra.mxu0 0
        %5751 = vmatprep.subr.bf16.mxu0 0
        %5752 = vmatpush1.bf16.xpose.msra.mxu0 0
        %5753 = vmatprep.subr.bf16.mxu0 0
        %5754 = vmatpush1.bf16.xpose.msra.mxu0 0
        %5755 = vmatprep.subr.bf16.mxu0 0
        %5756 = vmatpush1.bf16.xpose.msra.mxu0 0
        %5757 = vmatprep.subr.bf16.mxu0 0
        %5758 = vmatpush1.bf16.xpose.msra.mxu0 0
        %5759 = vmatprep.subr.bf16.mxu0 0
        %5760 = vmatpush1.bf16.xpose.msra.mxu0 0
        %5761 = vmatprep.subr.bf16.mxu0 0
        %5762 = vmatpush1.bf16.xpose.msra.mxu0 0
        %5763 = vmatprep.subr.bf16.mxu0 0
        %5764 = vmatpush1.bf16.xpose.msra.mxu0 0
        %5765 = vmatprep.subr.bf16.mxu0 0
        %5766 = vmatpush1.bf16.xpose.msra.mxu0 0
        %5767 = vmatprep.mubr.bf16.mxu0 0
        %5768 = vmatmul.mubr.bf16.gmra.mrb[0].mxu0 %v5730
        %v5769 = vpop.f32.mrb[0].mxu0
        %v5770 = vadd.f32 0.0, %v5769
        %v5771 = vpop.f32.mrb[0].mxu0
        %v5772 = vpop.f32.mrb[0].mxu0
        %v5773 = vpop.f32.mrb[0].mxu0
        %5774 = vdwg.mxu0
        %v5776 = vsel %vm4348, %v1931, 0
        %v5779 = vsel %vm4348, %v3131, 0
        %5781 = vmatprep.subr.bf16.mxu0 0
        %5782 = vmatpush1.bf16.xpose.msra.mxu0 %v5779
        %5783 = vmatprep.subr.bf16.mxu0 0
        %5784 = vmatpush1.bf16.xpose.msra.mxu0 0
        %5785 = vmatprep.subr.bf16.mxu0 0
        %5786 = vmatpush1.bf16.xpose.msra.mxu0 0
        %5787 = vmatprep.subr.bf16.mxu0 0
        %5788 = vmatpush1.bf16.xpose.msra.mxu0 0
        %5789 = vmatprep.subr.bf16.mxu0 0
        %5790 = vmatpush1.bf16.xpose.msra.mxu0 0
        %5791 = vmatprep.subr.bf16.mxu0 0
        %5792 = vmatpush1.bf16.xpose.msra.mxu0 0
        %5793 = vmatprep.subr.bf16.mxu0 0
        %5794 = vmatpush1.bf16.xpose.msra.mxu0 0
        %5795 = vmatprep.subr.bf16.mxu0 0
        %5796 = vmatpush1.bf16.xpose.msra.mxu0 0
        %5797 = vmatprep.subr.bf16.mxu0 0
        %5798 = vmatpush1.bf16.xpose.msra.mxu0 0
        %5799 = vmatprep.subr.bf16.mxu0 0
        %5800 = vmatpush1.bf16.xpose.msra.mxu0 0
        %5801 = vmatprep.subr.bf16.mxu0 0
        %5802 = vmatpush1.bf16.xpose.msra.mxu0 0
        %5803 = vmatprep.subr.bf16.mxu0 0
        %5804 = vmatpush1.bf16.xpose.msra.mxu0 0
        %5805 = vmatprep.subr.bf16.mxu0 0
        %5806 = vmatpush1.bf16.xpose.msra.mxu0 0
        %5807 = vmatprep.subr.bf16.mxu0 0
        %5808 = vmatpush1.bf16.xpose.msra.mxu0 0
        %5809 = vmatprep.subr.bf16.mxu0 0
        %5810 = vmatpush1.bf16.xpose.msra.mxu0 0
        %5811 = vmatprep.subr.bf16.mxu0 0
        %5812 = vmatpush1.bf16.xpose.msra.mxu0 0
        %5813 = vmatprep.mubr.bf16.mxu0 0
        %5814 = vmatmul.mubr.bf16.gmra.mrb[0].mxu0 %v5776
        %v5815 = vpop.f32.mrb[0].mxu0
        %v5816 = vadd.f32 0.0, %v5815
        %v5817 = vpop.f32.mrb[0].mxu0
        %v5818 = vpop.f32.mrb[0].mxu0
        %v5819 = vpop.f32.mrb[0].mxu0
        %5820 = vdwg.mxu0
        %v5821 = vsel %vm4348, %v4390, -inf
        %5822 = vmax.xlane.f32.xlu0 %v5821
        %v5823 = vpop.xlane.xlu0 %5822
        %v5824 = vsel %vm4348, %v4436, -inf
        %5825 = vmax.xlane.f32.xlu0 %v5824
        %v5826 = vpop.xlane.xlu0 %5825
        %v5827 = vsel %vm4348, %v4482, -inf
        %5828 = vmax.xlane.f32.xlu0 %v5827
        %v5829 = vpop.xlane.xlu0 %5828
        %v5830 = vsel %vm4348, %v4528, -inf
        %5831 = vmax.xlane.f32.xlu0 %v5830
        %v5832 = vpop.xlane.xlu0 %5831
        %v5833 = vsel %vm4348, %v4574, -inf
        %5834 = vmax.xlane.f32.xlu0 %v5833
        %v5835 = vpop.xlane.xlu0 %5834
        %v5836 = vsel %vm4348, %v4620, -inf
        %5837 = vmax.xlane.f32.xlu0 %v5836
        %v5838 = vpop.xlane.xlu0 %5837
        %v5839 = vsel %vm4348, %v4666, -inf
        %5840 = vmax.xlane.f32.xlu0 %v5839
        %v5841 = vpop.xlane.xlu0 %5840
        %v5842 = vsel %vm4348, %v4712, -inf
        %5843 = vmax.xlane.f32.xlu0 %v5842
        %v5844 = vpop.xlane.xlu0 %5843
        %v5845 = vsel %vm4348, %v4758, -inf
        %5846 = vmax.xlane.f32.xlu0 %v5845
        %v5847 = vpop.xlane.xlu0 %5846
        %v5848 = vsel %vm4348, %v4804, -inf
        %5849 = vmax.xlane.f32.xlu0 %v5848
        %v5850 = vpop.xlane.xlu0 %5849
        %v5851 = vsel %vm4348, %v4850, -inf
        %5852 = vmax.xlane.f32.xlu0 %v5851
        %v5853 = vpop.xlane.xlu0 %5852
        %v5854 = vsel %vm4348, %v4896, -inf
        %5855 = vmax.xlane.f32.xlu0 %v5854
        %v5856 = vpop.xlane.xlu0 %5855
        %v5857 = vsel %vm4348, %v4942, -inf
        %5858 = vmax.xlane.f32.xlu0 %v5857
        %v5859 = vpop.xlane.xlu0 %5858
        %v5860 = vsel %vm4348, %v4988, -inf
        %5861 = vmax.xlane.f32.xlu0 %v5860
        %v5862 = vpop.xlane.xlu0 %5861
        %v5863 = vsel %vm4348, %v5034, -inf
        %5864 = vmax.xlane.f32.xlu0 %v5863
        %v5865 = vpop.xlane.xlu0 %5864
        %v5866 = vsel %vm4348, %v5080, -inf
        %5867 = vmax.xlane.f32.xlu0 %v5866
        %v5868 = vpop.xlane.xlu0 %5867
        %v5869 = vsel %vm4348, %v5126, -inf
        %5870 = vmax.xlane.f32.xlu0 %v5869
        %v5871 = vpop.xlane.xlu0 %5870
        %v5872 = vsel %vm4348, %v5172, -inf
        %5873 = vmax.xlane.f32.xlu0 %v5872
        %v5874 = vpop.xlane.xlu0 %5873
        %v5875 = vsel %vm4348, %v5218, -inf
        %5876 = vmax.xlane.f32.xlu0 %v5875
        %v5877 = vpop.xlane.xlu0 %5876
        %v5878 = vsel %vm4348, %v5264, -inf
        %5879 = vmax.xlane.f32.xlu0 %v5878
        %v5880 = vpop.xlane.xlu0 %5879
        %v5881 = vsel %vm4348, %v5310, -inf
        %5882 = vmax.xlane.f32.xlu0 %v5881
        %v5883 = vpop.xlane.xlu0 %5882
        %v5884 = vsel %vm4348, %v5356, -inf
        %5885 = vmax.xlane.f32.xlu0 %v5884
        %v5886 = vpop.xlane.xlu0 %5885
        %v5887 = vsel %vm4348, %v5402, -inf
        %5888 = vmax.xlane.f32.xlu0 %v5887
        %v5889 = vpop.xlane.xlu0 %5888
        %v5890 = vsel %vm4348, %v5448, -inf
        %5891 = vmax.xlane.f32.xlu0 %v5890
        %v5892 = vpop.xlane.xlu0 %5891
        %v5893 = vsel %vm4348, %v5494, -inf
        %5894 = vmax.xlane.f32.xlu0 %v5893
        %v5895 = vpop.xlane.xlu0 %5894
        %v5896 = vsel %vm4348, %v5540, -inf
        %5897 = vmax.xlane.f32.xlu0 %v5896
        %v5898 = vpop.xlane.xlu0 %5897
        %v5899 = vsel %vm4348, %v5586, -inf
        %5900 = vmax.xlane.f32.xlu0 %v5899
        %v5901 = vpop.xlane.xlu0 %5900
        %v5902 = vsel %vm4348, %v5632, -inf
        %5903 = vmax.xlane.f32.xlu0 %v5902
        %v5904 = vpop.xlane.xlu0 %5903
        %v5905 = vsel %vm4348, %v5678, -inf
        %5906 = vmax.xlane.f32.xlu0 %v5905
        %v5907 = vpop.xlane.xlu0 %5906
        %v5908 = vsel %vm4348, %v5724, -inf
        %5909 = vmax.xlane.f32.xlu0 %v5908
        %v5910 = vpop.xlane.xlu0 %5909
        %v5911 = vsel %vm4348, %v5770, -inf
        %5912 = vmax.xlane.f32.xlu0 %v5911
        %v5913 = vpop.xlane.xlu0 %5912
        %v5914 = vsel %vm4348, %v5816, -inf
        %5915 = vmax.xlane.f32.xlu0 %v5914
        %v5916 = vpop.xlane.xlu0 %5915
        %v5917 = vsub.f32 %v4390, %v5823
        %v5918 = vsub.f32 %v4436, %v5826
        %v5919 = vsub.f32 %v4482, %v5829
        %v5920 = vsub.f32 %v4528, %v5832
        %v5921 = vsub.f32 %v4574, %v5835
        %v5922 = vsub.f32 %v4620, %v5838
        %v5923 = vsub.f32 %v4666, %v5841
        %v5924 = vsub.f32 %v4712, %v5844
        %v5925 = vsub.f32 %v4758, %v5847
        %v5926 = vsub.f32 %v4804, %v5850
        %v5927 = vsub.f32 %v4850, %v5853
        %v5928 = vsub.f32 %v4896, %v5856
        %v5929 = vsub.f32 %v4942, %v5859
        %v5930 = vsub.f32 %v4988, %v5862
        %v5931 = vsub.f32 %v5034, %v5865
        %v5932 = vsub.f32 %v5080, %v5868
        %v5933 = vsub.f32 %v5126, %v5871
        %v5934 = vsub.f32 %v5172, %v5874
        %v5935 = vsub.f32 %v5218, %v5877
        %v5936 = vsub.f32 %v5264, %v5880
        %v5937 = vsub.f32 %v5310, %v5883
        %v5938 = vsub.f32 %v5356, %v5886
        %v5939 = vsub.f32 %v5402, %v5889
        %v5940 = vsub.f32 %v5448, %v5892
        %v5941 = vsub.f32 %v5494, %v5895
        %v5942 = vsub.f32 %v5540, %v5898
        %v5943 = vsub.f32 %v5586, %v5901
        %v5944 = vsub.f32 %v5632, %v5904
        %v5945 = vsub.f32 %v5678, %v5907
        %v5946 = vsub.f32 %v5724, %v5910
        %v5947 = vsub.f32 %v5770, %v5913
        %v5948 = vsub.f32 %v5816, %v5916
        %v5949 = vmul.f32 %v5917, 1.442695
        %v5950 = vpow.pop %v5949
        %v5951 = vmul.f32 %v5918, 1.442695
        %v5952 = vpow.pop %v5951
        %v5953 = vmul.f32 %v5919, 1.442695
        %v5954 = vpow.pop %v5953
        %v5955 = vmul.f32 %v5920, 1.442695
        %v5956 = vpow.pop %v5955
        %v5957 = vmul.f32 %v5921, 1.442695
        %v5958 = vpow.pop %v5957
        %v5959 = vmul.f32 %v5922, 1.442695
        %v5960 = vpow.pop %v5959
        %v5961 = vmul.f32 %v5923, 1.442695
        %v5962 = vpow.pop %v5961
        %v5963 = vmul.f32 %v5924, 1.442695
        %v5964 = vpow.pop %v5963
        %v5965 = vmul.f32 %v5925, 1.442695
        %v5966 = vpow.pop %v5965
        %v5967 = vmul.f32 %v5926, 1.442695
        %v5968 = vpow.pop %v5967
        %v5969 = vmul.f32 %v5927, 1.442695
        %v5970 = vpow.pop %v5969
        %v5971 = vmul.f32 %v5928, 1.442695
        %v5972 = vpow.pop %v5971
        %v5973 = vmul.f32 %v5929, 1.442695
        %v5974 = vpow.pop %v5973
        %v5975 = vmul.f32 %v5930, 1.442695
        %v5976 = vpow.pop %v5975
        %v5977 = vmul.f32 %v5931, 1.442695
        %v5978 = vpow.pop %v5977
        %v5979 = vmul.f32 %v5932, 1.442695
        %v5980 = vpow.pop %v5979
        %v5981 = vmul.f32 %v5933, 1.442695
        %v5982 = vpow.pop %v5981
        %v5983 = vmul.f32 %v5934, 1.442695
        %v5984 = vpow.pop %v5983
        %v5985 = vmul.f32 %v5935, 1.442695
        %v5986 = vpow.pop %v5985
        %v5987 = vmul.f32 %v5936, 1.442695
        %v5988 = vpow.pop %v5987
        %v5989 = vmul.f32 %v5937, 1.442695
        %v5990 = vpow.pop %v5989
        %v5991 = vmul.f32 %v5938, 1.442695
        %v5992 = vpow.pop %v5991
        %v5993 = vmul.f32 %v5939, 1.442695
        %v5994 = vpow.pop %v5993
        %v5995 = vmul.f32 %v5940, 1.442695
        %v5996 = vpow.pop %v5995
        %v5997 = vmul.f32 %v5941, 1.442695
        %v5998 = vpow.pop %v5997
        %v5999 = vmul.f32 %v5942, 1.442695
        %v6000 = vpow.pop %v5999
        %v6001 = vmul.f32 %v5943, 1.442695
        %v6002 = vpow.pop %v6001
        %v6003 = vmul.f32 %v5944, 1.442695
        %v6004 = vpow.pop %v6003
        %v6005 = vmul.f32 %v5945, 1.442695
        %v6006 = vpow.pop %v6005
        %v6007 = vmul.f32 %v5946, 1.442695
        %v6008 = vpow.pop %v6007
        %v6009 = vmul.f32 %v5947, 1.442695
        %v6010 = vpow.pop %v6009
        %v6011 = vmul.f32 %v5948, 1.442695
        %v6012 = vpow.pop %v6011
        %v6013 = vsel %vm4348, %v5950, 0.0
        %6014 = vadd.xlane.f32.xlu0 %v6013
        %v6015 = vpop.xlane.xlu0 %6014
        %v6016 = vsel %vm4348, %v5952, 0.0
        %6017 = vadd.xlane.f32.xlu0 %v6016
        %v6018 = vpop.xlane.xlu0 %6017
        %v6019 = vsel %vm4348, %v5954, 0.0
        %6020 = vadd.xlane.f32.xlu0 %v6019
        %v6021 = vpop.xlane.xlu0 %6020
        %v6022 = vsel %vm4348, %v5956, 0.0
        %6023 = vadd.xlane.f32.xlu0 %v6022
        %v6024 = vpop.xlane.xlu0 %6023
        %v6025 = vsel %vm4348, %v5958, 0.0
        %6026 = vadd.xlane.f32.xlu0 %v6025
        %v6027 = vpop.xlane.xlu0 %6026
        %v6028 = vsel %vm4348, %v5960, 0.0
        %6029 = vadd.xlane.f32.xlu0 %v6028
        %v6030 = vpop.xlane.xlu0 %6029
        %v6031 = vsel %vm4348, %v5962, 0.0
        %6032 = vadd.xlane.f32.xlu0 %v6031
        %v6033 = vpop.xlane.xlu0 %6032
        %v6034 = vsel %vm4348, %v5964, 0.0
        %6035 = vadd.xlane.f32.xlu0 %v6034
        %v6036 = vpop.xlane.xlu0 %6035
        %v6037 = vsel %vm4348, %v5966, 0.0
        %6038 = vadd.xlane.f32.xlu0 %v6037
        %v6039 = vpop.xlane.xlu0 %6038
        %v6040 = vsel %vm4348, %v5968, 0.0
        %6041 = vadd.xlane.f32.xlu0 %v6040
        %v6042 = vpop.xlane.xlu0 %6041
        %v6043 = vsel %vm4348, %v5970, 0.0
        %6044 = vadd.xlane.f32.xlu0 %v6043
        %v6045 = vpop.xlane.xlu0 %6044
        %v6046 = vsel %vm4348, %v5972, 0.0
        %6047 = vadd.xlane.f32.xlu0 %v6046
        %v6048 = vpop.xlane.xlu0 %6047
        %v6049 = vsel %vm4348, %v5974, 0.0
        %6050 = vadd.xlane.f32.xlu0 %v6049
        %v6051 = vpop.xlane.xlu0 %6050
        %v6052 = vsel %vm4348, %v5976, 0.0
        %6053 = vadd.xlane.f32.xlu0 %v6052
        %v6054 = vpop.xlane.xlu0 %6053
        %v6055 = vsel %vm4348, %v5978, 0.0
        %6056 = vadd.xlane.f32.xlu0 %v6055
        %v6057 = vpop.xlane.xlu0 %6056
        %v6058 = vsel %vm4348, %v5980, 0.0
        %6059 = vadd.xlane.f32.xlu0 %v6058
        %v6060 = vpop.xlane.xlu0 %6059
        %v6061 = vsel %vm4348, %v5982, 0.0
        %6062 = vadd.xlane.f32.xlu0 %v6061
        %v6063 = vpop.xlane.xlu0 %6062
        %v6064 = vsel %vm4348, %v5984, 0.0
        %6065 = vadd.xlane.f32.xlu0 %v6064
        %v6066 = vpop.xlane.xlu0 %6065
        %v6067 = vsel %vm4348, %v5986, 0.0
        %6068 = vadd.xlane.f32.xlu0 %v6067
        %v6069 = vpop.xlane.xlu0 %6068
        %v6070 = vsel %vm4348, %v5988, 0.0
        %6071 = vadd.xlane.f32.xlu0 %v6070
        %v6072 = vpop.xlane.xlu0 %6071
        %v6073 = vsel %vm4348, %v5990, 0.0
        %6074 = vadd.xlane.f32.xlu0 %v6073
        %v6075 = vpop.xlane.xlu0 %6074
        %v6076 = vsel %vm4348, %v5992, 0.0
        %6077 = vadd.xlane.f32.xlu0 %v6076
        %v6078 = vpop.xlane.xlu0 %6077
        %v6079 = vsel %vm4348, %v5994, 0.0
        %6080 = vadd.xlane.f32.xlu0 %v6079
        %v6081 = vpop.xlane.xlu0 %6080
        %v6082 = vsel %vm4348, %v5996, 0.0
        %6083 = vadd.xlane.f32.xlu0 %v6082
        %v6084 = vpop.xlane.xlu0 %6083
        %v6085 = vsel %vm4348, %v5998, 0.0
        %6086 = vadd.xlane.f32.xlu0 %v6085
        %v6087 = vpop.xlane.xlu0 %6086
        %v6088 = vsel %vm4348, %v6000, 0.0
        %6089 = vadd.xlane.f32.xlu0 %v6088
        %v6090 = vpop.xlane.xlu0 %6089
        %v6091 = vsel %vm4348, %v6002, 0.0
        %6092 = vadd.xlane.f32.xlu0 %v6091
        %v6093 = vpop.xlane.xlu0 %6092
        %v6094 = vsel %vm4348, %v6004, 0.0
        %6095 = vadd.xlane.f32.xlu0 %v6094
        %v6096 = vpop.xlane.xlu0 %6095
        %v6097 = vsel %vm4348, %v6006, 0.0
        %6098 = vadd.xlane.f32.xlu0 %v6097
        %v6099 = vpop.xlane.xlu0 %6098
        %v6100 = vsel %vm4348, %v6008, 0.0
        %6101 = vadd.xlane.f32.xlu0 %v6100
        %v6102 = vpop.xlane.xlu0 %6101
        %v6103 = vsel %vm4348, %v6010, 0.0
        %6104 = vadd.xlane.f32.xlu0 %v6103
        %v6105 = vpop.xlane.xlu0 %6104
        %v6106 = vsel %vm4348, %v6012, 0.0
        %6107 = vadd.xlane.f32.xlu0 %v6106
        %v6108 = vpop.xlane.xlu0 %6107
        %v6109 = vrcp.pop %v6015
        %v6110 = vrcp.pop %v6018
        %v6111 = vrcp.pop %v6021
        %v6112 = vrcp.pop %v6024
        %v6113 = vrcp.pop %v6027
        %v6114 = vrcp.pop %v6030
        %v6115 = vrcp.pop %v6033
        %v6116 = vrcp.pop %v6036
        %v6117 = vrcp.pop %v6039
        %v6118 = vrcp.pop %v6042
        %v6119 = vrcp.pop %v6045
        %v6120 = vrcp.pop %v6048
        %v6121 = vrcp.pop %v6051
        %v6122 = vrcp.pop %v6054
        %v6123 = vrcp.pop %v6057
        %v6124 = vrcp.pop %v6060
        %v6125 = vrcp.pop %v6063
        %v6126 = vrcp.pop %v6066
        %v6127 = vrcp.pop %v6069
        %v6128 = vrcp.pop %v6072
        %v6129 = vrcp.pop %v6075
        %v6130 = vrcp.pop %v6078
        %v6131 = vrcp.pop %v6081
        %v6132 = vrcp.pop %v6084
        %v6133 = vrcp.pop %v6087
        %v6134 = vrcp.pop %v6090
        %v6135 = vrcp.pop %v6093
        %v6136 = vrcp.pop %v6096
        %v6137 = vrcp.pop %v6099
        %v6138 = vrcp.pop %v6102
        %v6139 = vrcp.pop %v6105
        %v6140 = vrcp.pop %v6108
        %v6141 = vmul.f32 %v5950, %v6109
        %v6142 = vmul.f32 %v5952, %v6110
        %v6143 = vmul.f32 %v5954, %v6111
        %v6144 = vmul.f32 %v5956, %v6112
        %v6145 = vmul.f32 %v5958, %v6113
        %v6146 = vmul.f32 %v5960, %v6114
        %v6147 = vmul.f32 %v5962, %v6115
        %v6148 = vmul.f32 %v5964, %v6116
        %v6149 = vmul.f32 %v5966, %v6117
        %v6150 = vmul.f32 %v5968, %v6118
        %v6151 = vmul.f32 %v5970, %v6119
        %v6152 = vmul.f32 %v5972, %v6120
        %v6153 = vmul.f32 %v5974, %v6121
        %v6154 = vmul.f32 %v5976, %v6122
        %v6155 = vmul.f32 %v5978, %v6123
        %v6156 = vmul.f32 %v5980, %v6124
        %v6157 = vmul.f32 %v5982, %v6125
        %v6158 = vmul.f32 %v5984, %v6126
        %v6159 = vmul.f32 %v5986, %v6127
        %v6160 = vmul.f32 %v5988, %v6128
        %v6161 = vmul.f32 %v5990, %v6129
        %v6162 = vmul.f32 %v5992, %v6130
        %v6163 = vmul.f32 %v5994, %v6131
        %v6164 = vmul.f32 %v5996, %v6132
        %v6165 = vmul.f32 %v5998, %v6133
        %v6166 = vmul.f32 %v6000, %v6134
        %v6167 = vmul.f32 %v6002, %v6135
        %v6168 = vmul.f32 %v6004, %v6136
        %v6169 = vmul.f32 %v6006, %v6137
        %v6170 = vmul.f32 %v6008, %v6138
        %v6171 = vmul.f32 %v6010, %v6139
        %v6172 = vmul.f32 %v6012, %v6140
        %v6173 = vsel %vm4348, %v6141, 0.0
        %v6174 = vsel %vm4348, %v6142, 0.0
        %v6175 = vadd.f32 %v6173, %v6174
        %v6176 = vsel %vm4348, %v6143, 0.0
        %v6177 = vadd.f32 %v6175, %v6176
        %v6178 = vsel %vm4348, %v6144, 0.0
        %v6179 = vadd.f32 %v6177, %v6178
        %v6180 = vsel %vm4348, %v6145, 0.0
        %v6181 = vsel %vm4348, %v6146, 0.0
        %v6182 = vadd.f32 %v6180, %v6181
        %v6183 = vsel %vm4348, %v6147, 0.0
        %v6184 = vadd.f32 %v6182, %v6183
        %v6185 = vsel %vm4348, %v6148, 0.0
        %v6186 = vadd.f32 %v6184, %v6185
        %v6187 = vsel %vm4348, %v6149, 0.0
        %v6188 = vsel %vm4348, %v6150, 0.0
        %v6189 = vadd.f32 %v6187, %v6188
        %v6190 = vsel %vm4348, %v6151, 0.0
        %v6191 = vadd.f32 %v6189, %v6190
        %v6192 = vsel %vm4348, %v6152, 0.0
        %v6193 = vadd.f32 %v6191, %v6192
        %v6194 = vsel %vm4348, %v6153, 0.0
        %v6195 = vsel %vm4348, %v6154, 0.0
        %v6196 = vadd.f32 %v6194, %v6195
        %v6197 = vsel %vm4348, %v6155, 0.0
        %v6198 = vadd.f32 %v6196, %v6197
        %v6199 = vsel %vm4348, %v6156, 0.0
        %v6200 = vadd.f32 %v6198, %v6199
        %v6201 = vsel %vm4348, %v6157, 0.0
        %v6202 = vsel %vm4348, %v6158, 0.0
        %v6203 = vadd.f32 %v6201, %v6202
        %v6204 = vsel %vm4348, %v6159, 0.0
        %v6205 = vadd.f32 %v6203, %v6204
        %v6206 = vsel %vm4348, %v6160, 0.0
        %v6207 = vadd.f32 %v6205, %v6206
        %v6208 = vsel %vm4348, %v6161, 0.0
        %v6209 = vsel %vm4348, %v6162, 0.0
        %v6210 = vadd.f32 %v6208, %v6209
        %v6211 = vsel %vm4348, %v6163, 0.0
        %v6212 = vadd.f32 %v6210, %v6211
        %v6213 = vsel %vm4348, %v6164, 0.0
        %v6214 = vadd.f32 %v6212, %v6213
        %v6215 = vsel %vm4348, %v6165, 0.0
        %v6216 = vsel %vm4348, %v6166, 0.0
        %v6217 = vadd.f32 %v6215, %v6216
        %v6218 = vsel %vm4348, %v6167, 0.0
        %v6219 = vadd.f32 %v6217, %v6218
        %v6220 = vsel %vm4348, %v6168, 0.0
        %v6221 = vadd.f32 %v6219, %v6220
        %v6222 = vsel %vm4348, %v6169, 0.0
        %v6223 = vsel %vm4348, %v6170, 0.0
        %v6224 = vadd.f32 %v6222, %v6223
        %v6225 = vsel %vm4348, %v6171, 0.0
        %v6226 = vadd.f32 %v6224, %v6225
        %v6227 = vsel %vm4348, %v6172, 0.0
        %v6228 = vadd.f32 %v6226, %v6227
        %v6229 = vmul.f32 %v6179, 0.25
        %v6230 = vmul.f32 %v6186, 0.25
        %v6231 = vmul.f32 %v6193, 0.25
        %v6232 = vmul.f32 %v6200, 0.25
        %v6233 = vmul.f32 %v6207, 0.25
        %v6234 = vmul.f32 %v6214, 0.25
        %v6235 = vmul.f32 %v6221, 0.25
        %v6236 = vmul.f32 %v6228, 0.25
        %6237 = vst.msk [vmem:[%s498] sm:$0xff] %vm4348, %v6229
        %6238 = vst.msk [vmem:[%s498 + $0x8] sm:$0xff] %vm4348, %v6230
        %6239 = vst.msk [vmem:[%s498 + $0x10] sm:$0xff] %vm4348, %v6231
        %6240 = vst.msk [vmem:[%s498 + $0x18] sm:$0xff] %vm4348, %v6232
        %6241 = vst.msk [vmem:[%s498 + $0x20] sm:$0xff] %vm4348, %v6233
        %6242 = vst.msk [vmem:[%s498 + $0x28] sm:$0xff] %vm4348, %v6234
        %6243 = vst.msk [vmem:[%s498 + $0x30] sm:$0xff] %vm4348, %v6235
        %6244 = vst.msk [vmem:[%s498 + $0x38] sm:$0xff] %vm4348, %v6236
        %v6245 = vpack.c.bf16 %v6141, %v6141
        %v6246 = vpack.c.bf16 %v6142, %v6142
        %v6247 = vpack.c.bf16 %v6143, %v6143
        %v6248 = vpack.c.bf16 %v6144, %v6144
        %v6249 = vpack.c.bf16 %v6145, %v6145
        %v6250 = vpack.c.bf16 %v6146, %v6146
        %v6251 = vpack.c.bf16 %v6147, %v6147
        %v6252 = vpack.c.bf16 %v6148, %v6148
        %v6253 = vpack.c.bf16 %v6149, %v6149
        %v6254 = vpack.c.bf16 %v6150, %v6150
        %v6255 = vpack.c.bf16 %v6151, %v6151
        %v6256 = vpack.c.bf16 %v6152, %v6152
        %v6257 = vpack.c.bf16 %v6153, %v6153
        %v6258 = vpack.c.bf16 %v6154, %v6154
        %v6259 = vpack.c.bf16 %v6155, %v6155
        %v6260 = vpack.c.bf16 %v6156, %v6156
        %v6261 = vpack.c.bf16 %v6157, %v6157
        %v6262 = vpack.c.bf16 %v6158, %v6158
        %v6263 = vpack.c.bf16 %v6159, %v6159
        %v6264 = vpack.c.bf16 %v6160, %v6160
        %v6265 = vpack.c.bf16 %v6161, %v6161
        %v6266 = vpack.c.bf16 %v6162, %v6162
        %v6267 = vpack.c.bf16 %v6163, %v6163
        %v6268 = vpack.c.bf16 %v6164, %v6164
        %v6269 = vpack.c.bf16 %v6165, %v6165
        %v6270 = vpack.c.bf16 %v6166, %v6166
        %v6271 = vpack.c.bf16 %v6167, %v6167
        %v6272 = vpack.c.bf16 %v6168, %v6168
        %v6273 = vpack.c.bf16 %v6169, %v6169
        %v6274 = vpack.c.bf16 %v6170, %v6170
        %v6275 = vpack.c.bf16 %v6171, %v6171
        %v6276 = vpack.c.bf16 %v6172, %v6172
        %v6278 = vsel %vm4348, %v6245, 0
        %vm6280 = vcmask 1043456
        %v6282 = vsel %vm6280, %v4316, 0
        %6284 = vmatprep.subr.bf16.mxu0 0
        %6285 = vmatpush1.bf16.msra.mxu0 %v6282
        %6286 = vmatprep.subr.bf16.mxu0 0
        %6287 = vmatpush1.bf16.msra.mxu0 0
        %6288 = vmatprep.subr.bf16.mxu0 0
        %6289 = vmatpush1.bf16.msra.mxu0 0
        %6290 = vmatprep.subr.bf16.mxu0 0
        %6291 = vmatpush1.bf16.msra.mxu0 0
        %6292 = vmatprep.subr.bf16.mxu0 0
        %6293 = vmatpush1.bf16.msra.mxu0 0
        %6294 = vmatprep.subr.bf16.mxu0 0
        %6295 = vmatpush1.bf16.msra.mxu0 0
        %6296 = vmatprep.subr.bf16.mxu0 0
        %6297 = vmatpush1.bf16.msra.mxu0 0
        %6298 = vmatprep.subr.bf16.mxu0 0
        %6299 = vmatpush1.bf16.msra.mxu0 0
        %6300 = vmatprep.subr.bf16.mxu0 0
        %6301 = vmatpush1.bf16.msra.mxu0 0
        %6302 = vmatprep.subr.bf16.mxu0 0
        %6303 = vmatpush1.bf16.msra.mxu0 0
        %6304 = vmatprep.subr.bf16.mxu0 0
        %6305 = vmatpush1.bf16.msra.mxu0 0
        %6306 = vmatprep.subr.bf16.mxu0 0
        %6307 = vmatpush1.bf16.msra.mxu0 0
        %6308 = vmatprep.subr.bf16.mxu0 0
        %6309 = vmatpush1.bf16.msra.mxu0 0
        %6310 = vmatprep.subr.bf16.mxu0 0
        %6311 = vmatpush1.bf16.msra.mxu0 0
        %6312 = vmatprep.subr.bf16.mxu0 0
        %6313 = vmatpush1.bf16.msra.mxu0 0
        %6314 = vmatprep.subr.bf16.mxu0 0
        %6315 = vmatpush1.bf16.msra.mxu0 0
        %6316 = vmatprep.mubr.bf16.mxu0 0
        %6317 = vmatmul.mubr.bf16.gmra.mrb[0].mxu0 %v6278
        %v6318 = vpop.f32.mrb[0].mxu0
        %v6319 = vadd.f32 0.0, %v6318
        %v6320 = vpop.f32.mrb[0].mxu0
        %v6321 = vpop.f32.mrb[0].mxu0
        %v6322 = vpop.f32.mrb[0].mxu0
        %6323 = vdwg.mxu0
        %v6325 = vsel %vm4348, %v6246, 0
        %v6328 = vsel %vm6280, %v4317, 0
        %6330 = vmatprep.subr.bf16.mxu0 0
        %6331 = vmatpush1.bf16.msra.mxu0 %v6328
        %6332 = vmatprep.subr.bf16.mxu0 0
        %6333 = vmatpush1.bf16.msra.mxu0 0
        %6334 = vmatprep.subr.bf16.mxu0 0
        %6335 = vmatpush1.bf16.msra.mxu0 0
        %6336 = vmatprep.subr.bf16.mxu0 0
        %6337 = vmatpush1.bf16.msra.mxu0 0
        %6338 = vmatprep.subr.bf16.mxu0 0
        %6339 = vmatpush1.bf16.msra.mxu0 0
        %6340 = vmatprep.subr.bf16.mxu0 0
        %6341 = vmatpush1.bf16.msra.mxu0 0
        %6342 = vmatprep.subr.bf16.mxu0 0
        %6343 = vmatpush1.bf16.msra.mxu0 0
        %6344 = vmatprep.subr.bf16.mxu0 0
        %6345 = vmatpush1.bf16.msra.mxu0 0
        %6346 = vmatprep.subr.bf16.mxu0 0
        %6347 = vmatpush1.bf16.msra.mxu0 0
        %6348 = vmatprep.subr.bf16.mxu0 0
        %6349 = vmatpush1.bf16.msra.mxu0 0
        %6350 = vmatprep.subr.bf16.mxu0 0
        %6351 = vmatpush1.bf16.msra.mxu0 0
        %6352 = vmatprep.subr.bf16.mxu0 0
        %6353 = vmatpush1.bf16.msra.mxu0 0
        %6354 = vmatprep.subr.bf16.mxu0 0
        %6355 = vmatpush1.bf16.msra.mxu0 0
        %6356 = vmatprep.subr.bf16.mxu0 0
        %6357 = vmatpush1.bf16.msra.mxu0 0
        %6358 = vmatprep.subr.bf16.mxu0 0
        %6359 = vmatpush1.bf16.msra.mxu0 0
        %6360 = vmatprep.subr.bf16.mxu0 0
        %6361 = vmatpush1.bf16.msra.mxu0 0
        %6362 = vmatprep.mubr.bf16.mxu0 0
        %6363 = vmatmul.mubr.bf16.gmra.mrb[0].mxu0 %v6325
        %v6364 = vpop.f32.mrb[0].mxu0
        %v6365 = vadd.f32 0.0, %v6364
        %v6366 = vpop.f32.mrb[0].mxu0
        %v6367 = vpop.f32.mrb[0].mxu0
        %v6368 = vpop.f32.mrb[0].mxu0
        %6369 = vdwg.mxu0
        %v6371 = vsel %vm4348, %v6247, 0
        %v6374 = vsel %vm6280, %v4318, 0
        %6376 = vmatprep.subr.bf16.mxu0 0
        %6377 = vmatpush1.bf16.msra.mxu0 %v6374
        %6378 = vmatprep.subr.bf16.mxu0 0
        %6379 = vmatpush1.bf16.msra.mxu0 0
        %6380 = vmatprep.subr.bf16.mxu0 0
        %6381 = vmatpush1.bf16.msra.mxu0 0
        %6382 = vmatprep.subr.bf16.mxu0 0
        %6383 = vmatpush1.bf16.msra.mxu0 0
        %6384 = vmatprep.subr.bf16.mxu0 0
        %6385 = vmatpush1.bf16.msra.mxu0 0
        %6386 = vmatprep.subr.bf16.mxu0 0
        %6387 = vmatpush1.bf16.msra.mxu0 0
        %6388 = vmatprep.subr.bf16.mxu0 0
        %6389 = vmatpush1.bf16.msra.mxu0 0
        %6390 = vmatprep.subr.bf16.mxu0 0
        %6391 = vmatpush1.bf16.msra.mxu0 0
        %6392 = vmatprep.subr.bf16.mxu0 0
        %6393 = vmatpush1.bf16.msra.mxu0 0
        %6394 = vmatprep.subr.bf16.mxu0 0
        %6395 = vmatpush1.bf16.msra.mxu0 0
        %6396 = vmatprep.subr.bf16.mxu0 0
        %6397 = vmatpush1.bf16.msra.mxu0 0
        %6398 = vmatprep.subr.bf16.mxu0 0
        %6399 = vmatpush1.bf16.msra.mxu0 0
        %6400 = vmatprep.subr.bf16.mxu0 0
        %6401 = vmatpush1.bf16.msra.mxu0 0
        %6402 = vmatprep.subr.bf16.mxu0 0
        %6403 = vmatpush1.bf16.msra.mxu0 0
        %6404 = vmatprep.subr.bf16.mxu0 0
        %6405 = vmatpush1.bf16.msra.mxu0 0
        %6406 = vmatprep.subr.bf16.mxu0 0
        %6407 = vmatpush1.bf16.msra.mxu0 0
        %6408 = vmatprep.mubr.bf16.mxu0 0
        %6409 = vmatmul.mubr.bf16.gmra.mrb[0].mxu0 %v6371
        %v6410 = vpop.f32.mrb[0].mxu0
        %v6411 = vadd.f32 0.0, %v6410
        %v6412 = vpop.f32.mrb[0].mxu0
        %v6413 = vpop.f32.mrb[0].mxu0
        %v6414 = vpop.f32.mrb[0].mxu0
        %6415 = vdwg.mxu0
        %v6417 = vsel %vm4348, %v6248, 0
        %v6420 = vsel %vm6280, %v4319, 0
        %6422 = vmatprep.subr.bf16.mxu0 0
        %6423 = vmatpush1.bf16.msra.mxu0 %v6420
        %6424 = vmatprep.subr.bf16.mxu0 0
        %6425 = vmatpush1.bf16.msra.mxu0 0
        %6426 = vmatprep.subr.bf16.mxu0 0
        %6427 = vmatpush1.bf16.msra.mxu0 0
        %6428 = vmatprep.subr.bf16.mxu0 0
        %6429 = vmatpush1.bf16.msra.mxu0 0
        %6430 = vmatprep.subr.bf16.mxu0 0
        %6431 = vmatpush1.bf16.msra.mxu0 0
        %6432 = vmatprep.subr.bf16.mxu0 0
        %6433 = vmatpush1.bf16.msra.mxu0 0
        %6434 = vmatprep.subr.bf16.mxu0 0
        %6435 = vmatpush1.bf16.msra.mxu0 0
        %6436 = vmatprep.subr.bf16.mxu0 0
        %6437 = vmatpush1.bf16.msra.mxu0 0
        %6438 = vmatprep.subr.bf16.mxu0 0
        %6439 = vmatpush1.bf16.msra.mxu0 0
        %6440 = vmatprep.subr.bf16.mxu0 0
        %6441 = vmatpush1.bf16.msra.mxu0 0
        %6442 = vmatprep.subr.bf16.mxu0 0
        %6443 = vmatpush1.bf16.msra.mxu0 0
        %6444 = vmatprep.subr.bf16.mxu0 0
        %6445 = vmatpush1.bf16.msra.mxu0 0
        %6446 = vmatprep.subr.bf16.mxu0 0
        %6447 = vmatpush1.bf16.msra.mxu0 0
        %6448 = vmatprep.subr.bf16.mxu0 0
        %6449 = vmatpush1.bf16.msra.mxu0 0
        %6450 = vmatprep.subr.bf16.mxu0 0
        %6451 = vmatpush1.bf16.msra.mxu0 0
        %6452 = vmatprep.subr.bf16.mxu0 0
        %6453 = vmatpush1.bf16.msra.mxu0 0
        %6454 = vmatprep.mubr.bf16.mxu0 0
        %6455 = vmatmul.mubr.bf16.gmra.mrb[0].mxu0 %v6417
        %v6456 = vpop.f32.mrb[0].mxu0
        %v6457 = vadd.f32 0.0, %v6456
        %v6458 = vpop.f32.mrb[0].mxu0
        %v6459 = vpop.f32.mrb[0].mxu0
        %v6460 = vpop.f32.mrb[0].mxu0
        %6461 = vdwg.mxu0
        %v6463 = vsel %vm4348, %v6249, 0
        %v6466 = vsel %vm6280, %v4320, 0
        %6468 = vmatprep.subr.bf16.mxu0 0
        %6469 = vmatpush1.bf16.msra.mxu0 %v6466
        %6470 = vmatprep.subr.bf16.mxu0 0
        %6471 = vmatpush1.bf16.msra.mxu0 0
        %6472 = vmatprep.subr.bf16.mxu0 0
        %6473 = vmatpush1.bf16.msra.mxu0 0
        %6474 = vmatprep.subr.bf16.mxu0 0
        %6475 = vmatpush1.bf16.msra.mxu0 0
        %6476 = vmatprep.subr.bf16.mxu0 0
        %6477 = vmatpush1.bf16.msra.mxu0 0
        %6478 = vmatprep.subr.bf16.mxu0 0
        %6479 = vmatpush1.bf16.msra.mxu0 0
        %6480 = vmatprep.subr.bf16.mxu0 0
        %6481 = vmatpush1.bf16.msra.mxu0 0
        %6482 = vmatprep.subr.bf16.mxu0 0
        %6483 = vmatpush1.bf16.msra.mxu0 0
        %6484 = vmatprep.subr.bf16.mxu0 0
        %6485 = vmatpush1.bf16.msra.mxu0 0
        %6486 = vmatprep.subr.bf16.mxu0 0
        %6487 = vmatpush1.bf16.msra.mxu0 0
        %6488 = vmatprep.subr.bf16.mxu0 0
        %6489 = vmatpush1.bf16.msra.mxu0 0
        %6490 = vmatprep.subr.bf16.mxu0 0
        %6491 = vmatpush1.bf16.msra.mxu0 0
        %6492 = vmatprep.subr.bf16.mxu0 0
        %6493 = vmatpush1.bf16.msra.mxu0 0
        %6494 = vmatprep.subr.bf16.mxu0 0
        %6495 = vmatpush1.bf16.msra.mxu0 0
        %6496 = vmatprep.subr.bf16.mxu0 0
        %6497 = vmatpush1.bf16.msra.mxu0 0
        %6498 = vmatprep.subr.bf16.mxu0 0
        %6499 = vmatpush1.bf16.msra.mxu0 0
        %6500 = vmatprep.mubr.bf16.mxu0 0
        %6501 = vmatmul.mubr.bf16.gmra.mrb[0].mxu0 %v6463
        %v6502 = vpop.f32.mrb[0].mxu0
        %v6503 = vadd.f32 0.0, %v6502
        %v6504 = vpop.f32.mrb[0].mxu0
        %v6505 = vpop.f32.mrb[0].mxu0
        %v6506 = vpop.f32.mrb[0].mxu0
        %6507 = vdwg.mxu0
        %v6509 = vsel %vm4348, %v6250, 0
        %v6512 = vsel %vm6280, %v4321, 0
        %6514 = vmatprep.subr.bf16.mxu0 0
        %6515 = vmatpush1.bf16.msra.mxu0 %v6512
        %6516 = vmatprep.subr.bf16.mxu0 0
        %6517 = vmatpush1.bf16.msra.mxu0 0
        %6518 = vmatprep.subr.bf16.mxu0 0
        %6519 = vmatpush1.bf16.msra.mxu0 0
        %6520 = vmatprep.subr.bf16.mxu0 0
        %6521 = vmatpush1.bf16.msra.mxu0 0
        %6522 = vmatprep.subr.bf16.mxu0 0
        %6523 = vmatpush1.bf16.msra.mxu0 0
        %6524 = vmatprep.subr.bf16.mxu0 0
        %6525 = vmatpush1.bf16.msra.mxu0 0
        %6526 = vmatprep.subr.bf16.mxu0 0
        %6527 = vmatpush1.bf16.msra.mxu0 0
        %6528 = vmatprep.subr.bf16.mxu0 0
        %6529 = vmatpush1.bf16.msra.mxu0 0
        %6530 = vmatprep.subr.bf16.mxu0 0
        %6531 = vmatpush1.bf16.msra.mxu0 0
        %6532 = vmatprep.subr.bf16.mxu0 0
        %6533 = vmatpush1.bf16.msra.mxu0 0
        %6534 = vmatprep.subr.bf16.mxu0 0
        %6535 = vmatpush1.bf16.msra.mxu0 0
        %6536 = vmatprep.subr.bf16.mxu0 0
        %6537 = vmatpush1.bf16.msra.mxu0 0
        %6538 = vmatprep.subr.bf16.mxu0 0
        %6539 = vmatpush1.bf16.msra.mxu0 0
        %6540 = vmatprep.subr.bf16.mxu0 0
        %6541 = vmatpush1.bf16.msra.mxu0 0
        %6542 = vmatprep.subr.bf16.mxu0 0
        %6543 = vmatpush1.bf16.msra.mxu0 0
        %6544 = vmatprep.subr.bf16.mxu0 0
        %6545 = vmatpush1.bf16.msra.mxu0 0
        %6546 = vmatprep.mubr.bf16.mxu0 0
        %6547 = vmatmul.mubr.bf16.gmra.mrb[0].mxu0 %v6509
        %v6548 = vpop.f32.mrb[0].mxu0
        %v6549 = vadd.f32 0.0, %v6548
        %v6550 = vpop.f32.mrb[0].mxu0
        %v6551 = vpop.f32.mrb[0].mxu0
        %v6552 = vpop.f32.mrb[0].mxu0
        %6553 = vdwg.mxu0
        %v6555 = vsel %vm4348, %v6251, 0
        %v6558 = vsel %vm6280, %v4322, 0
        %6560 = vmatprep.subr.bf16.mxu0 0
        %6561 = vmatpush1.bf16.msra.mxu0 %v6558
        %6562 = vmatprep.subr.bf16.mxu0 0
        %6563 = vmatpush1.bf16.msra.mxu0 0
        %6564 = vmatprep.subr.bf16.mxu0 0
        %6565 = vmatpush1.bf16.msra.mxu0 0
        %6566 = vmatprep.subr.bf16.mxu0 0
        %6567 = vmatpush1.bf16.msra.mxu0 0
        %6568 = vmatprep.subr.bf16.mxu0 0
        %6569 = vmatpush1.bf16.msra.mxu0 0
        %6570 = vmatprep.subr.bf16.mxu0 0
        %6571 = vmatpush1.bf16.msra.mxu0 0
        %6572 = vmatprep.subr.bf16.mxu0 0
        %6573 = vmatpush1.bf16.msra.mxu0 0
        %6574 = vmatprep.subr.bf16.mxu0 0
        %6575 = vmatpush1.bf16.msra.mxu0 0
        %6576 = vmatprep.subr.bf16.mxu0 0
        %6577 = vmatpush1.bf16.msra.mxu0 0
        %6578 = vmatprep.subr.bf16.mxu0 0
        %6579 = vmatpush1.bf16.msra.mxu0 0
        %6580 = vmatprep.subr.bf16.mxu0 0
        %6581 = vmatpush1.bf16.msra.mxu0 0
        %6582 = vmatprep.subr.bf16.mxu0 0
        %6583 = vmatpush1.bf16.msra.mxu0 0
        %6584 = vmatprep.subr.bf16.mxu0 0
        %6585 = vmatpush1.bf16.msra.mxu0 0
        %6586 = vmatprep.subr.bf16.mxu0 0
        %6587 = vmatpush1.bf16.msra.mxu0 0
        %6588 = vmatprep.subr.bf16.mxu0 0
        %6589 = vmatpush1.bf16.msra.mxu0 0
        %6590 = vmatprep.subr.bf16.mxu0 0
        %6591 = vmatpush1.bf16.msra.mxu0 0
        %6592 = vmatprep.mubr.bf16.mxu0 0
        %6593 = vmatmul.mubr.bf16.gmra.mrb[0].mxu0 %v6555
        %v6594 = vpop.f32.mrb[0].mxu0
        %v6595 = vadd.f32 0.0, %v6594
        %v6596 = vpop.f32.mrb[0].mxu0
        %v6597 = vpop.f32.mrb[0].mxu0
        %v6598 = vpop.f32.mrb[0].mxu0
        %6599 = vdwg.mxu0
        %v6601 = vsel %vm4348, %v6252, 0
        %v6604 = vsel %vm6280, %v4323, 0
        %6606 = vmatprep.subr.bf16.mxu0 0
        %6607 = vmatpush1.bf16.msra.mxu0 %v6604
        %6608 = vmatprep.subr.bf16.mxu0 0
        %6609 = vmatpush1.bf16.msra.mxu0 0
        %6610 = vmatprep.subr.bf16.mxu0 0
        %6611 = vmatpush1.bf16.msra.mxu0 0
        %6612 = vmatprep.subr.bf16.mxu0 0
        %6613 = vmatpush1.bf16.msra.mxu0 0
        %6614 = vmatprep.subr.bf16.mxu0 0
        %6615 = vmatpush1.bf16.msra.mxu0 0
        %6616 = vmatprep.subr.bf16.mxu0 0
        %6617 = vmatpush1.bf16.msra.mxu0 0
        %6618 = vmatprep.subr.bf16.mxu0 0
        %6619 = vmatpush1.bf16.msra.mxu0 0
        %6620 = vmatprep.subr.bf16.mxu0 0
        %6621 = vmatpush1.bf16.msra.mxu0 0
        %6622 = vmatprep.subr.bf16.mxu0 0
        %6623 = vmatpush1.bf16.msra.mxu0 0
        %6624 = vmatprep.subr.bf16.mxu0 0
        %6625 = vmatpush1.bf16.msra.mxu0 0
        %6626 = vmatprep.subr.bf16.mxu0 0
        %6627 = vmatpush1.bf16.msra.mxu0 0
        %6628 = vmatprep.subr.bf16.mxu0 0
        %6629 = vmatpush1.bf16.msra.mxu0 0
        %6630 = vmatprep.subr.bf16.mxu0 0
        %6631 = vmatpush1.bf16.msra.mxu0 0
        %6632 = vmatprep.subr.bf16.mxu0 0
        %6633 = vmatpush1.bf16.msra.mxu0 0
        %6634 = vmatprep.subr.bf16.mxu0 0
        %6635 = vmatpush1.bf16.msra.mxu0 0
        %6636 = vmatprep.subr.bf16.mxu0 0
        %6637 = vmatpush1.bf16.msra.mxu0 0
        %6638 = vmatprep.mubr.bf16.mxu0 0
        %6639 = vmatmul.mubr.bf16.gmra.mrb[0].mxu0 %v6601
        %v6640 = vpop.f32.mrb[0].mxu0
        %v6641 = vadd.f32 0.0, %v6640
        %v6642 = vpop.f32.mrb[0].mxu0
        %v6643 = vpop.f32.mrb[0].mxu0
        %v6644 = vpop.f32.mrb[0].mxu0
        %6645 = vdwg.mxu0
        %v6647 = vsel %vm4348, %v6253, 0
        %v6650 = vsel %vm6280, %v4324, 0
        %6652 = vmatprep.subr.bf16.mxu0 0
        %6653 = vmatpush1.bf16.msra.mxu0 %v6650
        %6654 = vmatprep.subr.bf16.mxu0 0
        %6655 = vmatpush1.bf16.msra.mxu0 0
        %6656 = vmatprep.subr.bf16.mxu0 0
        %6657 = vmatpush1.bf16.msra.mxu0 0
        %6658 = vmatprep.subr.bf16.mxu0 0
        %6659 = vmatpush1.bf16.msra.mxu0 0
        %6660 = vmatprep.subr.bf16.mxu0 0
        %6661 = vmatpush1.bf16.msra.mxu0 0
        %6662 = vmatprep.subr.bf16.mxu0 0
        %6663 = vmatpush1.bf16.msra.mxu0 0
        %6664 = vmatprep.subr.bf16.mxu0 0
        %6665 = vmatpush1.bf16.msra.mxu0 0
        %6666 = vmatprep.subr.bf16.mxu0 0
        %6667 = vmatpush1.bf16.msra.mxu0 0
        %6668 = vmatprep.subr.bf16.mxu0 0
        %6669 = vmatpush1.bf16.msra.mxu0 0
        %6670 = vmatprep.subr.bf16.mxu0 0
        %6671 = vmatpush1.bf16.msra.mxu0 0
        %6672 = vmatprep.subr.bf16.mxu0 0
        %6673 = vmatpush1.bf16.msra.mxu0 0
        %6674 = vmatprep.subr.bf16.mxu0 0
        %6675 = vmatpush1.bf16.msra.mxu0 0
        %6676 = vmatprep.subr.bf16.mxu0 0
        %6677 = vmatpush1.bf16.msra.mxu0 0
        %6678 = vmatprep.subr.bf16.mxu0 0
        %6679 = vmatpush1.bf16.msra.mxu0 0
        %6680 = vmatprep.subr.bf16.mxu0 0
        %6681 = vmatpush1.bf16.msra.mxu0 0
        %6682 = vmatprep.subr.bf16.mxu0 0
        %6683 = vmatpush1.bf16.msra.mxu0 0
        %6684 = vmatprep.mubr.bf16.mxu0 0
        %6685 = vmatmul.mubr.bf16.gmra.mrb[0].mxu0 %v6647
        %v6686 = vpop.f32.mrb[0].mxu0
        %v6687 = vadd.f32 0.0, %v6686
        %v6688 = vpop.f32.mrb[0].mxu0
        %v6689 = vpop.f32.mrb[0].mxu0
        %v6690 = vpop.f32.mrb[0].mxu0
        %6691 = vdwg.mxu0
        %v6693 = vsel %vm4348, %v6254, 0
        %v6696 = vsel %vm6280, %v4325, 0
        %6698 = vmatprep.subr.bf16.mxu0 0
        %6699 = vmatpush1.bf16.msra.mxu0 %v6696
        %6700 = vmatprep.subr.bf16.mxu0 0
        %6701 = vmatpush1.bf16.msra.mxu0 0
        %6702 = vmatprep.subr.bf16.mxu0 0
        %6703 = vmatpush1.bf16.msra.mxu0 0
        %6704 = vmatprep.subr.bf16.mxu0 0
        %6705 = vmatpush1.bf16.msra.mxu0 0
        %6706 = vmatprep.subr.bf16.mxu0 0
        %6707 = vmatpush1.bf16.msra.mxu0 0
        %6708 = vmatprep.subr.bf16.mxu0 0
        %6709 = vmatpush1.bf16.msra.mxu0 0
        %6710 = vmatprep.subr.bf16.mxu0 0
        %6711 = vmatpush1.bf16.msra.mxu0 0
        %6712 = vmatprep.subr.bf16.mxu0 0
        %6713 = vmatpush1.bf16.msra.mxu0 0
        %6714 = vmatprep.subr.bf16.mxu0 0
        %6715 = vmatpush1.bf16.msra.mxu0 0
        %6716 = vmatprep.subr.bf16.mxu0 0
        %6717 = vmatpush1.bf16.msra.mxu0 0
        %6718 = vmatprep.subr.bf16.mxu0 0
        %6719 = vmatpush1.bf16.msra.mxu0 0
        %6720 = vmatprep.subr.bf16.mxu0 0
        %6721 = vmatpush1.bf16.msra.mxu0 0
        %6722 = vmatprep.subr.bf16.mxu0 0
        %6723 = vmatpush1.bf16.msra.mxu0 0
        %6724 = vmatprep.subr.bf16.mxu0 0
        %6725 = vmatpush1.bf16.msra.mxu0 0
        %6726 = vmatprep.subr.bf16.mxu0 0
        %6727 = vmatpush1.bf16.msra.mxu0 0
        %6728 = vmatprep.subr.bf16.mxu0 0
        %6729 = vmatpush1.bf16.msra.mxu0 0
        %6730 = vmatprep.mubr.bf16.mxu0 0
        %6731 = vmatmul.mubr.bf16.gmra.mrb[0].mxu0 %v6693
        %v6732 = vpop.f32.mrb[0].mxu0
        %v6733 = vadd.f32 0.0, %v6732
        %v6734 = vpop.f32.mrb[0].mxu0
        %v6735 = vpop.f32.mrb[0].mxu0
        %v6736 = vpop.f32.mrb[0].mxu0
        %6737 = vdwg.mxu0
        %v6739 = vsel %vm4348, %v6255, 0
        %v6742 = vsel %vm6280, %v4326, 0
        %6744 = vmatprep.subr.bf16.mxu0 0
        %6745 = vmatpush1.bf16.msra.mxu0 %v6742
        %6746 = vmatprep.subr.bf16.mxu0 0
        %6747 = vmatpush1.bf16.msra.mxu0 0
        %6748 = vmatprep.subr.bf16.mxu0 0
        %6749 = vmatpush1.bf16.msra.mxu0 0
        %6750 = vmatprep.subr.bf16.mxu0 0
        %6751 = vmatpush1.bf16.msra.mxu0 0
        %6752 = vmatprep.subr.bf16.mxu0 0
        %6753 = vmatpush1.bf16.msra.mxu0 0
        %6754 = vmatprep.subr.bf16.mxu0 0
        %6755 = vmatpush1.bf16.msra.mxu0 0
        %6756 = vmatprep.subr.bf16.mxu0 0
        %6757 = vmatpush1.bf16.msra.mxu0 0
        %6758 = vmatprep.subr.bf16.mxu0 0
        %6759 = vmatpush1.bf16.msra.mxu0 0
        %6760 = vmatprep.subr.bf16.mxu0 0
        %6761 = vmatpush1.bf16.msra.mxu0 0
        %6762 = vmatprep.subr.bf16.mxu0 0
        %6763 = vmatpush1.bf16.msra.mxu0 0
        %6764 = vmatprep.subr.bf16.mxu0 0
        %6765 = vmatpush1.bf16.msra.mxu0 0
        %6766 = vmatprep.subr.bf16.mxu0 0
        %6767 = vmatpush1.bf16.msra.mxu0 0
        %6768 = vmatprep.subr.bf16.mxu0 0
        %6769 = vmatpush1.bf16.msra.mxu0 0
        %6770 = vmatprep.subr.bf16.mxu0 0
        %6771 = vmatpush1.bf16.msra.mxu0 0
        %6772 = vmatprep.subr.bf16.mxu0 0
        %6773 = vmatpush1.bf16.msra.mxu0 0
        %6774 = vmatprep.subr.bf16.mxu0 0
        %6775 = vmatpush1.bf16.msra.mxu0 0
        %6776 = vmatprep.mubr.bf16.mxu0 0
        %6777 = vmatmul.mubr.bf16.gmra.mrb[0].mxu0 %v6739
        %v6778 = vpop.f32.mrb[0].mxu0
        %v6779 = vadd.f32 0.0, %v6778
        %v6780 = vpop.f32.mrb[0].mxu0
        %v6781 = vpop.f32.mrb[0].mxu0
        %v6782 = vpop.f32.mrb[0].mxu0
        %6783 = vdwg.mxu0
        %v6785 = vsel %vm4348, %v6256, 0
        %v6788 = vsel %vm6280, %v4327, 0
        %6790 = vmatprep.subr.bf16.mxu0 0
        %6791 = vmatpush1.bf16.msra.mxu0 %v6788
        %6792 = vmatprep.subr.bf16.mxu0 0
        %6793 = vmatpush1.bf16.msra.mxu0 0
        %6794 = vmatprep.subr.bf16.mxu0 0
        %6795 = vmatpush1.bf16.msra.mxu0 0
        %6796 = vmatprep.subr.bf16.mxu0 0
        %6797 = vmatpush1.bf16.msra.mxu0 0
        %6798 = vmatprep.subr.bf16.mxu0 0
        %6799 = vmatpush1.bf16.msra.mxu0 0
        %6800 = vmatprep.subr.bf16.mxu0 0
        %6801 = vmatpush1.bf16.msra.mxu0 0
        %6802 = vmatprep.subr.bf16.mxu0 0
        %6803 = vmatpush1.bf16.msra.mxu0 0
        %6804 = vmatprep.subr.bf16.mxu0 0
        %6805 = vmatpush1.bf16.msra.mxu0 0
        %6806 = vmatprep.subr.bf16.mxu0 0
        %6807 = vmatpush1.bf16.msra.mxu0 0
        %6808 = vmatprep.subr.bf16.mxu0 0
        %6809 = vmatpush1.bf16.msra.mxu0 0
        %6810 = vmatprep.subr.bf16.mxu0 0
        %6811 = vmatpush1.bf16.msra.mxu0 0
        %6812 = vmatprep.subr.bf16.mxu0 0
        %6813 = vmatpush1.bf16.msra.mxu0 0
        %6814 = vmatprep.subr.bf16.mxu0 0
        %6815 = vmatpush1.bf16.msra.mxu0 0
        %6816 = vmatprep.subr.bf16.mxu0 0
        %6817 = vmatpush1.bf16.msra.mxu0 0
        %6818 = vmatprep.subr.bf16.mxu0 0
        %6819 = vmatpush1.bf16.msra.mxu0 0
        %6820 = vmatprep.subr.bf16.mxu0 0
        %6821 = vmatpush1.bf16.msra.mxu0 0
        %6822 = vmatprep.mubr.bf16.mxu0 0
        %6823 = vmatmul.mubr.bf16.gmra.mrb[0].mxu0 %v6785
        %v6824 = vpop.f32.mrb[0].mxu0
        %v6825 = vadd.f32 0.0, %v6824
        %v6826 = vpop.f32.mrb[0].mxu0
        %v6827 = vpop.f32.mrb[0].mxu0
        %v6828 = vpop.f32.mrb[0].mxu0
        %6829 = vdwg.mxu0
        %v6831 = vsel %vm4348, %v6257, 0
        %v6834 = vsel %vm6280, %v4328, 0
        %6836 = vmatprep.subr.bf16.mxu0 0
        %6837 = vmatpush1.bf16.msra.mxu0 %v6834
        %6838 = vmatprep.subr.bf16.mxu0 0
        %6839 = vmatpush1.bf16.msra.mxu0 0
        %6840 = vmatprep.subr.bf16.mxu0 0
        %6841 = vmatpush1.bf16.msra.mxu0 0
        %6842 = vmatprep.subr.bf16.mxu0 0
        %6843 = vmatpush1.bf16.msra.mxu0 0
        %6844 = vmatprep.subr.bf16.mxu0 0
        %6845 = vmatpush1.bf16.msra.mxu0 0
        %6846 = vmatprep.subr.bf16.mxu0 0
        %6847 = vmatpush1.bf16.msra.mxu0 0
        %6848 = vmatprep.subr.bf16.mxu0 0
        %6849 = vmatpush1.bf16.msra.mxu0 0
        %6850 = vmatprep.subr.bf16.mxu0 0
        %6851 = vmatpush1.bf16.msra.mxu0 0
        %6852 = vmatprep.subr.bf16.mxu0 0
        %6853 = vmatpush1.bf16.msra.mxu0 0
        %6854 = vmatprep.subr.bf16.mxu0 0
        %6855 = vmatpush1.bf16.msra.mxu0 0
        %6856 = vmatprep.subr.bf16.mxu0 0
        %6857 = vmatpush1.bf16.msra.mxu0 0
        %6858 = vmatprep.subr.bf16.mxu0 0
        %6859 = vmatpush1.bf16.msra.mxu0 0
        %6860 = vmatprep.subr.bf16.mxu0 0
        %6861 = vmatpush1.bf16.msra.mxu0 0
        %6862 = vmatprep.subr.bf16.mxu0 0
        %6863 = vmatpush1.bf16.msra.mxu0 0
        %6864 = vmatprep.subr.bf16.mxu0 0
        %6865 = vmatpush1.bf16.msra.mxu0 0
        %6866 = vmatprep.subr.bf16.mxu0 0
        %6867 = vmatpush1.bf16.msra.mxu0 0
        %6868 = vmatprep.mubr.bf16.mxu0 0
        %6869 = vmatmul.mubr.bf16.gmra.mrb[0].mxu0 %v6831
        %v6870 = vpop.f32.mrb[0].mxu0
        %v6871 = vadd.f32 0.0, %v6870
        %v6872 = vpop.f32.mrb[0].mxu0
        %v6873 = vpop.f32.mrb[0].mxu0
        %v6874 = vpop.f32.mrb[0].mxu0
        %6875 = vdwg.mxu0
        %v6877 = vsel %vm4348, %v6258, 0
        %v6880 = vsel %vm6280, %v4329, 0
        %6882 = vmatprep.subr.bf16.mxu0 0
        %6883 = vmatpush1.bf16.msra.mxu0 %v6880
        %6884 = vmatprep.subr.bf16.mxu0 0
        %6885 = vmatpush1.bf16.msra.mxu0 0
        %6886 = vmatprep.subr.bf16.mxu0 0
        %6887 = vmatpush1.bf16.msra.mxu0 0
        %6888 = vmatprep.subr.bf16.mxu0 0
        %6889 = vmatpush1.bf16.msra.mxu0 0
        %6890 = vmatprep.subr.bf16.mxu0 0
        %6891 = vmatpush1.bf16.msra.mxu0 0
        %6892 = vmatprep.subr.bf16.mxu0 0
        %6893 = vmatpush1.bf16.msra.mxu0 0
        %6894 = vmatprep.subr.bf16.mxu0 0
        %6895 = vmatpush1.bf16.msra.mxu0 0
        %6896 = vmatprep.subr.bf16.mxu0 0
        %6897 = vmatpush1.bf16.msra.mxu0 0
        %6898 = vmatprep.subr.bf16.mxu0 0
        %6899 = vmatpush1.bf16.msra.mxu0 0
        %6900 = vmatprep.subr.bf16.mxu0 0
        %6901 = vmatpush1.bf16.msra.mxu0 0
        %6902 = vmatprep.subr.bf16.mxu0 0
        %6903 = vmatpush1.bf16.msra.mxu0 0
        %6904 = vmatprep.subr.bf16.mxu0 0
        %6905 = vmatpush1.bf16.msra.mxu0 0
        %6906 = vmatprep.subr.bf16.mxu0 0
        %6907 = vmatpush1.bf16.msra.mxu0 0
        %6908 = vmatprep.subr.bf16.mxu0 0
        %6909 = vmatpush1.bf16.msra.mxu0 0
        %6910 = vmatprep.subr.bf16.mxu0 0
        %6911 = vmatpush1.bf16.msra.mxu0 0
        %6912 = vmatprep.subr.bf16.mxu0 0
        %6913 = vmatpush1.bf16.msra.mxu0 0
        %6914 = vmatprep.mubr.bf16.mxu0 0
        %6915 = vmatmul.mubr.bf16.gmra.mrb[0].mxu0 %v6877
        %v6916 = vpop.f32.mrb[0].mxu0
        %v6917 = vadd.f32 0.0, %v6916
        %v6918 = vpop.f32.mrb[0].mxu0
        %v6919 = vpop.f32.mrb[0].mxu0
        %v6920 = vpop.f32.mrb[0].mxu0
        %6921 = vdwg.mxu0
        %v6923 = vsel %vm4348, %v6259, 0
        %v6926 = vsel %vm6280, %v4330, 0
        %6928 = vmatprep.subr.bf16.mxu0 0
        %6929 = vmatpush1.bf16.msra.mxu0 %v6926
        %6930 = vmatprep.subr.bf16.mxu0 0
        %6931 = vmatpush1.bf16.msra.mxu0 0
        %6932 = vmatprep.subr.bf16.mxu0 0
        %6933 = vmatpush1.bf16.msra.mxu0 0
        %6934 = vmatprep.subr.bf16.mxu0 0
        %6935 = vmatpush1.bf16.msra.mxu0 0
        %6936 = vmatprep.subr.bf16.mxu0 0
        %6937 = vmatpush1.bf16.msra.mxu0 0
        %6938 = vmatprep.subr.bf16.mxu0 0
        %6939 = vmatpush1.bf16.msra.mxu0 0
        %6940 = vmatprep.subr.bf16.mxu0 0
        %6941 = vmatpush1.bf16.msra.mxu0 0
        %6942 = vmatprep.subr.bf16.mxu0 0
        %6943 = vmatpush1.bf16.msra.mxu0 0
        %6944 = vmatprep.subr.bf16.mxu0 0
        %6945 = vmatpush1.bf16.msra.mxu0 0
        %6946 = vmatprep.subr.bf16.mxu0 0
        %6947 = vmatpush1.bf16.msra.mxu0 0
        %6948 = vmatprep.subr.bf16.mxu0 0
        %6949 = vmatpush1.bf16.msra.mxu0 0
        %6950 = vmatprep.subr.bf16.mxu0 0
        %6951 = vmatpush1.bf16.msra.mxu0 0
        %6952 = vmatprep.subr.bf16.mxu0 0
        %6953 = vmatpush1.bf16.msra.mxu0 0
        %6954 = vmatprep.subr.bf16.mxu0 0
        %6955 = vmatpush1.bf16.msra.mxu0 0
        %6956 = vmatprep.subr.bf16.mxu0 0
        %6957 = vmatpush1.bf16.msra.mxu0 0
        %6958 = vmatprep.subr.bf16.mxu0 0
        %6959 = vmatpush1.bf16.msra.mxu0 0
        %6960 = vmatprep.mubr.bf16.mxu0 0
        %6961 = vmatmul.mubr.bf16.gmra.mrb[0].mxu0 %v6923
        %v6962 = vpop.f32.mrb[0].mxu0
        %v6963 = vadd.f32 0.0, %v6962
        %v6964 = vpop.f32.mrb[0].mxu0
        %v6965 = vpop.f32.mrb[0].mxu0
        %v6966 = vpop.f32.mrb[0].mxu0
        %6967 = vdwg.mxu0
        %v6969 = vsel %vm4348, %v6260, 0
        %v6972 = vsel %vm6280, %v4331, 0
        %6974 = vmatprep.subr.bf16.mxu0 0
        %6975 = vmatpush1.bf16.msra.mxu0 %v6972
        %6976 = vmatprep.subr.bf16.mxu0 0
        %6977 = vmatpush1.bf16.msra.mxu0 0
        %6978 = vmatprep.subr.bf16.mxu0 0
        %6979 = vmatpush1.bf16.msra.mxu0 0
        %6980 = vmatprep.subr.bf16.mxu0 0
        %6981 = vmatpush1.bf16.msra.mxu0 0
        %6982 = vmatprep.subr.bf16.mxu0 0
        %6983 = vmatpush1.bf16.msra.mxu0 0
        %6984 = vmatprep.subr.bf16.mxu0 0
        %6985 = vmatpush1.bf16.msra.mxu0 0
        %6986 = vmatprep.subr.bf16.mxu0 0
        %6987 = vmatpush1.bf16.msra.mxu0 0
        %6988 = vmatprep.subr.bf16.mxu0 0
        %6989 = vmatpush1.bf16.msra.mxu0 0
        %6990 = vmatprep.subr.bf16.mxu0 0
        %6991 = vmatpush1.bf16.msra.mxu0 0
        %6992 = vmatprep.subr.bf16.mxu0 0
        %6993 = vmatpush1.bf16.msra.mxu0 0
        %6994 = vmatprep.subr.bf16.mxu0 0
        %6995 = vmatpush1.bf16.msra.mxu0 0
        %6996 = vmatprep.subr.bf16.mxu0 0
        %6997 = vmatpush1.bf16.msra.mxu0 0
        %6998 = vmatprep.subr.bf16.mxu0 0
        %6999 = vmatpush1.bf16.msra.mxu0 0
        %7000 = vmatprep.subr.bf16.mxu0 0
        %7001 = vmatpush1.bf16.msra.mxu0 0
        %7002 = vmatprep.subr.bf16.mxu0 0
        %7003 = vmatpush1.bf16.msra.mxu0 0
        %7004 = vmatprep.subr.bf16.mxu0 0
        %7005 = vmatpush1.bf16.msra.mxu0 0
        %7006 = vmatprep.mubr.bf16.mxu0 0
        %7007 = vmatmul.mubr.bf16.gmra.mrb[0].mxu0 %v6969
        %v7008 = vpop.f32.mrb[0].mxu0
        %v7009 = vadd.f32 0.0, %v7008
        %v7010 = vpop.f32.mrb[0].mxu0
        %v7011 = vpop.f32.mrb[0].mxu0
        %v7012 = vpop.f32.mrb[0].mxu0
        %7013 = vdwg.mxu0
        %v7015 = vsel %vm4348, %v6261, 0
        %v7018 = vsel %vm6280, %v4332, 0
        %7020 = vmatprep.subr.bf16.mxu0 0
        %7021 = vmatpush1.bf16.msra.mxu0 %v7018
        %7022 = vmatprep.subr.bf16.mxu0 0
        %7023 = vmatpush1.bf16.msra.mxu0 0
        %7024 = vmatprep.subr.bf16.mxu0 0
        %7025 = vmatpush1.bf16.msra.mxu0 0
        %7026 = vmatprep.subr.bf16.mxu0 0
        %7027 = vmatpush1.bf16.msra.mxu0 0
        %7028 = vmatprep.subr.bf16.mxu0 0
        %7029 = vmatpush1.bf16.msra.mxu0 0
        %7030 = vmatprep.subr.bf16.mxu0 0
        %7031 = vmatpush1.bf16.msra.mxu0 0
        %7032 = vmatprep.subr.bf16.mxu0 0
        %7033 = vmatpush1.bf16.msra.mxu0 0
        %7034 = vmatprep.subr.bf16.mxu0 0
        %7035 = vmatpush1.bf16.msra.mxu0 0
        %7036 = vmatprep.subr.bf16.mxu0 0
        %7037 = vmatpush1.bf16.msra.mxu0 0
        %7038 = vmatprep.subr.bf16.mxu0 0
        %7039 = vmatpush1.bf16.msra.mxu0 0
        %7040 = vmatprep.subr.bf16.mxu0 0
        %7041 = vmatpush1.bf16.msra.mxu0 0
        %7042 = vmatprep.subr.bf16.mxu0 0
        %7043 = vmatpush1.bf16.msra.mxu0 0
        %7044 = vmatprep.subr.bf16.mxu0 0
        %7045 = vmatpush1.bf16.msra.mxu0 0
        %7046 = vmatprep.subr.bf16.mxu0 0
        %7047 = vmatpush1.bf16.msra.mxu0 0
        %7048 = vmatprep.subr.bf16.mxu0 0
        %7049 = vmatpush1.bf16.msra.mxu0 0
        %7050 = vmatprep.subr.bf16.mxu0 0
        %7051 = vmatpush1.bf16.msra.mxu0 0
        %7052 = vmatprep.mubr.bf16.mxu0 0
        %7053 = vmatmul.mubr.bf16.gmra.mrb[0].mxu0 %v7015
        %v7054 = vpop.f32.mrb[0].mxu0
        %v7055 = vadd.f32 0.0, %v7054
        %v7056 = vpop.f32.mrb[0].mxu0
        %v7057 = vpop.f32.mrb[0].mxu0
        %v7058 = vpop.f32.mrb[0].mxu0
        %7059 = vdwg.mxu0
        %v7061 = vsel %vm4348, %v6262, 0
        %v7064 = vsel %vm6280, %v4333, 0
        %7066 = vmatprep.subr.bf16.mxu0 0
        %7067 = vmatpush1.bf16.msra.mxu0 %v7064
        %7068 = vmatprep.subr.bf16.mxu0 0
        %7069 = vmatpush1.bf16.msra.mxu0 0
        %7070 = vmatprep.subr.bf16.mxu0 0
        %7071 = vmatpush1.bf16.msra.mxu0 0
        %7072 = vmatprep.subr.bf16.mxu0 0
        %7073 = vmatpush1.bf16.msra.mxu0 0
        %7074 = vmatprep.subr.bf16.mxu0 0
        %7075 = vmatpush1.bf16.msra.mxu0 0
        %7076 = vmatprep.subr.bf16.mxu0 0
        %7077 = vmatpush1.bf16.msra.mxu0 0
        %7078 = vmatprep.subr.bf16.mxu0 0
        %7079 = vmatpush1.bf16.msra.mxu0 0
        %7080 = vmatprep.subr.bf16.mxu0 0
        %7081 = vmatpush1.bf16.msra.mxu0 0
        %7082 = vmatprep.subr.bf16.mxu0 0
        %7083 = vmatpush1.bf16.msra.mxu0 0
        %7084 = vmatprep.subr.bf16.mxu0 0
        %7085 = vmatpush1.bf16.msra.mxu0 0
        %7086 = vmatprep.subr.bf16.mxu0 0
        %7087 = vmatpush1.bf16.msra.mxu0 0
        %7088 = vmatprep.subr.bf16.mxu0 0
        %7089 = vmatpush1.bf16.msra.mxu0 0
        %7090 = vmatprep.subr.bf16.mxu0 0
        %7091 = vmatpush1.bf16.msra.mxu0 0
        %7092 = vmatprep.subr.bf16.mxu0 0
        %7093 = vmatpush1.bf16.msra.mxu0 0
        %7094 = vmatprep.subr.bf16.mxu0 0
        %7095 = vmatpush1.bf16.msra.mxu0 0
        %7096 = vmatprep.subr.bf16.mxu0 0
        %7097 = vmatpush1.bf16.msra.mxu0 0
        %7098 = vmatprep.mubr.bf16.mxu0 0
        %7099 = vmatmul.mubr.bf16.gmra.mrb[0].mxu0 %v7061
        %v7100 = vpop.f32.mrb[0].mxu0
        %v7101 = vadd.f32 0.0, %v7100
        %v7102 = vpop.f32.mrb[0].mxu0
        %v7103 = vpop.f32.mrb[0].mxu0
        %v7104 = vpop.f32.mrb[0].mxu0
        %7105 = vdwg.mxu0
        %v7107 = vsel %vm4348, %v6263, 0
        %v7110 = vsel %vm6280, %v4334, 0
        %7112 = vmatprep.subr.bf16.mxu0 0
        %7113 = vmatpush1.bf16.msra.mxu0 %v7110
        %7114 = vmatprep.subr.bf16.mxu0 0
        %7115 = vmatpush1.bf16.msra.mxu0 0
        %7116 = vmatprep.subr.bf16.mxu0 0
        %7117 = vmatpush1.bf16.msra.mxu0 0
        %7118 = vmatprep.subr.bf16.mxu0 0
        %7119 = vmatpush1.bf16.msra.mxu0 0
        %7120 = vmatprep.subr.bf16.mxu0 0
        %7121 = vmatpush1.bf16.msra.mxu0 0
        %7122 = vmatprep.subr.bf16.mxu0 0
        %7123 = vmatpush1.bf16.msra.mxu0 0
        %7124 = vmatprep.subr.bf16.mxu0 0
        %7125 = vmatpush1.bf16.msra.mxu0 0
        %7126 = vmatprep.subr.bf16.mxu0 0
        %7127 = vmatpush1.bf16.msra.mxu0 0
        %7128 = vmatprep.subr.bf16.mxu0 0
        %7129 = vmatpush1.bf16.msra.mxu0 0
        %7130 = vmatprep.subr.bf16.mxu0 0
        %7131 = vmatpush1.bf16.msra.mxu0 0
        %7132 = vmatprep.subr.bf16.mxu0 0
        %7133 = vmatpush1.bf16.msra.mxu0 0
        %7134 = vmatprep.subr.bf16.mxu0 0
        %7135 = vmatpush1.bf16.msra.mxu0 0
        %7136 = vmatprep.subr.bf16.mxu0 0
        %7137 = vmatpush1.bf16.msra.mxu0 0
        %7138 = vmatprep.subr.bf16.mxu0 0
        %7139 = vmatpush1.bf16.msra.mxu0 0
        %7140 = vmatprep.subr.bf16.mxu0 0
        %7141 = vmatpush1.bf16.msra.mxu0 0
        %7142 = vmatprep.subr.bf16.mxu0 0
        %7143 = vmatpush1.bf16.msra.mxu0 0
        %7144 = vmatprep.mubr.bf16.mxu0 0
        %7145 = vmatmul.mubr.bf16.gmra.mrb[0].mxu0 %v7107
        %v7146 = vpop.f32.mrb[0].mxu0
        %v7147 = vadd.f32 0.0, %v7146
        %v7148 = vpop.f32.mrb[0].mxu0
        %v7149 = vpop.f32.mrb[0].mxu0
        %v7150 = vpop.f32.mrb[0].mxu0
        %7151 = vdwg.mxu0
        %v7153 = vsel %vm4348, %v6264, 0
        %v7156 = vsel %vm6280, %v4335, 0
        %7158 = vmatprep.subr.bf16.mxu0 0
        %7159 = vmatpush1.bf16.msra.mxu0 %v7156
        %7160 = vmatprep.subr.bf16.mxu0 0
        %7161 = vmatpush1.bf16.msra.mxu0 0
        %7162 = vmatprep.subr.bf16.mxu0 0
        %7163 = vmatpush1.bf16.msra.mxu0 0
        %7164 = vmatprep.subr.bf16.mxu0 0
        %7165 = vmatpush1.bf16.msra.mxu0 0
        %7166 = vmatprep.subr.bf16.mxu0 0
        %7167 = vmatpush1.bf16.msra.mxu0 0
        %7168 = vmatprep.subr.bf16.mxu0 0
        %7169 = vmatpush1.bf16.msra.mxu0 0
        %7170 = vmatprep.subr.bf16.mxu0 0
        %7171 = vmatpush1.bf16.msra.mxu0 0
        %7172 = vmatprep.subr.bf16.mxu0 0
        %7173 = vmatpush1.bf16.msra.mxu0 0
        %7174 = vmatprep.subr.bf16.mxu0 0
        %7175 = vmatpush1.bf16.msra.mxu0 0
        %7176 = vmatprep.subr.bf16.mxu0 0
        %7177 = vmatpush1.bf16.msra.mxu0 0
        %7178 = vmatprep.subr.bf16.mxu0 0
        %7179 = vmatpush1.bf16.msra.mxu0 0
        %7180 = vmatprep.subr.bf16.mxu0 0
        %7181 = vmatpush1.bf16.msra.mxu0 0
        %7182 = vmatprep.subr.bf16.mxu0 0
        %7183 = vmatpush1.bf16.msra.mxu0 0
        %7184 = vmatprep.subr.bf16.mxu0 0
        %7185 = vmatpush1.bf16.msra.mxu0 0
        %7186 = vmatprep.subr.bf16.mxu0 0
        %7187 = vmatpush1.bf16.msra.mxu0 0
        %7188 = vmatprep.subr.bf16.mxu0 0
        %7189 = vmatpush1.bf16.msra.mxu0 0
        %7190 = vmatprep.mubr.bf16.mxu0 0
        %7191 = vmatmul.mubr.bf16.gmra.mrb[0].mxu0 %v7153
        %v7192 = vpop.f32.mrb[0].mxu0
        %v7193 = vadd.f32 0.0, %v7192
        %v7194 = vpop.f32.mrb[0].mxu0
        %v7195 = vpop.f32.mrb[0].mxu0
        %v7196 = vpop.f32.mrb[0].mxu0
        %7197 = vdwg.mxu0
        %v7199 = vsel %vm4348, %v6265, 0
        %v7202 = vsel %vm6280, %v4336, 0
        %7204 = vmatprep.subr.bf16.mxu0 0
        %7205 = vmatpush1.bf16.msra.mxu0 %v7202
        %7206 = vmatprep.subr.bf16.mxu0 0
        %7207 = vmatpush1.bf16.msra.mxu0 0
        %7208 = vmatprep.subr.bf16.mxu0 0
        %7209 = vmatpush1.bf16.msra.mxu0 0
        %7210 = vmatprep.subr.bf16.mxu0 0
        %7211 = vmatpush1.bf16.msra.mxu0 0
        %7212 = vmatprep.subr.bf16.mxu0 0
        %7213 = vmatpush1.bf16.msra.mxu0 0
        %7214 = vmatprep.subr.bf16.mxu0 0
        %7215 = vmatpush1.bf16.msra.mxu0 0
        %7216 = vmatprep.subr.bf16.mxu0 0
        %7217 = vmatpush1.bf16.msra.mxu0 0
        %7218 = vmatprep.subr.bf16.mxu0 0
        %7219 = vmatpush1.bf16.msra.mxu0 0
        %7220 = vmatprep.subr.bf16.mxu0 0
        %7221 = vmatpush1.bf16.msra.mxu0 0
        %7222 = vmatprep.subr.bf16.mxu0 0
        %7223 = vmatpush1.bf16.msra.mxu0 0
        %7224 = vmatprep.subr.bf16.mxu0 0
        %7225 = vmatpush1.bf16.msra.mxu0 0
        %7226 = vmatprep.subr.bf16.mxu0 0
        %7227 = vmatpush1.bf16.msra.mxu0 0
        %7228 = vmatprep.subr.bf16.mxu0 0
        %7229 = vmatpush1.bf16.msra.mxu0 0
        %7230 = vmatprep.subr.bf16.mxu0 0
        %7231 = vmatpush1.bf16.msra.mxu0 0
        %7232 = vmatprep.subr.bf16.mxu0 0
        %7233 = vmatpush1.bf16.msra.mxu0 0
        %7234 = vmatprep.subr.bf16.mxu0 0
        %7235 = vmatpush1.bf16.msra.mxu0 0
        %7236 = vmatprep.mubr.bf16.mxu0 0
        %7237 = vmatmul.mubr.bf16.gmra.mrb[0].mxu0 %v7199
        %v7238 = vpop.f32.mrb[0].mxu0
        %v7239 = vadd.f32 0.0, %v7238
        %v7240 = vpop.f32.mrb[0].mxu0
        %v7241 = vpop.f32.mrb[0].mxu0
        %v7242 = vpop.f32.mrb[0].mxu0
        %7243 = vdwg.mxu0
        %v7245 = vsel %vm4348, %v6266, 0
        %v7248 = vsel %vm6280, %v4337, 0
        %7250 = vmatprep.subr.bf16.mxu0 0
        %7251 = vmatpush1.bf16.msra.mxu0 %v7248
        %7252 = vmatprep.subr.bf16.mxu0 0
        %7253 = vmatpush1.bf16.msra.mxu0 0
        %7254 = vmatprep.subr.bf16.mxu0 0
        %7255 = vmatpush1.bf16.msra.mxu0 0
        %7256 = vmatprep.subr.bf16.mxu0 0
        %7257 = vmatpush1.bf16.msra.mxu0 0
        %7258 = vmatprep.subr.bf16.mxu0 0
        %7259 = vmatpush1.bf16.msra.mxu0 0
        %7260 = vmatprep.subr.bf16.mxu0 0
        %7261 = vmatpush1.bf16.msra.mxu0 0
        %7262 = vmatprep.subr.bf16.mxu0 0
        %7263 = vmatpush1.bf16.msra.mxu0 0
        %7264 = vmatprep.subr.bf16.mxu0 0
        %7265 = vmatpush1.bf16.msra.mxu0 0
        %7266 = vmatprep.subr.bf16.mxu0 0
        %7267 = vmatpush1.bf16.msra.mxu0 0
        %7268 = vmatprep.subr.bf16.mxu0 0
        %7269 = vmatpush1.bf16.msra.mxu0 0
        %7270 = vmatprep.subr.bf16.mxu0 0
        %7271 = vmatpush1.bf16.msra.mxu0 0
        %7272 = vmatprep.subr.bf16.mxu0 0
        %7273 = vmatpush1.bf16.msra.mxu0 0
        %7274 = vmatprep.subr.bf16.mxu0 0
        %7275 = vmatpush1.bf16.msra.mxu0 0
        %7276 = vmatprep.subr.bf16.mxu0 0
        %7277 = vmatpush1.bf16.msra.mxu0 0
        %7278 = vmatprep.subr.bf16.mxu0 0
        %7279 = vmatpush1.bf16.msra.mxu0 0
        %7280 = vmatprep.subr.bf16.mxu0 0
        %7281 = vmatpush1.bf16.msra.mxu0 0
        %7282 = vmatprep.mubr.bf16.mxu0 0
        %7283 = vmatmul.mubr.bf16.gmra.mrb[0].mxu0 %v7245
        %v7284 = vpop.f32.mrb[0].mxu0
        %v7285 = vadd.f32 0.0, %v7284
        %v7286 = vpop.f32.mrb[0].mxu0
        %v7287 = vpop.f32.mrb[0].mxu0
        %v7288 = vpop.f32.mrb[0].mxu0
        %7289 = vdwg.mxu0
        %v7291 = vsel %vm4348, %v6267, 0
        %v7294 = vsel %vm6280, %v4338, 0
        %7296 = vmatprep.subr.bf16.mxu0 0
        %7297 = vmatpush1.bf16.msra.mxu0 %v7294
        %7298 = vmatprep.subr.bf16.mxu0 0
        %7299 = vmatpush1.bf16.msra.mxu0 0
        %7300 = vmatprep.subr.bf16.mxu0 0
        %7301 = vmatpush1.bf16.msra.mxu0 0
        %7302 = vmatprep.subr.bf16.mxu0 0
        %7303 = vmatpush1.bf16.msra.mxu0 0
        %7304 = vmatprep.subr.bf16.mxu0 0
        %7305 = vmatpush1.bf16.msra.mxu0 0
        %7306 = vmatprep.subr.bf16.mxu0 0
        %7307 = vmatpush1.bf16.msra.mxu0 0
        %7308 = vmatprep.subr.bf16.mxu0 0
        %7309 = vmatpush1.bf16.msra.mxu0 0
        %7310 = vmatprep.subr.bf16.mxu0 0
        %7311 = vmatpush1.bf16.msra.mxu0 0
        %7312 = vmatprep.subr.bf16.mxu0 0
        %7313 = vmatpush1.bf16.msra.mxu0 0
        %7314 = vmatprep.subr.bf16.mxu0 0
        %7315 = vmatpush1.bf16.msra.mxu0 0
        %7316 = vmatprep.subr.bf16.mxu0 0
        %7317 = vmatpush1.bf16.msra.mxu0 0
        %7318 = vmatprep.subr.bf16.mxu0 0
        %7319 = vmatpush1.bf16.msra.mxu0 0
        %7320 = vmatprep.subr.bf16.mxu0 0
        %7321 = vmatpush1.bf16.msra.mxu0 0
        %7322 = vmatprep.subr.bf16.mxu0 0
        %7323 = vmatpush1.bf16.msra.mxu0 0
        %7324 = vmatprep.subr.bf16.mxu0 0
        %7325 = vmatpush1.bf16.msra.mxu0 0
        %7326 = vmatprep.subr.bf16.mxu0 0
        %7327 = vmatpush1.bf16.msra.mxu0 0
        %7328 = vmatprep.mubr.bf16.mxu0 0
        %7329 = vmatmul.mubr.bf16.gmra.mrb[0].mxu0 %v7291
        %v7330 = vpop.f32.mrb[0].mxu0
        %v7331 = vadd.f32 0.0, %v7330
        %v7332 = vpop.f32.mrb[0].mxu0
        %v7333 = vpop.f32.mrb[0].mxu0
        %v7334 = vpop.f32.mrb[0].mxu0
        %7335 = vdwg.mxu0
        %v7337 = vsel %vm4348, %v6268, 0
        %v7340 = vsel %vm6280, %v4339, 0
        %7342 = vmatprep.subr.bf16.mxu0 0
        %7343 = vmatpush1.bf16.msra.mxu0 %v7340
        %7344 = vmatprep.subr.bf16.mxu0 0
        %7345 = vmatpush1.bf16.msra.mxu0 0
        %7346 = vmatprep.subr.bf16.mxu0 0
        %7347 = vmatpush1.bf16.msra.mxu0 0
        %7348 = vmatprep.subr.bf16.mxu0 0
        %7349 = vmatpush1.bf16.msra.mxu0 0
        %7350 = vmatprep.subr.bf16.mxu0 0
        %7351 = vmatpush1.bf16.msra.mxu0 0
        %7352 = vmatprep.subr.bf16.mxu0 0
        %7353 = vmatpush1.bf16.msra.mxu0 0
        %7354 = vmatprep.subr.bf16.mxu0 0
        %7355 = vmatpush1.bf16.msra.mxu0 0
        %7356 = vmatprep.subr.bf16.mxu0 0
        %7357 = vmatpush1.bf16.msra.mxu0 0
        %7358 = vmatprep.subr.bf16.mxu0 0
        %7359 = vmatpush1.bf16.msra.mxu0 0
        %7360 = vmatprep.subr.bf16.mxu0 0
        %7361 = vmatpush1.bf16.msra.mxu0 0
        %7362 = vmatprep.subr.bf16.mxu0 0
        %7363 = vmatpush1.bf16.msra.mxu0 0
        %7364 = vmatprep.subr.bf16.mxu0 0
        %7365 = vmatpush1.bf16.msra.mxu0 0
        %7366 = vmatprep.subr.bf16.mxu0 0
        %7367 = vmatpush1.bf16.msra.mxu0 0
        %7368 = vmatprep.subr.bf16.mxu0 0
        %7369 = vmatpush1.bf16.msra.mxu0 0
        %7370 = vmatprep.subr.bf16.mxu0 0
        %7371 = vmatpush1.bf16.msra.mxu0 0
        %7372 = vmatprep.subr.bf16.mxu0 0
        %7373 = vmatpush1.bf16.msra.mxu0 0
        %7374 = vmatprep.mubr.bf16.mxu0 0
        %7375 = vmatmul.mubr.bf16.gmra.mrb[0].mxu0 %v7337
        %v7376 = vpop.f32.mrb[0].mxu0
        %v7377 = vadd.f32 0.0, %v7376
        %v7378 = vpop.f32.mrb[0].mxu0
        %v7379 = vpop.f32.mrb[0].mxu0
        %v7380 = vpop.f32.mrb[0].mxu0
        %7381 = vdwg.mxu0
        %v7383 = vsel %vm4348, %v6269, 0
        %v7386 = vsel %vm6280, %v4340, 0
        %7388 = vmatprep.subr.bf16.mxu0 0
        %7389 = vmatpush1.bf16.msra.mxu0 %v7386
        %7390 = vmatprep.subr.bf16.mxu0 0
        %7391 = vmatpush1.bf16.msra.mxu0 0
        %7392 = vmatprep.subr.bf16.mxu0 0
        %7393 = vmatpush1.bf16.msra.mxu0 0
        %7394 = vmatprep.subr.bf16.mxu0 0
        %7395 = vmatpush1.bf16.msra.mxu0 0
        %7396 = vmatprep.subr.bf16.mxu0 0
        %7397 = vmatpush1.bf16.msra.mxu0 0
        %7398 = vmatprep.subr.bf16.mxu0 0
        %7399 = vmatpush1.bf16.msra.mxu0 0
        %7400 = vmatprep.subr.bf16.mxu0 0
        %7401 = vmatpush1.bf16.msra.mxu0 0
        %7402 = vmatprep.subr.bf16.mxu0 0
        %7403 = vmatpush1.bf16.msra.mxu0 0
        %7404 = vmatprep.subr.bf16.mxu0 0
        %7405 = vmatpush1.bf16.msra.mxu0 0
        %7406 = vmatprep.subr.bf16.mxu0 0
        %7407 = vmatpush1.bf16.msra.mxu0 0
        %7408 = vmatprep.subr.bf16.mxu0 0
        %7409 = vmatpush1.bf16.msra.mxu0 0
        %7410 = vmatprep.subr.bf16.mxu0 0
        %7411 = vmatpush1.bf16.msra.mxu0 0
        %7412 = vmatprep.subr.bf16.mxu0 0
        %7413 = vmatpush1.bf16.msra.mxu0 0
        %7414 = vmatprep.subr.bf16.mxu0 0
        %7415 = vmatpush1.bf16.msra.mxu0 0
        %7416 = vmatprep.subr.bf16.mxu0 0
        %7417 = vmatpush1.bf16.msra.mxu0 0
        %7418 = vmatprep.subr.bf16.mxu0 0
        %7419 = vmatpush1.bf16.msra.mxu0 0
        %7420 = vmatprep.mubr.bf16.mxu0 0
        %7421 = vmatmul.mubr.bf16.gmra.mrb[0].mxu0 %v7383
        %v7422 = vpop.f32.mrb[0].mxu0
        %v7423 = vadd.f32 0.0, %v7422
        %v7424 = vpop.f32.mrb[0].mxu0
        %v7425 = vpop.f32.mrb[0].mxu0
        %v7426 = vpop.f32.mrb[0].mxu0
        %7427 = vdwg.mxu0
        %v7429 = vsel %vm4348, %v6270, 0
        %v7432 = vsel %vm6280, %v4341, 0
        %7434 = vmatprep.subr.bf16.mxu0 0
        %7435 = vmatpush1.bf16.msra.mxu0 %v7432
        %7436 = vmatprep.subr.bf16.mxu0 0
        %7437 = vmatpush1.bf16.msra.mxu0 0
        %7438 = vmatprep.subr.bf16.mxu0 0
        %7439 = vmatpush1.bf16.msra.mxu0 0
        %7440 = vmatprep.subr.bf16.mxu0 0
        %7441 = vmatpush1.bf16.msra.mxu0 0
        %7442 = vmatprep.subr.bf16.mxu0 0
        %7443 = vmatpush1.bf16.msra.mxu0 0
        %7444 = vmatprep.subr.bf16.mxu0 0
        %7445 = vmatpush1.bf16.msra.mxu0 0
        %7446 = vmatprep.subr.bf16.mxu0 0
        %7447 = vmatpush1.bf16.msra.mxu0 0
        %7448 = vmatprep.subr.bf16.mxu0 0
        %7449 = vmatpush1.bf16.msra.mxu0 0
        %7450 = vmatprep.subr.bf16.mxu0 0
        %7451 = vmatpush1.bf16.msra.mxu0 0
        %7452 = vmatprep.subr.bf16.mxu0 0
        %7453 = vmatpush1.bf16.msra.mxu0 0
        %7454 = vmatprep.subr.bf16.mxu0 0
        %7455 = vmatpush1.bf16.msra.mxu0 0
        %7456 = vmatprep.subr.bf16.mxu0 0
        %7457 = vmatpush1.bf16.msra.mxu0 0
        %7458 = vmatprep.subr.bf16.mxu0 0
        %7459 = vmatpush1.bf16.msra.mxu0 0
        %7460 = vmatprep.subr.bf16.mxu0 0
        %7461 = vmatpush1.bf16.msra.mxu0 0
        %7462 = vmatprep.subr.bf16.mxu0 0
        %7463 = vmatpush1.bf16.msra.mxu0 0
        %7464 = vmatprep.subr.bf16.mxu0 0
        %7465 = vmatpush1.bf16.msra.mxu0 0
        %7466 = vmatprep.mubr.bf16.mxu0 0
        %7467 = vmatmul.mubr.bf16.gmra.mrb[0].mxu0 %v7429
        %v7468 = vpop.f32.mrb[0].mxu0
        %v7469 = vadd.f32 0.0, %v7468
        %v7470 = vpop.f32.mrb[0].mxu0
        %v7471 = vpop.f32.mrb[0].mxu0
        %v7472 = vpop.f32.mrb[0].mxu0
        %7473 = vdwg.mxu0
        %v7475 = vsel %vm4348, %v6271, 0
        %v7478 = vsel %vm6280, %v4342, 0
        %7480 = vmatprep.subr.bf16.mxu0 0
        %7481 = vmatpush1.bf16.msra.mxu0 %v7478
        %7482 = vmatprep.subr.bf16.mxu0 0
        %7483 = vmatpush1.bf16.msra.mxu0 0
        %7484 = vmatprep.subr.bf16.mxu0 0
        %7485 = vmatpush1.bf16.msra.mxu0 0
        %7486 = vmatprep.subr.bf16.mxu0 0
        %7487 = vmatpush1.bf16.msra.mxu0 0
        %7488 = vmatprep.subr.bf16.mxu0 0
        %7489 = vmatpush1.bf16.msra.mxu0 0
        %7490 = vmatprep.subr.bf16.mxu0 0
        %7491 = vmatpush1.bf16.msra.mxu0 0
        %7492 = vmatprep.subr.bf16.mxu0 0
        %7493 = vmatpush1.bf16.msra.mxu0 0
        %7494 = vmatprep.subr.bf16.mxu0 0
        %7495 = vmatpush1.bf16.msra.mxu0 0
        %7496 = vmatprep.subr.bf16.mxu0 0
        %7497 = vmatpush1.bf16.msra.mxu0 0
        %7498 = vmatprep.subr.bf16.mxu0 0
        %7499 = vmatpush1.bf16.msra.mxu0 0
        %7500 = vmatprep.subr.bf16.mxu0 0
        %7501 = vmatpush1.bf16.msra.mxu0 0
        %7502 = vmatprep.subr.bf16.mxu0 0
        %7503 = vmatpush1.bf16.msra.mxu0 0
        %7504 = vmatprep.subr.bf16.mxu0 0
        %7505 = vmatpush1.bf16.msra.mxu0 0
        %7506 = vmatprep.subr.bf16.mxu0 0
        %7507 = vmatpush1.bf16.msra.mxu0 0
        %7508 = vmatprep.subr.bf16.mxu0 0
        %7509 = vmatpush1.bf16.msra.mxu0 0
        %7510 = vmatprep.subr.bf16.mxu0 0
        %7511 = vmatpush1.bf16.msra.mxu0 0
        %7512 = vmatprep.mubr.bf16.mxu0 0
        %7513 = vmatmul.mubr.bf16.gmra.mrb[0].mxu0 %v7475
        %v7514 = vpop.f32.mrb[0].mxu0
        %v7515 = vadd.f32 0.0, %v7514
        %v7516 = vpop.f32.mrb[0].mxu0
        %v7517 = vpop.f32.mrb[0].mxu0
        %v7518 = vpop.f32.mrb[0].mxu0
        %7519 = vdwg.mxu0
        %v7521 = vsel %vm4348, %v6272, 0
        %v7524 = vsel %vm6280, %v4343, 0
        %7526 = vmatprep.subr.bf16.mxu0 0
        %7527 = vmatpush1.bf16.msra.mxu0 %v7524
        %7528 = vmatprep.subr.bf16.mxu0 0
        %7529 = vmatpush1.bf16.msra.mxu0 0
        %7530 = vmatprep.subr.bf16.mxu0 0
        %7531 = vmatpush1.bf16.msra.mxu0 0
        %7532 = vmatprep.subr.bf16.mxu0 0
        %7533 = vmatpush1.bf16.msra.mxu0 0
        %7534 = vmatprep.subr.bf16.mxu0 0
        %7535 = vmatpush1.bf16.msra.mxu0 0
        %7536 = vmatprep.subr.bf16.mxu0 0
        %7537 = vmatpush1.bf16.msra.mxu0 0
        %7538 = vmatprep.subr.bf16.mxu0 0
        %7539 = vmatpush1.bf16.msra.mxu0 0
        %7540 = vmatprep.subr.bf16.mxu0 0
        %7541 = vmatpush1.bf16.msra.mxu0 0
        %7542 = vmatprep.subr.bf16.mxu0 0
        %7543 = vmatpush1.bf16.msra.mxu0 0
        %7544 = vmatprep.subr.bf16.mxu0 0
        %7545 = vmatpush1.bf16.msra.mxu0 0
        %7546 = vmatprep.subr.bf16.mxu0 0
        %7547 = vmatpush1.bf16.msra.mxu0 0
        %7548 = vmatprep.subr.bf16.mxu0 0
        %7549 = vmatpush1.bf16.msra.mxu0 0
        %7550 = vmatprep.subr.bf16.mxu0 0
        %7551 = vmatpush1.bf16.msra.mxu0 0
        %7552 = vmatprep.subr.bf16.mxu0 0
        %7553 = vmatpush1.bf16.msra.mxu0 0
        %7554 = vmatprep.subr.bf16.mxu0 0
        %7555 = vmatpush1.bf16.msra.mxu0 0
        %7556 = vmatprep.subr.bf16.mxu0 0
        %7557 = vmatpush1.bf16.msra.mxu0 0
        %7558 = vmatprep.mubr.bf16.mxu0 0
        %7559 = vmatmul.mubr.bf16.gmra.mrb[0].mxu0 %v7521
        %v7560 = vpop.f32.mrb[0].mxu0
        %v7561 = vadd.f32 0.0, %v7560
        %v7562 = vpop.f32.mrb[0].mxu0
        %v7563 = vpop.f32.mrb[0].mxu0
        %v7564 = vpop.f32.mrb[0].mxu0
        %7565 = vdwg.mxu0
        %v7567 = vsel %vm4348, %v6273, 0
        %v7570 = vsel %vm6280, %v4344, 0
        %7572 = vmatprep.subr.bf16.mxu0 0
        %7573 = vmatpush1.bf16.msra.mxu0 %v7570
        %7574 = vmatprep.subr.bf16.mxu0 0
        %7575 = vmatpush1.bf16.msra.mxu0 0
        %7576 = vmatprep.subr.bf16.mxu0 0
        %7577 = vmatpush1.bf16.msra.mxu0 0
        %7578 = vmatprep.subr.bf16.mxu0 0
        %7579 = vmatpush1.bf16.msra.mxu0 0
        %7580 = vmatprep.subr.bf16.mxu0 0
        %7581 = vmatpush1.bf16.msra.mxu0 0
        %7582 = vmatprep.subr.bf16.mxu0 0
        %7583 = vmatpush1.bf16.msra.mxu0 0
        %7584 = vmatprep.subr.bf16.mxu0 0
        %7585 = vmatpush1.bf16.msra.mxu0 0
        %7586 = vmatprep.subr.bf16.mxu0 0
        %7587 = vmatpush1.bf16.msra.mxu0 0
        %7588 = vmatprep.subr.bf16.mxu0 0
        %7589 = vmatpush1.bf16.msra.mxu0 0
        %7590 = vmatprep.subr.bf16.mxu0 0
        %7591 = vmatpush1.bf16.msra.mxu0 0
        %7592 = vmatprep.subr.bf16.mxu0 0
        %7593 = vmatpush1.bf16.msra.mxu0 0
        %7594 = vmatprep.subr.bf16.mxu0 0
        %7595 = vmatpush1.bf16.msra.mxu0 0
        %7596 = vmatprep.subr.bf16.mxu0 0
        %7597 = vmatpush1.bf16.msra.mxu0 0
        %7598 = vmatprep.subr.bf16.mxu0 0
        %7599 = vmatpush1.bf16.msra.mxu0 0
        %7600 = vmatprep.subr.bf16.mxu0 0
        %7601 = vmatpush1.bf16.msra.mxu0 0
        %7602 = vmatprep.subr.bf16.mxu0 0
        %7603 = vmatpush1.bf16.msra.mxu0 0
        %7604 = vmatprep.mubr.bf16.mxu0 0
        %7605 = vmatmul.mubr.bf16.gmra.mrb[0].mxu0 %v7567
        %v7606 = vpop.f32.mrb[0].mxu0
        %v7607 = vadd.f32 0.0, %v7606
        %v7608 = vpop.f32.mrb[0].mxu0
        %v7609 = vpop.f32.mrb[0].mxu0
        %v7610 = vpop.f32.mrb[0].mxu0
        %7611 = vdwg.mxu0
        %v7613 = vsel %vm4348, %v6274, 0
        %v7616 = vsel %vm6280, %v4345, 0
        %7618 = vmatprep.subr.bf16.mxu0 0
        %7619 = vmatpush1.bf16.msra.mxu0 %v7616
        %7620 = vmatprep.subr.bf16.mxu0 0
        %7621 = vmatpush1.bf16.msra.mxu0 0
        %7622 = vmatprep.subr.bf16.mxu0 0
        %7623 = vmatpush1.bf16.msra.mxu0 0
        %7624 = vmatprep.subr.bf16.mxu0 0
        %7625 = vmatpush1.bf16.msra.mxu0 0
        %7626 = vmatprep.subr.bf16.mxu0 0
        %7627 = vmatpush1.bf16.msra.mxu0 0
        %7628 = vmatprep.subr.bf16.mxu0 0
        %7629 = vmatpush1.bf16.msra.mxu0 0
        %7630 = vmatprep.subr.bf16.mxu0 0
        %7631 = vmatpush1.bf16.msra.mxu0 0
        %7632 = vmatprep.subr.bf16.mxu0 0
        %7633 = vmatpush1.bf16.msra.mxu0 0
        %7634 = vmatprep.subr.bf16.mxu0 0
        %7635 = vmatpush1.bf16.msra.mxu0 0
        %7636 = vmatprep.subr.bf16.mxu0 0
        %7637 = vmatpush1.bf16.msra.mxu0 0
        %7638 = vmatprep.subr.bf16.mxu0 0
        %7639 = vmatpush1.bf16.msra.mxu0 0
        %7640 = vmatprep.subr.bf16.mxu0 0
        %7641 = vmatpush1.bf16.msra.mxu0 0
        %7642 = vmatprep.subr.bf16.mxu0 0
        %7643 = vmatpush1.bf16.msra.mxu0 0
        %7644 = vmatprep.subr.bf16.mxu0 0
        %7645 = vmatpush1.bf16.msra.mxu0 0
        %7646 = vmatprep.subr.bf16.mxu0 0
        %7647 = vmatpush1.bf16.msra.mxu0 0
        %7648 = vmatprep.subr.bf16.mxu0 0
        %7649 = vmatpush1.bf16.msra.mxu0 0
        %7650 = vmatprep.mubr.bf16.mxu0 0
        %7651 = vmatmul.mubr.bf16.gmra.mrb[0].mxu0 %v7613
        %v7652 = vpop.f32.mrb[0].mxu0
        %v7653 = vadd.f32 0.0, %v7652
        %v7654 = vpop.f32.mrb[0].mxu0
        %v7655 = vpop.f32.mrb[0].mxu0
        %v7656 = vpop.f32.mrb[0].mxu0
        %7657 = vdwg.mxu0
        %v7659 = vsel %vm4348, %v6275, 0
        %v7662 = vsel %vm6280, %v4346, 0
        %7664 = vmatprep.subr.bf16.mxu0 0
        %7665 = vmatpush1.bf16.msra.mxu0 %v7662
        %7666 = vmatprep.subr.bf16.mxu0 0
        %7667 = vmatpush1.bf16.msra.mxu0 0
        %7668 = vmatprep.subr.bf16.mxu0 0
        %7669 = vmatpush1.bf16.msra.mxu0 0
        %7670 = vmatprep.subr.bf16.mxu0 0
        %7671 = vmatpush1.bf16.msra.mxu0 0
        %7672 = vmatprep.subr.bf16.mxu0 0
        %7673 = vmatpush1.bf16.msra.mxu0 0
        %7674 = vmatprep.subr.bf16.mxu0 0
        %7675 = vmatpush1.bf16.msra.mxu0 0
        %7676 = vmatprep.subr.bf16.mxu0 0
        %7677 = vmatpush1.bf16.msra.mxu0 0
        %7678 = vmatprep.subr.bf16.mxu0 0
        %7679 = vmatpush1.bf16.msra.mxu0 0
        %7680 = vmatprep.subr.bf16.mxu0 0
        %7681 = vmatpush1.bf16.msra.mxu0 0
        %7682 = vmatprep.subr.bf16.mxu0 0
        %7683 = vmatpush1.bf16.msra.mxu0 0
        %7684 = vmatprep.subr.bf16.mxu0 0
        %7685 = vmatpush1.bf16.msra.mxu0 0
        %7686 = vmatprep.subr.bf16.mxu0 0
        %7687 = vmatpush1.bf16.msra.mxu0 0
        %7688 = vmatprep.subr.bf16.mxu0 0
        %7689 = vmatpush1.bf16.msra.mxu0 0
        %7690 = vmatprep.subr.bf16.mxu0 0
        %7691 = vmatpush1.bf16.msra.mxu0 0
        %7692 = vmatprep.subr.bf16.mxu0 0
        %7693 = vmatpush1.bf16.msra.mxu0 0
        %7694 = vmatprep.subr.bf16.mxu0 0
        %7695 = vmatpush1.bf16.msra.mxu0 0
        %7696 = vmatprep.mubr.bf16.mxu0 0
        %7697 = vmatmul.mubr.bf16.gmra.mrb[0].mxu0 %v7659
        %v7698 = vpop.f32.mrb[0].mxu0
        %v7699 = vadd.f32 0.0, %v7698
        %v7700 = vpop.f32.mrb[0].mxu0
        %v7701 = vpop.f32.mrb[0].mxu0
        %v7702 = vpop.f32.mrb[0].mxu0
        %7703 = vdwg.mxu0
        %v7705 = vsel %vm4348, %v6276, 0
        %v7708 = vsel %vm6280, %v4347, 0
        %7710 = vmatprep.subr.bf16.mxu0 0
        %7711 = vmatpush1.bf16.msra.mxu0 %v7708
        %7712 = vmatprep.subr.bf16.mxu0 0
        %7713 = vmatpush1.bf16.msra.mxu0 0
        %7714 = vmatprep.subr.bf16.mxu0 0
        %7715 = vmatpush1.bf16.msra.mxu0 0
        %7716 = vmatprep.subr.bf16.mxu0 0
        %7717 = vmatpush1.bf16.msra.mxu0 0
        %7718 = vmatprep.subr.bf16.mxu0 0
        %7719 = vmatpush1.bf16.msra.mxu0 0
        %7720 = vmatprep.subr.bf16.mxu0 0
        %7721 = vmatpush1.bf16.msra.mxu0 0
        %7722 = vmatprep.subr.bf16.mxu0 0
        %7723 = vmatpush1.bf16.msra.mxu0 0
        %7724 = vmatprep.subr.bf16.mxu0 0
        %7725 = vmatpush1.bf16.msra.mxu0 0
        %7726 = vmatprep.subr.bf16.mxu0 0
        %7727 = vmatpush1.bf16.msra.mxu0 0
        %7728 = vmatprep.subr.bf16.mxu0 0
        %7729 = vmatpush1.bf16.msra.mxu0 0
        %7730 = vmatprep.subr.bf16.mxu0 0
        %7731 = vmatpush1.bf16.msra.mxu0 0
        %7732 = vmatprep.subr.bf16.mxu0 0
        %7733 = vmatpush1.bf16.msra.mxu0 0
        %7734 = vmatprep.subr.bf16.mxu0 0
        %7735 = vmatpush1.bf16.msra.mxu0 0
        %7736 = vmatprep.subr.bf16.mxu0 0
        %7737 = vmatpush1.bf16.msra.mxu0 0
        %7738 = vmatprep.subr.bf16.mxu0 0
        %7739 = vmatpush1.bf16.msra.mxu0 0
        %7740 = vmatprep.subr.bf16.mxu0 0
        %7741 = vmatpush1.bf16.msra.mxu0 0
        %7742 = vmatprep.mubr.bf16.mxu0 0
        %7743 = vmatmul.mubr.bf16.gmra.mrb[0].mxu0 %v7705
        %v7744 = vpop.f32.mrb[0].mxu0
        %v7745 = vadd.f32 0.0, %v7744
        %v7746 = vpop.f32.mrb[0].mxu0
        %v7747 = vpop.f32.mrb[0].mxu0
        %v7748 = vpop.f32.mrb[0].mxu0
        %7749 = vdwg.mxu0
        %v7750 = vcombine.low %v6319, %v6411
        %v7751 = vcombine.high %v6319, %v6411
        %v7753 = vunpack.c.l.s4 1983009808
        %v7754 = vunpack.c.0.s8 %v7753
        %v7755 = vlaneseq
        %v7756 = vshrl.u32 %v7755, 7
        %v7757 = vsub.s32 %v7754, %v7756
        %v7758 = vrot.slane %v7750, %v7757
        %v7760 = vunpack.c.l.s4 1983009808
        %v7761 = vunpack.c.0.s8 %v7760
        %v7762 = vlaneseq
        %v7763 = vshrl.u32 %v7762, 7
        %v7764 = vsub.s32 %v7761, %v7763
        %v7765 = vrot.slane %v7751, %v7764
        %v7766 = vcombine.low %v6365, %v6457
        %v7767 = vcombine.high %v6365, %v6457
        %v7769 = vunpack.c.l.s4 1983009808
        %v7770 = vunpack.c.0.s8 %v7769
        %v7771 = vlaneseq
        %v7772 = vshrl.u32 %v7771, 7
        %v7773 = vsub.s32 %v7770, %v7772
        %v7774 = vrot.slane %v7766, %v7773
        %v7776 = vunpack.c.l.s4 1983009808
        %v7777 = vunpack.c.0.s8 %v7776
        %v7778 = vlaneseq
        %v7779 = vshrl.u32 %v7778, 7
        %v7780 = vsub.s32 %v7777, %v7779
        %v7781 = vrot.slane %v7767, %v7780
        %v7782 = vcombine.low %v7758, %v7774
        %v7783 = vcombine.high %v7758, %v7774
        %v7785 = vunpack.c.l.s4 1934713408
        %v7786 = vunpack.c.0.s8 %v7785
        %v7787 = vlaneseq
        %v7788 = vshrl.u32 %v7787, 7
        %v7789 = vsub.s32 %v7786, %v7788
        %v7790 = vrot.slane %v7782, %v7789
        %v7792 = vunpack.c.l.s4 1934713408
        %v7793 = vunpack.c.0.s8 %v7792
        %v7794 = vlaneseq
        %v7795 = vshrl.u32 %v7794, 7
        %v7796 = vsub.s32 %v7793, %v7795
        %v7797 = vrot.slane %v7783, %v7796
        %v7798 = vcombine.low %v7765, %v7781
        %v7799 = vcombine.high %v7765, %v7781
        %v7801 = vunpack.c.l.s4 1934713408
        %v7802 = vunpack.c.0.s8 %v7801
        %v7803 = vlaneseq
        %v7804 = vshrl.u32 %v7803, 7
        %v7805 = vsub.s32 %v7802, %v7804
        %v7806 = vrot.slane %v7798, %v7805
        %v7808 = vunpack.c.l.s4 1934713408
        %v7809 = vunpack.c.0.s8 %v7808
        %v7810 = vlaneseq
        %v7811 = vshrl.u32 %v7810, 7
        %v7812 = vsub.s32 %v7809, %v7811
        %v7813 = vrot.slane %v7799, %v7812
        %v7814 = vcombine.high %v7790, 0.0
        %v7815 = vcombine.high %v7797, 0.0
        %v7816 = vcombine.high %v7806, 0.0
        %v7817 = vcombine.high %v7813, 0.0
        %v7818 = vcombine.low %v6503, %v6595
        %v7819 = vcombine.high %v6503, %v6595
        %v7821 = vunpack.c.l.s4 1983009808
        %v7822 = vunpack.c.0.s8 %v7821
        %v7823 = vlaneseq
        %v7824 = vshrl.u32 %v7823, 7
        %v7825 = vsub.s32 %v7822, %v7824
        %v7826 = vrot.slane %v7818, %v7825
        %v7828 = vunpack.c.l.s4 1983009808
        %v7829 = vunpack.c.0.s8 %v7828
        %v7830 = vlaneseq
        %v7831 = vshrl.u32 %v7830, 7
        %v7832 = vsub.s32 %v7829, %v7831
        %v7833 = vrot.slane %v7819, %v7832
        %v7834 = vcombine.low %v6549, %v6641
        %v7835 = vcombine.high %v6549, %v6641
        %v7837 = vunpack.c.l.s4 1983009808
        %v7838 = vunpack.c.0.s8 %v7837
        %v7839 = vlaneseq
        %v7840 = vshrl.u32 %v7839, 7
        %v7841 = vsub.s32 %v7838, %v7840
        %v7842 = vrot.slane %v7834, %v7841
        %v7844 = vunpack.c.l.s4 1983009808
        %v7845 = vunpack.c.0.s8 %v7844
        %v7846 = vlaneseq
        %v7847 = vshrl.u32 %v7846, 7
        %v7848 = vsub.s32 %v7845, %v7847
        %v7849 = vrot.slane %v7835, %v7848
        %v7850 = vcombine.low %v7826, %v7842
        %v7851 = vcombine.high %v7826, %v7842
        %v7853 = vunpack.c.l.s4 1934713408
        %v7854 = vunpack.c.0.s8 %v7853
        %v7855 = vlaneseq
        %v7856 = vshrl.u32 %v7855, 7
        %v7857 = vsub.s32 %v7854, %v7856
        %v7858 = vrot.slane %v7850, %v7857
        %v7860 = vunpack.c.l.s4 1934713408
        %v7861 = vunpack.c.0.s8 %v7860
        %v7862 = vlaneseq
        %v7863 = vshrl.u32 %v7862, 7
        %v7864 = vsub.s32 %v7861, %v7863
        %v7865 = vrot.slane %v7851, %v7864
        %v7866 = vcombine.low %v7833, %v7849
        %v7867 = vcombine.high %v7833, %v7849
        %v7869 = vunpack.c.l.s4 1934713408
        %v7870 = vunpack.c.0.s8 %v7869
        %v7871 = vlaneseq
        %v7872 = vshrl.u32 %v7871, 7
        %v7873 = vsub.s32 %v7870, %v7872
        %v7874 = vrot.slane %v7866, %v7873
        %v7876 = vunpack.c.l.s4 1934713408
        %v7877 = vunpack.c.0.s8 %v7876
        %v7878 = vlaneseq
        %v7879 = vshrl.u32 %v7878, 7
        %v7880 = vsub.s32 %v7877, %v7879
        %v7881 = vrot.slane %v7867, %v7880
        %v7882 = vcombine.high %v7858, 0.0
        %v7883 = vcombine.high %v7865, 0.0
        %v7884 = vcombine.high %v7874, 0.0
        %v7885 = vcombine.high %v7881, 0.0
        %v7886 = vcombine.low %v6687, %v6779
        %v7887 = vcombine.high %v6687, %v6779
        %v7889 = vunpack.c.l.s4 1983009808
        %v7890 = vunpack.c.0.s8 %v7889
        %v7891 = vlaneseq
        %v7892 = vshrl.u32 %v7891, 7
        %v7893 = vsub.s32 %v7890, %v7892
        %v7894 = vrot.slane %v7886, %v7893
        %v7896 = vunpack.c.l.s4 1983009808
        %v7897 = vunpack.c.0.s8 %v7896
        %v7898 = vlaneseq
        %v7899 = vshrl.u32 %v7898, 7
        %v7900 = vsub.s32 %v7897, %v7899
        %v7901 = vrot.slane %v7887, %v7900
        %v7902 = vcombine.low %v6733, %v6825
        %v7903 = vcombine.high %v6733, %v6825
        %v7905 = vunpack.c.l.s4 1983009808
        %v7906 = vunpack.c.0.s8 %v7905
        %v7907 = vlaneseq
        %v7908 = vshrl.u32 %v7907, 7
        %v7909 = vsub.s32 %v7906, %v7908
        %v7910 = vrot.slane %v7902, %v7909
        %v7912 = vunpack.c.l.s4 1983009808
        %v7913 = vunpack.c.0.s8 %v7912
        %v7914 = vlaneseq
        %v7915 = vshrl.u32 %v7914, 7
        %v7916 = vsub.s32 %v7913, %v7915
        %v7917 = vrot.slane %v7903, %v7916
        %v7918 = vcombine.low %v7894, %v7910
        %v7919 = vcombine.high %v7894, %v7910
        %v7921 = vunpack.c.l.s4 1934713408
        %v7922 = vunpack.c.0.s8 %v7921
        %v7923 = vlaneseq
        %v7924 = vshrl.u32 %v7923, 7
        %v7925 = vsub.s32 %v7922, %v7924
        %v7926 = vrot.slane %v7918, %v7925
        %v7928 = vunpack.c.l.s4 1934713408
        %v7929 = vunpack.c.0.s8 %v7928
        %v7930 = vlaneseq
        %v7931 = vshrl.u32 %v7930, 7
        %v7932 = vsub.s32 %v7929, %v7931
        %v7933 = vrot.slane %v7919, %v7932
        %v7934 = vcombine.low %v7901, %v7917
        %v7935 = vcombine.high %v7901, %v7917
        %v7937 = vunpack.c.l.s4 1934713408
        %v7938 = vunpack.c.0.s8 %v7937
        %v7939 = vlaneseq
        %v7940 = vshrl.u32 %v7939, 7
        %v7941 = vsub.s32 %v7938, %v7940
        %v7942 = vrot.slane %v7934, %v7941
        %v7944 = vunpack.c.l.s4 1934713408
        %v7945 = vunpack.c.0.s8 %v7944
        %v7946 = vlaneseq
        %v7947 = vshrl.u32 %v7946, 7
        %v7948 = vsub.s32 %v7945, %v7947
        %v7949 = vrot.slane %v7935, %v7948
        %v7950 = vcombine.high %v7926, 0.0
        %v7951 = vcombine.high %v7933, 0.0
        %v7952 = vcombine.high %v7942, 0.0
        %v7953 = vcombine.high %v7949, 0.0
        %v7954 = vcombine.low %v6871, %v6963
        %v7955 = vcombine.high %v6871, %v6963
        %v7957 = vunpack.c.l.s4 1983009808
        %v7958 = vunpack.c.0.s8 %v7957
        %v7959 = vlaneseq
        %v7960 = vshrl.u32 %v7959, 7
        %v7961 = vsub.s32 %v7958, %v7960
        %v7962 = vrot.slane %v7954, %v7961
        %v7964 = vunpack.c.l.s4 1983009808
        %v7965 = vunpack.c.0.s8 %v7964
        %v7966 = vlaneseq
        %v7967 = vshrl.u32 %v7966, 7
        %v7968 = vsub.s32 %v7965, %v7967
        %v7969 = vrot.slane %v7955, %v7968
        %v7970 = vcombine.low %v6917, %v7009
        %v7971 = vcombine.high %v6917, %v7009
        %v7973 = vunpack.c.l.s4 1983009808
        %v7974 = vunpack.c.0.s8 %v7973
        %v7975 = vlaneseq
        %v7976 = vshrl.u32 %v7975, 7
        %v7977 = vsub.s32 %v7974, %v7976
        %v7978 = vrot.slane %v7970, %v7977
        %v7980 = vunpack.c.l.s4 1983009808
        %v7981 = vunpack.c.0.s8 %v7980
        %v7982 = vlaneseq
        %v7983 = vshrl.u32 %v7982, 7
        %v7984 = vsub.s32 %v7981, %v7983
        %v7985 = vrot.slane %v7971, %v7984
        %v7986 = vcombine.low %v7962, %v7978
        %v7987 = vcombine.high %v7962, %v7978
        %v7989 = vunpack.c.l.s4 1934713408
        %v7990 = vunpack.c.0.s8 %v7989
        %v7991 = vlaneseq
        %v7992 = vshrl.u32 %v7991, 7
        %v7993 = vsub.s32 %v7990, %v7992
        %v7994 = vrot.slane %v7986, %v7993
        %v7996 = vunpack.c.l.s4 1934713408
        %v7997 = vunpack.c.0.s8 %v7996
        %v7998 = vlaneseq
        %v7999 = vshrl.u32 %v7998, 7
        %v8000 = vsub.s32 %v7997, %v7999
        %v8001 = vrot.slane %v7987, %v8000
        %v8002 = vcombine.low %v7969, %v7985
        %v8003 = vcombine.high %v7969, %v7985
        %v8005 = vunpack.c.l.s4 1934713408
        %v8006 = vunpack.c.0.s8 %v8005
        %v8007 = vlaneseq
        %v8008 = vshrl.u32 %v8007, 7
        %v8009 = vsub.s32 %v8006, %v8008
        %v8010 = vrot.slane %v8002, %v8009
        %v8012 = vunpack.c.l.s4 1934713408
        %v8013 = vunpack.c.0.s8 %v8012
        %v8014 = vlaneseq
        %v8015 = vshrl.u32 %v8014, 7
        %v8016 = vsub.s32 %v8013, %v8015
        %v8017 = vrot.slane %v8003, %v8016
        %v8018 = vcombine.high %v7994, 0.0
        %v8019 = vcombine.high %v8001, 0.0
        %v8020 = vcombine.high %v8010, 0.0
        %v8021 = vcombine.high %v8017, 0.0
        %v8022 = vcombine.low %v7055, %v7147
        %v8023 = vcombine.high %v7055, %v7147
        %v8025 = vunpack.c.l.s4 1983009808
        %v8026 = vunpack.c.0.s8 %v8025
        %v8027 = vlaneseq
        %v8028 = vshrl.u32 %v8027, 7
        %v8029 = vsub.s32 %v8026, %v8028
        %v8030 = vrot.slane %v8022, %v8029
        %v8032 = vunpack.c.l.s4 1983009808
        %v8033 = vunpack.c.0.s8 %v8032
        %v8034 = vlaneseq
        %v8035 = vshrl.u32 %v8034, 7
        %v8036 = vsub.s32 %v8033, %v8035
        %v8037 = vrot.slane %v8023, %v8036
        %v8038 = vcombine.low %v7101, %v7193
        %v8039 = vcombine.high %v7101, %v7193
        %v8041 = vunpack.c.l.s4 1983009808
        %v8042 = vunpack.c.0.s8 %v8041
        %v8043 = vlaneseq
        %v8044 = vshrl.u32 %v8043, 7
        %v8045 = vsub.s32 %v8042, %v8044
        %v8046 = vrot.slane %v8038, %v8045
        %v8048 = vunpack.c.l.s4 1983009808
        %v8049 = vunpack.c.0.s8 %v8048
        %v8050 = vlaneseq
        %v8051 = vshrl.u32 %v8050, 7
        %v8052 = vsub.s32 %v8049, %v8051
        %v8053 = vrot.slane %v8039, %v8052
        %v8054 = vcombine.low %v8030, %v8046
        %v8055 = vcombine.high %v8030, %v8046
        %v8057 = vunpack.c.l.s4 1934713408
        %v8058 = vunpack.c.0.s8 %v8057
        %v8059 = vlaneseq
        %v8060 = vshrl.u32 %v8059, 7
        %v8061 = vsub.s32 %v8058, %v8060
        %v8062 = vrot.slane %v8054, %v8061
        %v8064 = vunpack.c.l.s4 1934713408
        %v8065 = vunpack.c.0.s8 %v8064
        %v8066 = vlaneseq
        %v8067 = vshrl.u32 %v8066, 7
        %v8068 = vsub.s32 %v8065, %v8067
        %v8069 = vrot.slane %v8055, %v8068
        %v8070 = vcombine.low %v8037, %v8053
        %v8071 = vcombine.high %v8037, %v8053
        %v8073 = vunpack.c.l.s4 1934713408
        %v8074 = vunpack.c.0.s8 %v8073
        %v8075 = vlaneseq
        %v8076 = vshrl.u32 %v8075, 7
        %v8077 = vsub.s32 %v8074, %v8076
        %v8078 = vrot.slane %v8070, %v8077
        %v8080 = vunpack.c.l.s4 1934713408
        %v8081 = vunpack.c.0.s8 %v8080
        %v8082 = vlaneseq
        %v8083 = vshrl.u32 %v8082, 7
        %v8084 = vsub.s32 %v8081, %v8083
        %v8085 = vrot.slane %v8071, %v8084
        %v8086 = vcombine.high %v8062, 0.0
        %v8087 = vcombine.high %v8069, 0.0
        %v8088 = vcombine.high %v8078, 0.0
        %v8089 = vcombine.high %v8085, 0.0
        %v8090 = vcombine.low %v7239, %v7331
        %v8091 = vcombine.high %v7239, %v7331
        %v8093 = vunpack.c.l.s4 1983009808
        %v8094 = vunpack.c.0.s8 %v8093
        %v8095 = vlaneseq
        %v8096 = vshrl.u32 %v8095, 7
        %v8097 = vsub.s32 %v8094, %v8096
        %v8098 = vrot.slane %v8090, %v8097
        %v8100 = vunpack.c.l.s4 1983009808
        %v8101 = vunpack.c.0.s8 %v8100
        %v8102 = vlaneseq
        %v8103 = vshrl.u32 %v8102, 7
        %v8104 = vsub.s32 %v8101, %v8103
        %v8105 = vrot.slane %v8091, %v8104
        %v8106 = vcombine.low %v7285, %v7377
        %v8107 = vcombine.high %v7285, %v7377
        %v8109 = vunpack.c.l.s4 1983009808
        %v8110 = vunpack.c.0.s8 %v8109
        %v8111 = vlaneseq
        %v8112 = vshrl.u32 %v8111, 7
        %v8113 = vsub.s32 %v8110, %v8112
        %v8114 = vrot.slane %v8106, %v8113
        %v8116 = vunpack.c.l.s4 1983009808
        %v8117 = vunpack.c.0.s8 %v8116
        %v8118 = vlaneseq
        %v8119 = vshrl.u32 %v8118, 7
        %v8120 = vsub.s32 %v8117, %v8119
        %v8121 = vrot.slane %v8107, %v8120
        %v8122 = vcombine.low %v8098, %v8114
        %v8123 = vcombine.high %v8098, %v8114
        %v8125 = vunpack.c.l.s4 1934713408
        %v8126 = vunpack.c.0.s8 %v8125
        %v8127 = vlaneseq
        %v8128 = vshrl.u32 %v8127, 7
        %v8129 = vsub.s32 %v8126, %v8128
        %v8130 = vrot.slane %v8122, %v8129
        %v8132 = vunpack.c.l.s4 1934713408
        %v8133 = vunpack.c.0.s8 %v8132
        %v8134 = vlaneseq
        %v8135 = vshrl.u32 %v8134, 7
        %v8136 = vsub.s32 %v8133, %v8135
        %v8137 = vrot.slane %v8123, %v8136
        %v8138 = vcombine.low %v8105, %v8121
        %v8139 = vcombine.high %v8105, %v8121
        %v8141 = vunpack.c.l.s4 1934713408
        %v8142 = vunpack.c.0.s8 %v8141
        %v8143 = vlaneseq
        %v8144 = vshrl.u32 %v8143, 7
        %v8145 = vsub.s32 %v8142, %v8144
        %v8146 = vrot.slane %v8138, %v8145
        %v8148 = vunpack.c.l.s4 1934713408
        %v8149 = vunpack.c.0.s8 %v8148
        %v8150 = vlaneseq
        %v8151 = vshrl.u32 %v8150, 7
        %v8152 = vsub.s32 %v8149, %v8151
        %v8153 = vrot.slane %v8139, %v8152
        %v8154 = vcombine.high %v8130, 0.0
        %v8155 = vcombine.high %v8137, 0.0
        %v8156 = vcombine.high %v8146, 0.0
        %v8157 = vcombine.high %v8153, 0.0
        %v8158 = vcombine.low %v7423, %v7515
        %v8159 = vcombine.high %v7423, %v7515
        %v8161 = vunpack.c.l.s4 1983009808
        %v8162 = vunpack.c.0.s8 %v8161
        %v8163 = vlaneseq
        %v8164 = vshrl.u32 %v8163, 7
        %v8165 = vsub.s32 %v8162, %v8164
        %v8166 = vrot.slane %v8158, %v8165
        %v8168 = vunpack.c.l.s4 1983009808
        %v8169 = vunpack.c.0.s8 %v8168
        %v8170 = vlaneseq
        %v8171 = vshrl.u32 %v8170, 7
        %v8172 = vsub.s32 %v8169, %v8171
        %v8173 = vrot.slane %v8159, %v8172
        %v8174 = vcombine.low %v7469, %v7561
        %v8175 = vcombine.high %v7469, %v7561
        %v8177 = vunpack.c.l.s4 1983009808
        %v8178 = vunpack.c.0.s8 %v8177
        %v8179 = vlaneseq
        %v8180 = vshrl.u32 %v8179, 7
        %v8181 = vsub.s32 %v8178, %v8180
        %v8182 = vrot.slane %v8174, %v8181
        %v8184 = vunpack.c.l.s4 1983009808
        %v8185 = vunpack.c.0.s8 %v8184
        %v8186 = vlaneseq
        %v8187 = vshrl.u32 %v8186, 7
        %v8188 = vsub.s32 %v8185, %v8187
        %v8189 = vrot.slane %v8175, %v8188
        %v8190 = vcombine.low %v8166, %v8182
        %v8191 = vcombine.high %v8166, %v8182
        %v8193 = vunpack.c.l.s4 1934713408
        %v8194 = vunpack.c.0.s8 %v8193
        %v8195 = vlaneseq
        %v8196 = vshrl.u32 %v8195, 7
        %v8197 = vsub.s32 %v8194, %v8196
        %v8198 = vrot.slane %v8190, %v8197
        %v8200 = vunpack.c.l.s4 1934713408
        %v8201 = vunpack.c.0.s8 %v8200
        %v8202 = vlaneseq
        %v8203 = vshrl.u32 %v8202, 7
        %v8204 = vsub.s32 %v8201, %v8203
        %v8205 = vrot.slane %v8191, %v8204
        %v8206 = vcombine.low %v8173, %v8189
        %v8207 = vcombine.high %v8173, %v8189
        %v8209 = vunpack.c.l.s4 1934713408
        %v8210 = vunpack.c.0.s8 %v8209
        %v8211 = vlaneseq
        %v8212 = vshrl.u32 %v8211, 7
        %v8213 = vsub.s32 %v8210, %v8212
        %v8214 = vrot.slane %v8206, %v8213
        %v8216 = vunpack.c.l.s4 1934713408
        %v8217 = vunpack.c.0.s8 %v8216
        %v8218 = vlaneseq
        %v8219 = vshrl.u32 %v8218, 7
        %v8220 = vsub.s32 %v8217, %v8219
        %v8221 = vrot.slane %v8207, %v8220
        %v8222 = vcombine.high %v8198, 0.0
        %v8223 = vcombine.high %v8205, 0.0
        %v8224 = vcombine.high %v8214, 0.0
        %v8225 = vcombine.high %v8221, 0.0
        %v8226 = vcombine.low %v7607, %v7699
        %v8227 = vcombine.high %v7607, %v7699
        %v8229 = vunpack.c.l.s4 1983009808
        %v8230 = vunpack.c.0.s8 %v8229
        %v8231 = vlaneseq
        %v8232 = vshrl.u32 %v8231, 7
        %v8233 = vsub.s32 %v8230, %v8232
        %v8234 = vrot.slane %v8226, %v8233
        %v8236 = vunpack.c.l.s4 1983009808
        %v8237 = vunpack.c.0.s8 %v8236
        %v8238 = vlaneseq
        %v8239 = vshrl.u32 %v8238, 7
        %v8240 = vsub.s32 %v8237, %v8239
        %v8241 = vrot.slane %v8227, %v8240
        %v8242 = vcombine.low %v7653, %v7745
        %v8243 = vcombine.high %v7653, %v7745
        %v8245 = vunpack.c.l.s4 1983009808
        %v8246 = vunpack.c.0.s8 %v8245
        %v8247 = vlaneseq
        %v8248 = vshrl.u32 %v8247, 7
        %v8249 = vsub.s32 %v8246, %v8248
        %v8250 = vrot.slane %v8242, %v8249
        %v8252 = vunpack.c.l.s4 1983009808
        %v8253 = vunpack.c.0.s8 %v8252
        %v8254 = vlaneseq
        %v8255 = vshrl.u32 %v8254, 7
        %v8256 = vsub.s32 %v8253, %v8255
        %v8257 = vrot.slane %v8243, %v8256
        %v8258 = vcombine.low %v8234, %v8250
        %v8259 = vcombine.high %v8234, %v8250
        %v8261 = vunpack.c.l.s4 1934713408
        %v8262 = vunpack.c.0.s8 %v8261
        %v8263 = vlaneseq
        %v8264 = vshrl.u32 %v8263, 7
        %v8265 = vsub.s32 %v8262, %v8264
        %v8266 = vrot.slane %v8258, %v8265
        %v8268 = vunpack.c.l.s4 1934713408
        %v8269 = vunpack.c.0.s8 %v8268
        %v8270 = vlaneseq
        %v8271 = vshrl.u32 %v8270, 7
        %v8272 = vsub.s32 %v8269, %v8271
        %v8273 = vrot.slane %v8259, %v8272
        %v8274 = vcombine.low %v8241, %v8257
        %v8275 = vcombine.high %v8241, %v8257
        %v8277 = vunpack.c.l.s4 1934713408
        %v8278 = vunpack.c.0.s8 %v8277
        %v8279 = vlaneseq
        %v8280 = vshrl.u32 %v8279, 7
        %v8281 = vsub.s32 %v8278, %v8280
        %v8282 = vrot.slane %v8274, %v8281
        %v8284 = vunpack.c.l.s4 1934713408
        %v8285 = vunpack.c.0.s8 %v8284
        %v8286 = vlaneseq
        %v8287 = vshrl.u32 %v8286, 7
        %v8288 = vsub.s32 %v8285, %v8287
        %v8289 = vrot.slane %v8275, %v8288
        %v8290 = vcombine.high %v8266, 0.0
        %v8291 = vcombine.high %v8273, 0.0
        %v8292 = vcombine.high %v8282, 0.0
        %v8293 = vcombine.high %v8289, 0.0
        %v8294 = vcombine.low %v7790, %v7926
        %v8296 = vunpack.c.l.s4 1983009808
        %v8297 = vunpack.c.0.s8 %v8296
        %v8298 = vlaneseq
        %v8299 = vshrl.u32 %v8298, 7
        %v8300 = vsub.s32 %v8297, %v8299
        %v8301 = vrot.slane %v8294, %v8300
        %v8302 = vcombine.low %v7858, %v7994
        %v8304 = vunpack.c.l.s4 1983009808
        %v8305 = vunpack.c.0.s8 %v8304
        %v8306 = vlaneseq
        %v8307 = vshrl.u32 %v8306, 7
        %v8308 = vsub.s32 %v8305, %v8307
        %v8309 = vrot.slane %v8302, %v8308
        %v8310 = vcombine.low %v8062, %v8198
        %v8312 = vunpack.c.l.s4 1983009808
        %v8313 = vunpack.c.0.s8 %v8312
        %v8314 = vlaneseq
        %v8315 = vshrl.u32 %v8314, 7
        %v8316 = vsub.s32 %v8313, %v8315
        %v8317 = vrot.slane %v8310, %v8316
        %v8318 = vcombine.low %v8130, %v8266
        %v8320 = vunpack.c.l.s4 1983009808
        %v8321 = vunpack.c.0.s8 %v8320
        %v8322 = vlaneseq
        %v8323 = vshrl.u32 %v8322, 7
        %v8324 = vsub.s32 %v8321, %v8323
        %v8325 = vrot.slane %v8318, %v8324
        %v8326 = vcombine.low %v8301, %v8309
        %v8327 = vcombine.high %v8301, %v8309
        %v8329 = vunpack.c.l.s4 1934713408
        %v8330 = vunpack.c.0.s8 %v8329
        %v8331 = vlaneseq
        %v8332 = vshrl.u32 %v8331, 7
        %v8333 = vsub.s32 %v8330, %v8332
        %v8334 = vrot.slane %v8326, %v8333
        %v8336 = vunpack.c.l.s4 1934713408
        %v8337 = vunpack.c.0.s8 %v8336
        %v8338 = vlaneseq
        %v8339 = vshrl.u32 %v8338, 7
        %v8340 = vsub.s32 %v8337, %v8339
        %v8341 = vrot.slane %v8327, %v8340
        %v8342 = vcombine.low %v8317, %v8325
        %v8343 = vcombine.high %v8317, %v8325
        %v8345 = vunpack.c.l.s4 1934713408
        %v8346 = vunpack.c.0.s8 %v8345
        %v8347 = vlaneseq
        %v8348 = vshrl.u32 %v8347, 7
        %v8349 = vsub.s32 %v8346, %v8348
        %v8350 = vrot.slane %v8342, %v8349
        %v8352 = vunpack.c.l.s4 1934713408
        %v8353 = vunpack.c.0.s8 %v8352
        %v8354 = vlaneseq
        %v8355 = vshrl.u32 %v8354, 7
        %v8356 = vsub.s32 %v8353, %v8355
        %v8357 = vrot.slane %v8343, %v8356
        %v8358 = vcombine.low %v8334, %v8350
        %v8359 = vcombine.high %v8334, %v8350
        %v8360 = vcombine.low %v8341, %v8357
        %v8361 = vcombine.high %v8341, %v8357
        %v8362 = vcombine.low %v7814, %v7950
        %v8364 = vunpack.c.l.s4 1983009808
        %v8365 = vunpack.c.0.s8 %v8364
        %v8366 = vlaneseq
        %v8367 = vshrl.u32 %v8366, 7
        %v8368 = vsub.s32 %v8365, %v8367
        %v8369 = vrot.slane %v8362, %v8368
        %v8370 = vcombine.low %v7882, %v8018
        %v8372 = vunpack.c.l.s4 1983009808
        %v8373 = vunpack.c.0.s8 %v8372
        %v8374 = vlaneseq
        %v8375 = vshrl.u32 %v8374, 7
        %v8376 = vsub.s32 %v8373, %v8375
        %v8377 = vrot.slane %v8370, %v8376
        %v8378 = vcombine.low %v8086, %v8222
        %v8380 = vunpack.c.l.s4 1983009808
        %v8381 = vunpack.c.0.s8 %v8380
        %v8382 = vlaneseq
        %v8383 = vshrl.u32 %v8382, 7
        %v8384 = vsub.s32 %v8381, %v8383
        %v8385 = vrot.slane %v8378, %v8384
        %v8386 = vcombine.low %v8154, %v8290
        %v8388 = vunpack.c.l.s4 1983009808
        %v8389 = vunpack.c.0.s8 %v8388
        %v8390 = vlaneseq
        %v8391 = vshrl.u32 %v8390, 7
        %v8392 = vsub.s32 %v8389, %v8391
        %v8393 = vrot.slane %v8386, %v8392
        %v8394 = vcombine.low %v8369, %v8377
        %v8395 = vcombine.high %v8369, %v8377
        %v8397 = vunpack.c.l.s4 1934713408
        %v8398 = vunpack.c.0.s8 %v8397
        %v8399 = vlaneseq
        %v8400 = vshrl.u32 %v8399, 7
        %v8401 = vsub.s32 %v8398, %v8400
        %v8402 = vrot.slane %v8394, %v8401
        %v8404 = vunpack.c.l.s4 1934713408
        %v8405 = vunpack.c.0.s8 %v8404
        %v8406 = vlaneseq
        %v8407 = vshrl.u32 %v8406, 7
        %v8408 = vsub.s32 %v8405, %v8407
        %v8409 = vrot.slane %v8395, %v8408
        %v8410 = vcombine.low %v8385, %v8393
        %v8411 = vcombine.high %v8385, %v8393
        %v8413 = vunpack.c.l.s4 1934713408
        %v8414 = vunpack.c.0.s8 %v8413
        %v8415 = vlaneseq
        %v8416 = vshrl.u32 %v8415, 7
        %v8417 = vsub.s32 %v8414, %v8416
        %v8418 = vrot.slane %v8410, %v8417
        %v8420 = vunpack.c.l.s4 1934713408
        %v8421 = vunpack.c.0.s8 %v8420
        %v8422 = vlaneseq
        %v8423 = vshrl.u32 %v8422, 7
        %v8424 = vsub.s32 %v8421, %v8423
        %v8425 = vrot.slane %v8411, %v8424
        %v8426 = vcombine.low %v8402, %v8418
        %v8427 = vcombine.high %v8402, %v8418
        %v8428 = vcombine.low %v8409, %v8425
        %v8429 = vcombine.high %v8409, %v8425
        %v8430 = vcombine.low %v7797, %v7933
        %v8432 = vunpack.c.l.s4 1983009808
        %v8433 = vunpack.c.0.s8 %v8432
        %v8434 = vlaneseq
        %v8435 = vshrl.u32 %v8434, 7
        %v8436 = vsub.s32 %v8433, %v8435
        %v8437 = vrot.slane %v8430, %v8436
        %v8438 = vcombine.low %v7865, %v8001
        %v8440 = vunpack.c.l.s4 1983009808
        %v8441 = vunpack.c.0.s8 %v8440
        %v8442 = vlaneseq
        %v8443 = vshrl.u32 %v8442, 7
        %v8444 = vsub.s32 %v8441, %v8443
        %v8445 = vrot.slane %v8438, %v8444
        %v8446 = vcombine.low %v8069, %v8205
        %v8448 = vunpack.c.l.s4 1983009808
        %v8449 = vunpack.c.0.s8 %v8448
        %v8450 = vlaneseq
        %v8451 = vshrl.u32 %v8450, 7
        %v8452 = vsub.s32 %v8449, %v8451
        %v8453 = vrot.slane %v8446, %v8452
        %v8454 = vcombine.low %v8137, %v8273
        %v8456 = vunpack.c.l.s4 1983009808
        %v8457 = vunpack.c.0.s8 %v8456
        %v8458 = vlaneseq
        %v8459 = vshrl.u32 %v8458, 7
        %v8460 = vsub.s32 %v8457, %v8459
        %v8461 = vrot.slane %v8454, %v8460
        %v8462 = vcombine.low %v8437, %v8445
        %v8463 = vcombine.high %v8437, %v8445
        %v8465 = vunpack.c.l.s4 1934713408
        %v8466 = vunpack.c.0.s8 %v8465
        %v8467 = vlaneseq
        %v8468 = vshrl.u32 %v8467, 7
        %v8469 = vsub.s32 %v8466, %v8468
        %v8470 = vrot.slane %v8462, %v8469
        %v8472 = vunpack.c.l.s4 1934713408
        %v8473 = vunpack.c.0.s8 %v8472
        %v8474 = vlaneseq
        %v8475 = vshrl.u32 %v8474, 7
        %v8476 = vsub.s32 %v8473, %v8475
        %v8477 = vrot.slane %v8463, %v8476
        %v8478 = vcombine.low %v8453, %v8461
        %v8479 = vcombine.high %v8453, %v8461
        %v8481 = vunpack.c.l.s4 1934713408
        %v8482 = vunpack.c.0.s8 %v8481
        %v8483 = vlaneseq
        %v8484 = vshrl.u32 %v8483, 7
        %v8485 = vsub.s32 %v8482, %v8484
        %v8486 = vrot.slane %v8478, %v8485
        %v8488 = vunpack.c.l.s4 1934713408
        %v8489 = vunpack.c.0.s8 %v8488
        %v8490 = vlaneseq
        %v8491 = vshrl.u32 %v8490, 7
        %v8492 = vsub.s32 %v8489, %v8491
        %v8493 = vrot.slane %v8479, %v8492
        %v8494 = vcombine.low %v8470, %v8486
        %v8495 = vcombine.high %v8470, %v8486
        %v8496 = vcombine.low %v8477, %v8493
        %v8497 = vcombine.high %v8477, %v8493
        %v8498 = vcombine.low %v7815, %v7951
        %v8500 = vunpack.c.l.s4 1983009808
        %v8501 = vunpack.c.0.s8 %v8500
        %v8502 = vlaneseq
        %v8503 = vshrl.u32 %v8502, 7
        %v8504 = vsub.s32 %v8501, %v8503
        %v8505 = vrot.slane %v8498, %v8504
        %v8506 = vcombine.low %v7883, %v8019
        %v8508 = vunpack.c.l.s4 1983009808
        %v8509 = vunpack.c.0.s8 %v8508
        %v8510 = vlaneseq
        %v8511 = vshrl.u32 %v8510, 7
        %v8512 = vsub.s32 %v8509, %v8511
        %v8513 = vrot.slane %v8506, %v8512
        %v8514 = vcombine.low %v8087, %v8223
        %v8516 = vunpack.c.l.s4 1983009808
        %v8517 = vunpack.c.0.s8 %v8516
        %v8518 = vlaneseq
        %v8519 = vshrl.u32 %v8518, 7
        %v8520 = vsub.s32 %v8517, %v8519
        %v8521 = vrot.slane %v8514, %v8520
        %v8522 = vcombine.low %v8155, %v8291
        %v8524 = vunpack.c.l.s4 1983009808
        %v8525 = vunpack.c.0.s8 %v8524
        %v8526 = vlaneseq
        %v8527 = vshrl.u32 %v8526, 7
        %v8528 = vsub.s32 %v8525, %v8527
        %v8529 = vrot.slane %v8522, %v8528
        %v8530 = vcombine.low %v8505, %v8513
        %v8531 = vcombine.high %v8505, %v8513
        %v8533 = vunpack.c.l.s4 1934713408
        %v8534 = vunpack.c.0.s8 %v8533
        %v8535 = vlaneseq
        %v8536 = vshrl.u32 %v8535, 7
        %v8537 = vsub.s32 %v8534, %v8536
        %v8538 = vrot.slane %v8530, %v8537
        %v8540 = vunpack.c.l.s4 1934713408
        %v8541 = vunpack.c.0.s8 %v8540
        %v8542 = vlaneseq
        %v8543 = vshrl.u32 %v8542, 7
        %v8544 = vsub.s32 %v8541, %v8543
        %v8545 = vrot.slane %v8531, %v8544
        %v8546 = vcombine.low %v8521, %v8529
        %v8547 = vcombine.high %v8521, %v8529
        %v8549 = vunpack.c.l.s4 1934713408
        %v8550 = vunpack.c.0.s8 %v8549
        %v8551 = vlaneseq
        %v8552 = vshrl.u32 %v8551, 7
        %v8553 = vsub.s32 %v8550, %v8552
        %v8554 = vrot.slane %v8546, %v8553
        %v8556 = vunpack.c.l.s4 1934713408
        %v8557 = vunpack.c.0.s8 %v8556
        %v8558 = vlaneseq
        %v8559 = vshrl.u32 %v8558, 7
        %v8560 = vsub.s32 %v8557, %v8559
        %v8561 = vrot.slane %v8547, %v8560
        %v8562 = vcombine.low %v8538, %v8554
        %v8563 = vcombine.high %v8538, %v8554
        %v8564 = vcombine.low %v8545, %v8561
        %v8565 = vcombine.high %v8545, %v8561
        %v8566 = vcombine.low %v7806, %v7942
        %v8568 = vunpack.c.l.s4 1983009808
        %v8569 = vunpack.c.0.s8 %v8568
        %v8570 = vlaneseq
        %v8571 = vshrl.u32 %v8570, 7
        %v8572 = vsub.s32 %v8569, %v8571
        %v8573 = vrot.slane %v8566, %v8572
        %v8574 = vcombine.low %v7874, %v8010
        %v8576 = vunpack.c.l.s4 1983009808
        %v8577 = vunpack.c.0.s8 %v8576
        %v8578 = vlaneseq
        %v8579 = vshrl.u32 %v8578, 7
        %v8580 = vsub.s32 %v8577, %v8579
        %v8581 = vrot.slane %v8574, %v8580
        %v8582 = vcombine.low %v8078, %v8214
        %v8584 = vunpack.c.l.s4 1983009808
        %v8585 = vunpack.c.0.s8 %v8584
        %v8586 = vlaneseq
        %v8587 = vshrl.u32 %v8586, 7
        %v8588 = vsub.s32 %v8585, %v8587
        %v8589 = vrot.slane %v8582, %v8588
        %v8590 = vcombine.low %v8146, %v8282
        %v8592 = vunpack.c.l.s4 1983009808
        %v8593 = vunpack.c.0.s8 %v8592
        %v8594 = vlaneseq
        %v8595 = vshrl.u32 %v8594, 7
        %v8596 = vsub.s32 %v8593, %v8595
        %v8597 = vrot.slane %v8590, %v8596
        %v8598 = vcombine.low %v8573, %v8581
        %v8599 = vcombine.high %v8573, %v8581
        %v8601 = vunpack.c.l.s4 1934713408
        %v8602 = vunpack.c.0.s8 %v8601
        %v8603 = vlaneseq
        %v8604 = vshrl.u32 %v8603, 7
        %v8605 = vsub.s32 %v8602, %v8604
        %v8606 = vrot.slane %v8598, %v8605
        %v8608 = vunpack.c.l.s4 1934713408
        %v8609 = vunpack.c.0.s8 %v8608
        %v8610 = vlaneseq
        %v8611 = vshrl.u32 %v8610, 7
        %v8612 = vsub.s32 %v8609, %v8611
        %v8613 = vrot.slane %v8599, %v8612
        %v8614 = vcombine.low %v8589, %v8597
        %v8615 = vcombine.high %v8589, %v8597
        %v8617 = vunpack.c.l.s4 1934713408
        %v8618 = vunpack.c.0.s8 %v8617
        %v8619 = vlaneseq
        %v8620 = vshrl.u32 %v8619, 7
        %v8621 = vsub.s32 %v8618, %v8620
        %v8622 = vrot.slane %v8614, %v8621
        %v8624 = vunpack.c.l.s4 1934713408
        %v8625 = vunpack.c.0.s8 %v8624
        %v8626 = vlaneseq
        %v8627 = vshrl.u32 %v8626, 7
        %v8628 = vsub.s32 %v8625, %v8627
        %v8629 = vrot.slane %v8615, %v8628
        %v8630 = vcombine.low %v8606, %v8622
        %v8631 = vcombine.high %v8606, %v8622
        %v8632 = vcombine.low %v8613, %v8629
        %v8633 = vcombine.high %v8613, %v8629
        %v8634 = vcombine.low %v7816, %v7952
        %v8636 = vunpack.c.l.s4 1983009808
        %v8637 = vunpack.c.0.s8 %v8636
        %v8638 = vlaneseq
        %v8639 = vshrl.u32 %v8638, 7
        %v8640 = vsub.s32 %v8637, %v8639
        %v8641 = vrot.slane %v8634, %v8640
        %v8642 = vcombine.low %v7884, %v8020
        %v8644 = vunpack.c.l.s4 1983009808
        %v8645 = vunpack.c.0.s8 %v8644
        %v8646 = vlaneseq
        %v8647 = vshrl.u32 %v8646, 7
        %v8648 = vsub.s32 %v8645, %v8647
        %v8649 = vrot.slane %v8642, %v8648
        %v8650 = vcombine.low %v8088, %v8224
        %v8652 = vunpack.c.l.s4 1983009808
        %v8653 = vunpack.c.0.s8 %v8652
        %v8654 = vlaneseq
        %v8655 = vshrl.u32 %v8654, 7
        %v8656 = vsub.s32 %v8653, %v8655
        %v8657 = vrot.slane %v8650, %v8656
        %v8658 = vcombine.low %v8156, %v8292
        %v8660 = vunpack.c.l.s4 1983009808
        %v8661 = vunpack.c.0.s8 %v8660
        %v8662 = vlaneseq
        %v8663 = vshrl.u32 %v8662, 7
        %v8664 = vsub.s32 %v8661, %v8663
        %v8665 = vrot.slane %v8658, %v8664
        %v8666 = vcombine.low %v8641, %v8649
        %v8667 = vcombine.high %v8641, %v8649
        %v8669 = vunpack.c.l.s4 1934713408
        %v8670 = vunpack.c.0.s8 %v8669
        %v8671 = vlaneseq
        %v8672 = vshrl.u32 %v8671, 7
        %v8673 = vsub.s32 %v8670, %v8672
        %v8674 = vrot.slane %v8666, %v8673
        %v8676 = vunpack.c.l.s4 1934713408
        %v8677 = vunpack.c.0.s8 %v8676
        %v8678 = vlaneseq
        %v8679 = vshrl.u32 %v8678, 7
        %v8680 = vsub.s32 %v8677, %v8679
        %v8681 = vrot.slane %v8667, %v8680
        %v8682 = vcombine.low %v8657, %v8665
        %v8683 = vcombine.high %v8657, %v8665
        %v8685 = vunpack.c.l.s4 1934713408
        %v8686 = vunpack.c.0.s8 %v8685
        %v8687 = vlaneseq
        %v8688 = vshrl.u32 %v8687, 7
        %v8689 = vsub.s32 %v8686, %v8688
        %v8690 = vrot.slane %v8682, %v8689
        %v8692 = vunpack.c.l.s4 1934713408
        %v8693 = vunpack.c.0.s8 %v8692
        %v8694 = vlaneseq
        %v8695 = vshrl.u32 %v8694, 7
        %v8696 = vsub.s32 %v8693, %v8695
        %v8697 = vrot.slane %v8683, %v8696
        %v8698 = vcombine.low %v8674, %v8690
        %v8699 = vcombine.high %v8674, %v8690
        %v8700 = vcombine.low %v8681, %v8697
        %v8701 = vcombine.high %v8681, %v8697
        %v8702 = vcombine.low %v7813, %v7949
        %v8704 = vunpack.c.l.s4 1983009808
        %v8705 = vunpack.c.0.s8 %v8704
        %v8706 = vlaneseq
        %v8707 = vshrl.u32 %v8706, 7
        %v8708 = vsub.s32 %v8705, %v8707
        %v8709 = vrot.slane %v8702, %v8708
        %v8710 = vcombine.low %v7881, %v8017
        %v8712 = vunpack.c.l.s4 1983009808
        %v8713 = vunpack.c.0.s8 %v8712
        %v8714 = vlaneseq
        %v8715 = vshrl.u32 %v8714, 7
        %v8716 = vsub.s32 %v8713, %v8715
        %v8717 = vrot.slane %v8710, %v8716
        %v8718 = vcombine.low %v8085, %v8221
        %v8720 = vunpack.c.l.s4 1983009808
        %v8721 = vunpack.c.0.s8 %v8720
        %v8722 = vlaneseq
        %v8723 = vshrl.u32 %v8722, 7
        %v8724 = vsub.s32 %v8721, %v8723
        %v8725 = vrot.slane %v8718, %v8724
        %v8726 = vcombine.low %v8153, %v8289
        %v8728 = vunpack.c.l.s4 1983009808
        %v8729 = vunpack.c.0.s8 %v8728
        %v8730 = vlaneseq
        %v8731 = vshrl.u32 %v8730, 7
        %v8732 = vsub.s32 %v8729, %v8731
        %v8733 = vrot.slane %v8726, %v8732
        %v8734 = vcombine.low %v8709, %v8717
        %v8735 = vcombine.high %v8709, %v8717
        %v8737 = vunpack.c.l.s4 1934713408
        %v8738 = vunpack.c.0.s8 %v8737
        %v8739 = vlaneseq
        %v8740 = vshrl.u32 %v8739, 7
        %v8741 = vsub.s32 %v8738, %v8740
        %v8742 = vrot.slane %v8734, %v8741
        %v8744 = vunpack.c.l.s4 1934713408
        %v8745 = vunpack.c.0.s8 %v8744
        %v8746 = vlaneseq
        %v8747 = vshrl.u32 %v8746, 7
        %v8748 = vsub.s32 %v8745, %v8747
        %v8749 = vrot.slane %v8735, %v8748
        %v8750 = vcombine.low %v8725, %v8733
        %v8751 = vcombine.high %v8725, %v8733
        %v8753 = vunpack.c.l.s4 1934713408
        %v8754 = vunpack.c.0.s8 %v8753
        %v8755 = vlaneseq
        %v8756 = vshrl.u32 %v8755, 7
        %v8757 = vsub.s32 %v8754, %v8756
        %v8758 = vrot.slane %v8750, %v8757
        %v8760 = vunpack.c.l.s4 1934713408
        %v8761 = vunpack.c.0.s8 %v8760
        %v8762 = vlaneseq
        %v8763 = vshrl.u32 %v8762, 7
        %v8764 = vsub.s32 %v8761, %v8763
        %v8765 = vrot.slane %v8751, %v8764
        %v8766 = vcombine.low %v8742, %v8758
        %v8767 = vcombine.high %v8742, %v8758
        %v8768 = vcombine.low %v8749, %v8765
        %v8769 = vcombine.high %v8749, %v8765
        %v8770 = vcombine.low %v7817, %v7953
        %v8772 = vunpack.c.l.s4 1983009808
        %v8773 = vunpack.c.0.s8 %v8772
        %v8774 = vlaneseq
        %v8775 = vshrl.u32 %v8774, 7
        %v8776 = vsub.s32 %v8773, %v8775
        %v8777 = vrot.slane %v8770, %v8776
        %v8778 = vcombine.low %v7885, %v8021
        %v8780 = vunpack.c.l.s4 1983009808
        %v8781 = vunpack.c.0.s8 %v8780
        %v8782 = vlaneseq
        %v8783 = vshrl.u32 %v8782, 7
        %v8784 = vsub.s32 %v8781, %v8783
        %v8785 = vrot.slane %v8778, %v8784
        %v8786 = vcombine.low %v8089, %v8225
        %v8788 = vunpack.c.l.s4 1983009808
        %v8789 = vunpack.c.0.s8 %v8788
        %v8790 = vlaneseq
        %v8791 = vshrl.u32 %v8790, 7
        %v8792 = vsub.s32 %v8789, %v8791
        %v8793 = vrot.slane %v8786, %v8792
        %v8794 = vcombine.low %v8157, %v8293
        %v8796 = vunpack.c.l.s4 1983009808
        %v8797 = vunpack.c.0.s8 %v8796
        %v8798 = vlaneseq
        %v8799 = vshrl.u32 %v8798, 7
        %v8800 = vsub.s32 %v8797, %v8799
        %v8801 = vrot.slane %v8794, %v8800
        %v8802 = vcombine.low %v8777, %v8785
        %v8803 = vcombine.high %v8777, %v8785
        %v8805 = vunpack.c.l.s4 1934713408
        %v8806 = vunpack.c.0.s8 %v8805
        %v8807 = vlaneseq
        %v8808 = vshrl.u32 %v8807, 7
        %v8809 = vsub.s32 %v8806, %v8808
        %v8810 = vrot.slane %v8802, %v8809
        %v8812 = vunpack.c.l.s4 1934713408
        %v8813 = vunpack.c.0.s8 %v8812
        %v8814 = vlaneseq
        %v8815 = vshrl.u32 %v8814, 7
        %v8816 = vsub.s32 %v8813, %v8815
        %v8817 = vrot.slane %v8803, %v8816
        %v8818 = vcombine.low %v8793, %v8801
        %v8819 = vcombine.high %v8793, %v8801
        %v8821 = vunpack.c.l.s4 1934713408
        %v8822 = vunpack.c.0.s8 %v8821
        %v8823 = vlaneseq
        %v8824 = vshrl.u32 %v8823, 7
        %v8825 = vsub.s32 %v8822, %v8824
        %v8826 = vrot.slane %v8818, %v8825
        %v8828 = vunpack.c.l.s4 1934713408
        %v8829 = vunpack.c.0.s8 %v8828
        %v8830 = vlaneseq
        %v8831 = vshrl.u32 %v8830, 7
        %v8832 = vsub.s32 %v8829, %v8831
        %v8833 = vrot.slane %v8819, %v8832
        %v8834 = vcombine.low %v8810, %v8826
        %v8835 = vcombine.high %v8810, %v8826
        %v8836 = vcombine.low %v8817, %v8833
        %v8837 = vcombine.high %v8817, %v8833
        %8846 = vrot.lane.b32.xlu0 %v8359, 8
        %v8847 = vpop.permute.xlu0 %8846
        %8848 = vrot.lane.b32.xlu0 %v8427, 8
        %v8849 = vpop.permute.xlu0 %8848
        %8850 = vrot.lane.b32.xlu0 %v8495, 8
        %v8851 = vpop.permute.xlu0 %8850
        %8852 = vrot.lane.b32.xlu0 %v8563, 8
        %v8853 = vpop.permute.xlu0 %8852
        %8854 = vrot.lane.b32.xlu0 %v8631, 8
        %v8855 = vpop.permute.xlu0 %8854
        %8856 = vrot.lane.b32.xlu0 %v8699, 8
        %v8857 = vpop.permute.xlu0 %8856
        %8858 = vrot.lane.b32.xlu0 %v8767, 8
        %v8859 = vpop.permute.xlu0 %8858
        %8860 = vrot.lane.b32.xlu0 %v8835, 8
        %v8861 = vpop.permute.xlu0 %8860
        %8878 = vrot.lane.b32.xlu0 %v8360, 16
        %v8879 = vpop.permute.xlu0 %8878
        %8880 = vrot.lane.b32.xlu0 %v8428, 16
        %v8881 = vpop.permute.xlu0 %8880
        %8882 = vrot.lane.b32.xlu0 %v8496, 16
        %v8883 = vpop.permute.xlu0 %8882
        %8884 = vrot.lane.b32.xlu0 %v8564, 16
        %v8885 = vpop.permute.xlu0 %8884
        %8886 = vrot.lane.b32.xlu0 %v8632, 16
        %v8887 = vpop.permute.xlu0 %8886
        %8888 = vrot.lane.b32.xlu0 %v8700, 16
        %v8889 = vpop.permute.xlu0 %8888
        %8890 = vrot.lane.b32.xlu0 %v8768, 16
        %v8891 = vpop.permute.xlu0 %8890
        %8892 = vrot.lane.b32.xlu0 %v8836, 16
        %v8893 = vpop.permute.xlu0 %8892
        %8910 = vrot.lane.b32.xlu0 %v8361, 24
        %v8911 = vpop.permute.xlu0 %8910
        %8912 = vrot.lane.b32.xlu0 %v8429, 24
        %v8913 = vpop.permute.xlu0 %8912
        %8914 = vrot.lane.b32.xlu0 %v8497, 24
        %v8915 = vpop.permute.xlu0 %8914
        %8916 = vrot.lane.b32.xlu0 %v8565, 24
        %v8917 = vpop.permute.xlu0 %8916
        %8918 = vrot.lane.b32.xlu0 %v8633, 24
        %v8919 = vpop.permute.xlu0 %8918
        %8920 = vrot.lane.b32.xlu0 %v8701, 24
        %v8921 = vpop.permute.xlu0 %8920
        %8922 = vrot.lane.b32.xlu0 %v8769, 24
        %v8923 = vpop.permute.xlu0 %8922
        %8924 = vrot.lane.b32.xlu0 %v8837, 24
        %v8925 = vpop.permute.xlu0 %8924
        %v8934 = vsel %vm4348, %v8358, %v8847
        %v8935 = vsel %vm4348, %v8426, %v8849
        %v8936 = vsel %vm4348, %v8494, %v8851
        %v8937 = vsel %vm4348, %v8562, %v8853
        %v8938 = vsel %vm4348, %v8630, %v8855
        %v8939 = vsel %vm4348, %v8698, %v8857
        %v8940 = vsel %vm4348, %v8766, %v8859
        %v8941 = vsel %vm4348, %v8834, %v8861
        %vm8942 = vcmask 130048
        %v8943 = vsel %vm8942, %v8934, %v8879
        %v8944 = vsel %vm8942, %v8935, %v8881
        %v8945 = vsel %vm8942, %v8936, %v8883
        %v8946 = vsel %vm8942, %v8937, %v8885
        %v8947 = vsel %vm8942, %v8938, %v8887
        %v8948 = vsel %vm8942, %v8939, %v8889
        %v8949 = vsel %vm8942, %v8940, %v8891
        %v8950 = vsel %vm8942, %v8941, %v8893
        %vm8951 = vcmask 195584
        %v8952 = vsel %vm8951, %v8943, %v8911
        %v8953 = vsel %vm8951, %v8944, %v8913
        %v8954 = vsel %vm8951, %v8945, %v8915
        %v8955 = vsel %vm8951, %v8946, %v8917
        %v8956 = vsel %vm8951, %v8947, %v8919
        %v8957 = vsel %vm8951, %v8948, %v8921
        %v8958 = vsel %vm8951, %v8949, %v8923
        %v8959 = vsel %vm8951, %v8950, %v8925
        %v8960 = vpack.c.bf16 %v8953, %v8952
        %v8961 = vpack.c.bf16 %v8955, %v8954
        %v8962 = vpack.c.bf16 %v8957, %v8956
        %v8963 = vpack.c.bf16 %v8959, %v8958
        %v8964 = vld [vmem:[%s4] sm:$0xf]
        %v8965 = vld [vmem:[%s4 + $0x4] sm:$0xf]
        %v8966 = vld [vmem:[%s4 + $0x8] sm:$0xf]
        %v8967 = vld [vmem:[%s4 + $0xc] sm:$0xf]
        %v8968 = vlaneseq
        %v8969 = vshrl.u32 %v8968, 7
        %v8970 = vsub.s32 1, %v8969
        %v8971 = vrot.slane %v501, %v8970
        %v8976 = vunpack.c.l.b16 %v8964
        %v8977 = vunpack.c.l.b16 %v8965
        %v8978 = vunpack.c.l.b16 %v8966
        %v8979 = vunpack.c.l.b16 %v8967
        %v8980 = vpack.c.b16 %v8977, %v8976
        %v8981 = vpack.c.b16 %v8979, %v8978
        %v8985 = vsel %vm542, %v8960, 0
        %v8988 = vsel %vm542, %v8961, 0
        %v8991 = vsel %vm542, %v8962, 0
        %v8994 = vsel %vm542, %v8963, 0
        %8996 = vmatprep.subr.bf16.mxu0 0
        %8997 = vmatpush1.bf16.msra.mxu0 %v8980
        %8998 = vmatprep.subr.bf16.mxu0 0
        %8999 = vmatpush1.bf16.msra.mxu0 %v8981
        %9000 = vmatprep.subr.bf16.mxu0 0
        %9001 = vmatpush1.bf16.msra.mxu0 0
        %9002 = vmatprep.subr.bf16.mxu0 0
        %9003 = vmatpush1.bf16.msra.mxu0 0
        %9004 = vmatprep.subr.bf16.mxu0 0
        %9005 = vmatpush1.bf16.msra.mxu0 0
        %9006 = vmatprep.subr.bf16.mxu0 0
        %9007 = vmatpush1.bf16.msra.mxu0 0
        %9008 = vmatprep.subr.bf16.mxu0 0
        %9009 = vmatpush1.bf16.msra.mxu0 0
        %9010 = vmatprep.subr.bf16.mxu0 0
        %9011 = vmatpush1.bf16.msra.mxu0 0
        %9012 = vmatprep.subr.bf16.mxu0 0
        %9013 = vmatpush1.bf16.msra.mxu0 0
        %9014 = vmatprep.subr.bf16.mxu0 0
        %9015 = vmatpush1.bf16.msra.mxu0 0
        %9016 = vmatprep.subr.bf16.mxu0 0
        %9017 = vmatpush1.bf16.msra.mxu0 0
        %9018 = vmatprep.subr.bf16.mxu0 0
        %9019 = vmatpush1.bf16.msra.mxu0 0
        %9020 = vmatprep.subr.bf16.mxu0 0
        %9021 = vmatpush1.bf16.msra.mxu0 0
        %9022 = vmatprep.subr.bf16.mxu0 0
        %9023 = vmatpush1.bf16.msra.mxu0 0
        %9024 = vmatprep.subr.bf16.mxu0 0
        %9025 = vmatpush1.bf16.msra.mxu0 0
        %9026 = vmatprep.subr.bf16.mxu0 0
        %9027 = vmatpush1.bf16.msra.mxu0 0
        %9028 = vmatprep.mubr.bf16.mxu0 0
        %9029 = vmatmul.mubr.bf16.gmra.mrb[0].mxu0 %v8985
        %v9030 = vpop.f32.mrb[0].mxu0
        %v9031 = vadd.f32 %v8971, %v9030
        %v9032 = vpop.f32.mrb[0].mxu0
        %v9033 = vpop.f32.mrb[0].mxu0
        %v9034 = vadd.f32 %v8971, %v9033
        %v9035 = vpop.f32.mrb[0].mxu0
        %9036 = vmatprep.mubr.bf16.mxu0 0
        %9037 = vmatmul.mubr.bf16.gmra.mrb[0].mxu0 %v8988
        %v9038 = vpop.f32.mrb[0].mxu0
        %v9039 = vadd.f32 %v8971, %v9038
        %v9040 = vpop.f32.mrb[0].mxu0
        %v9041 = vpop.f32.mrb[0].mxu0
        %v9042 = vadd.f32 %v8971, %v9041
        %v9043 = vpop.f32.mrb[0].mxu0
        %9044 = vmatprep.mubr.bf16.mxu0 0
        %9045 = vmatmul.mubr.bf16.gmra.mrb[0].mxu0 %v8991
        %v9046 = vpop.f32.mrb[0].mxu0
        %v9047 = vadd.f32 %v8971, %v9046
        %v9048 = vpop.f32.mrb[0].mxu0
        %v9049 = vpop.f32.mrb[0].mxu0
        %v9050 = vadd.f32 %v8971, %v9049
        %v9051 = vpop.f32.mrb[0].mxu0
        %9052 = vmatprep.mubr.bf16.mxu0 0
        %9053 = vmatmul.mubr.bf16.gmra.mrb[0].mxu0 %v8994
        %v9054 = vpop.f32.mrb[0].mxu0
        %v9055 = vadd.f32 %v8971, %v9054
        %v9056 = vpop.f32.mrb[0].mxu0
        %v9057 = vpop.f32.mrb[0].mxu0
        %v9058 = vadd.f32 %v8971, %v9057
        %v9059 = vpop.f32.mrb[0].mxu0
        %9060 = vdwg.mxu0
        %v9061 = vadd.f32 %v502, %v9031
        %v9062 = vadd.f32 %v503, %v9034
        %v9063 = vadd.f32 %v504, %v9039
        %v9064 = vadd.f32 %v505, %v9042
        %v9065 = vadd.f32 %v506, %v9047
        %v9066 = vadd.f32 %v507, %v9050
        %v9067 = vadd.f32 %v508, %v9055
        %v9068 = vadd.f32 %v509, %v9058
        %v9069 = vsel %vm542, %v9061, 0.0
        %9070 = vadd.xlane.f32.xlu0 %v9069
        %v9071 = vpop.xlane.xlu0 %9070
        %v9072 = vsel %vm542, %v9062, 0.0
        %9073 = vadd.xlane.f32.xlu0 %v9072
        %v9074 = vpop.xlane.xlu0 %9073
        %v9075 = vsel %vm542, %v9063, 0.0
        %9076 = vadd.xlane.f32.xlu0 %v9075
        %v9077 = vpop.xlane.xlu0 %9076
        %v9078 = vsel %vm542, %v9064, 0.0
        %9079 = vadd.xlane.f32.xlu0 %v9078
        %v9080 = vpop.xlane.xlu0 %9079
        %v9081 = vsel %vm542, %v9065, 0.0
        %9082 = vadd.xlane.f32.xlu0 %v9081
        %v9083 = vpop.xlane.xlu0 %9082
        %v9084 = vsel %vm542, %v9066, 0.0
        %9085 = vadd.xlane.f32.xlu0 %v9084
        %v9086 = vpop.xlane.xlu0 %9085
        %v9087 = vsel %vm542, %v9067, 0.0
        %9088 = vadd.xlane.f32.xlu0 %v9087
        %v9089 = vpop.xlane.xlu0 %9088
        %v9090 = vsel %vm542, %v9068, 0.0
        %9091 = vadd.xlane.f32.xlu0 %v9090
        %v9092 = vpop.xlane.xlu0 %9091
        %v9093 = vrcp.pop 32.0
        %v9094 = vmul.f32 %v9071, %v9093
        %v9095 = vmul.f32 %v9074, %v9093
        %v9096 = vmul.f32 %v9077, %v9093
        %v9097 = vmul.f32 %v9080, %v9093
        %v9098 = vmul.f32 %v9083, %v9093
        %v9099 = vmul.f32 %v9086, %v9093
        %v9100 = vmul.f32 %v9089, %v9093
        %v9101 = vmul.f32 %v9092, %v9093
        %v9102 = vsub.f32 %v9061, %v9094
        %v9103 = vsub.f32 %v9062, %v9095
        %v9104 = vsub.f32 %v9063, %v9096
        %v9105 = vsub.f32 %v9064, %v9097
        %v9106 = vsub.f32 %v9065, %v9098
        %v9107 = vsub.f32 %v9066, %v9099
        %v9108 = vsub.f32 %v9067, %v9100
        %v9109 = vsub.f32 %v9068, %v9101
        %v9110 = vmul.f32 %v9102, %v9102
        %v9111 = vmul.f32 %v9103, %v9103
        %v9112 = vmul.f32 %v9104, %v9104
        %v9113 = vmul.f32 %v9105, %v9105
        %v9114 = vmul.f32 %v9106, %v9106
        %v9115 = vmul.f32 %v9107, %v9107
        %v9116 = vmul.f32 %v9108, %v9108
        %v9117 = vmul.f32 %v9109, %v9109
        %v9118 = vsel %vm542, %v9110, 0.0
        %9119 = vadd.xlane.f32.xlu0 %v9118
        %v9120 = vpop.xlane.xlu0 %9119
        %v9121 = vsel %vm542, %v9111, 0.0
        %9122 = vadd.xlane.f32.xlu0 %v9121
        %v9123 = vpop.xlane.xlu0 %9122
        %v9124 = vsel %vm542, %v9112, 0.0
        %9125 = vadd.xlane.f32.xlu0 %v9124
        %v9126 = vpop.xlane.xlu0 %9125
        %v9127 = vsel %vm542, %v9113, 0.0
        %9128 = vadd.xlane.f32.xlu0 %v9127
        %v9129 = vpop.xlane.xlu0 %9128
        %v9130 = vsel %vm542, %v9114, 0.0
        %9131 = vadd.xlane.f32.xlu0 %v9130
        %v9132 = vpop.xlane.xlu0 %9131
        %v9133 = vsel %vm542, %v9115, 0.0
        %9134 = vadd.xlane.f32.xlu0 %v9133
        %v9135 = vpop.xlane.xlu0 %9134
        %v9136 = vsel %vm542, %v9116, 0.0
        %9137 = vadd.xlane.f32.xlu0 %v9136
        %v9138 = vpop.xlane.xlu0 %9137
        %v9139 = vsel %vm542, %v9117, 0.0
        %9140 = vadd.xlane.f32.xlu0 %v9139
        %v9141 = vpop.xlane.xlu0 %9140
        %v9142 = vmul.f32 %v9120, %v9093
        %v9143 = vmul.f32 %v9123, %v9093
        %v9144 = vmul.f32 %v9126, %v9093
        %v9145 = vmul.f32 %v9129, %v9093
        %v9146 = vmul.f32 %v9132, %v9093
        %v9147 = vmul.f32 %v9135, %v9093
        %v9148 = vmul.f32 %v9138, %v9093
        %v9149 = vmul.f32 %v9141, %v9093
        %v9150 = vadd.f32 %v9142, 1e-05
        %v9151 = vadd.f32 %v9143, 1e-05
        %v9152 = vadd.f32 %v9144, 1e-05
        %v9153 = vadd.f32 %v9145, 1e-05
        %v9154 = vadd.f32 %v9146, 1e-05
        %v9155 = vadd.f32 %v9147, 1e-05
        %v9156 = vadd.f32 %v9148, 1e-05
        %v9157 = vadd.f32 %v9149, 1e-05
        %v9158 = vrsqrt.pop %v9150
        %v9159 = vrsqrt.pop %v9151
        %v9160 = vrsqrt.pop %v9152
        %v9161 = vrsqrt.pop %v9153
        %v9162 = vrsqrt.pop %v9154
        %v9163 = vrsqrt.pop %v9155
        %v9164 = vrsqrt.pop %v9156
        %v9165 = vrsqrt.pop %v9157
        %v9166 = vmul.f32 %v9102, %v9158
        %v9167 = vmul.f32 %v9103, %v9159
        %v9168 = vmul.f32 %v9104, %v9160
        %v9169 = vmul.f32 %v9105, %v9161
        %v9170 = vmul.f32 %v9106, %v9162
        %v9171 = vmul.f32 %v9107, %v9163
        %v9172 = vmul.f32 %v9108, %v9164
        %v9173 = vmul.f32 %v9109, %v9165
        %v9174 = vlaneseq
        %v9175 = vshrl.u32 %v9174, 7
        %v9176 = vsub.s32 3, %v9175
        %v9177 = vrot.slane %v501, %v9176
        %v9178 = vmul.f32 %v9166, %v9177
        %v9179 = vmul.f32 %v9167, %v9177
        %v9180 = vmul.f32 %v9168, %v9177
        %v9181 = vmul.f32 %v9169, %v9177
        %v9182 = vmul.f32 %v9170, %v9177
        %v9183 = vmul.f32 %v9171, %v9177
        %v9184 = vmul.f32 %v9172, %v9177
        %v9185 = vmul.f32 %v9173, %v9177
        %v9186 = vlaneseq
        %v9187 = vshrl.u32 %v9186, 7
        %v9188 = vsub.s32 4, %v9187
        %v9189 = vrot.slane %v501, %v9188
        %v9190 = vadd.f32 %v9178, %v9189
        %v9191 = vadd.f32 %v9179, %v9189
        %v9192 = vadd.f32 %v9180, %v9189
        %v9193 = vadd.f32 %v9181, %v9189
        %v9194 = vadd.f32 %v9182, %v9189
        %v9195 = vadd.f32 %v9183, %v9189
        %v9196 = vadd.f32 %v9184, %v9189
        %v9197 = vadd.f32 %v9185, %v9189
        %v9198 = vpack.c.bf16 %v9191, %v9190
        %v9199 = vpack.c.bf16 %v9193, %v9192
        %v9200 = vpack.c.bf16 %v9195, %v9194
        %v9201 = vpack.c.bf16 %v9197, %v9196
        %v9202 = vld [vmem:[#allocation7] sm:$0xf]
        %v9203 = vld [vmem:[#allocation7 + $0x4] sm:$0xf]
        %v9204 = vld [vmem:[#allocation7 + $0x8] sm:$0xf]
        %v9205 = vld [vmem:[#allocation7 + $0xc] sm:$0xf]
        %v9206 = vld [vmem:[%s9] sm:$0x1]
        %v9208 = vlaneseq
        %v9209 = vshrl.u32 %v9208, 7
        %v9210 = vsub.s32 0, %v9209
        %v9211 = vrot.slane %v9206, %v9210
        %v9217 = vunpack.c.l.b16 %v9202
        %v9218 = vunpack.c.l.b16 %v9203
        %v9219 = vunpack.c.l.b16 %v9204
        %v9220 = vunpack.c.l.b16 %v9205
        %v9221 = vpack.c.b16 %v9218, %v9217
        %v9222 = vpack.c.b16 %v9220, %v9219
        %v9226 = vsel %vm542, %v9198, 0
        %v9229 = vsel %vm542, %v9199, 0
        %v9232 = vsel %vm542, %v9200, 0
        %v9235 = vsel %vm542, %v9201, 0
        %9237 = vmatprep.subr.bf16.mxu0 0
        %9238 = vmatpush1.bf16.msra.mxu0 %v9221
        %9239 = vmatprep.subr.bf16.mxu0 0
        %9240 = vmatpush1.bf16.msra.mxu0 %v9222
        %9241 = vmatprep.subr.bf16.mxu0 0
        %9242 = vmatpush1.bf16.msra.mxu0 0
        %9243 = vmatprep.subr.bf16.mxu0 0
        %9244 = vmatpush1.bf16.msra.mxu0 0
        %9245 = vmatprep.subr.bf16.mxu0 0
        %9246 = vmatpush1.bf16.msra.mxu0 0
        %9247 = vmatprep.subr.bf16.mxu0 0
        %9248 = vmatpush1.bf16.msra.mxu0 0
        %9249 = vmatprep.subr.bf16.mxu0 0
        %9250 = vmatpush1.bf16.msra.mxu0 0
        %9251 = vmatprep.subr.bf16.mxu0 0
        %9252 = vmatpush1.bf16.msra.mxu0 0
        %9253 = vmatprep.subr.bf16.mxu0 0
        %9254 = vmatpush1.bf16.msra.mxu0 0
        %9255 = vmatprep.subr.bf16.mxu0 0
        %9256 = vmatpush1.bf16.msra.mxu0 0
        %9257 = vmatprep.subr.bf16.mxu0 0
        %9258 = vmatpush1.bf16.msra.mxu0 0
        %9259 = vmatprep.subr.bf16.mxu0 0
        %9260 = vmatpush1.bf16.msra.mxu0 0
        %9261 = vmatprep.subr.bf16.mxu0 0
        %9262 = vmatpush1.bf16.msra.mxu0 0
        %9263 = vmatprep.subr.bf16.mxu0 0
        %9264 = vmatpush1.bf16.msra.mxu0 0
        %9265 = vmatprep.subr.bf16.mxu0 0
        %9266 = vmatpush1.bf16.msra.mxu0 0
        %9267 = vmatprep.subr.bf16.mxu0 0
        %9268 = vmatpush1.bf16.msra.mxu0 0
        %9269 = vmatprep.mubr.bf16.mxu0 0
        %9270 = vmatmul.mubr.bf16.gmra.mrb[0].mxu0 %v9226
        %v9271 = vpop.f32.mrb[0].mxu0
        %v9272 = vadd.f32 %v9211, %v9271
        %v9273 = vpop.f32.mrb[0].mxu0
        %v9274 = vpop.f32.mrb[0].mxu0
        %v9275 = vadd.f32 %v9211, %v9274
        %v9276 = vpop.f32.mrb[0].mxu0
        %9277 = vmatprep.mubr.bf16.mxu0 0
        %9278 = vmatmul.mubr.bf16.gmra.mrb[0].mxu0 %v9229
        %v9279 = vpop.f32.mrb[0].mxu0
        %v9280 = vadd.f32 %v9211, %v9279
        %v9281 = vpop.f32.mrb[0].mxu0
        %v9282 = vpop.f32.mrb[0].mxu0
        %v9283 = vadd.f32 %v9211, %v9282
        %v9284 = vpop.f32.mrb[0].mxu0
        %9285 = vmatprep.mubr.bf16.mxu0 0
        %9286 = vmatmul.mubr.bf16.gmra.mrb[0].mxu0 %v9232
        %v9287 = vpop.f32.mrb[0].mxu0
        %v9288 = vadd.f32 %v9211, %v9287
        %v9289 = vpop.f32.mrb[0].mxu0
        %v9290 = vpop.f32.mrb[0].mxu0
        %v9291 = vadd.f32 %v9211, %v9290
        %v9292 = vpop.f32.mrb[0].mxu0
        %9293 = vmatprep.mubr.bf16.mxu0 0
        %9294 = vmatmul.mubr.bf16.gmra.mrb[0].mxu0 %v9235
        %v9295 = vpop.f32.mrb[0].mxu0
        %v9296 = vadd.f32 %v9211, %v9295
        %v9297 = vpop.f32.mrb[0].mxu0
        %v9298 = vpop.f32.mrb[0].mxu0
        %v9299 = vadd.f32 %v9211, %v9298
        %v9300 = vpop.f32.mrb[0].mxu0
        %9301 = vdwg.mxu0
        %v9302 = vmax.f32 %v9272, 0.0
        %v9303 = vmax.f32 %v9275, 0.0
        %v9304 = vmax.f32 %v9280, 0.0
        %v9305 = vmax.f32 %v9283, 0.0
        %v9306 = vmax.f32 %v9288, 0.0
        %v9307 = vmax.f32 %v9291, 0.0
        %v9308 = vmax.f32 %v9296, 0.0
        %v9309 = vmax.f32 %v9299, 0.0
        %v9310 = vpack.c.bf16 %v9303, %v9302
        %v9311 = vpack.c.bf16 %v9305, %v9304
        %v9312 = vpack.c.bf16 %v9307, %v9306
        %v9313 = vpack.c.bf16 %v9309, %v9308
        %v9314 = vld [vmem:[%s6] sm:$0xf]
        %v9315 = vld [vmem:[%s6 + $0x4] sm:$0xf]
        %v9316 = vld [vmem:[%s6 + $0x8] sm:$0xf]
        %v9317 = vld [vmem:[%s6 + $0xc] sm:$0xf]
        %v9318 = vld [vmem:[%s6 + $0x10] sm:$0xf]
        %v9319 = vld [vmem:[%s6 + $0x14] sm:$0xf]
        %v9320 = vld [vmem:[%s6 + $0x18] sm:$0xf]
        %v9321 = vld [vmem:[%s6 + $0x1c] sm:$0xf]
        %v9322 = vlaneseq
        %v9323 = vshrl.u32 %v9322, 7
        %v9324 = vsub.s32 2, %v9323
        %v9325 = vrot.slane %v501, %v9324
        %v9334 = vunpack.c.l.b16 %v9314
        %v9335 = vunpack.c.l.b16 %v9315
        %v9336 = vunpack.c.l.b16 %v9316
        %v9337 = vunpack.c.l.b16 %v9317
        %v9338 = vunpack.c.l.b16 %v9318
        %v9339 = vunpack.c.l.b16 %v9319
        %v9340 = vunpack.c.l.b16 %v9320
        %v9341 = vunpack.c.l.b16 %v9321
        %v9342 = vpack.c.b16 %v9335, %v9334
        %v9343 = vpack.c.b16 %v9337, %v9336
        %v9344 = vpack.c.b16 %v9339, %v9338
        %v9345 = vpack.c.b16 %v9341, %v9340
        %vm9350 = vcmask 523264
        %v9352 = vsel %vm9350, %v9310, 0
        %v9355 = vsel %vm9350, %v9311, 0
        %v9358 = vsel %vm9350, %v9312, 0
        %v9361 = vsel %vm9350, %v9313, 0
        %9363 = vmatprep.subr.bf16.mxu0 0
        %9364 = vmatpush1.bf16.msra.mxu0 %v9342
        %9365 = vmatprep.subr.bf16.mxu0 0
        %9366 = vmatpush1.bf16.msra.mxu0 %v9343
        %9367 = vmatprep.subr.bf16.mxu0 0
        %9368 = vmatpush1.bf16.msra.mxu0 %v9344
        %9369 = vmatprep.subr.bf16.mxu0 0
        %9370 = vmatpush1.bf16.msra.mxu0 %v9345
        %9371 = vmatprep.subr.bf16.mxu0 0
        %9372 = vmatpush1.bf16.msra.mxu0 0
        %9373 = vmatprep.subr.bf16.mxu0 0
        %9374 = vmatpush1.bf16.msra.mxu0 0
        %9375 = vmatprep.subr.bf16.mxu0 0
        %9376 = vmatpush1.bf16.msra.mxu0 0
        %9377 = vmatprep.subr.bf16.mxu0 0
        %9378 = vmatpush1.bf16.msra.mxu0 0
        %9379 = vmatprep.subr.bf16.mxu0 0
        %9380 = vmatpush1.bf16.msra.mxu0 0
        %9381 = vmatprep.subr.bf16.mxu0 0
        %9382 = vmatpush1.bf16.msra.mxu0 0
        %9383 = vmatprep.subr.bf16.mxu0 0
        %9384 = vmatpush1.bf16.msra.mxu0 0
        %9385 = vmatprep.subr.bf16.mxu0 0
        %9386 = vmatpush1.bf16.msra.mxu0 0
        %9387 = vmatprep.subr.bf16.mxu0 0
        %9388 = vmatpush1.bf16.msra.mxu0 0
        %9389 = vmatprep.subr.bf16.mxu0 0
        %9390 = vmatpush1.bf16.msra.mxu0 0
        %9391 = vmatprep.subr.bf16.mxu0 0
        %9392 = vmatpush1.bf16.msra.mxu0 0
        %9393 = vmatprep.subr.bf16.mxu0 0
        %9394 = vmatpush1.bf16.msra.mxu0 0
        %9395 = vmatprep.mubr.bf16.mxu0 0
        %9396 = vmatmul.mubr.bf16.gmra.mrb[0].mxu0 %v9352
        %v9397 = vpop.f32.mrb[0].mxu0
        %v9398 = vadd.f32 %v9325, %v9397
        %v9399 = vpop.f32.mrb[0].mxu0
        %v9400 = vpop.f32.mrb[0].mxu0
        %v9401 = vadd.f32 %v9325, %v9400
        %v9402 = vpop.f32.mrb[0].mxu0
        %9403 = vmatprep.mubr.bf16.mxu0 0
        %9404 = vmatmul.mubr.bf16.gmra.mrb[0].mxu0 %v9355
        %v9405 = vpop.f32.mrb[0].mxu0
        %v9406 = vadd.f32 %v9325, %v9405
        %v9407 = vpop.f32.mrb[0].mxu0
        %v9408 = vpop.f32.mrb[0].mxu0
        %v9409 = vadd.f32 %v9325, %v9408
        %v9410 = vpop.f32.mrb[0].mxu0
        %9411 = vmatprep.mubr.bf16.mxu0 0
        %9412 = vmatmul.mubr.bf16.gmra.mrb[0].mxu0 %v9358
        %v9413 = vpop.f32.mrb[0].mxu0
        %v9414 = vadd.f32 %v9325, %v9413
        %v9415 = vpop.f32.mrb[0].mxu0
        %v9416 = vpop.f32.mrb[0].mxu0
        %v9417 = vadd.f32 %v9325, %v9416
        %v9418 = vpop.f32.mrb[0].mxu0
        %9419 = vmatprep.mubr.bf16.mxu0 0
        %9420 = vmatmul.mubr.bf16.gmra.mrb[0].mxu0 %v9361
        %v9421 = vpop.f32.mrb[0].mxu0
        %v9422 = vadd.f32 %v9325, %v9421
        %v9423 = vpop.f32.mrb[0].mxu0
        %v9424 = vpop.f32.mrb[0].mxu0
        %v9425 = vadd.f32 %v9325, %v9424
        %v9426 = vpop.f32.mrb[0].mxu0
        %9427 = vdwg.mxu0
        %v9428 = vadd.f32 %v9190, %v9398
        %v9429 = vadd.f32 %v9191, %v9401
        %v9430 = vadd.f32 %v9192, %v9406
        %v9431 = vadd.f32 %v9193, %v9409
        %v9432 = vadd.f32 %v9194, %v9414
        %v9433 = vadd.f32 %v9195, %v9417
        %v9434 = vadd.f32 %v9196, %v9422
        %v9435 = vadd.f32 %v9197, %v9425
        %v9436 = vsel %vm542, %v9428, 0.0
        %9437 = vadd.xlane.f32.xlu0 %v9436
        %v9438 = vpop.xlane.xlu0 %9437
        %v9439 = vsel %vm542, %v9429, 0.0
        %9440 = vadd.xlane.f32.xlu0 %v9439
        %v9441 = vpop.xlane.xlu0 %9440
        %v9442 = vsel %vm542, %v9430, 0.0
        %9443 = vadd.xlane.f32.xlu0 %v9442
        %v9444 = vpop.xlane.xlu0 %9443
        %v9445 = vsel %vm542, %v9431, 0.0
        %9446 = vadd.xlane.f32.xlu0 %v9445
        %v9447 = vpop.xlane.xlu0 %9446
        %v9448 = vsel %vm542, %v9432, 0.0
        %9449 = vadd.xlane.f32.xlu0 %v9448
        %v9450 = vpop.xlane.xlu0 %9449
        %v9451 = vsel %vm542, %v9433, 0.0
        %9452 = vadd.xlane.f32.xlu0 %v9451
        %v9453 = vpop.xlane.xlu0 %9452
        %v9454 = vsel %vm542, %v9434, 0.0
        %9455 = vadd.xlane.f32.xlu0 %v9454
        %v9456 = vpop.xlane.xlu0 %9455
        %v9457 = vsel %vm542, %v9435, 0.0
        %9458 = vadd.xlane.f32.xlu0 %v9457
        %v9459 = vpop.xlane.xlu0 %9458
        %v9460 = vmul.f32 %v9438, %v9093
        %v9461 = vmul.f32 %v9441, %v9093
        %v9462 = vmul.f32 %v9444, %v9093
        %v9463 = vmul.f32 %v9447, %v9093
        %v9464 = vmul.f32 %v9450, %v9093
        %v9465 = vmul.f32 %v9453, %v9093
        %v9466 = vmul.f32 %v9456, %v9093
        %v9467 = vmul.f32 %v9459, %v9093
        %v9468 = vsub.f32 %v9428, %v9460
        %v9469 = vsub.f32 %v9429, %v9461
        %v9470 = vsub.f32 %v9430, %v9462
        %v9471 = vsub.f32 %v9431, %v9463
        %v9472 = vsub.f32 %v9432, %v9464
        %v9473 = vsub.f32 %v9433, %v9465
        %v9474 = vsub.f32 %v9434, %v9466
        %v9475 = vsub.f32 %v9435, %v9467
        %v9476 = vmul.f32 %v9468, %v9468
        %v9477 = vmul.f32 %v9469, %v9469
        %v9478 = vmul.f32 %v9470, %v9470
        %v9479 = vmul.f32 %v9471, %v9471
        %v9480 = vmul.f32 %v9472, %v9472
        %v9481 = vmul.f32 %v9473, %v9473
        %v9482 = vmul.f32 %v9474, %v9474
        %v9483 = vmul.f32 %v9475, %v9475
        %v9484 = vsel %vm542, %v9476, 0.0
        %9485 = vadd.xlane.f32.xlu0 %v9484
        %v9486 = vpop.xlane.xlu0 %9485
        %v9487 = vsel %vm542, %v9477, 0.0
        %9488 = vadd.xlane.f32.xlu0 %v9487
        %v9489 = vpop.xlane.xlu0 %9488
        %v9490 = vsel %vm542, %v9478, 0.0
        %9491 = vadd.xlane.f32.xlu0 %v9490
        %v9492 = vpop.xlane.xlu0 %9491
        %v9493 = vsel %vm542, %v9479, 0.0
        %9494 = vadd.xlane.f32.xlu0 %v9493
        %v9495 = vpop.xlane.xlu0 %9494
        %v9496 = vsel %vm542, %v9480, 0.0
        %9497 = vadd.xlane.f32.xlu0 %v9496
        %v9498 = vpop.xlane.xlu0 %9497
        %v9499 = vsel %vm542, %v9481, 0.0
        %9500 = vadd.xlane.f32.xlu0 %v9499
        %v9501 = vpop.xlane.xlu0 %9500
        %v9502 = vsel %vm542, %v9482, 0.0
        %9503 = vadd.xlane.f32.xlu0 %v9502
        %v9504 = vpop.xlane.xlu0 %9503
        %v9505 = vsel %vm542, %v9483, 0.0
        %9506 = vadd.xlane.f32.xlu0 %v9505
        %v9507 = vpop.xlane.xlu0 %9506
        %v9508 = vmul.f32 %v9486, %v9093
        %v9509 = vmul.f32 %v9489, %v9093
        %v9510 = vmul.f32 %v9492, %v9093
        %v9511 = vmul.f32 %v9495, %v9093
        %v9512 = vmul.f32 %v9498, %v9093
        %v9513 = vmul.f32 %v9501, %v9093
        %v9514 = vmul.f32 %v9504, %v9093
        %v9515 = vmul.f32 %v9507, %v9093
        %v9516 = vadd.f32 %v9508, 1e-05
        %v9517 = vadd.f32 %v9509, 1e-05
        %v9518 = vadd.f32 %v9510, 1e-05
        %v9519 = vadd.f32 %v9511, 1e-05
        %v9520 = vadd.f32 %v9512, 1e-05
        %v9521 = vadd.f32 %v9513, 1e-05
        %v9522 = vadd.f32 %v9514, 1e-05
        %v9523 = vadd.f32 %v9515, 1e-05
        %v9524 = vrsqrt.pop %v9516
        %v9525 = vrsqrt.pop %v9517
        %v9526 = vrsqrt.pop %v9518
        %v9527 = vrsqrt.pop %v9519
        %v9528 = vrsqrt.pop %v9520
        %v9529 = vrsqrt.pop %v9521
        %v9530 = vrsqrt.pop %v9522
        %v9531 = vrsqrt.pop %v9523
        %v9532 = vmul.f32 %v9468, %v9524
        %v9533 = vmul.f32 %v9469, %v9525
        %v9534 = vmul.f32 %v9470, %v9526
        %v9535 = vmul.f32 %v9471, %v9527
        %v9536 = vmul.f32 %v9472, %v9528
        %v9537 = vmul.f32 %v9473, %v9529
        %v9538 = vmul.f32 %v9474, %v9530
        %v9539 = vmul.f32 %v9475, %v9531
        %v9540 = vlaneseq
        %v9541 = vshrl.u32 %v9540, 7
        %v9542 = vsub.s32 5, %v9541
        %v9543 = vrot.slane %v501, %v9542
        %v9544 = vmul.f32 %v9532, %v9543
        %v9545 = vmul.f32 %v9533, %v9543
        %v9546 = vmul.f32 %v9534, %v9543
        %v9547 = vmul.f32 %v9535, %v9543
        %v9548 = vmul.f32 %v9536, %v9543
        %v9549 = vmul.f32 %v9537, %v9543
        %v9550 = vmul.f32 %v9538, %v9543
        %v9551 = vmul.f32 %v9539, %v9543
        %v9552 = vlaneseq
        %v9553 = vshrl.u32 %v9552, 7
        %v9554 = vsub.s32 6, %v9553
        %v9555 = vrot.slane %v501, %v9554
        %v9556 = vadd.f32 %v9544, %v9555
        %v9557 = vadd.f32 %v9545, %v9555
        %v9558 = vadd.f32 %v9546, %v9555
        %v9559 = vadd.f32 %v9547, %v9555
        %v9560 = vadd.f32 %v9548, %v9555
        %v9561 = vadd.f32 %v9549, %v9555
        %v9562 = vadd.f32 %v9550, %v9555
        %v9563 = vadd.f32 %v9551, %v9555
        %9564 = vst.msk [vmem:[%s478] sm:$0xff] %vm542, %v9556
        %9565 = vst.msk [vmem:[%s478 + $0x8] sm:$0xff] %vm542, %v9557
        %9566 = vst.msk [vmem:[%s478 + $0x10] sm:$0xff] %vm542, %v9558
        %9567 = vst.msk [vmem:[%s478 + $0x18] sm:$0xff] %vm542, %v9559
        %9568 = vst.msk [vmem:[%s478 + $0x20] sm:$0xff] %vm542, %v9560
        %9569 = vst.msk [vmem:[%s478 + $0x28] sm:$0xff] %vm542, %v9561
        %9570 = vst.msk [vmem:[%s478 + $0x30] sm:$0xff] %vm542, %v9562
        %9571 = vst.msk [vmem:[%s478 + $0x38] sm:$0xff] %vm542, %v9563
        %s9572 = sand.u32 %s276, 1
        %s9573 = scalar_lea.sflag [#allocation4], %s9572
        %s9574 = sand.u32 %s276, 1
        %s9575 = smul.addr %s9574, 64
        %s9576 = scalar_lea.vmem [#allocation8], %s9575
        %s9577 = smul.u32 8, %s36
        %p9578 = scmp.lt.s32.totalorder %s9577, 15
        %s9579 = scalar_select %p9578, %s9577, 15
        %p9580 = scmp.lt.s32.totalorder %s37, 0
        %s9581 = scalar_select %p9580, %s37, 0
        %s9582 = sadd.s32 %s9581, %s9579
        %s9583 = smul.addr %s9582, 8
        %s9584 = scalar_lea.vmem %s11, %s9583
        // Predicated region
        $region73: #{tpu_custom_call.1} parent=59 // pred_check
          %p9585 = pneg %p286
        $region74: #{tpu_custom_call.1} parent=59 // pred_check_branch
          %9587 = sbr.rel (%p9585) target = $region76
        $region75: #{tpu_custom_call.1} parent=59 // pred_region
          %s9588 = smul.u32 8, %s37
          %s9590 = ssub.s32 1024, 1024
          %9591 = vsyncadd %s9573, %s9590
          %s9592 = smul.addr %s9588, 2
          %s9593 = sadd.s32 %s36, %s9592
          %s9594 = smul.addr %s9593, 128
          %s9595 = scalar_lea.hbm %s10, %s9594
          %s9596 = sshll.u32 %s9576, 4
          %s9597 = int_to_ptr.vmem [resolvable:$true] %s9596
          %9602 = dma.vmem_to_hbm [thread:$0]  %s9597, 1024, %s9595, %s9573, 128, 256, 8
        $region76: #{tpu_custom_call.1} parent=59 // pred_fallthru
          _
        // Predicated region
        $region77: #{tpu_custom_call.1} parent=59 // pred_check
          %p9603 = pneg %p314
        $region78: #{tpu_custom_call.1} parent=59 // pred_check_branch
          %9605 = sbr.rel (%p9603) target = $region80
        $region79: #{tpu_custom_call.1} parent=59 // pred_region
          %s9606 = smul.u32 8, %s36
        $region80: #{tpu_custom_call.1} parent=59 // pred_fallthru
          _
      $region60: #{tpu_custom_call.1} parent=5 // pred_fallthru
        _
      %p9607 = scmp.le.s32.totalorder 2, %s27
      // Predicated region
      $region81: #{tpu_custom_call.1} parent=5 // pred_check
        %p9608 = pneg %p9607
      $region82: #{tpu_custom_call.1} parent=5 // pred_check_branch
        %9610 = sbr.rel (%p9608) target = $region84
      $region83: #{tpu_custom_call.1} parent=5 // pred_region
        %s9611 = ssub.s32 %s27, 2
        // Predicated region
        $region85: #{tpu_custom_call.1} parent=83 // pred_check
          %p9612 = pneg %p292
        $region86: #{tpu_custom_call.1} parent=83 // pred_check_branch
          %9614 = sbr.rel (%p9612) target = $region88
        $region87: #{tpu_custom_call.1} parent=83 // pred_region
          %s9615 = sand.u32 %s277, 1
          %s9616 = scalar_lea.sflag [#allocation4], %s9615
          %s9617 = sand.u32 %s277, 1
          %s9618 = smul.addr %s9617, 64
          %s9619 = scalar_lea.vmem [#allocation8], %s9618
          %9620 = dma.done %s9616, 1024
        $region88: #{tpu_custom_call.1} parent=83 // pred_fallthru
          _
        // Predicated region
        $region89: #{tpu_custom_call.1} parent=83 // pred_check
          %p9621 = pneg %p320
        $region90: #{tpu_custom_call.1} parent=83 // pred_check_branch
          %9623 = sbr.rel (%p9621) target = $region92
        $region91: #{tpu_custom_call.1} parent=83 // pred_region
          %s9624 = smul.u32 8, %s38
          %p9625 = scmp.lt.s32.totalorder %s9624, 15
          %s9626 = scalar_select %p9625, %s9624, 15
          %p9627 = scmp.lt.s32.totalorder %s39, 0
          %s9628 = scalar_select %p9627, %s39, 0
          %s9629 = sadd.s32 %s9628, %s9626
          %s9630 = smul.addr %s9629, 8
          %s9631 = scalar_lea.vmem %s11, %s9630
        $region92: #{tpu_custom_call.1} parent=83 // pred_fallthru
          _
      $region84: #{tpu_custom_call.1} parent=5 // pred_fallthru
        _
    $region6: #{tpu_custom_call.1} parent=1 // loop_footer
      %s31 = sadd.s32 1, %s27
    $region7: #{tpu_custom_call.1} parent=1 // loop_footer_branch
      %26 = sbr.rel target = $region3
    $region8: #{tpu_custom_call.1} parent=1 // loop_exit
      _
    %9632 = vsyncpa [#allocation3], 1
    %s9633 = scalar_lea.sflag [#allocation3], 1
    %9634 = vsyncpa %s9633, 1
    %9635 = vsyncpa [#allocation6], 1
    %s9636 = scalar_lea.sflag [#allocation6], 1
    %9637 = vsyncpa %s9636, 1
    %9638 = vsyncpa [#allocation4], 1
    %s9639 = scalar_lea.sflag [#allocation4], 1
    %9640 = vsyncpa %s9639, 1

</llo_original>
